<compile_context>
chip_gen: v6e
topology: v6e:2x2x1
jax: 0.10.0
libtpu: 0.0.40
codegen_flags: <defaults>
</compile_context>

<pallas_src>
import functools

import jax
import jax.numpy as jnp
from jax import lax
from jax.experimental import pallas as pl
from jax.experimental.pallas import tpu as pltpu

EPS = 1e-5  # nn.InstanceNorm2d default


def _reflect_pad_into(pad_ref, src, H, W):
    """Write ReflectionPad2d(1) of src (H, W, C) into pad_ref (H+2, W+2, C)."""
    s = src.astype(pad_ref.dtype)          # bf16 scratch: cast on write
    pad_ref[1:H + 1, 1:W + 1, :] = s
    pad_ref[0:1, 1:W + 1, :] = s[1:2]
    pad_ref[H + 1:H + 2, 1:W + 1, :] = s[H - 2:H - 1]
    # Columns after rows so corners reflect both axes (matches nn.ReflectionPad2d).
    pad_ref[:, 0:1, :] = pad_ref[:, 2:3, :]
    pad_ref[:, W + 1:W + 2, :] = pad_ref[:, W - 1:W, :]


def _conv3x3_in_stats(xpad_ref, w_ref, y_ref, H, W, C, th):
    """3x3 conv with dy folded into the contraction + fused IN statistics.

    xpad_ref: (H+2, W+2, C) bf16 reflect-padded input (VMEM scratch).
    w_ref:    (3, 3C, C) bf16 folded weights, w_ref[dx][dy*C + ci, co].
    y_ref:    (H, W, C) f32 scratch receiving the (bias-free) conv output.
    Returns (mean, inv_std), each (1, 1, C) f32.
    """
    inv_n = 1.0 / float(H * W)
    s = jnp.zeros((1, C), jnp.float32)
    ss = jnp.zeros((1, C), jnp.float32)
    r0 = 0
    while r0 < H:                       # static row-tile loop (unrolled at trace)
        rows = min(th, H - r0)
        m = rows * W
        acc = jnp.zeros((m, C), jnp.float32)
        for dx in range(3):
            # Fold the three dy-shifted row windows along the channel axis so a
            # single matmul with K=3C replaces three K=C taps (1/3 the f32
            # accumulator round trips through VMEM).
            # TODO(synk): dx=1,2 column slices are not 8-sublane aligned; a
            # pltpu.roll-based shift (XLU) could overlap that relayout with MXU.
            op = jnp.concatenate(
                [xpad_ref[r0 + dy:r0 + dy + rows, dx:dx + W, :].reshape(m, C)
                 for dy in range(3)], axis=-1)
            acc = acc + jnp.dot(op, w_ref[dx],
                                preferred_element_type=jnp.float32)
        y_ref[r0:r0 + rows, :, :] = acc.reshape(rows, W, C)
        # Fused per-tile InstanceNorm statistics (no full-image acc*acc temp).
        s = s + jnp.sum(acc, axis=0, keepdims=True)
        ss = ss + jnp.sum(acc * acc, axis=0, keepdims=True)
        r0 += rows
    mean = s * inv_n
    var = jnp.maximum(ss * inv_n - mean * mean, 0.0)   # clamp: no rsqrt(neg)
    inv_std = lax.rsqrt(var + EPS)
    return mean.reshape(1, 1, C), inv_std.reshape(1, 1, C)


def _resblock_kernel(x_ref, w1_ref, w2_ref, out_ref, xpad_scr, y_scr,
                     *, H, W, C, th):
    """Fused: pad -> conv -> IN -> ReLU -> pad -> conv -> IN -> + x."""
    # Stage 1.  Conv bias before a non-affine InstanceNorm cancels with the
    # mean subtraction, so it is never computed.
    _reflect_pad_into(xpad_scr, x_ref[0], H, W)
    mean1, inv1 = _conv3x3_in_stats(xpad_scr, w1_ref, y_scr, H, W, C, th)
    h = jnp.maximum((y_scr[...] - mean1) * inv1, 0.0)
    # TODO(synk): use_dropout=True branch (nn.Dropout(0.5)) not implemented
    # (config chosen with use_dropout=False, as in default ResnetGenerator).

    # Stage 2: reuse the same pad scratch; residual add fused into the store.
    _reflect_pad_into(xpad_scr, h, H, W)
    mean2, inv2 = _conv3x3_in_stats(xpad_scr, w2_ref, y_scr, H, W, C, th)
    out_ref[0] = (x_ref[0].astype(jnp.float32)
                  + (y_scr[...] - mean2) * inv2).astype(out_ref.dtype)


def _fold_weight_bf16(w_hwio):
    """(3, 3, C, C) HWIO -> (3, 3C, C) bf16 with layout [dx, dy*C + ci, co]."""
    C = w_hwio.shape[2]
    return jnp.transpose(w_hwio, (1, 0, 2, 3)).reshape(3, 3 * C, C).astype(
        jnp.bfloat16)


def _physical_vmem_bytes():
    try:
        cap = getattr(pltpu.get_tpu_info(), "vmem_capacity_bytes", None)
        if cap:
            return int(cap)
    except Exception:
        pass
    return 64 << 20  # conservative: v7x per-TensorCore VMEM


def resnet_block_forward_nhwc(x_nhwc, params):
    """Fused ResnetBlock forward on NHWC input.  Returns NHWC."""
    w1, _b1, w2, _b2 = params
    N, H, W, C = x_nhwc.shape
    w1f = _fold_weight_bf16(w1)
    w2f = _fold_weight_bf16(w2)

    # Row-tile so each matmul M dim is ~512 and IN stats fuse per tile.
    th = max(1, min(H, max(1, 512 // W)))
    kern = functools.partial(_resblock_kernel, H=H, W=W, C=C, th=th)

    elt = x_nhwc.dtype.itemsize
    img = H * W * C
    w_bytes = 2 * 9 * C * C * 2                   # two bf16 folded weights
    cost = pl.CostEstimate(
        flops=2 * 2 * 9 * H * W * C * C * N,      # two 3x3 convs per image
        transcendentals=0,
        bytes_accessed=2 * N * img * elt + w_bytes,
    )

    # VMEM budget: double-buffered x/out blocks and weights, both scratch
    # buffers, plus compiler-materialized f32 temporaries (acc / h / operands).
    # TODO(synk): at production sizes on v7x (64 MiB VMEM/TC, C=256, H=W>=128)
    # whole-image blocks do not fit; add an H-row grid axis with halo rows and
    # cross-tile IN stats (two passes), marking N and the row axis "parallel".
    need = (4 * img * elt + 2 * w_bytes
            + (H + 2) * (W + 2) * C * 2           # bf16 pad scratch
            + img * 4                             # f32 conv-output scratch
            + 5 * img * 4                         # f32 temporaries
            + (4 << 20))                          # headroom
    phys = _physical_vmem_bytes()
    vmem_limit = int(min(max(need, 16 << 20), phys))

    return pl.pallas_call(
        kern,
        out_shape=jax.ShapeDtypeStruct((N, H, W, C), x_nhwc.dtype),
        grid_spec=pltpu.PrefetchScalarGridSpec(
            num_scalar_prefetch=0,
            grid=(N,),
            in_specs=[
                pl.BlockSpec((1, H, W, C), lambda n: (n, 0, 0, 0)),
                pl.BlockSpec((3, 3 * C, C), lambda n: (0, 0, 0)),
                pl.BlockSpec((3, 3 * C, C), lambda n: (0, 0, 0)),
            ],
            out_specs=pl.BlockSpec((1, H, W, C), lambda n: (n, 0, 0, 0)),
            scratch_shapes=[
                pltpu.VMEM((H + 2, W + 2, C), jnp.bfloat16),  # pad scratch
                pltpu.VMEM((H, W, C), jnp.float32),           # conv output
            ],
        ),
        compiler_params=pltpu.CompilerParams(
            dimension_semantics=("parallel",),
            vmem_limit_bytes=vmem_limit,
        ),
        cost_estimate=cost,
    )(x_nhwc, w1f, w2f)


def resnet_block_forward(x_nchw, params):
    """x_nchw: (N, C, H, W) like the PyTorch module.  Returns (N, C, H, W).

    NOTE: conv biases (params[1], params[3]) are accepted but unused — a bias
    added right before a non-affine InstanceNorm is removed exactly by the
    per-channel mean subtraction.  For stacked blocks prefer the NHWC entry
    point end-to-end so these boundary transposes disappear.
    """
    x_nhwc = jnp.transpose(x_nchw, (0, 2, 3, 1))
    out_nhwc = resnet_block_forward_nhwc(x_nhwc, params)
    return jnp.transpose(out_nhwc, (0, 3, 1, 2))


def init_params(key, dim, dtype=jnp.float32):
    """Deterministic synthetic weights. HWIO conv weights, 1-D biases."""
    k1, k2, k3, k4 = jax.random.split(key, 4)
    scale = 0.1
    w1 = scale * jax.random.normal(k1, (3, 3, dim, dim), dtype)
    b1 = scale * jax.random.normal(k2, (dim,), dtype)
    w2 = scale * jax.random.normal(k3, (3, 3, dim, dim), dtype)
    b2 = scale * jax.random.normal(k4, (dim,), dtype)
    return (w1, b1, w2, b2)


def _reference(x_nchw, params):
    """Pure-JAX (XLA) reference of the PyTorch ResnetBlock forward."""
    w1, b1, w2, b2 = params
    x = jnp.transpose(x_nchw, (0, 2, 3, 1)).astype(jnp.float32)

    def conv_in(h, w, b):
        hp = jnp.pad(h, ((0, 0), (1, 1), (1, 1), (0, 0)), mode="reflect")
        y = lax.conv_general_dilated(
            hp, w.astype(jnp.float32), (1, 1), "VALID",
            dimension_numbers=("NHWC", "HWIO", "NHWC")) + b
        mean = jnp.mean(y, axis=(1, 2), keepdims=True)
        var = jnp.var(y, axis=(1, 2), keepdims=True)
        return (y - mean) * lax.rsqrt(var + EPS)

    h = jax.nn.relu(conv_in(x, w1, b1))
    y = conv_in(h, w2, b2)
    return jnp.transpose(x + y, (0, 3, 1, 2)).astype(x_nchw.dtype)


if __name__ == "__main__":
    N, C, H, W = 2, 4, 16, 16
    key = jax.random.PRNGKey(0)
    kx, kp = jax.random.split(key)
    x = jax.random.normal(kx, (N, C, H, W), jnp.float32)
    params = init_params(kp, C)

    out = jax.block_until_ready(resnet_block_forward(x, params))
    assert out.shape == (N, C, H, W) and out.dtype == x.dtype
    assert bool(jnp.all(jnp.isfinite(out)))

    ref = jax.block_until_ready(_reference(x, params))
    err = float(jnp.max(jnp.abs(out - ref)))
    assert err < 1e-1, f"max abs error vs reference: {err}"
    print("KERNEL_OK")
</pallas_src>

<mosaic_0001>
module attributes {stable_mosaic.version = 11 : i64} {
  func.func @_resblock_kernel(%arg0: i32, %arg1: memref<1x16x16x4xf32, #tpu.memory_space<vmem>>, %arg2: memref<3x12x4xbf16, #tpu.memory_space<vmem>>, %arg3: memref<3x12x4xbf16, #tpu.memory_space<vmem>>, %arg4: memref<1x16x16x4xf32, #tpu.memory_space<vmem>>, %arg5: memref<18x18x4xbf16, #tpu.memory_space<vmem>>, %arg6: memref<16x16x4xf32, #tpu.memory_space<vmem>>) attributes {dimension_semantics = [#tpu.dimension_semantics<parallel>], iteration_bounds = array<i64: 2>, scalar_prefetch = 0 : i64, scratch_operands = 2 : i64, tpu.core_type = #tpu.core_type<tc>, window_params = [{transform_indices = @transform_0, window_bounds = array<i64: 1, 16, 16, 4>}, {pipeline_mode = #tpu.pipeline_mode<synchronous>, transform_indices = @transform_1, window_bounds = array<i64: 3, 12, 4>}, {pipeline_mode = #tpu.pipeline_mode<synchronous>, transform_indices = @transform_2, window_bounds = array<i64: 3, 12, 4>}, {transform_indices = @transform_3, window_bounds = array<i64: 1, 16, 16, 4>}]} {
    %c0 = arith.constant 0 : index
    %c0_0 = arith.constant 0 : index
    %c0_1 = arith.constant 0 : index
    %c0_2 = arith.constant 0 : index
    %0 = vector.load %arg1[%c0, %c0_0, %c0_1, %c0_2] : memref<1x16x16x4xf32, #tpu.memory_space<vmem>>, vector<1x16x16x4xf32>
    %1 = vector.shape_cast %0 : vector<1x16x16x4xf32> to vector<16x16x4xf32>
    %2 = arith.truncf %1 : vector<16x16x4xf32> to vector<16x16x4xbf16>
    %c1 = arith.constant 1 : index
    %c1_3 = arith.constant 1 : index
    %c0_4 = arith.constant 0 : index
    %3 = vector.load %arg5[%c1, %c1_3, %c0_4] : memref<18x18x4xbf16, #tpu.memory_space<vmem>>, vector<16x16x4xbf16>
    tpu.vector_store %arg5[%c1, %c1_3, %c0_4], %2 {strides = array<i32>} : memref<18x18x4xbf16, #tpu.memory_space<vmem>>, vector<16x16x4xbf16>,
    %4 = vector.extract_strided_slice %2 {offsets = [1, 0, 0], sizes = [1, 16, 4], strides = [1, 1, 1]} : vector<16x16x4xbf16> to vector<1x16x4xbf16>
    %c0_5 = arith.constant 0 : index
    %c1_6 = arith.constant 1 : index
    %c0_7 = arith.constant 0 : index
    %5 = vector.load %arg5[%c0_5, %c1_6, %c0_7] : memref<18x18x4xbf16, #tpu.memory_space<vmem>>, vector<1x16x4xbf16>
    tpu.vector_store %arg5[%c0_5, %c1_6, %c0_7], %4 {strides = array<i32>} : memref<18x18x4xbf16, #tpu.memory_space<vmem>>, vector<1x16x4xbf16>,
    %6 = vector.extract_strided_slice %2 {offsets = [14, 0, 0], sizes = [1, 16, 4], strides = [1, 1, 1]} : vector<16x16x4xbf16> to vector<1x16x4xbf16>
    %c17 = arith.constant 17 : index
    %c1_8 = arith.constant 1 : index
    %c0_9 = arith.constant 0 : index
    %7 = vector.load %arg5[%c17, %c1_8, %c0_9] : memref<18x18x4xbf16, #tpu.memory_space<vmem>>, vector<1x16x4xbf16>
    tpu.vector_store %arg5[%c17, %c1_8, %c0_9], %6 {strides = array<i32>} : memref<18x18x4xbf16, #tpu.memory_space<vmem>>, vector<1x16x4xbf16>,
    %c0_10 = arith.constant 0 : index
    %c2 = arith.constant 2 : index
    %c0_11 = arith.constant 0 : index
    %8 = vector.load %arg5[%c0_10, %c2, %c0_11] : memref<18x18x4xbf16, #tpu.memory_space<vmem>>, vector<18x1x4xbf16>
    %c0_12 = arith.constant 0 : index
    %c0_13 = arith.constant 0 : index
    %c0_14 = arith.constant 0 : index
    %9 = vector.load %arg5[%c0_12, %c0_13, %c0_14] : memref<18x18x4xbf16, #tpu.memory_space<vmem>>, vector<18x1x4xbf16>
    tpu.vector_store %arg5[%c0_12, %c0_13, %c0_14], %8 {strides = array<i32>} : memref<18x18x4xbf16, #tpu.memory_space<vmem>>, vector<18x1x4xbf16>,
    %c0_15 = arith.constant 0 : index
    %c15 = arith.constant 15 : index
    %c0_16 = arith.constant 0 : index
    %10 = vector.load %arg5[%c0_15, %c15, %c0_16] : memref<18x18x4xbf16, #tpu.memory_space<vmem>>, vector<18x1x4xbf16>
    %c0_17 = arith.constant 0 : index
    %c17_18 = arith.constant 17 : index
    %c0_19 = arith.constant 0 : index
    %11 = vector.load %arg5[%c0_17, %c17_18, %c0_19] : memref<18x18x4xbf16, #tpu.memory_space<vmem>>, vector<18x1x4xbf16>
    tpu.vector_store %arg5[%c0_17, %c17_18, %c0_19], %10 {strides = array<i32>} : memref<18x18x4xbf16, #tpu.memory_space<vmem>>, vector<18x1x4xbf16>,
    %cst = arith.constant 0.000000e+00 : f32
    %12 = vector.broadcast %cst : f32 to vector<1x4xf32>
    %cst_20 = arith.constant 0.000000e+00 : f32
    %13 = vector.broadcast %cst_20 : f32 to vector<1x4xf32>
    %cst_21 = arith.constant 0.000000e+00 : f32
    %14 = vector.broadcast %cst_21 : f32 to vector<256x4xf32>
    %c0_22 = arith.constant 0 : index
    %c0_23 = arith.constant 0 : index
    %c0_24 = arith.constant 0 : index
    %15 = vector.load %arg5[%c0_22, %c0_23, %c0_24] : memref<18x18x4xbf16, #tpu.memory_space<vmem>>, vector<16x16x4xbf16>
    %16 = vector.shape_cast %15 : vector<16x16x4xbf16> to vector<256x4xbf16>
    %c1_25 = arith.constant 1 : index
    %c0_26 = arith.constant 0 : index
    %c0_27 = arith.constant 0 : index
    %17 = vector.load %arg5[%c1_25, %c0_26, %c0_27] : memref<18x18x4xbf16, #tpu.memory_space<vmem>>, vector<16x16x4xbf16>
    %18 = vector.shape_cast %17 : vector<16x16x4xbf16> to vector<256x4xbf16>
    %c2_28 = arith.constant 2 : index
    %c0_29 = arith.constant 0 : index
    %c0_30 = arith.constant 0 : index
    %19 = vector.load %arg5[%c2_28, %c0_29, %c0_30] : memref<18x18x4xbf16, #tpu.memory_space<vmem>>, vector<16x16x4xbf16>
    %20 = vector.shape_cast %19 : vector<16x16x4xbf16> to vector<256x4xbf16>
    %21 = tpu.concatenate %16, %18, %20 in 1 : vector<256x4xbf16>, vector<256x4xbf16>, vector<256x4xbf16> -> vector<256x12xbf16>
    %c0_31 = arith.constant 0 : index
    %c0_32 = arith.constant 0 : index
    %c0_33 = arith.constant 0 : index
    %22 = vector.load %arg2[%c0_31, %c0_32, %c0_33] : memref<3x12x4xbf16, #tpu.memory_space<vmem>>, vector<1x12x4xbf16>
    %23 = vector.shape_cast %22 : vector<1x12x4xbf16> to vector<12x4xbf16>
    %cst_34 = arith.constant dense<0.000000e+00> : vector<256x4xf32>
    %24 = tpu.matmul %21, %23, %cst_34 {dimension_numbers = #tpu.dot_dimension_numbers<[1], [0], [0], [1], [0, 0, 1, 1], [], []>} : vector<256x12xbf16>, vector<12x4xbf16>, vector<256x4xf32> -> vector<256x4xf32>
    %25 = arith.addf %14, %24 : vector<256x4xf32>
    %c0_35 = arith.constant 0 : index
    %c1_36 = arith.constant 1 : index
    %c0_37 = arith.constant 0 : index
    %26 = vector.load %arg5[%c0_35, %c1_36, %c0_37] : memref<18x18x4xbf16, #tpu.memory_space<vmem>>, vector<16x16x4xbf16>
    %27 = vector.shape_cast %26 : vector<16x16x4xbf16> to vector<256x4xbf16>
    %c1_38 = arith.constant 1 : index
    %c1_39 = arith.constant 1 : index
    %c0_40 = arith.constant 0 : index
    %28 = vector.load %arg5[%c1_38, %c1_39, %c0_40] : memref<18x18x4xbf16, #tpu.memory_space<vmem>>, vector<16x16x4xbf16>
    %29 = vector.shape_cast %28 : vector<16x16x4xbf16> to vector<256x4xbf16>
    %c2_41 = arith.constant 2 : index
    %c1_42 = arith.constant 1 : index
    %c0_43 = arith.constant 0 : index
    %30 = vector.load %arg5[%c2_41, %c1_42, %c0_43] : memref<18x18x4xbf16, #tpu.memory_space<vmem>>, vector<16x16x4xbf16>
    %31 = vector.shape_cast %30 : vector<16x16x4xbf16> to vector<256x4xbf16>
    %32 = tpu.concatenate %27, %29, %31 in 1 : vector<256x4xbf16>, vector<256x4xbf16>, vector<256x4xbf16> -> vector<256x12xbf16>
    %c1_44 = arith.constant 1 : index
    %c0_45 = arith.constant 0 : index
    %c0_46 = arith.constant 0 : index
    %33 = vector.load %arg2[%c1_44, %c0_45, %c0_46] : memref<3x12x4xbf16, #tpu.memory_space<vmem>>, vector<1x12x4xbf16>
    %34 = vector.shape_cast %33 : vector<1x12x4xbf16> to vector<12x4xbf16>
    %cst_47 = arith.constant dense<0.000000e+00> : vector<256x4xf32>
    %35 = tpu.matmul %32, %34, %cst_47 {dimension_numbers = #tpu.dot_dimension_numbers<[1], [0], [0], [1], [0, 0, 1, 1], [], []>} : vector<256x12xbf16>, vector<12x4xbf16>, vector<256x4xf32> -> vector<256x4xf32>
    %36 = arith.addf %25, %35 : vector<256x4xf32>
    %c0_48 = arith.constant 0 : index
    %c2_49 = arith.constant 2 : index
    %c0_50 = arith.constant 0 : index
    %37 = vector.load %arg5[%c0_48, %c2_49, %c0_50] : memref<18x18x4xbf16, #tpu.memory_space<vmem>>, vector<16x16x4xbf16>
    %38 = vector.shape_cast %37 : vector<16x16x4xbf16> to vector<256x4xbf16>
    %c1_51 = arith.constant 1 : index
    %c2_52 = arith.constant 2 : index
    %c0_53 = arith.constant 0 : index
    %39 = vector.load %arg5[%c1_51, %c2_52, %c0_53] : memref<18x18x4xbf16, #tpu.memory_space<vmem>>, vector<16x16x4xbf16>
    %40 = vector.shape_cast %39 : vector<16x16x4xbf16> to vector<256x4xbf16>
    %c2_54 = arith.constant 2 : index
    %c2_55 = arith.constant 2 : index
    %c0_56 = arith.constant 0 : index
    %41 = vector.load %arg5[%c2_54, %c2_55, %c0_56] : memref<18x18x4xbf16, #tpu.memory_space<vmem>>, vector<16x16x4xbf16>
    %42 = vector.shape_cast %41 : vector<16x16x4xbf16> to vector<256x4xbf16>
    %43 = tpu.concatenate %38, %40, %42 in 1 : vector<256x4xbf16>, vector<256x4xbf16>, vector<256x4xbf16> -> vector<256x12xbf16>
    %c2_57 = arith.constant 2 : index
    %c0_58 = arith.constant 0 : index
    %c0_59 = arith.constant 0 : index
    %44 = vector.load %arg2[%c2_57, %c0_58, %c0_59] : memref<3x12x4xbf16, #tpu.memory_space<vmem>>, vector<1x12x4xbf16>
    %45 = vector.shape_cast %44 : vector<1x12x4xbf16> to vector<12x4xbf16>
    %cst_60 = arith.constant dense<0.000000e+00> : vector<256x4xf32>
    %46 = tpu.matmul %43, %45, %cst_60 {dimension_numbers = #tpu.dot_dimension_numbers<[1], [0], [0], [1], [0, 0, 1, 1], [], []>} : vector<256x12xbf16>, vector<12x4xbf16>, vector<256x4xf32> -> vector<256x4xf32>
    %47 = arith.addf %36, %46 : vector<256x4xf32>
    %48 = vector.shape_cast %47 : vector<256x4xf32> to vector<16x16x4xf32>
    %c0_61 = arith.constant 0 : index
    %c0_62 = arith.constant 0 : index
    %c0_63 = arith.constant 0 : index
    %49 = vector.load %arg6[%c0_61, %c0_62, %c0_63] : memref<16x16x4xf32, #tpu.memory_space<vmem>>, vector<16x16x4xf32>
    tpu.vector_store %arg6[%c0_61, %c0_62, %c0_63], %48 {strides = array<i32>} : memref<16x16x4xf32, #tpu.memory_space<vmem>>, vector<16x16x4xf32>,
    %cst_64 = arith.constant dense<0.000000e+00> : vector<4xf32>
    %50 = vector.multi_reduction <add>, %47, %cst_64 [0] : vector<256x4xf32> to vector<4xf32>
    %51 = vector.shape_cast %50 : vector<4xf32> to vector<1x4xf32>
    %52 = arith.addf %12, %51 : vector<1x4xf32>
    %53 = arith.mulf %47, %47 : vector<256x4xf32>
    %cst_65 = arith.constant dense<0.000000e+00> : vector<4xf32>
    %54 = vector.multi_reduction <add>, %53, %cst_65 [0] : vector<256x4xf32> to vector<4xf32>
    %55 = vector.shape_cast %54 : vector<4xf32> to vector<1x4xf32>
    %56 = arith.addf %13, %55 : vector<1x4xf32>
    %cst_66 = arith.constant 3.906250e-03 : f32
    %57 = vector.broadcast %cst_66 : f32 to vector<1x4xf32>
    %58 = arith.mulf %52, %57 : vector<1x4xf32>
    %cst_67 = arith.constant 3.906250e-03 : f32
    %59 = vector.broadcast %cst_67 : f32 to vector<1x4xf32>
    %60 = arith.mulf %56, %59 : vector<1x4xf32>
    %61 = arith.mulf %58, %58 : vector<1x4xf32>
    %62 = arith.subf %60, %61 : vector<1x4xf32>
    %cst_68 = arith.constant 0.000000e+00 : f32
    %63 = vector.broadcast %cst_68 : f32 to vector<1x4xf32>
    %64 = arith.maximumf %62, %63 : vector<1x4xf32>
    %cst_69 = arith.constant 9.99999974E-6 : f32
    %65 = vector.broadcast %cst_69 : f32 to vector<1x4xf32>
    %66 = arith.addf %64, %65 : vector<1x4xf32>
    %67 = math.rsqrt %66 : vector<1x4xf32>
    %68 = vector.shape_cast %58 : vector<1x4xf32> to vector<1x1x4xf32>
    %69 = vector.shape_cast %67 : vector<1x4xf32> to vector<1x1x4xf32>
    %c0_70 = arith.constant 0 : index
    %c0_71 = arith.constant 0 : index
    %c0_72 = arith.constant 0 : index
    %70 = vector.load %arg6[%c0_70, %c0_71, %c0_72] : memref<16x16x4xf32, #tpu.memory_space<vmem>>, vector<16x16x4xf32>
    %71 = vector.broadcast %68 : vector<1x1x4xf32> to vector<16x16x4xf32>
    %72 = arith.subf %70, %71 : vector<16x16x4xf32>
    %73 = vector.broadcast %69 : vector<1x1x4xf32> to vector<16x16x4xf32>
    %74 = arith.mulf %72, %73 : vector<16x16x4xf32>
    %cst_73 = arith.constant 0.000000e+00 : f32
    %75 = vector.broadcast %cst_73 : f32 to vector<16x16x4xf32>
    %76 = arith.maximumf %74, %75 : vector<16x16x4xf32>
    %77 = arith.truncf %76 : vector<16x16x4xf32> to vector<16x16x4xbf16>
    %c1_74 = arith.constant 1 : index
    %c1_75 = arith.constant 1 : index
    %c0_76 = arith.constant 0 : index
    %78 = vector.load %arg5[%c1_74, %c1_75, %c0_76] : memref<18x18x4xbf16, #tpu.memory_space<vmem>>, vector<16x16x4xbf16>
    tpu.vector_store %arg5[%c1_74, %c1_75, %c0_76], %77 {strides = array<i32>} : memref<18x18x4xbf16, #tpu.memory_space<vmem>>, vector<16x16x4xbf16>,
    %79 = vector.extract_strided_slice %77 {offsets = [1, 0, 0], sizes = [1, 16, 4], strides = [1, 1, 1]} : vector<16x16x4xbf16> to vector<1x16x4xbf16>
    %c0_77 = arith.constant 0 : index
    %c1_78 = arith.constant 1 : index
    %c0_79 = arith.constant 0 : index
    %80 = vector.load %arg5[%c0_77, %c1_78, %c0_79] : memref<18x18x4xbf16, #tpu.memory_space<vmem>>, vector<1x16x4xbf16>
    tpu.vector_store %arg5[%c0_77, %c1_78, %c0_79], %79 {strides = array<i32>} : memref<18x18x4xbf16, #tpu.memory_space<vmem>>, vector<1x16x4xbf16>,
    %81 = vector.extract_strided_slice %77 {offsets = [14, 0, 0], sizes = [1, 16, 4], strides = [1, 1, 1]} : vector<16x16x4xbf16> to vector<1x16x4xbf16>
    %c17_80 = arith.constant 17 : index
    %c1_81 = arith.constant 1 : index
    %c0_82 = arith.constant 0 : index
    %82 = vector.load %arg5[%c17_80, %c1_81, %c0_82] : memref<18x18x4xbf16, #tpu.memory_space<vmem>>, vector<1x16x4xbf16>
    tpu.vector_store %arg5[%c17_80, %c1_81, %c0_82], %81 {strides = array<i32>} : memref<18x18x4xbf16, #tpu.memory_space<vmem>>, vector<1x16x4xbf16>,
    %c0_83 = arith.constant 0 : index
    %c2_84 = arith.constant 2 : index
    %c0_85 = arith.constant 0 : index
    %83 = vector.load %arg5[%c0_83, %c2_84, %c0_85] : memref<18x18x4xbf16, #tpu.memory_space<vmem>>, vector<18x1x4xbf16>
    %c0_86 = arith.constant 0 : index
    %c0_87 = arith.constant 0 : index
    %c0_88 = arith.constant 0 : index
    %84 = vector.load %arg5[%c0_86, %c0_87, %c0_88] : memref<18x18x4xbf16, #tpu.memory_space<vmem>>, vector<18x1x4xbf16>
    tpu.vector_store %arg5[%c0_86, %c0_87, %c0_88], %83 {strides = array<i32>} : memref<18x18x4xbf16, #tpu.memory_space<vmem>>, vector<18x1x4xbf16>,
    %c0_89 = arith.constant 0 : index
    %c15_90 = arith.constant 15 : index
    %c0_91 = arith.constant 0 : index
    %85 = vector.load %arg5[%c0_89, %c15_90, %c0_91] : memref<18x18x4xbf16, #tpu.memory_space<vmem>>, vector<18x1x4xbf16>
    %c0_92 = arith.constant 0 : index
    %c17_93 = arith.constant 17 : index
    %c0_94 = arith.constant 0 : index
    %86 = vector.load %arg5[%c0_92, %c17_93, %c0_94] : memref<18x18x4xbf16, #tpu.memory_space<vmem>>, vector<18x1x4xbf16>
    tpu.vector_store %arg5[%c0_92, %c17_93, %c0_94], %85 {strides = array<i32>} : memref<18x18x4xbf16, #tpu.memory_space<vmem>>, vector<18x1x4xbf16>,
    %cst_95 = arith.constant 0.000000e+00 : f32
    %87 = vector.broadcast %cst_95 : f32 to vector<1x4xf32>
    %cst_96 = arith.constant 0.000000e+00 : f32
    %88 = vector.broadcast %cst_96 : f32 to vector<1x4xf32>
    %cst_97 = arith.constant 0.000000e+00 : f32
    %89 = vector.broadcast %cst_97 : f32 to vector<256x4xf32>
    %c0_98 = arith.constant 0 : index
    %c0_99 = arith.constant 0 : index
    %c0_100 = arith.constant 0 : index
    %90 = vector.load %arg5[%c0_98, %c0_99, %c0_100] : memref<18x18x4xbf16, #tpu.memory_space<vmem>>, vector<16x16x4xbf16>
    %91 = vector.shape_cast %90 : vector<16x16x4xbf16> to vector<256x4xbf16>
    %c1_101 = arith.constant 1 : index
    %c0_102 = arith.constant 0 : index
    %c0_103 = arith.constant 0 : index
    %92 = vector.load %arg5[%c1_101, %c0_102, %c0_103] : memref<18x18x4xbf16, #tpu.memory_space<vmem>>, vector<16x16x4xbf16>
    %93 = vector.shape_cast %92 : vector<16x16x4xbf16> to vector<256x4xbf16>
    %c2_104 = arith.constant 2 : index
    %c0_105 = arith.constant 0 : index
    %c0_106 = arith.constant 0 : index
    %94 = vector.load %arg5[%c2_104, %c0_105, %c0_106] : memref<18x18x4xbf16, #tpu.memory_space<vmem>>, vector<16x16x4xbf16>
    %95 = vector.shape_cast %94 : vector<16x16x4xbf16> to vector<256x4xbf16>
    %96 = tpu.concatenate %91, %93, %95 in 1 : vector<256x4xbf16>, vector<256x4xbf16>, vector<256x4xbf16> -> vector<256x12xbf16>
    %c0_107 = arith.constant 0 : index
    %c0_108 = arith.constant 0 : index
    %c0_109 = arith.constant 0 : index
    %97 = vector.load %arg3[%c0_107, %c0_108, %c0_109] : memref<3x12x4xbf16, #tpu.memory_space<vmem>>, vector<1x12x4xbf16>
    %98 = vector.shape_cast %97 : vector<1x12x4xbf16> to vector<12x4xbf16>
    %cst_110 = arith.constant dense<0.000000e+00> : vector<256x4xf32>
    %99 = tpu.matmul %96, %98, %cst_110 {dimension_numbers = #tpu.dot_dimension_numbers<[1], [0], [0], [1], [0, 0, 1, 1], [], []>} : vector<256x12xbf16>, vector<12x4xbf16>, vector<256x4xf32> -> vector<256x4xf32>
    %100 = arith.addf %89, %99 : vector<256x4xf32>
    %c0_111 = arith.constant 0 : index
    %c1_112 = arith.constant 1 : index
    %c0_113 = arith.constant 0 : index
    %101 = vector.load %arg5[%c0_111, %c1_112, %c0_113] : memref<18x18x4xbf16, #tpu.memory_space<vmem>>, vector<16x16x4xbf16>
    %102 = vector.shape_cast %101 : vector<16x16x4xbf16> to vector<256x4xbf16>
    %c1_114 = arith.constant 1 : index
    %c1_115 = arith.constant 1 : index
    %c0_116 = arith.constant 0 : index
    %103 = vector.load %arg5[%c1_114, %c1_115, %c0_116] : memref<18x18x4xbf16, #tpu.memory_space<vmem>>, vector<16x16x4xbf16>
    %104 = vector.shape_cast %103 : vector<16x16x4xbf16> to vector<256x4xbf16>
    %c2_117 = arith.constant 2 : index
    %c1_118 = arith.constant 1 : index
    %c0_119 = arith.constant 0 : index
    %105 = vector.load %arg5[%c2_117, %c1_118, %c0_119] : memref<18x18x4xbf16, #tpu.memory_space<vmem>>, vector<16x16x4xbf16>
    %106 = vector.shape_cast %105 : vector<16x16x4xbf16> to vector<256x4xbf16>
    %107 = tpu.concatenate %102, %104, %106 in 1 : vector<256x4xbf16>, vector<256x4xbf16>, vector<256x4xbf16> -> vector<256x12xbf16>
    %c1_120 = arith.constant 1 : index
    %c0_121 = arith.constant 0 : index
    %c0_122 = arith.constant 0 : index
    %108 = vector.load %arg3[%c1_120, %c0_121, %c0_122] : memref<3x12x4xbf16, #tpu.memory_space<vmem>>, vector<1x12x4xbf16>
    %109 = vector.shape_cast %108 : vector<1x12x4xbf16> to vector<12x4xbf16>
    %cst_123 = arith.constant dense<0.000000e+00> : vector<256x4xf32>
    %110 = tpu.matmul %107, %109, %cst_123 {dimension_numbers = #tpu.dot_dimension_numbers<[1], [0], [0], [1], [0, 0, 1, 1], [], []>} : vector<256x12xbf16>, vector<12x4xbf16>, vector<256x4xf32> -> vector<256x4xf32>
    %111 = arith.addf %100, %110 : vector<256x4xf32>
    %c0_124 = arith.constant 0 : index
    %c2_125 = arith.constant 2 : index
    %c0_126 = arith.constant 0 : index
    %112 = vector.load %arg5[%c0_124, %c2_125, %c0_126] : memref<18x18x4xbf16, #tpu.memory_space<vmem>>, vector<16x16x4xbf16>
    %113 = vector.shape_cast %112 : vector<16x16x4xbf16> to vector<256x4xbf16>
    %c1_127 = arith.constant 1 : index
    %c2_128 = arith.constant 2 : index
    %c0_129 = arith.constant 0 : index
    %114 = vector.load %arg5[%c1_127, %c2_128, %c0_129] : memref<18x18x4xbf16, #tpu.memory_space<vmem>>, vector<16x16x4xbf16>
    %115 = vector.shape_cast %114 : vector<16x16x4xbf16> to vector<256x4xbf16>
    %c2_130 = arith.constant 2 : index
    %c2_131 = arith.constant 2 : index
    %c0_132 = arith.constant 0 : index
    %116 = vector.load %arg5[%c2_130, %c2_131, %c0_132] : memref<18x18x4xbf16, #tpu.memory_space<vmem>>, vector<16x16x4xbf16>
    %117 = vector.shape_cast %116 : vector<16x16x4xbf16> to vector<256x4xbf16>
    %118 = tpu.concatenate %113, %115, %117 in 1 : vector<256x4xbf16>, vector<256x4xbf16>, vector<256x4xbf16> -> vector<256x12xbf16>
    %c2_133 = arith.constant 2 : index
    %c0_134 = arith.constant 0 : index
    %c0_135 = arith.constant 0 : index
    %119 = vector.load %arg3[%c2_133, %c0_134, %c0_135] : memref<3x12x4xbf16, #tpu.memory_space<vmem>>, vector<1x12x4xbf16>
    %120 = vector.shape_cast %119 : vector<1x12x4xbf16> to vector<12x4xbf16>
    %cst_136 = arith.constant dense<0.000000e+00> : vector<256x4xf32>
    %121 = tpu.matmul %118, %120, %cst_136 {dimension_numbers = #tpu.dot_dimension_numbers<[1], [0], [0], [1], [0, 0, 1, 1], [], []>} : vector<256x12xbf16>, vector<12x4xbf16>, vector<256x4xf32> -> vector<256x4xf32>
    %122 = arith.addf %111, %121 : vector<256x4xf32>
    %123 = vector.shape_cast %122 : vector<256x4xf32> to vector<16x16x4xf32>
    %c0_137 = arith.constant 0 : index
    %c0_138 = arith.constant 0 : index
    %c0_139 = arith.constant 0 : index
    %124 = vector.load %arg6[%c0_137, %c0_138, %c0_139] : memref<16x16x4xf32, #tpu.memory_space<vmem>>, vector<16x16x4xf32>
    tpu.vector_store %arg6[%c0_137, %c0_138, %c0_139], %123 {strides = array<i32>} : memref<16x16x4xf32, #tpu.memory_space<vmem>>, vector<16x16x4xf32>,
    %cst_140 = arith.constant dense<0.000000e+00> : vector<4xf32>
    %125 = vector.multi_reduction <add>, %122, %cst_140 [0] : vector<256x4xf32> to vector<4xf32>
    %126 = vector.shape_cast %125 : vector<4xf32> to vector<1x4xf32>
    %127 = arith.addf %87, %126 : vector<1x4xf32>
    %128 = arith.mulf %122, %122 : vector<256x4xf32>
    %cst_141 = arith.constant dense<0.000000e+00> : vector<4xf32>
    %129 = vector.multi_reduction <add>, %128, %cst_141 [0] : vector<256x4xf32> to vector<4xf32>
    %130 = vector.shape_cast %129 : vector<4xf32> to vector<1x4xf32>
    %131 = arith.addf %88, %130 : vector<1x4xf32>
    %cst_142 = arith.constant 3.906250e-03 : f32
    %132 = vector.broadcast %cst_142 : f32 to vector<1x4xf32>
    %133 = arith.mulf %127, %132 : vector<1x4xf32>
    %cst_143 = arith.constant 3.906250e-03 : f32
    %134 = vector.broadcast %cst_143 : f32 to vector<1x4xf32>
    %135 = arith.mulf %131, %134 : vector<1x4xf32>
    %136 = arith.mulf %133, %133 : vector<1x4xf32>
    %137 = arith.subf %135, %136 : vector<1x4xf32>
    %cst_144 = arith.constant 0.000000e+00 : f32
    %138 = vector.broadcast %cst_144 : f32 to vector<1x4xf32>
    %139 = arith.maximumf %137, %138 : vector<1x4xf32>
    %cst_145 = arith.constant 9.99999974E-6 : f32
    %140 = vector.broadcast %cst_145 : f32 to vector<1x4xf32>
    %141 = arith.addf %139, %140 : vector<1x4xf32>
    %142 = math.rsqrt %141 : vector<1x4xf32>
    %143 = vector.shape_cast %133 : vector<1x4xf32> to vector<1x1x4xf32>
    %144 = vector.shape_cast %142 : vector<1x4xf32> to vector<1x1x4xf32>
    %c0_146 = arith.constant 0 : index
    %c0_147 = arith.constant 0 : index
    %c0_148 = arith.constant 0 : index
    %c0_149 = arith.constant 0 : index
    %145 = vector.load %arg1[%c0_146, %c0_147, %c0_148, %c0_149] : memref<1x16x16x4xf32, #tpu.memory_space<vmem>>, vector<1x16x16x4xf32>
    %146 = vector.shape_cast %145 : vector<1x16x16x4xf32> to vector<16x16x4xf32>
    %c0_150 = arith.constant 0 : index
    %c0_151 = arith.constant 0 : index
    %c0_152 = arith.constant 0 : index
    %147 = vector.load %arg6[%c0_150, %c0_151, %c0_152] : memref<16x16x4xf32, #tpu.memory_space<vmem>>, vector<16x16x4xf32>
    %148 = vector.broadcast %143 : vector<1x1x4xf32> to vector<16x16x4xf32>
    %149 = arith.subf %147, %148 : vector<16x16x4xf32>
    %150 = vector.broadcast %144 : vector<1x1x4xf32> to vector<16x16x4xf32>
    %151 = arith.mulf %149, %150 : vector<16x16x4xf32>
    %152 = arith.addf %146, %151 : vector<16x16x4xf32>
    %c0_153 = arith.constant 0 : index
    %c0_154 = arith.constant 0 : index
    %c0_155 = arith.constant 0 : index
    %c0_156 = arith.constant 0 : index
    %153 = vector.load %arg4[%c0_153, %c0_154, %c0_155, %c0_156] : memref<1x16x16x4xf32, #tpu.memory_space<vmem>>, vector<1x16x16x4xf32>
    %154 = vector.shape_cast %153 : vector<1x16x16x4xf32> to vector<16x16x4xf32>
    %155 = vector.shape_cast %152 : vector<16x16x4xf32> to vector<1x16x16x4xf32>
    tpu.vector_store %arg4[%c0_153, %c0_154, %c0_155, %c0_156], %155 {strides = array<i32>} : memref<1x16x16x4xf32, #tpu.memory_space<vmem>>, vector<1x16x16x4xf32>,
    return
  }
  func.func @transform_0(%arg0: i32) -> (i32, i32, i32, i32) {
    %c0_i32 = arith.constant 0 : i32
    %c0_i32_0 = arith.constant 0 : i32
    %c0_i32_1 = arith.constant 0 : i32
    %c0_i32_2 = arith.constant 0 : i32
    return %arg0, %c0_i32, %c0_i32_0, %c0_i32_1 : i32, i32, i32, i32
  }
  func.func @transform_1(%arg0: i32) -> (i32, i32, i32) {
    %c0_i32 = arith.constant 0 : i32
    %c0_i32_0 = arith.constant 0 : i32
    %c0_i32_1 = arith.constant 0 : i32
    %c0_i32_2 = arith.constant 0 : i32
    return %c0_i32, %c0_i32_0, %c0_i32_1 : i32, i32, i32
  }
  func.func @transform_2(%arg0: i32) -> (i32, i32, i32) {
    %c0_i32 = arith.constant 0 : i32
    %c0_i32_0 = arith.constant 0 : i32
    %c0_i32_1 = arith.constant 0 : i32
    %c0_i32_2 = arith.constant 0 : i32
    return %c0_i32, %c0_i32_0, %c0_i32_1 : i32, i32, i32
  }
  func.func @transform_3(%arg0: i32) -> (i32, i32, i32, i32) {
    %c0_i32 = arith.constant 0 : i32
    %c0_i32_0 = arith.constant 0 : i32
    %c0_i32_1 = arith.constant 0 : i32
    %c0_i32_2 = arith.constant 0 : i32
    return %arg0, %c0_i32, %c0_i32_0, %c0_i32_1 : i32, i32, i32, i32
  }
}

</mosaic_0001>

<llo_original>
// kernel: tpu_custom_call.1
$region0: #{tpu_custom_call.1}
  #allocation0 [shape = 'u32[]', space=smem, size = 0x4, offset = 0x4, fixed_abs, tag = 'smem constant byte address 0x4 - core index']
  #allocation1 [shape = 'u32[144,128]{1,0:T(1,128)}', space=vmem, size = 0x12000, scoped, tag = 'internal scratch']
  #allocation2 [shape = 'bf16[18,18,4]{2,1,0:T(8,128)(2,1)}', space=vmem, size = 0x1b000, scoped, tag = 'scratch operand']
  #allocation3 [shape = 'f32[16,16,4]{2,1,0:T(8,128)}', space=vmem, size = 0x20000, scoped, tag = 'scratch operand']
  %s0 = inlined_call_operand.vmem [shape: f32[2,16,16,4], index: 0, kind: input, shape index: {}]
  %s1 = inlined_call_operand.vmem [shape: bf16[3,12,4], index: 1, kind: input, shape index: {}]
  %s2 = inlined_call_operand.vmem [shape: bf16[3,12,4], index: 2, kind: input, shape index: {}]
  %s3 = inlined_call_operand.vmem [shape: f32[2,16,16,4], index: 3, kind: output, shape index: {}]
  %s4 = sld [smem:[#allocation0]]
  $region45: #{tpu_custom_call.1} parent=0
    _
  %s6 = ssub.s32 1, %s4
  %s7 = scalar_select 0, %s6, %s4
  loop: start=0, step=1, limit=4
  $region2: #{tpu_custom_call.1} parent=0 // loop_pre_header
    _
  $region3: #{tpu_custom_call.1} parent=0 // loop_header
    %s9 = sphi 0, %s13
    %p10 = scmp.ge.s32.totalorder %s9, 4
    %s19 = sphi 0, %s21
    %s22 = sphi 0, %s19
    %s23 = sphi 0, %s22
    %s39 = sphi 0, %s23
    %s43 = sphi 0, %s43
    %s45 = sphi 0, %s43
    %s46 = sphi 0, %s45
    %s60 = sphi 0, %s46
    %s64 = sphi 0, %s64
    %s66 = sphi 0, %s64
    %s67 = sphi 0, %s66
    %s81 = sphi 0, %s67
    %s87 = sphi 0, %s89
    %s90 = sphi 0, %s87
    %s91 = sphi 0, %s90
    %s107 = sphi 0, %s91
  $region4: #{tpu_custom_call.1} parent=0 // loop_header_branch
    %12 = sbr.rel (%p10) target = $region8
  $region5: #{tpu_custom_call.1} parent=0 // loop_body
    %s14 = ssub.s32 %s9, 1
    %s15 = ssub.s32 %s9, 2
    %s16 = sadd.s32 %s9, 1
    %s17 = ssub.s32 %s9, %s16
    %p18 = scmp.eq.s32.totalorder %s17, 0
    %s20 = sadd.s32 %s19, 1
    %s21 = scalar_select %p18, %s19, %s20
    %p24 = pneg %p18
    %p25 = scmp.eq.s32.totalorder %s9, 1
    %p26 = por %p24, %p25
    %p27 = scmp.ne.s32.totalorder %s19, %s22
    %p28 = scmp.eq.s32.totalorder %s9, 0
    %p29 = por %p27, %p28
    %p30 = scmp.ne.s32.totalorder %s19, %s22
    %p31 = scmp.eq.s32.totalorder %s14, 1
    %p32 = por %p30, %p31
    %p33 = scmp.ne.s32.totalorder %s22, %s23
    %p34 = scmp.eq.s32.totalorder %s14, 0
    %p35 = por %p33, %p34
    %p36 = scmp.ne.s32.totalorder %s22, %s23
    %p37 = scmp.eq.s32.totalorder %s15, 1
    %p38 = por %p36, %p37
    %p40 = scmp.ne.s32.totalorder %s23, %s39
    %p41 = scmp.eq.s32.totalorder %s15, 0
    %p42 = por %p40, %p41
    %s44 = sadd.s32 %s43, 1
    %p47 = scmp.eq.s32.totalorder %s9, 1
    %p48 = scmp.ne.s32.totalorder %s43, %s45
    %p49 = scmp.eq.s32.totalorder %s9, 0
    %p50 = por %p48, %p49
    %p51 = scmp.ne.s32.totalorder %s43, %s45
    %p52 = scmp.eq.s32.totalorder %s14, 1
    %p53 = por %p51, %p52
    %p54 = scmp.ne.s32.totalorder %s45, %s46
    %p55 = scmp.eq.s32.totalorder %s14, 0
    %p56 = por %p54, %p55
    %p57 = scmp.ne.s32.totalorder %s45, %s46
    %p58 = scmp.eq.s32.totalorder %s15, 1
    %p59 = por %p57, %p58
    %p61 = scmp.ne.s32.totalorder %s46, %s60
    %p62 = scmp.eq.s32.totalorder %s15, 0
    %p63 = por %p61, %p62
    %s65 = sadd.s32 %s64, 1
    %p68 = scmp.eq.s32.totalorder %s9, 1
    %p69 = scmp.ne.s32.totalorder %s64, %s66
    %p70 = scmp.eq.s32.totalorder %s9, 0
    %p71 = por %p69, %p70
    %p72 = scmp.ne.s32.totalorder %s64, %s66
    %p73 = scmp.eq.s32.totalorder %s14, 1
    %p74 = por %p72, %p73
    %p75 = scmp.ne.s32.totalorder %s66, %s67
    %p76 = scmp.eq.s32.totalorder %s14, 0
    %p77 = por %p75, %p76
    %p78 = scmp.ne.s32.totalorder %s66, %s67
    %p79 = scmp.eq.s32.totalorder %s15, 1
    %p80 = por %p78, %p79
    %p82 = scmp.ne.s32.totalorder %s67, %s81
    %p83 = scmp.eq.s32.totalorder %s15, 0
    %p84 = por %p82, %p83
    %s85 = ssub.s32 %s9, %s16
    %p86 = scmp.eq.s32.totalorder %s85, 0
    %s88 = sadd.s32 %s87, 1
    %s89 = scalar_select %p86, %s87, %s88
    %p92 = pneg %p86
    %p93 = scmp.eq.s32.totalorder %s9, 1
    %p94 = por %p92, %p93
    %p95 = scmp.ne.s32.totalorder %s87, %s90
    %p96 = scmp.eq.s32.totalorder %s9, 0
    %p97 = por %p95, %p96
    %p98 = scmp.ne.s32.totalorder %s87, %s90
    %p99 = scmp.eq.s32.totalorder %s14, 1
    %p100 = por %p98, %p99
    %p101 = scmp.ne.s32.totalorder %s90, %s91
    %p102 = scmp.eq.s32.totalorder %s14, 0
    %p103 = por %p101, %p102
    %p104 = scmp.ne.s32.totalorder %s90, %s91
    %p105 = scmp.eq.s32.totalorder %s15, 1
    %p106 = por %p104, %p105
    %p108 = scmp.ne.s32.totalorder %s91, %s107
    %p109 = scmp.eq.s32.totalorder %s15, 0
    %p110 = por %p108, %p109
    %p111 = scmp.le.s32.totalorder 1, %s9
    %p112 = scmp.lt.s32.totalorder %s9, 3
    %p113 = pnand %p111, %p112
    %p114 = pneg %p113
    // Predicated region
    $region9: #{tpu_custom_call.1} parent=5 // pred_check
      _
    $region10: #{tpu_custom_call.1} parent=5 // pred_check_branch
      %116 = sbr.rel (%p113) target = $region12
    $region11: #{tpu_custom_call.1} parent=5 // pred_region
      %s117 = ssub.s32 %s9, 1
      // Predicated region
      $region13: #{tpu_custom_call.1} parent=11 // pred_check
        %p118 = pneg %p56
      $region14: #{tpu_custom_call.1} parent=11 // pred_check_branch
        %120 = sbr.rel (%p118) target = $region16
      $region15: #{tpu_custom_call.1} parent=11 // pred_region
        _
      $region16: #{tpu_custom_call.1} parent=11 // pred_fallthru
        _
      // Predicated region
      $region17: #{tpu_custom_call.1} parent=11 // pred_check
        %p121 = pneg %p77
      $region18: #{tpu_custom_call.1} parent=11 // pred_check_branch
        %123 = sbr.rel (%p121) target = $region20
      $region19: #{tpu_custom_call.1} parent=11 // pred_region
        _
      $region20: #{tpu_custom_call.1} parent=11 // pred_fallthru
        _
    $region12: #{tpu_custom_call.1} parent=5 // pred_fallthru
      _
    %p124 = scmp.lt.s32.totalorder %s9, 2
    // Predicated region
    $region21: #{tpu_custom_call.1} parent=5 // pred_check
      %p125 = pneg %p124
    $region22: #{tpu_custom_call.1} parent=5 // pred_check_branch
      %127 = sbr.rel (%p125) target = $region24
    $region23: #{tpu_custom_call.1} parent=5 // pred_region
      // Predicated region
      $region25: #{tpu_custom_call.1} parent=23 // pred_check
        %p128 = pneg %p29
      $region26: #{tpu_custom_call.1} parent=23 // pred_check_branch
        %130 = sbr.rel (%p128) target = $region28
      $region27: #{tpu_custom_call.1} parent=23 // pred_region
        %p131 = scmp.lt.s32.totalorder %s9, 1
        %s132 = scalar_select %p131, %s9, 1
        %s133 = smul.addr %s132, 32
        %s134 = smul.addr %s133, 8
        %s135 = scalar_lea.vmem %s0, %s134
      $region28: #{tpu_custom_call.1} parent=23 // pred_fallthru
        _
    $region24: #{tpu_custom_call.1} parent=5 // pred_fallthru
      _
    %p136 = scmp.le.s32.totalorder 1, %s9
    %p137 = scmp.lt.s32.totalorder %s9, 3
    %p138 = pnand %p136, %p137
    %p139 = pneg %p138
    // Predicated region
    $region29: #{tpu_custom_call.1} parent=5 // pred_check
      _
    $region30: #{tpu_custom_call.1} parent=5 // pred_check_branch
      %141 = sbr.rel (%p138) target = $region32
    $region31: #{tpu_custom_call.1} parent=5 // pred_region
      %s142 = ssub.s32 %s9, 1
      %p143 = scmp.lt.s32.totalorder %s14, 1
      %s144 = scalar_select %p143, %s14, 1
      %s145 = smul.addr %s144, 32
      %s146 = smul.addr %s145, 8
      %s147 = scalar_lea.vmem %s0, %s146
      %p148 = pneg %p35
      %p149 = pneg %p32
      %p150 = pneg %p56
      %p151 = pneg %p53
      %p152 = pneg %p77
      %p153 = pneg %p74
      %p154 = pneg %p103
      %p155 = pneg %p100
      %p156 = scmp.lt.s32.totalorder %s14, 1
      %s157 = scalar_select %p156, %s14, 1
      %s158 = smul.addr %s157, 32
      %s159 = smul.addr %s158, 8
      %s160 = scalar_lea.vmem %s3, %s159
      %p161 = scmp.lt.s32.totalorder %s14, 1
      %s162 = scalar_select %p161, %s14, 1
      %s163 = smul.addr %s162, 32
      %s164 = smul.addr %s163, 8
      %s165 = scalar_lea.vmem %s0, %s164
      %p166 = scmp.lt.s32.totalorder %s14, 1
      %s167 = scalar_select %p166, %s14, 1
      %s168 = smul.addr %s167, 32
      %s169 = smul.addr %s168, 8
      %s170 = scalar_lea.vmem %s3, %s169
      %v172 = vld [vmem:[%s165] sm:$0xff]
      %v173 = vld [vmem:[%s165 + $0x8] sm:$0xff]
      %v174 = vld [vmem:[%s165 + $0x10] sm:$0xff]
      %v175 = vld [vmem:[%s165 + $0x18] sm:$0xff]
      %v176 = vld [vmem:[%s165 + $0x20] sm:$0xff]
      %v177 = vld [vmem:[%s165 + $0x28] sm:$0xff]
      %v178 = vld [vmem:[%s165 + $0x30] sm:$0xff]
      %v179 = vld [vmem:[%s165 + $0x38] sm:$0xff]
      %v180 = vld [vmem:[%s165 + $0x40] sm:$0xff]
      %v181 = vld [vmem:[%s165 + $0x48] sm:$0xff]
      %v182 = vld [vmem:[%s165 + $0x50] sm:$0xff]
      %v183 = vld [vmem:[%s165 + $0x58] sm:$0xff]
      %v184 = vld [vmem:[%s165 + $0x60] sm:$0xff]
      %v185 = vld [vmem:[%s165 + $0x68] sm:$0xff]
      %v186 = vld [vmem:[%s165 + $0x70] sm:$0xff]
      %v187 = vld [vmem:[%s165 + $0x78] sm:$0xff]
      %v188 = vld [vmem:[%s165 + $0x80] sm:$0xff]
      %v189 = vld [vmem:[%s165 + $0x88] sm:$0xff]
      %v190 = vld [vmem:[%s165 + $0x90] sm:$0xff]
      %v191 = vld [vmem:[%s165 + $0x98] sm:$0xff]
      %v192 = vld [vmem:[%s165 + $0xa0] sm:$0xff]
      %v193 = vld [vmem:[%s165 + $0xa8] sm:$0xff]
      %v194 = vld [vmem:[%s165 + $0xb0] sm:$0xff]
      %v195 = vld [vmem:[%s165 + $0xb8] sm:$0xff]
      %v196 = vld [vmem:[%s165 + $0xc0] sm:$0xff]
      %v197 = vld [vmem:[%s165 + $0xc8] sm:$0xff]
      %v198 = vld [vmem:[%s165 + $0xd0] sm:$0xff]
      %v199 = vld [vmem:[%s165 + $0xd8] sm:$0xff]
      %v200 = vld [vmem:[%s165 + $0xe0] sm:$0xff]
      %v201 = vld [vmem:[%s165 + $0xe8] sm:$0xff]
      %v202 = vld [vmem:[%s165 + $0xf0] sm:$0xff]
      %v203 = vld [vmem:[%s165 + $0xf8] sm:$0xff]
      %v204 = vpack.c.bf16 %v173, %v172
      %v205 = vpack.c.bf16 %v175, %v174
      %v206 = vpack.c.bf16 %v177, %v176
      %v207 = vpack.c.bf16 %v179, %v178
      %v208 = vpack.c.bf16 %v181, %v180
      %v209 = vpack.c.bf16 %v183, %v182
      %v210 = vpack.c.bf16 %v185, %v184
      %v211 = vpack.c.bf16 %v187, %v186
      %v212 = vpack.c.bf16 %v189, %v188
      %v213 = vpack.c.bf16 %v191, %v190
      %v214 = vpack.c.bf16 %v193, %v192
      %v215 = vpack.c.bf16 %v195, %v194
      %v216 = vpack.c.bf16 %v197, %v196
      %v217 = vpack.c.bf16 %v199, %v198
      %v218 = vpack.c.bf16 %v201, %v200
      %v219 = vpack.c.bf16 %v203, %v202
      %v236 = vunpack.c.l.b16 %v204
      %v237 = vunpack.c.h.b16 %v204
      %v238 = vunpack.c.l.b16 %v205
      %v239 = vunpack.c.h.b16 %v205
      %v240 = vunpack.c.l.b16 %v206
      %v241 = vunpack.c.h.b16 %v206
      %v242 = vunpack.c.l.b16 %v207
      %v243 = vunpack.c.h.b16 %v207
      %v244 = vunpack.c.l.b16 %v208
      %v245 = vunpack.c.h.b16 %v208
      %v246 = vunpack.c.l.b16 %v209
      %v247 = vunpack.c.h.b16 %v209
      %v248 = vunpack.c.l.b16 %v210
      %v249 = vunpack.c.h.b16 %v210
      %v250 = vunpack.c.l.b16 %v211
      %v251 = vunpack.c.h.b16 %v211
      %v252 = vunpack.c.l.b16 %v212
      %v253 = vunpack.c.h.b16 %v212
      %v254 = vunpack.c.l.b16 %v213
      %v255 = vunpack.c.h.b16 %v213
      %v256 = vunpack.c.l.b16 %v214
      %v257 = vunpack.c.h.b16 %v214
      %v258 = vunpack.c.l.b16 %v215
      %v259 = vunpack.c.h.b16 %v215
      %v260 = vunpack.c.l.b16 %v216
      %v261 = vunpack.c.h.b16 %v216
      %v262 = vunpack.c.l.b16 %v217
      %v263 = vunpack.c.h.b16 %v217
      %v264 = vunpack.c.l.b16 %v218
      %v265 = vunpack.c.h.b16 %v218
      %v266 = vunpack.c.l.b16 %v219
      %v267 = vunpack.c.h.b16 %v219
      %v268 = vpack.c.b16 %v236, %v236
      %v269 = vpack.c.b16 %v237, %v237
      %v270 = vpack.c.b16 %v238, %v238
      %v271 = vpack.c.b16 %v239, %v239
      %v272 = vpack.c.b16 %v240, %v240
      %v273 = vpack.c.b16 %v241, %v241
      %v274 = vpack.c.b16 %v242, %v242
      %v275 = vpack.c.b16 %v243, %v243
      %v276 = vpack.c.b16 %v244, %v244
      %v277 = vpack.c.b16 %v245, %v245
      %v278 = vpack.c.b16 %v246, %v246
      %v279 = vpack.c.b16 %v247, %v247
      %v280 = vpack.c.b16 %v248, %v248
      %v281 = vpack.c.b16 %v249, %v249
      %v282 = vpack.c.b16 %v250, %v250
      %v283 = vpack.c.b16 %v251, %v251
      %v284 = vpack.c.b16 %v252, %v252
      %v285 = vpack.c.b16 %v253, %v253
      %v286 = vpack.c.b16 %v254, %v254
      %v287 = vpack.c.b16 %v255, %v255
      %v288 = vpack.c.b16 %v256, %v256
      %v289 = vpack.c.b16 %v257, %v257
      %v290 = vpack.c.b16 %v258, %v258
      %v291 = vpack.c.b16 %v259, %v259
      %v292 = vpack.c.b16 %v260, %v260
      %v293 = vpack.c.b16 %v261, %v261
      %v294 = vpack.c.b16 %v262, %v262
      %v295 = vpack.c.b16 %v263, %v263
      %v296 = vpack.c.b16 %v264, %v264
      %v297 = vpack.c.b16 %v265, %v265
      %v298 = vpack.c.b16 %v266, %v266
      %v299 = vpack.c.b16 %v267, %v267
      %vm300 = vsmask.f32 256
      %vm301 = vsmask.f32 4368
      %vm302 = vmor %vm300, %vm301
      %v304 = vshrl.u32 %v268, 16
      %v306 = vrot.slane %v304, 7
      %v307 = vshll.u32 %v268, 16
      %v309 = vor.u32 %v306, %v307
      %v310 = vrot.slane %v306, 4
      %v312 = vshrl.u32 %v269, 16
      %v314 = vrot.slane %v312, 7
      %v315 = vshll.u32 %v269, 16
      %v317 = vor.u32 %v314, %v315
      %v318 = vsel %vm302, %v310, %v317
      %v319 = vrot.slane %v314, 4
      %v321 = vshrl.u32 %v270, 16
      %v323 = vrot.slane %v321, 7
      %v324 = vshll.u32 %v270, 16
      %v326 = vor.u32 %v323, %v324
      %v327 = vrot.slane %v323, 4
      %v329 = vshrl.u32 %v271, 16
      %v331 = vrot.slane %v329, 7
      %v332 = vshll.u32 %v271, 16
      %v334 = vor.u32 %v331, %v332
      %v335 = vsel %vm302, %v327, %v334
      %v336 = vrot.slane %v331, 4
      %v338 = vshrl.u32 %v272, 16
      %v340 = vrot.slane %v338, 7
      %v341 = vshll.u32 %v272, 16
      %v343 = vor.u32 %v340, %v341
      %v344 = vrot.slane %v340, 4
      %v346 = vshrl.u32 %v273, 16
      %v348 = vrot.slane %v346, 7
      %v349 = vshll.u32 %v273, 16
      %v351 = vor.u32 %v348, %v349
      %v352 = vsel %vm302, %v344, %v351
      %v353 = vrot.slane %v348, 4
      %v355 = vshrl.u32 %v274, 16
      %v357 = vrot.slane %v355, 7
      %v358 = vshll.u32 %v274, 16
      %v360 = vor.u32 %v357, %v358
      %v361 = vrot.slane %v357, 4
      %v363 = vshrl.u32 %v275, 16
      %v365 = vrot.slane %v363, 7
      %v366 = vshll.u32 %v275, 16
      %v368 = vor.u32 %v365, %v366
      %v369 = vsel %vm302, %v361, %v368
      %v370 = vrot.slane %v365, 4
      %v372 = vshrl.u32 %v276, 16
      %v374 = vrot.slane %v372, 7
      %v375 = vshll.u32 %v276, 16
      %v377 = vor.u32 %v374, %v375
      %v378 = vrot.slane %v374, 4
      %v380 = vshrl.u32 %v277, 16
      %v382 = vrot.slane %v380, 7
      %v383 = vshll.u32 %v277, 16
      %v385 = vor.u32 %v382, %v383
      %v386 = vsel %vm302, %v378, %v385
      %v387 = vrot.slane %v382, 4
      %v389 = vshrl.u32 %v278, 16
      %v391 = vrot.slane %v389, 7
      %v392 = vshll.u32 %v278, 16
      %v394 = vor.u32 %v391, %v392
      %v395 = vrot.slane %v391, 4
      %v397 = vshrl.u32 %v279, 16
      %v399 = vrot.slane %v397, 7
      %v400 = vshll.u32 %v279, 16
      %v402 = vor.u32 %v399, %v400
      %v403 = vsel %vm302, %v395, %v402
      %v404 = vrot.slane %v399, 4
      %v406 = vshrl.u32 %v280, 16
      %v408 = vrot.slane %v406, 7
      %v409 = vshll.u32 %v280, 16
      %v411 = vor.u32 %v408, %v409
      %v412 = vrot.slane %v408, 4
      %v414 = vshrl.u32 %v281, 16
      %v416 = vrot.slane %v414, 7
      %v417 = vshll.u32 %v281, 16
      %v419 = vor.u32 %v416, %v417
      %v420 = vsel %vm302, %v412, %v419
      %v421 = vrot.slane %v416, 4
      %v423 = vshrl.u32 %v282, 16
      %v425 = vrot.slane %v423, 7
      %v426 = vshll.u32 %v282, 16
      %v428 = vor.u32 %v425, %v426
      %v429 = vrot.slane %v425, 4
      %v431 = vshrl.u32 %v283, 16
      %v433 = vrot.slane %v431, 7
      %v434 = vshll.u32 %v283, 16
      %v436 = vor.u32 %v433, %v434
      %v437 = vsel %vm302, %v429, %v436
      %v438 = vrot.slane %v433, 4
      %v440 = vshrl.u32 %v284, 16
      %v442 = vrot.slane %v440, 7
      %v443 = vshll.u32 %v284, 16
      %v445 = vor.u32 %v442, %v443
      %v446 = vrot.slane %v442, 4
      %v448 = vshrl.u32 %v285, 16
      %v450 = vrot.slane %v448, 7
      %v451 = vshll.u32 %v285, 16
      %v453 = vor.u32 %v450, %v451
      %v454 = vsel %vm302, %v446, %v453
      %v455 = vrot.slane %v450, 4
      %v457 = vshrl.u32 %v286, 16
      %v459 = vrot.slane %v457, 7
      %v460 = vshll.u32 %v286, 16
      %v462 = vor.u32 %v459, %v460
      %v463 = vrot.slane %v459, 4
      %v465 = vshrl.u32 %v287, 16
      %v467 = vrot.slane %v465, 7
      %v468 = vshll.u32 %v287, 16
      %v470 = vor.u32 %v467, %v468
      %v471 = vsel %vm302, %v463, %v470
      %v472 = vrot.slane %v467, 4
      %v474 = vshrl.u32 %v288, 16
      %v476 = vrot.slane %v474, 7
      %v477 = vshll.u32 %v288, 16
      %v479 = vor.u32 %v476, %v477
      %v480 = vrot.slane %v476, 4
      %v482 = vshrl.u32 %v289, 16
      %v484 = vrot.slane %v482, 7
      %v485 = vshll.u32 %v289, 16
      %v487 = vor.u32 %v484, %v485
      %v488 = vsel %vm302, %v480, %v487
      %v489 = vrot.slane %v484, 4
      %v491 = vshrl.u32 %v290, 16
      %v493 = vrot.slane %v491, 7
      %v494 = vshll.u32 %v290, 16
      %v496 = vor.u32 %v493, %v494
      %v497 = vrot.slane %v493, 4
      %v499 = vshrl.u32 %v291, 16
      %v501 = vrot.slane %v499, 7
      %v502 = vshll.u32 %v291, 16
      %v504 = vor.u32 %v501, %v502
      %v505 = vsel %vm302, %v497, %v504
      %v506 = vrot.slane %v501, 4
      %v508 = vshrl.u32 %v292, 16
      %v510 = vrot.slane %v508, 7
      %v511 = vshll.u32 %v292, 16
      %v513 = vor.u32 %v510, %v511
      %v514 = vrot.slane %v510, 4
      %v516 = vshrl.u32 %v293, 16
      %v518 = vrot.slane %v516, 7
      %v519 = vshll.u32 %v293, 16
      %v521 = vor.u32 %v518, %v519
      %v522 = vsel %vm302, %v514, %v521
      %v523 = vrot.slane %v518, 4
      %v525 = vshrl.u32 %v294, 16
      %v527 = vrot.slane %v525, 7
      %v528 = vshll.u32 %v294, 16
      %v530 = vor.u32 %v527, %v528
      %v531 = vrot.slane %v527, 4
      %v533 = vshrl.u32 %v295, 16
      %v535 = vrot.slane %v533, 7
      %v536 = vshll.u32 %v295, 16
      %v538 = vor.u32 %v535, %v536
      %v539 = vsel %vm302, %v531, %v538
      %v540 = vrot.slane %v535, 4
      %v542 = vshrl.u32 %v296, 16
      %v544 = vrot.slane %v542, 7
      %v545 = vshll.u32 %v296, 16
      %v547 = vor.u32 %v544, %v545
      %v548 = vrot.slane %v544, 4
      %v550 = vshrl.u32 %v297, 16
      %v552 = vrot.slane %v550, 7
      %v553 = vshll.u32 %v297, 16
      %v555 = vor.u32 %v552, %v553
      %v556 = vsel %vm302, %v548, %v555
      %v557 = vrot.slane %v552, 4
      %v559 = vshrl.u32 %v298, 16
      %v561 = vrot.slane %v559, 7
      %v562 = vshll.u32 %v298, 16
      %v564 = vor.u32 %v561, %v562
      %v565 = vrot.slane %v561, 4
      %v567 = vshrl.u32 %v299, 16
      %v569 = vrot.slane %v567, 7
      %v570 = vshll.u32 %v299, 16
      %v572 = vor.u32 %v569, %v570
      %v573 = vsel %vm302, %v565, %v572
      %v574 = vrot.slane %v569, 4
      %s623 = scalar_lea.vmem [#allocation2], 12
      %vm624 = vcmask 27648
      %vm625 = vsmask.f32 7938
      %vm626 = vmand %vm624, %vm625
      %v627 = vld [vmem:[%s623] sm:$0xf]
      %v628 = vsel %vm626, %v309, %v627
      %629 = vst [vmem:[%s623] sm:$0xf] %v628
      %vm630 = vcmask 27648
      %631 = vst.msk [vmem:[%s623 + $0x4] sm:$0xf] %vm630, %v318
      %vm632 = vcmask 24576
      %vm633 = vmand %vm632, %vm300
      %v634 = vld [vmem:[%s623 + $0x8] sm:$0x1]
      %v635 = vsel %vm633, %v319, %v634
      %636 = vst [vmem:[%s623 + $0x8] sm:$0x1] %v635
      %v637 = vld [vmem:[%s623 + $0xc] sm:$0xf]
      %v638 = vsel %vm626, %v326, %v637
      %639 = vst [vmem:[%s623 + $0xc] sm:$0xf] %v638
      %640 = vst.msk [vmem:[%s623 + $0x10] sm:$0xf] %vm630, %v335
      %v641 = vld [vmem:[%s623 + $0x14] sm:$0x1]
      %v642 = vsel %vm633, %v336, %v641
      %643 = vst [vmem:[%s623 + $0x14] sm:$0x1] %v642
      %v644 = vld [vmem:[%s623 + $0x18] sm:$0xf]
      %v645 = vsel %vm626, %v343, %v644
      %646 = vst [vmem:[%s623 + $0x18] sm:$0xf] %v645
      %647 = vst.msk [vmem:[%s623 + $0x1c] sm:$0xf] %vm630, %v352
      %v648 = vld [vmem:[%s623 + $0x20] sm:$0x1]
      %v649 = vsel %vm633, %v353, %v648
      %650 = vst [vmem:[%s623 + $0x20] sm:$0x1] %v649
      %v651 = vld [vmem:[%s623 + $0x24] sm:$0xf]
      %v652 = vsel %vm626, %v360, %v651
      %653 = vst [vmem:[%s623 + $0x24] sm:$0xf] %v652
      %654 = vst.msk [vmem:[%s623 + $0x28] sm:$0xf] %vm630, %v369
      %v655 = vld [vmem:[%s623 + $0x2c] sm:$0x1]
      %v656 = vsel %vm633, %v370, %v655
      %657 = vst [vmem:[%s623 + $0x2c] sm:$0x1] %v656
      %v658 = vld [vmem:[%s623 + $0x30] sm:$0xf]
      %v659 = vsel %vm626, %v377, %v658
      %660 = vst [vmem:[%s623 + $0x30] sm:$0xf] %v659
      %661 = vst.msk [vmem:[%s623 + $0x34] sm:$0xf] %vm630, %v386
      %v662 = vld [vmem:[%s623 + $0x38] sm:$0x1]
      %v663 = vsel %vm633, %v387, %v662
      %664 = vst [vmem:[%s623 + $0x38] sm:$0x1] %v663
      %v665 = vld [vmem:[%s623 + $0x3c] sm:$0xf]
      %v666 = vsel %vm626, %v394, %v665
      %667 = vst [vmem:[%s623 + $0x3c] sm:$0xf] %v666
      %668 = vst.msk [vmem:[%s623 + $0x40] sm:$0xf] %vm630, %v403
      %v669 = vld [vmem:[%s623 + $0x44] sm:$0x1]
      %v670 = vsel %vm633, %v404, %v669
      %671 = vst [vmem:[%s623 + $0x44] sm:$0x1] %v670
      %v672 = vld [vmem:[%s623 + $0x48] sm:$0xf]
      %v673 = vsel %vm626, %v411, %v672
      %674 = vst [vmem:[%s623 + $0x48] sm:$0xf] %v673
      %675 = vst.msk [vmem:[%s623 + $0x4c] sm:$0xf] %vm630, %v420
      %v676 = vld [vmem:[%s623 + $0x50] sm:$0x1]
      %v677 = vsel %vm633, %v421, %v676
      %678 = vst [vmem:[%s623 + $0x50] sm:$0x1] %v677
      %v679 = vld [vmem:[%s623 + $0x54] sm:$0xf]
      %v680 = vsel %vm626, %v428, %v679
      %681 = vst [vmem:[%s623 + $0x54] sm:$0xf] %v680
      %682 = vst.msk [vmem:[%s623 + $0x58] sm:$0xf] %vm630, %v437
      %v683 = vld [vmem:[%s623 + $0x5c] sm:$0x1]
      %v684 = vsel %vm633, %v438, %v683
      %685 = vst [vmem:[%s623 + $0x5c] sm:$0x1] %v684
      %v686 = vld [vmem:[%s623 + $0x60] sm:$0xf]
      %v687 = vsel %vm626, %v445, %v686
      %688 = vst [vmem:[%s623 + $0x60] sm:$0xf] %v687
      %689 = vst.msk [vmem:[%s623 + $0x64] sm:$0xf] %vm630, %v454
      %v690 = vld [vmem:[%s623 + $0x68] sm:$0x1]
      %v691 = vsel %vm633, %v455, %v690
      %692 = vst [vmem:[%s623 + $0x68] sm:$0x1] %v691
      %v693 = vld [vmem:[%s623 + $0x6c] sm:$0xf]
      %v694 = vsel %vm626, %v462, %v693
      %695 = vst [vmem:[%s623 + $0x6c] sm:$0xf] %v694
      %696 = vst.msk [vmem:[%s623 + $0x70] sm:$0xf] %vm630, %v471
      %v697 = vld [vmem:[%s623 + $0x74] sm:$0x1]
      %v698 = vsel %vm633, %v472, %v697
      %699 = vst [vmem:[%s623 + $0x74] sm:$0x1] %v698
      %v700 = vld [vmem:[%s623 + $0x78] sm:$0xf]
      %v701 = vsel %vm626, %v479, %v700
      %702 = vst [vmem:[%s623 + $0x78] sm:$0xf] %v701
      %703 = vst.msk [vmem:[%s623 + $0x7c] sm:$0xf] %vm630, %v488
      %v704 = vld [vmem:[%s623 + $0x80] sm:$0x1]
      %v705 = vsel %vm633, %v489, %v704
      %706 = vst [vmem:[%s623 + $0x80] sm:$0x1] %v705
      %v707 = vld [vmem:[%s623 + $0x84] sm:$0xf]
      %v708 = vsel %vm626, %v496, %v707
      %709 = vst [vmem:[%s623 + $0x84] sm:$0xf] %v708
      %710 = vst.msk [vmem:[%s623 + $0x88] sm:$0xf] %vm630, %v505
      %v711 = vld [vmem:[%s623 + $0x8c] sm:$0x1]
      %v712 = vsel %vm633, %v506, %v711
      %713 = vst [vmem:[%s623 + $0x8c] sm:$0x1] %v712
      %v714 = vld [vmem:[%s623 + $0x90] sm:$0xf]
      %v715 = vsel %vm626, %v513, %v714
      %716 = vst [vmem:[%s623 + $0x90] sm:$0xf] %v715
      %717 = vst.msk [vmem:[%s623 + $0x94] sm:$0xf] %vm630, %v522
      %v718 = vld [vmem:[%s623 + $0x98] sm:$0x1]
      %v719 = vsel %vm633, %v523, %v718
      %720 = vst [vmem:[%s623 + $0x98] sm:$0x1] %v719
      %v721 = vld [vmem:[%s623 + $0x9c] sm:$0xf]
      %v722 = vsel %vm626, %v530, %v721
      %723 = vst [vmem:[%s623 + $0x9c] sm:$0xf] %v722
      %724 = vst.msk [vmem:[%s623 + $0xa0] sm:$0xf] %vm630, %v539
      %v725 = vld [vmem:[%s623 + $0xa4] sm:$0x1]
      %v726 = vsel %vm633, %v540, %v725
      %727 = vst [vmem:[%s623 + $0xa4] sm:$0x1] %v726
      %v728 = vld [vmem:[%s623 + $0xa8] sm:$0xf]
      %v729 = vsel %vm626, %v547, %v728
      %730 = vst [vmem:[%s623 + $0xa8] sm:$0xf] %v729
      %731 = vst.msk [vmem:[%s623 + $0xac] sm:$0xf] %vm630, %v556
      %v732 = vld [vmem:[%s623 + $0xb0] sm:$0x1]
      %v733 = vsel %vm633, %v557, %v732
      %734 = vst [vmem:[%s623 + $0xb0] sm:$0x1] %v733
      %v735 = vld [vmem:[%s623 + $0xb4] sm:$0xf]
      %v736 = vsel %vm626, %v564, %v735
      %737 = vst [vmem:[%s623 + $0xb4] sm:$0xf] %v736
      %738 = vst.msk [vmem:[%s623 + $0xb8] sm:$0xf] %vm630, %v573
      %v739 = vld [vmem:[%s623 + $0xbc] sm:$0x1]
      %v740 = vsel %vm633, %v574, %v739
      %741 = vst [vmem:[%s623 + $0xbc] sm:$0x1] %v740
      %v742 = vld [vmem:[#allocation2] sm:$0xf]
      %v743 = vsel %vm626, %v326, %v742
      %744 = vst [vmem:[#allocation2] sm:$0xf] %v743
      %745 = vst.msk [vmem:[#allocation2 + $0x4] sm:$0xf] %vm630, %v335
      %v746 = vld [vmem:[#allocation2 + $0x8] sm:$0x1]
      %v747 = vsel %vm633, %v336, %v746
      %748 = vst [vmem:[#allocation2 + $0x8] sm:$0x1] %v747
      %s749 = scalar_lea.vmem [#allocation2], 204
      %v750 = vld [vmem:[%s749] sm:$0xf]
      %v751 = vsel %vm626, %v547, %v750
      %752 = vst [vmem:[%s749] sm:$0xf] %v751
      %753 = vst.msk [vmem:[%s749 + $0x4] sm:$0xf] %vm630, %v556
      %v754 = vld [vmem:[%s749 + $0x8] sm:$0x1]
      %v755 = vsel %vm633, %v557, %v754
      %756 = vst [vmem:[%s749 + $0x8] sm:$0x1] %v755
      %v757 = vld [vmem:[#allocation2] sm:$0x2]
      %v758 = vld [vmem:[#allocation2 + $0xc] sm:$0x2]
      %v759 = vld [vmem:[#allocation2 + $0x18] sm:$0x2]
      %v760 = vld [vmem:[#allocation2 + $0x24] sm:$0x2]
      %v761 = vld [vmem:[#allocation2 + $0x30] sm:$0x2]
      %v762 = vld [vmem:[#allocation2 + $0x3c] sm:$0x2]
      %v763 = vld [vmem:[#allocation2 + $0x48] sm:$0x2]
      %v764 = vld [vmem:[#allocation2 + $0x54] sm:$0x2]
      %v765 = vld [vmem:[#allocation2 + $0x60] sm:$0x2]
      %v766 = vld [vmem:[#allocation2 + $0x6c] sm:$0x2]
      %v767 = vld [vmem:[#allocation2 + $0x78] sm:$0x2]
      %v768 = vld [vmem:[#allocation2 + $0x84] sm:$0x2]
      %v769 = vld [vmem:[#allocation2 + $0x90] sm:$0x2]
      %v770 = vld [vmem:[#allocation2 + $0x9c] sm:$0x2]
      %v771 = vld [vmem:[#allocation2 + $0xa8] sm:$0x2]
      %v772 = vld [vmem:[#allocation2 + $0xb4] sm:$0x2]
      %v773 = vld [vmem:[#allocation2 + $0xc0] sm:$0x2]
      %v774 = vld [vmem:[#allocation2 + $0xcc] sm:$0x2]
      %v793 = vrot.slane %v757, 5
      %v794 = vrot.slane %v793, 4
      %v795 = vrot.slane %v758, 5
      %v796 = vrot.slane %v795, 4
      %v797 = vrot.slane %v759, 5
      %v798 = vrot.slane %v797, 4
      %v799 = vrot.slane %v760, 5
      %v800 = vrot.slane %v799, 4
      %v801 = vrot.slane %v761, 5
      %v802 = vrot.slane %v801, 4
      %v803 = vrot.slane %v762, 5
      %v804 = vrot.slane %v803, 4
      %v805 = vrot.slane %v763, 5
      %v806 = vrot.slane %v805, 4
      %v807 = vrot.slane %v764, 5
      %v808 = vrot.slane %v807, 4
      %v809 = vrot.slane %v765, 5
      %v810 = vrot.slane %v809, 4
      %v811 = vrot.slane %v766, 5
      %v812 = vrot.slane %v811, 4
      %v813 = vrot.slane %v767, 5
      %v814 = vrot.slane %v813, 4
      %v815 = vrot.slane %v768, 5
      %v816 = vrot.slane %v815, 4
      %v817 = vrot.slane %v769, 5
      %v818 = vrot.slane %v817, 4
      %v819 = vrot.slane %v770, 5
      %v820 = vrot.slane %v819, 4
      %v821 = vrot.slane %v771, 5
      %v822 = vrot.slane %v821, 4
      %v823 = vrot.slane %v772, 5
      %v824 = vrot.slane %v823, 4
      %v825 = vrot.slane %v773, 5
      %v826 = vrot.slane %v825, 4
      %v827 = vrot.slane %v774, 5
      %v828 = vrot.slane %v827, 4
      %v847 = vld [vmem:[#allocation2] sm:$0x1]
      %v848 = vsel %vm633, %v794, %v847
      %849 = vst [vmem:[#allocation2] sm:$0x1] %v848
      %v850 = vld [vmem:[#allocation2 + $0xc] sm:$0x1]
      %v851 = vsel %vm633, %v796, %v850
      %852 = vst [vmem:[#allocation2 + $0xc] sm:$0x1] %v851
      %v853 = vld [vmem:[#allocation2 + $0x18] sm:$0x1]
      %v854 = vsel %vm633, %v798, %v853
      %855 = vst [vmem:[#allocation2 + $0x18] sm:$0x1] %v854
      %v856 = vld [vmem:[#allocation2 + $0x24] sm:$0x1]
      %v857 = vsel %vm633, %v800, %v856
      %858 = vst [vmem:[#allocation2 + $0x24] sm:$0x1] %v857
      %v859 = vld [vmem:[#allocation2 + $0x30] sm:$0x1]
      %v860 = vsel %vm633, %v802, %v859
      %861 = vst [vmem:[#allocation2 + $0x30] sm:$0x1] %v860
      %v862 = vld [vmem:[#allocation2 + $0x3c] sm:$0x1]
      %v863 = vsel %vm633, %v804, %v862
      %864 = vst [vmem:[#allocation2 + $0x3c] sm:$0x1] %v863
      %v865 = vld [vmem:[#allocation2 + $0x48] sm:$0x1]
      %v866 = vsel %vm633, %v806, %v865
      %867 = vst [vmem:[#allocation2 + $0x48] sm:$0x1] %v866
      %v868 = vld [vmem:[#allocation2 + $0x54] sm:$0x1]
      %v869 = vsel %vm633, %v808, %v868
      %870 = vst [vmem:[#allocation2 + $0x54] sm:$0x1] %v869
      %v871 = vld [vmem:[#allocation2 + $0x60] sm:$0x1]
      %v872 = vsel %vm633, %v810, %v871
      %873 = vst [vmem:[#allocation2 + $0x60] sm:$0x1] %v872
      %v874 = vld [vmem:[#allocation2 + $0x6c] sm:$0x1]
      %v875 = vsel %vm633, %v812, %v874
      %876 = vst [vmem:[#allocation2 + $0x6c] sm:$0x1] %v875
      %v877 = vld [vmem:[#allocation2 + $0x78] sm:$0x1]
      %v878 = vsel %vm633, %v814, %v877
      %879 = vst [vmem:[#allocation2 + $0x78] sm:$0x1] %v878
      %v880 = vld [vmem:[#allocation2 + $0x84] sm:$0x1]
      %v881 = vsel %vm633, %v816, %v880
      %882 = vst [vmem:[#allocation2 + $0x84] sm:$0x1] %v881
      %v883 = vld [vmem:[#allocation2 + $0x90] sm:$0x1]
      %v884 = vsel %vm633, %v818, %v883
      %885 = vst [vmem:[#allocation2 + $0x90] sm:$0x1] %v884
      %v886 = vld [vmem:[#allocation2 + $0x9c] sm:$0x1]
      %v887 = vsel %vm633, %v820, %v886
      %888 = vst [vmem:[#allocation2 + $0x9c] sm:$0x1] %v887
      %v889 = vld [vmem:[#allocation2 + $0xa8] sm:$0x1]
      %v890 = vsel %vm633, %v822, %v889
      %891 = vst [vmem:[#allocation2 + $0xa8] sm:$0x1] %v890
      %v892 = vld [vmem:[#allocation2 + $0xb4] sm:$0x1]
      %v893 = vsel %vm633, %v824, %v892
      %894 = vst [vmem:[#allocation2 + $0xb4] sm:$0x1] %v893
      %v895 = vld [vmem:[#allocation2 + $0xc0] sm:$0x1]
      %v896 = vsel %vm633, %v826, %v895
      %897 = vst [vmem:[#allocation2 + $0xc0] sm:$0x1] %v896
      %v898 = vld [vmem:[#allocation2 + $0xcc] sm:$0x1]
      %v899 = vsel %vm633, %v828, %v898
      %900 = vst [vmem:[#allocation2 + $0xcc] sm:$0x1] %v899
      %v901 = vld [vmem:[#allocation2 + $0x4] sm:$0x8]
      %v902 = vld [vmem:[#allocation2 + $0x10] sm:$0x8]
      %v903 = vld [vmem:[#allocation2 + $0x1c] sm:$0x8]
      %v904 = vld [vmem:[#allocation2 + $0x28] sm:$0x8]
      %v905 = vld [vmem:[#allocation2 + $0x34] sm:$0x8]
      %v906 = vld [vmem:[#allocation2 + $0x40] sm:$0x8]
      %v907 = vld [vmem:[#allocation2 + $0x4c] sm:$0x8]
      %v908 = vld [vmem:[#allocation2 + $0x58] sm:$0x8]
      %v909 = vld [vmem:[#allocation2 + $0x64] sm:$0x8]
      %v910 = vld [vmem:[#allocation2 + $0x70] sm:$0x8]
      %v911 = vld [vmem:[#allocation2 + $0x7c] sm:$0x8]
      %v912 = vld [vmem:[#allocation2 + $0x88] sm:$0x8]
      %v913 = vld [vmem:[#allocation2 + $0x94] sm:$0x8]
      %v914 = vld [vmem:[#allocation2 + $0xa0] sm:$0x8]
      %v915 = vld [vmem:[#allocation2 + $0xac] sm:$0x8]
      %v916 = vld [vmem:[#allocation2 + $0xb8] sm:$0x8]
      %v917 = vld [vmem:[#allocation2 + $0xc4] sm:$0x8]
      %v918 = vld [vmem:[#allocation2 + $0xd0] sm:$0x8]
      %v937 = vrot.slane %v901, 7
      %v938 = vrot.slane %v937, 4
      %v939 = vrot.slane %v902, 7
      %v940 = vrot.slane %v939, 4
      %v941 = vrot.slane %v903, 7
      %v942 = vrot.slane %v941, 4
      %v943 = vrot.slane %v904, 7
      %v944 = vrot.slane %v943, 4
      %v945 = vrot.slane %v905, 7
      %v946 = vrot.slane %v945, 4
      %v947 = vrot.slane %v906, 7
      %v948 = vrot.slane %v947, 4
      %v949 = vrot.slane %v907, 7
      %v950 = vrot.slane %v949, 4
      %v951 = vrot.slane %v908, 7
      %v952 = vrot.slane %v951, 4
      %v953 = vrot.slane %v909, 7
      %v954 = vrot.slane %v953, 4
      %v955 = vrot.slane %v910, 7
      %v956 = vrot.slane %v955, 4
      %v957 = vrot.slane %v911, 7
      %v958 = vrot.slane %v957, 4
      %v959 = vrot.slane %v912, 7
      %v960 = vrot.slane %v959, 4
      %v961 = vrot.slane %v913, 7
      %v962 = vrot.slane %v961, 4
      %v963 = vrot.slane %v914, 7
      %v964 = vrot.slane %v963, 4
      %v965 = vrot.slane %v915, 7
      %v966 = vrot.slane %v965, 4
      %v967 = vrot.slane %v916, 7
      %v968 = vrot.slane %v967, 4
      %v969 = vrot.slane %v917, 7
      %v970 = vrot.slane %v969, 4
      %v971 = vrot.slane %v918, 7
      %v972 = vrot.slane %v971, 4
      %vm991 = vmand %vm632, %vm625
      %v992 = vld [vmem:[#allocation2 + $0x8] sm:$0x1]
      %v993 = vsel %vm991, %v938, %v992
      %994 = vst [vmem:[#allocation2 + $0x8] sm:$0x1] %v993
      %v995 = vld [vmem:[#allocation2 + $0x14] sm:$0x1]
      %v996 = vsel %vm991, %v940, %v995
      %997 = vst [vmem:[#allocation2 + $0x14] sm:$0x1] %v996
      %v998 = vld [vmem:[#allocation2 + $0x20] sm:$0x1]
      %v999 = vsel %vm991, %v942, %v998
      %1000 = vst [vmem:[#allocation2 + $0x20] sm:$0x1] %v999
      %v1001 = vld [vmem:[#allocation2 + $0x2c] sm:$0x1]
      %v1002 = vsel %vm991, %v944, %v1001
      %1003 = vst [vmem:[#allocation2 + $0x2c] sm:$0x1] %v1002
      %v1004 = vld [vmem:[#allocation2 + $0x38] sm:$0x1]
      %v1005 = vsel %vm991, %v946, %v1004
      %1006 = vst [vmem:[#allocation2 + $0x38] sm:$0x1] %v1005
      %v1007 = vld [vmem:[#allocation2 + $0x44] sm:$0x1]
      %v1008 = vsel %vm991, %v948, %v1007
      %1009 = vst [vmem:[#allocation2 + $0x44] sm:$0x1] %v1008
      %v1010 = vld [vmem:[#allocation2 + $0x50] sm:$0x1]
      %v1011 = vsel %vm991, %v950, %v1010
      %1012 = vst [vmem:[#allocation2 + $0x50] sm:$0x1] %v1011
      %v1013 = vld [vmem:[#allocation2 + $0x5c] sm:$0x1]
      %v1014 = vsel %vm991, %v952, %v1013
      %1015 = vst [vmem:[#allocation2 + $0x5c] sm:$0x1] %v1014
      %v1016 = vld [vmem:[#allocation2 + $0x68] sm:$0x1]
      %v1017 = vsel %vm991, %v954, %v1016
      %1018 = vst [vmem:[#allocation2 + $0x68] sm:$0x1] %v1017
      %v1019 = vld [vmem:[#allocation2 + $0x74] sm:$0x1]
      %v1020 = vsel %vm991, %v956, %v1019
      %1021 = vst [vmem:[#allocation2 + $0x74] sm:$0x1] %v1020
      %v1022 = vld [vmem:[#allocation2 + $0x80] sm:$0x1]
      %v1023 = vsel %vm991, %v958, %v1022
      %1024 = vst [vmem:[#allocation2 + $0x80] sm:$0x1] %v1023
      %v1025 = vld [vmem:[#allocation2 + $0x8c] sm:$0x1]
      %v1026 = vsel %vm991, %v960, %v1025
      %1027 = vst [vmem:[#allocation2 + $0x8c] sm:$0x1] %v1026
      %v1028 = vld [vmem:[#allocation2 + $0x98] sm:$0x1]
      %v1029 = vsel %vm991, %v962, %v1028
      %1030 = vst [vmem:[#allocation2 + $0x98] sm:$0x1] %v1029
      %v1031 = vld [vmem:[#allocation2 + $0xa4] sm:$0x1]
      %v1032 = vsel %vm991, %v964, %v1031
      %1033 = vst [vmem:[#allocation2 + $0xa4] sm:$0x1] %v1032
      %v1034 = vld [vmem:[#allocation2 + $0xb0] sm:$0x1]
      %v1035 = vsel %vm991, %v966, %v1034
      %1036 = vst [vmem:[#allocation2 + $0xb0] sm:$0x1] %v1035
      %v1037 = vld [vmem:[#allocation2 + $0xbc] sm:$0x1]
      %v1038 = vsel %vm991, %v968, %v1037
      %1039 = vst [vmem:[#allocation2 + $0xbc] sm:$0x1] %v1038
      %v1040 = vld [vmem:[#allocation2 + $0xc8] sm:$0x1]
      %v1041 = vsel %vm991, %v970, %v1040
      %1042 = vst [vmem:[#allocation2 + $0xc8] sm:$0x1] %v1041
      %v1043 = vld [vmem:[#allocation2 + $0xd4] sm:$0x1]
      %v1044 = vsel %vm991, %v972, %v1043
      %1045 = vst [vmem:[#allocation2 + $0xd4] sm:$0x1] %v1044
      %v1046 = vld [vmem:[#allocation2] sm:$0xf]
      %v1047 = vld [vmem:[#allocation2 + $0x4] sm:$0xf]
      %v1048 = vld [vmem:[#allocation2 + $0xc] sm:$0xf]
      %v1049 = vld [vmem:[#allocation2 + $0x10] sm:$0xf]
      %v1050 = vld [vmem:[#allocation2 + $0x18] sm:$0xf]
      %v1051 = vld [vmem:[#allocation2 + $0x1c] sm:$0xf]
      %v1052 = vld [vmem:[#allocation2 + $0x24] sm:$0xf]
      %v1053 = vld [vmem:[#allocation2 + $0x28] sm:$0xf]
      %v1054 = vld [vmem:[#allocation2 + $0x30] sm:$0xf]
      %v1055 = vld [vmem:[#allocation2 + $0x34] sm:$0xf]
      %v1056 = vld [vmem:[#allocation2 + $0x3c] sm:$0xf]
      %v1057 = vld [vmem:[#allocation2 + $0x40] sm:$0xf]
      %v1058 = vld [vmem:[#allocation2 + $0x48] sm:$0xf]
      %v1059 = vld [vmem:[#allocation2 + $0x4c] sm:$0xf]
      %v1060 = vld [vmem:[#allocation2 + $0x54] sm:$0xf]
      %v1061 = vld [vmem:[#allocation2 + $0x58] sm:$0xf]
      %v1062 = vld [vmem:[#allocation2 + $0x60] sm:$0xf]
      %v1063 = vld [vmem:[#allocation2 + $0x64] sm:$0xf]
      %v1064 = vld [vmem:[#allocation2 + $0x6c] sm:$0xf]
      %v1065 = vld [vmem:[#allocation2 + $0x70] sm:$0xf]
      %v1066 = vld [vmem:[#allocation2 + $0x78] sm:$0xf]
      %v1067 = vld [vmem:[#allocation2 + $0x7c] sm:$0xf]
      %v1068 = vld [vmem:[#allocation2 + $0x84] sm:$0xf]
      %v1069 = vld [vmem:[#allocation2 + $0x88] sm:$0xf]
      %v1070 = vld [vmem:[#allocation2 + $0x90] sm:$0xf]
      %v1071 = vld [vmem:[#allocation2 + $0x94] sm:$0xf]
      %v1072 = vld [vmem:[#allocation2 + $0x9c] sm:$0xf]
      %v1073 = vld [vmem:[#allocation2 + $0xa0] sm:$0xf]
      %v1074 = vld [vmem:[#allocation2 + $0xa8] sm:$0xf]
      %v1075 = vld [vmem:[#allocation2 + $0xac] sm:$0xf]
      %v1076 = vld [vmem:[#allocation2 + $0xb4] sm:$0xf]
      %v1077 = vld [vmem:[#allocation2 + $0xb8] sm:$0xf]
      %v1078 = vld [vmem:[%s623] sm:$0xf]
      %v1079 = vld [vmem:[%s623 + $0x4] sm:$0xf]
      %v1080 = vld [vmem:[%s623 + $0xc] sm:$0xf]
      %v1081 = vld [vmem:[%s623 + $0x10] sm:$0xf]
      %v1082 = vld [vmem:[%s623 + $0x18] sm:$0xf]
      %v1083 = vld [vmem:[%s623 + $0x1c] sm:$0xf]
      %v1084 = vld [vmem:[%s623 + $0x24] sm:$0xf]
      %v1085 = vld [vmem:[%s623 + $0x28] sm:$0xf]
      %v1086 = vld [vmem:[%s623 + $0x30] sm:$0xf]
      %v1087 = vld [vmem:[%s623 + $0x34] sm:$0xf]
      %v1088 = vld [vmem:[%s623 + $0x3c] sm:$0xf]
      %v1089 = vld [vmem:[%s623 + $0x40] sm:$0xf]
      %v1090 = vld [vmem:[%s623 + $0x48] sm:$0xf]
      %v1091 = vld [vmem:[%s623 + $0x4c] sm:$0xf]
      %v1092 = vld [vmem:[%s623 + $0x54] sm:$0xf]
      %v1093 = vld [vmem:[%s623 + $0x58] sm:$0xf]
      %v1094 = vld [vmem:[%s623 + $0x60] sm:$0xf]
      %v1095 = vld [vmem:[%s623 + $0x64] sm:$0xf]
      %v1096 = vld [vmem:[%s623 + $0x6c] sm:$0xf]
      %v1097 = vld [vmem:[%s623 + $0x70] sm:$0xf]
      %v1098 = vld [vmem:[%s623 + $0x78] sm:$0xf]
      %v1099 = vld [vmem:[%s623 + $0x7c] sm:$0xf]
      %v1100 = vld [vmem:[%s623 + $0x84] sm:$0xf]
      %v1101 = vld [vmem:[%s623 + $0x88] sm:$0xf]
      %v1102 = vld [vmem:[%s623 + $0x90] sm:$0xf]
      %v1103 = vld [vmem:[%s623 + $0x94] sm:$0xf]
      %v1104 = vld [vmem:[%s623 + $0x9c] sm:$0xf]
      %v1105 = vld [vmem:[%s623 + $0xa0] sm:$0xf]
      %v1106 = vld [vmem:[%s623 + $0xa8] sm:$0xf]
      %v1107 = vld [vmem:[%s623 + $0xac] sm:$0xf]
      %v1108 = vld [vmem:[%s623 + $0xb4] sm:$0xf]
      %v1109 = vld [vmem:[%s623 + $0xb8] sm:$0xf]
      %s1110 = scalar_lea.vmem [#allocation2], 24
      %v1111 = vld [vmem:[%s1110] sm:$0xf]
      %v1112 = vld [vmem:[%s1110 + $0x4] sm:$0xf]
      %v1113 = vld [vmem:[%s1110 + $0xc] sm:$0xf]
      %v1114 = vld [vmem:[%s1110 + $0x10] sm:$0xf]
      %v1115 = vld [vmem:[%s1110 + $0x18] sm:$0xf]
      %v1116 = vld [vmem:[%s1110 + $0x1c] sm:$0xf]
      %v1117 = vld [vmem:[%s1110 + $0x24] sm:$0xf]
      %v1118 = vld [vmem:[%s1110 + $0x28] sm:$0xf]
      %v1119 = vld [vmem:[%s1110 + $0x30] sm:$0xf]
      %v1120 = vld [vmem:[%s1110 + $0x34] sm:$0xf]
      %v1121 = vld [vmem:[%s1110 + $0x3c] sm:$0xf]
      %v1122 = vld [vmem:[%s1110 + $0x40] sm:$0xf]
      %v1123 = vld [vmem:[%s1110 + $0x48] sm:$0xf]
      %v1124 = vld [vmem:[%s1110 + $0x4c] sm:$0xf]
      %v1125 = vld [vmem:[%s1110 + $0x54] sm:$0xf]
      %v1126 = vld [vmem:[%s1110 + $0x58] sm:$0xf]
      %v1127 = vld [vmem:[%s1110 + $0x60] sm:$0xf]
      %v1128 = vld [vmem:[%s1110 + $0x64] sm:$0xf]
      %v1129 = vld [vmem:[%s1110 + $0x6c] sm:$0xf]
      %v1130 = vld [vmem:[%s1110 + $0x70] sm:$0xf]
      %v1131 = vld [vmem:[%s1110 + $0x78] sm:$0xf]
      %v1132 = vld [vmem:[%s1110 + $0x7c] sm:$0xf]
      %v1133 = vld [vmem:[%s1110 + $0x84] sm:$0xf]
      %v1134 = vld [vmem:[%s1110 + $0x88] sm:$0xf]
      %v1135 = vld [vmem:[%s1110 + $0x90] sm:$0xf]
      %v1136 = vld [vmem:[%s1110 + $0x94] sm:$0xf]
      %v1137 = vld [vmem:[%s1110 + $0x9c] sm:$0xf]
      %v1138 = vld [vmem:[%s1110 + $0xa0] sm:$0xf]
      %v1139 = vld [vmem:[%s1110 + $0xa8] sm:$0xf]
      %v1140 = vld [vmem:[%s1110 + $0xac] sm:$0xf]
      %v1141 = vld [vmem:[%s1110 + $0xb4] sm:$0xf]
      %v1142 = vld [vmem:[%s1110 + $0xb8] sm:$0xf]
      %v1175 = vunpack.c.l.b16 %v1046
      %v1176 = vunpack.c.l.b16 %v1047
      %v1177 = vunpack.c.l.b16 %v1048
      %v1178 = vunpack.c.l.b16 %v1049
      %v1179 = vunpack.c.l.b16 %v1050
      %v1180 = vunpack.c.l.b16 %v1051
      %v1181 = vunpack.c.l.b16 %v1052
      %v1182 = vunpack.c.l.b16 %v1053
      %v1183 = vunpack.c.l.b16 %v1054
      %v1184 = vunpack.c.l.b16 %v1055
      %v1185 = vunpack.c.l.b16 %v1056
      %v1186 = vunpack.c.l.b16 %v1057
      %v1187 = vunpack.c.l.b16 %v1058
      %v1188 = vunpack.c.l.b16 %v1059
      %v1189 = vunpack.c.l.b16 %v1060
      %v1190 = vunpack.c.l.b16 %v1061
      %v1191 = vunpack.c.l.b16 %v1062
      %v1192 = vunpack.c.l.b16 %v1063
      %v1193 = vunpack.c.l.b16 %v1064
      %v1194 = vunpack.c.l.b16 %v1065
      %v1195 = vunpack.c.l.b16 %v1066
      %v1196 = vunpack.c.l.b16 %v1067
      %v1197 = vunpack.c.l.b16 %v1068
      %v1198 = vunpack.c.l.b16 %v1069
      %v1199 = vunpack.c.l.b16 %v1070
      %v1200 = vunpack.c.l.b16 %v1071
      %v1201 = vunpack.c.l.b16 %v1072
      %v1202 = vunpack.c.l.b16 %v1073
      %v1203 = vunpack.c.l.b16 %v1074
      %v1204 = vunpack.c.l.b16 %v1075
      %v1205 = vunpack.c.l.b16 %v1076
      %v1206 = vunpack.c.l.b16 %v1077
      %v1207 = vpack.c.b16 %v1176, %v1175
      %v1208 = vpack.c.b16 %v1178, %v1177
      %v1209 = vpack.c.b16 %v1180, %v1179
      %v1210 = vpack.c.b16 %v1182, %v1181
      %v1211 = vpack.c.b16 %v1184, %v1183
      %v1212 = vpack.c.b16 %v1186, %v1185
      %v1213 = vpack.c.b16 %v1188, %v1187
      %v1214 = vpack.c.b16 %v1190, %v1189
      %v1215 = vpack.c.b16 %v1192, %v1191
      %v1216 = vpack.c.b16 %v1194, %v1193
      %v1217 = vpack.c.b16 %v1196, %v1195
      %v1218 = vpack.c.b16 %v1198, %v1197
      %v1219 = vpack.c.b16 %v1200, %v1199
      %v1220 = vpack.c.b16 %v1202, %v1201
      %v1221 = vpack.c.b16 %v1204, %v1203
      %v1222 = vpack.c.b16 %v1206, %v1205
      %v1255 = vunpack.c.l.b16 %v1078
      %v1256 = vunpack.c.l.b16 %v1079
      %v1257 = vunpack.c.l.b16 %v1080
      %v1258 = vunpack.c.l.b16 %v1081
      %v1259 = vunpack.c.l.b16 %v1082
      %v1260 = vunpack.c.l.b16 %v1083
      %v1261 = vunpack.c.l.b16 %v1084
      %v1262 = vunpack.c.l.b16 %v1085
      %v1263 = vunpack.c.l.b16 %v1086
      %v1264 = vunpack.c.l.b16 %v1087
      %v1265 = vunpack.c.l.b16 %v1088
      %v1266 = vunpack.c.l.b16 %v1089
      %v1267 = vunpack.c.l.b16 %v1090
      %v1268 = vunpack.c.l.b16 %v1091
      %v1269 = vunpack.c.l.b16 %v1092
      %v1270 = vunpack.c.l.b16 %v1093
      %v1271 = vunpack.c.l.b16 %v1094
      %v1272 = vunpack.c.l.b16 %v1095
      %v1273 = vunpack.c.l.b16 %v1096
      %v1274 = vunpack.c.l.b16 %v1097
      %v1275 = vunpack.c.l.b16 %v1098
      %v1276 = vunpack.c.l.b16 %v1099
      %v1277 = vunpack.c.l.b16 %v1100
      %v1278 = vunpack.c.l.b16 %v1101
      %v1279 = vunpack.c.l.b16 %v1102
      %v1280 = vunpack.c.l.b16 %v1103
      %v1281 = vunpack.c.l.b16 %v1104
      %v1282 = vunpack.c.l.b16 %v1105
      %v1283 = vunpack.c.l.b16 %v1106
      %v1284 = vunpack.c.l.b16 %v1107
      %v1285 = vunpack.c.l.b16 %v1108
      %v1286 = vunpack.c.l.b16 %v1109
      %v1287 = vpack.c.b16 %v1256, %v1255
      %v1288 = vpack.c.b16 %v1258, %v1257
      %v1289 = vpack.c.b16 %v1260, %v1259
      %v1290 = vpack.c.b16 %v1262, %v1261
      %v1291 = vpack.c.b16 %v1264, %v1263
      %v1292 = vpack.c.b16 %v1266, %v1265
      %v1293 = vpack.c.b16 %v1268, %v1267
      %v1294 = vpack.c.b16 %v1270, %v1269
      %v1295 = vpack.c.b16 %v1272, %v1271
      %v1296 = vpack.c.b16 %v1274, %v1273
      %v1297 = vpack.c.b16 %v1276, %v1275
      %v1298 = vpack.c.b16 %v1278, %v1277
      %v1299 = vpack.c.b16 %v1280, %v1279
      %v1300 = vpack.c.b16 %v1282, %v1281
      %v1301 = vpack.c.b16 %v1284, %v1283
      %v1302 = vpack.c.b16 %v1286, %v1285
      %1303 = vrot.lane.b32.xlu0 %v1287, 4
      %v1304 = vpop.permute.xlu0 %1303
      %1305 = vrot.lane.b32.xlu0 %v1288, 4
      %v1306 = vpop.permute.xlu0 %1305
      %1307 = vrot.lane.b32.xlu0 %v1289, 4
      %v1308 = vpop.permute.xlu0 %1307
      %1309 = vrot.lane.b32.xlu0 %v1290, 4
      %v1310 = vpop.permute.xlu0 %1309
      %1311 = vrot.lane.b32.xlu0 %v1291, 4
      %v1312 = vpop.permute.xlu0 %1311
      %1313 = vrot.lane.b32.xlu0 %v1292, 4
      %v1314 = vpop.permute.xlu0 %1313
      %1315 = vrot.lane.b32.xlu0 %v1293, 4
      %v1316 = vpop.permute.xlu0 %1315
      %1317 = vrot.lane.b32.xlu0 %v1294, 4
      %v1318 = vpop.permute.xlu0 %1317
      %1319 = vrot.lane.b32.xlu0 %v1295, 4
      %v1320 = vpop.permute.xlu0 %1319
      %1321 = vrot.lane.b32.xlu0 %v1296, 4
      %v1322 = vpop.permute.xlu0 %1321
      %1323 = vrot.lane.b32.xlu0 %v1297, 4
      %v1324 = vpop.permute.xlu0 %1323
      %1325 = vrot.lane.b32.xlu0 %v1298, 4
      %v1326 = vpop.permute.xlu0 %1325
      %1327 = vrot.lane.b32.xlu0 %v1299, 4
      %v1328 = vpop.permute.xlu0 %1327
      %1329 = vrot.lane.b32.xlu0 %v1300, 4
      %v1330 = vpop.permute.xlu0 %1329
      %1331 = vrot.lane.b32.xlu0 %v1301, 4
      %v1332 = vpop.permute.xlu0 %1331
      %1333 = vrot.lane.b32.xlu0 %v1302, 4
      %v1334 = vpop.permute.xlu0 %1333
      %v1367 = vunpack.c.l.b16 %v1111
      %v1368 = vunpack.c.l.b16 %v1112
      %v1369 = vunpack.c.l.b16 %v1113
      %v1370 = vunpack.c.l.b16 %v1114
      %v1371 = vunpack.c.l.b16 %v1115
      %v1372 = vunpack.c.l.b16 %v1116
      %v1373 = vunpack.c.l.b16 %v1117
      %v1374 = vunpack.c.l.b16 %v1118
      %v1375 = vunpack.c.l.b16 %v1119
      %v1376 = vunpack.c.l.b16 %v1120
      %v1377 = vunpack.c.l.b16 %v1121
      %v1378 = vunpack.c.l.b16 %v1122
      %v1379 = vunpack.c.l.b16 %v1123
      %v1380 = vunpack.c.l.b16 %v1124
      %v1381 = vunpack.c.l.b16 %v1125
      %v1382 = vunpack.c.l.b16 %v1126
      %v1383 = vunpack.c.l.b16 %v1127
      %v1384 = vunpack.c.l.b16 %v1128
      %v1385 = vunpack.c.l.b16 %v1129
      %v1386 = vunpack.c.l.b16 %v1130
      %v1387 = vunpack.c.l.b16 %v1131
      %v1388 = vunpack.c.l.b16 %v1132
      %v1389 = vunpack.c.l.b16 %v1133
      %v1390 = vunpack.c.l.b16 %v1134
      %v1391 = vunpack.c.l.b16 %v1135
      %v1392 = vunpack.c.l.b16 %v1136
      %v1393 = vunpack.c.l.b16 %v1137
      %v1394 = vunpack.c.l.b16 %v1138
      %v1395 = vunpack.c.l.b16 %v1139
      %v1396 = vunpack.c.l.b16 %v1140
      %v1397 = vunpack.c.l.b16 %v1141
      %v1398 = vunpack.c.l.b16 %v1142
      %v1399 = vpack.c.b16 %v1368, %v1367
      %v1400 = vpack.c.b16 %v1370, %v1369
      %v1401 = vpack.c.b16 %v1372, %v1371
      %v1402 = vpack.c.b16 %v1374, %v1373
      %v1403 = vpack.c.b16 %v1376, %v1375
      %v1404 = vpack.c.b16 %v1378, %v1377
      %v1405 = vpack.c.b16 %v1380, %v1379
      %v1406 = vpack.c.b16 %v1382, %v1381
      %v1407 = vpack.c.b16 %v1384, %v1383
      %v1408 = vpack.c.b16 %v1386, %v1385
      %v1409 = vpack.c.b16 %v1388, %v1387
      %v1410 = vpack.c.b16 %v1390, %v1389
      %v1411 = vpack.c.b16 %v1392, %v1391
      %v1412 = vpack.c.b16 %v1394, %v1393
      %v1413 = vpack.c.b16 %v1396, %v1395
      %v1414 = vpack.c.b16 %v1398, %v1397
      %1415 = vrot.lane.b32.xlu0 %v1399, 8
      %v1416 = vpop.permute.xlu0 %1415
      %1417 = vrot.lane.b32.xlu0 %v1400, 8
      %v1418 = vpop.permute.xlu0 %1417
      %1419 = vrot.lane.b32.xlu0 %v1401, 8
      %v1420 = vpop.permute.xlu0 %1419
      %1421 = vrot.lane.b32.xlu0 %v1402, 8
      %v1422 = vpop.permute.xlu0 %1421
      %1423 = vrot.lane.b32.xlu0 %v1403, 8
      %v1424 = vpop.permute.xlu0 %1423
      %1425 = vrot.lane.b32.xlu0 %v1404, 8
      %v1426 = vpop.permute.xlu0 %1425
      %1427 = vrot.lane.b32.xlu0 %v1405, 8
      %v1428 = vpop.permute.xlu0 %1427
      %1429 = vrot.lane.b32.xlu0 %v1406, 8
      %v1430 = vpop.permute.xlu0 %1429
      %1431 = vrot.lane.b32.xlu0 %v1407, 8
      %v1432 = vpop.permute.xlu0 %1431
      %1433 = vrot.lane.b32.xlu0 %v1408, 8
      %v1434 = vpop.permute.xlu0 %1433
      %1435 = vrot.lane.b32.xlu0 %v1409, 8
      %v1436 = vpop.permute.xlu0 %1435
      %1437 = vrot.lane.b32.xlu0 %v1410, 8
      %v1438 = vpop.permute.xlu0 %1437
      %1439 = vrot.lane.b32.xlu0 %v1411, 8
      %v1440 = vpop.permute.xlu0 %1439
      %1441 = vrot.lane.b32.xlu0 %v1412, 8
      %v1442 = vpop.permute.xlu0 %1441
      %1443 = vrot.lane.b32.xlu0 %v1413, 8
      %v1444 = vpop.permute.xlu0 %1443
      %1445 = vrot.lane.b32.xlu0 %v1414, 8
      %v1446 = vpop.permute.xlu0 %1445
      %vm1447 = vcmask 31744
      %v1450 = vsel %vm1447, %v1207, %v1304
      %v1453 = vsel %vm1447, %v1208, %v1306
      %v1456 = vsel %vm1447, %v1209, %v1308
      %v1459 = vsel %vm1447, %v1210, %v1310
      %v1462 = vsel %vm1447, %v1211, %v1312
      %v1465 = vsel %vm1447, %v1212, %v1314
      %v1468 = vsel %vm1447, %v1213, %v1316
      %v1471 = vsel %vm1447, %v1214, %v1318
      %v1474 = vsel %vm1447, %v1215, %v1320
      %v1477 = vsel %vm1447, %v1216, %v1322
      %v1480 = vsel %vm1447, %v1217, %v1324
      %v1483 = vsel %vm1447, %v1218, %v1326
      %v1486 = vsel %vm1447, %v1219, %v1328
      %v1489 = vsel %vm1447, %v1220, %v1330
      %v1492 = vsel %vm1447, %v1221, %v1332
      %v1495 = vsel %vm1447, %v1222, %v1334
      %vm1496 = vcmask 64512
      %v1498 = vsel %vm1496, %v1450, %v1416
      %v1500 = vsel %vm1496, %v1453, %v1418
      %v1502 = vsel %vm1496, %v1456, %v1420
      %v1504 = vsel %vm1496, %v1459, %v1422
      %v1506 = vsel %vm1496, %v1462, %v1424
      %v1508 = vsel %vm1496, %v1465, %v1426
      %v1510 = vsel %vm1496, %v1468, %v1428
      %v1512 = vsel %vm1496, %v1471, %v1430
      %v1514 = vsel %vm1496, %v1474, %v1432
      %v1516 = vsel %vm1496, %v1477, %v1434
      %v1518 = vsel %vm1496, %v1480, %v1436
      %v1520 = vsel %vm1496, %v1483, %v1438
      %v1522 = vsel %vm1496, %v1486, %v1440
      %v1524 = vsel %vm1496, %v1489, %v1442
      %v1526 = vsel %vm1496, %v1492, %v1444
      %v1528 = vsel %vm1496, %v1495, %v1446
      %v1529 = vld [vmem:[%s1] sm:$0xf]
      %v1530 = vld [vmem:[%s1 + $0x4] sm:$0x3]
      %v1531 = vld [vmem:[#allocation2 + $0x8] sm:$0x1]
      %v1532 = vld [vmem:[#allocation2 + $0x14] sm:$0x1]
      %v1533 = vld [vmem:[#allocation2 + $0x20] sm:$0x1]
      %v1534 = vld [vmem:[#allocation2 + $0x2c] sm:$0x1]
      %v1535 = vld [vmem:[#allocation2 + $0x38] sm:$0x1]
      %v1536 = vld [vmem:[#allocation2 + $0x44] sm:$0x1]
      %v1537 = vld [vmem:[#allocation2 + $0x50] sm:$0x1]
      %v1538 = vld [vmem:[#allocation2 + $0x5c] sm:$0x1]
      %v1539 = vld [vmem:[#allocation2 + $0x68] sm:$0x1]
      %v1540 = vld [vmem:[#allocation2 + $0x74] sm:$0x1]
      %v1541 = vld [vmem:[#allocation2 + $0x80] sm:$0x1]
      %v1542 = vld [vmem:[#allocation2 + $0x8c] sm:$0x1]
      %v1543 = vld [vmem:[#allocation2 + $0x98] sm:$0x1]
      %v1544 = vld [vmem:[#allocation2 + $0xa4] sm:$0x1]
      %v1545 = vld [vmem:[#allocation2 + $0xb0] sm:$0x1]
      %v1546 = vld [vmem:[#allocation2 + $0xbc] sm:$0x1]
      %vm1547 = vsmask.f32 3328
      %vm1548 = vsmask.f32 7440
      %vm1549 = vmor %vm1547, %vm1548
      %v1551 = vshrl.u32 %v1046, 16
      %v1553 = vrot.slane %v1551, 4
      %v1554 = vshll.u32 %v1046, 16
      %v1556 = vrot.slane %v1554, 5
      %v1557 = vor.u32 %v1553, %v1556
      %v1558 = vrot.slane %v1557, 4
      %v1560 = vshll.u32 %v1047, 16
      %v1562 = vrot.slane %v1560, 5
      %v1563 = vsel %vm1549, %v1558, %v1562
      %v1564 = vshrl.u32 %v1047, 16
      %v1566 = vrot.slane %v1564, 4
      %v1567 = vor.u32 %v1566, %v1562
      %v1568 = vrot.slane %v1567, 4
      %v1570 = vshll.u32 %v1531, 16
      %v1572 = vrot.slane %v1570, 5
      %v1573 = vsel %vm1549, %v1568, %v1572
      %v1575 = vshrl.u32 %v1048, 16
      %v1577 = vrot.slane %v1575, 4
      %v1578 = vshll.u32 %v1048, 16
      %v1580 = vrot.slane %v1578, 5
      %v1581 = vor.u32 %v1577, %v1580
      %v1582 = vrot.slane %v1581, 4
      %v1584 = vshll.u32 %v1049, 16
      %v1586 = vrot.slane %v1584, 5
      %v1587 = vsel %vm1549, %v1582, %v1586
      %v1588 = vshrl.u32 %v1049, 16
      %v1590 = vrot.slane %v1588, 4
      %v1591 = vor.u32 %v1590, %v1586
      %v1592 = vrot.slane %v1591, 4
      %v1594 = vshll.u32 %v1532, 16
      %v1596 = vrot.slane %v1594, 5
      %v1597 = vsel %vm1549, %v1592, %v1596
      %v1599 = vshrl.u32 %v1050, 16
      %v1601 = vrot.slane %v1599, 4
      %v1602 = vshll.u32 %v1050, 16
      %v1604 = vrot.slane %v1602, 5
      %v1605 = vor.u32 %v1601, %v1604
      %v1606 = vrot.slane %v1605, 4
      %v1608 = vshll.u32 %v1051, 16
      %v1610 = vrot.slane %v1608, 5
      %v1611 = vsel %vm1549, %v1606, %v1610
      %v1612 = vshrl.u32 %v1051, 16
      %v1614 = vrot.slane %v1612, 4
      %v1615 = vor.u32 %v1614, %v1610
      %v1616 = vrot.slane %v1615, 4
      %v1618 = vshll.u32 %v1533, 16
      %v1620 = vrot.slane %v1618, 5
      %v1621 = vsel %vm1549, %v1616, %v1620
      %v1623 = vshrl.u32 %v1052, 16
      %v1625 = vrot.slane %v1623, 4
      %v1626 = vshll.u32 %v1052, 16
      %v1628 = vrot.slane %v1626, 5
      %v1629 = vor.u32 %v1625, %v1628
      %v1630 = vrot.slane %v1629, 4
      %v1632 = vshll.u32 %v1053, 16
      %v1634 = vrot.slane %v1632, 5
      %v1635 = vsel %vm1549, %v1630, %v1634
      %v1636 = vshrl.u32 %v1053, 16
      %v1638 = vrot.slane %v1636, 4
      %v1639 = vor.u32 %v1638, %v1634
      %v1640 = vrot.slane %v1639, 4
      %v1642 = vshll.u32 %v1534, 16
      %v1644 = vrot.slane %v1642, 5
      %v1645 = vsel %vm1549, %v1640, %v1644
      %v1647 = vshrl.u32 %v1054, 16
      %v1649 = vrot.slane %v1647, 4
      %v1650 = vshll.u32 %v1054, 16
      %v1652 = vrot.slane %v1650, 5
      %v1653 = vor.u32 %v1649, %v1652
      %v1654 = vrot.slane %v1653, 4
      %v1656 = vshll.u32 %v1055, 16
      %v1658 = vrot.slane %v1656, 5
      %v1659 = vsel %vm1549, %v1654, %v1658
      %v1660 = vshrl.u32 %v1055, 16
      %v1662 = vrot.slane %v1660, 4
      %v1663 = vor.u32 %v1662, %v1658
      %v1664 = vrot.slane %v1663, 4
      %v1666 = vshll.u32 %v1535, 16
      %v1668 = vrot.slane %v1666, 5
      %v1669 = vsel %vm1549, %v1664, %v1668
      %v1671 = vshrl.u32 %v1056, 16
      %v1673 = vrot.slane %v1671, 4
      %v1674 = vshll.u32 %v1056, 16
      %v1676 = vrot.slane %v1674, 5
      %v1677 = vor.u32 %v1673, %v1676
      %v1678 = vrot.slane %v1677, 4
      %v1680 = vshll.u32 %v1057, 16
      %v1682 = vrot.slane %v1680, 5
      %v1683 = vsel %vm1549, %v1678, %v1682
      %v1684 = vshrl.u32 %v1057, 16
      %v1686 = vrot.slane %v1684, 4
      %v1687 = vor.u32 %v1686, %v1682
      %v1688 = vrot.slane %v1687, 4
      %v1690 = vshll.u32 %v1536, 16
      %v1692 = vrot.slane %v1690, 5
      %v1693 = vsel %vm1549, %v1688, %v1692
      %v1695 = vshrl.u32 %v1058, 16
      %v1697 = vrot.slane %v1695, 4
      %v1698 = vshll.u32 %v1058, 16
      %v1700 = vrot.slane %v1698, 5
      %v1701 = vor.u32 %v1697, %v1700
      %v1702 = vrot.slane %v1701, 4
      %v1704 = vshll.u32 %v1059, 16
      %v1706 = vrot.slane %v1704, 5
      %v1707 = vsel %vm1549, %v1702, %v1706
      %v1708 = vshrl.u32 %v1059, 16
      %v1710 = vrot.slane %v1708, 4
      %v1711 = vor.u32 %v1710, %v1706
      %v1712 = vrot.slane %v1711, 4
      %v1714 = vshll.u32 %v1537, 16
      %v1716 = vrot.slane %v1714, 5
      %v1717 = vsel %vm1549, %v1712, %v1716
      %v1719 = vshrl.u32 %v1060, 16
      %v1721 = vrot.slane %v1719, 4
      %v1722 = vshll.u32 %v1060, 16
      %v1724 = vrot.slane %v1722, 5
      %v1725 = vor.u32 %v1721, %v1724
      %v1726 = vrot.slane %v1725, 4
      %v1728 = vshll.u32 %v1061, 16
      %v1730 = vrot.slane %v1728, 5
      %v1731 = vsel %vm1549, %v1726, %v1730
      %v1732 = vshrl.u32 %v1061, 16
      %v1734 = vrot.slane %v1732, 4
      %v1735 = vor.u32 %v1734, %v1730
      %v1736 = vrot.slane %v1735, 4
      %v1738 = vshll.u32 %v1538, 16
      %v1740 = vrot.slane %v1738, 5
      %v1741 = vsel %vm1549, %v1736, %v1740
      %v1743 = vshrl.u32 %v1062, 16
      %v1745 = vrot.slane %v1743, 4
      %v1746 = vshll.u32 %v1062, 16
      %v1748 = vrot.slane %v1746, 5
      %v1749 = vor.u32 %v1745, %v1748
      %v1750 = vrot.slane %v1749, 4
      %v1752 = vshll.u32 %v1063, 16
      %v1754 = vrot.slane %v1752, 5
      %v1755 = vsel %vm1549, %v1750, %v1754
      %v1756 = vshrl.u32 %v1063, 16
      %v1758 = vrot.slane %v1756, 4
      %v1759 = vor.u32 %v1758, %v1754
      %v1760 = vrot.slane %v1759, 4
      %v1762 = vshll.u32 %v1539, 16
      %v1764 = vrot.slane %v1762, 5
      %v1765 = vsel %vm1549, %v1760, %v1764
      %v1767 = vshrl.u32 %v1064, 16
      %v1769 = vrot.slane %v1767, 4
      %v1770 = vshll.u32 %v1064, 16
      %v1772 = vrot.slane %v1770, 5
      %v1773 = vor.u32 %v1769, %v1772
      %v1774 = vrot.slane %v1773, 4
      %v1776 = vshll.u32 %v1065, 16
      %v1778 = vrot.slane %v1776, 5
      %v1779 = vsel %vm1549, %v1774, %v1778
      %v1780 = vshrl.u32 %v1065, 16
      %v1782 = vrot.slane %v1780, 4
      %v1783 = vor.u32 %v1782, %v1778
      %v1784 = vrot.slane %v1783, 4
      %v1786 = vshll.u32 %v1540, 16
      %v1788 = vrot.slane %v1786, 5
      %v1789 = vsel %vm1549, %v1784, %v1788
      %v1791 = vshrl.u32 %v1066, 16
      %v1793 = vrot.slane %v1791, 4
      %v1794 = vshll.u32 %v1066, 16
      %v1796 = vrot.slane %v1794, 5
      %v1797 = vor.u32 %v1793, %v1796
      %v1798 = vrot.slane %v1797, 4
      %v1800 = vshll.u32 %v1067, 16
      %v1802 = vrot.slane %v1800, 5
      %v1803 = vsel %vm1549, %v1798, %v1802
      %v1804 = vshrl.u32 %v1067, 16
      %v1806 = vrot.slane %v1804, 4
      %v1807 = vor.u32 %v1806, %v1802
      %v1808 = vrot.slane %v1807, 4
      %v1810 = vshll.u32 %v1541, 16
      %v1812 = vrot.slane %v1810, 5
      %v1813 = vsel %vm1549, %v1808, %v1812
      %v1815 = vshrl.u32 %v1068, 16
      %v1817 = vrot.slane %v1815, 4
      %v1818 = vshll.u32 %v1068, 16
      %v1820 = vrot.slane %v1818, 5
      %v1821 = vor.u32 %v1817, %v1820
      %v1822 = vrot.slane %v1821, 4
      %v1824 = vshll.u32 %v1069, 16
      %v1826 = vrot.slane %v1824, 5
      %v1827 = vsel %vm1549, %v1822, %v1826
      %v1828 = vshrl.u32 %v1069, 16
      %v1830 = vrot.slane %v1828, 4
      %v1831 = vor.u32 %v1830, %v1826
      %v1832 = vrot.slane %v1831, 4
      %v1834 = vshll.u32 %v1542, 16
      %v1836 = vrot.slane %v1834, 5
      %v1837 = vsel %vm1549, %v1832, %v1836
      %v1839 = vshrl.u32 %v1070, 16
      %v1841 = vrot.slane %v1839, 4
      %v1842 = vshll.u32 %v1070, 16
      %v1844 = vrot.slane %v1842, 5
      %v1845 = vor.u32 %v1841, %v1844
      %v1846 = vrot.slane %v1845, 4
      %v1848 = vshll.u32 %v1071, 16
      %v1850 = vrot.slane %v1848, 5
      %v1851 = vsel %vm1549, %v1846, %v1850
      %v1852 = vshrl.u32 %v1071, 16
      %v1854 = vrot.slane %v1852, 4
      %v1855 = vor.u32 %v1854, %v1850
      %v1856 = vrot.slane %v1855, 4
      %v1858 = vshll.u32 %v1543, 16
      %v1860 = vrot.slane %v1858, 5
      %v1861 = vsel %vm1549, %v1856, %v1860
      %v1863 = vshrl.u32 %v1072, 16
      %v1865 = vrot.slane %v1863, 4
      %v1866 = vshll.u32 %v1072, 16
      %v1868 = vrot.slane %v1866, 5
      %v1869 = vor.u32 %v1865, %v1868
      %v1870 = vrot.slane %v1869, 4
      %v1872 = vshll.u32 %v1073, 16
      %v1874 = vrot.slane %v1872, 5
      %v1875 = vsel %vm1549, %v1870, %v1874
      %v1876 = vshrl.u32 %v1073, 16
      %v1878 = vrot.slane %v1876, 4
      %v1879 = vor.u32 %v1878, %v1874
      %v1880 = vrot.slane %v1879, 4
      %v1882 = vshll.u32 %v1544, 16
      %v1884 = vrot.slane %v1882, 5
      %v1885 = vsel %vm1549, %v1880, %v1884
      %v1887 = vshrl.u32 %v1074, 16
      %v1889 = vrot.slane %v1887, 4
      %v1890 = vshll.u32 %v1074, 16
      %v1892 = vrot.slane %v1890, 5
      %v1893 = vor.u32 %v1889, %v1892
      %v1894 = vrot.slane %v1893, 4
      %v1896 = vshll.u32 %v1075, 16
      %v1898 = vrot.slane %v1896, 5
      %v1899 = vsel %vm1549, %v1894, %v1898
      %v1900 = vshrl.u32 %v1075, 16
      %v1902 = vrot.slane %v1900, 4
      %v1903 = vor.u32 %v1902, %v1898
      %v1904 = vrot.slane %v1903, 4
      %v1906 = vshll.u32 %v1545, 16
      %v1908 = vrot.slane %v1906, 5
      %v1909 = vsel %vm1549, %v1904, %v1908
      %v1911 = vshrl.u32 %v1076, 16
      %v1913 = vrot.slane %v1911, 4
      %v1914 = vshll.u32 %v1076, 16
      %v1916 = vrot.slane %v1914, 5
      %v1917 = vor.u32 %v1913, %v1916
      %v1918 = vrot.slane %v1917, 4
      %v1920 = vshll.u32 %v1077, 16
      %v1922 = vrot.slane %v1920, 5
      %v1923 = vsel %vm1549, %v1918, %v1922
      %v1924 = vshrl.u32 %v1077, 16
      %v1926 = vrot.slane %v1924, 4
      %v1927 = vor.u32 %v1926, %v1922
      %v1928 = vrot.slane %v1927, 4
      %v1930 = vshll.u32 %v1546, 16
      %v1932 = vrot.slane %v1930, 5
      %v1933 = vsel %vm1549, %v1928, %v1932
      %v1934 = vld [vmem:[%s623 + $0x8] sm:$0x1]
      %v1935 = vld [vmem:[%s623 + $0x14] sm:$0x1]
      %v1936 = vld [vmem:[%s623 + $0x20] sm:$0x1]
      %v1937 = vld [vmem:[%s623 + $0x2c] sm:$0x1]
      %v1938 = vld [vmem:[%s623 + $0x38] sm:$0x1]
      %v1939 = vld [vmem:[%s623 + $0x44] sm:$0x1]
      %v1940 = vld [vmem:[%s623 + $0x50] sm:$0x1]
      %v1941 = vld [vmem:[%s623 + $0x5c] sm:$0x1]
      %v1942 = vld [vmem:[%s623 + $0x68] sm:$0x1]
      %v1943 = vld [vmem:[%s623 + $0x74] sm:$0x1]
      %v1944 = vld [vmem:[%s623 + $0x80] sm:$0x1]
      %v1945 = vld [vmem:[%s623 + $0x8c] sm:$0x1]
      %v1946 = vld [vmem:[%s623 + $0x98] sm:$0x1]
      %v1947 = vld [vmem:[%s623 + $0xa4] sm:$0x1]
      %v1948 = vld [vmem:[%s623 + $0xb0] sm:$0x1]
      %v1949 = vld [vmem:[%s623 + $0xbc] sm:$0x1]
      %v1951 = vshrl.u32 %v1078, 16
      %v1953 = vrot.slane %v1951, 4
      %v1954 = vshll.u32 %v1078, 16
      %v1956 = vrot.slane %v1954, 5
      %v1957 = vor.u32 %v1953, %v1956
      %v1958 = vrot.slane %v1957, 4
      %v1960 = vshll.u32 %v1079, 16
      %v1962 = vrot.slane %v1960, 5
      %v1963 = vsel %vm1549, %v1958, %v1962
      %v1964 = vshrl.u32 %v1079, 16
      %v1966 = vrot.slane %v1964, 4
      %v1967 = vor.u32 %v1966, %v1962
      %v1968 = vrot.slane %v1967, 4
      %v1970 = vshll.u32 %v1934, 16
      %v1972 = vrot.slane %v1970, 5
      %v1973 = vsel %vm1549, %v1968, %v1972
      %v1975 = vshrl.u32 %v1080, 16
      %v1977 = vrot.slane %v1975, 4
      %v1978 = vshll.u32 %v1080, 16
      %v1980 = vrot.slane %v1978, 5
      %v1981 = vor.u32 %v1977, %v1980
      %v1982 = vrot.slane %v1981, 4
      %v1984 = vshll.u32 %v1081, 16
      %v1986 = vrot.slane %v1984, 5
      %v1987 = vsel %vm1549, %v1982, %v1986
      %v1988 = vshrl.u32 %v1081, 16
      %v1990 = vrot.slane %v1988, 4
      %v1991 = vor.u32 %v1990, %v1986
      %v1992 = vrot.slane %v1991, 4
      %v1994 = vshll.u32 %v1935, 16
      %v1996 = vrot.slane %v1994, 5
      %v1997 = vsel %vm1549, %v1992, %v1996
      %v1999 = vshrl.u32 %v1082, 16
      %v2001 = vrot.slane %v1999, 4
      %v2002 = vshll.u32 %v1082, 16
      %v2004 = vrot.slane %v2002, 5
      %v2005 = vor.u32 %v2001, %v2004
      %v2006 = vrot.slane %v2005, 4
      %v2008 = vshll.u32 %v1083, 16
      %v2010 = vrot.slane %v2008, 5
      %v2011 = vsel %vm1549, %v2006, %v2010
      %v2012 = vshrl.u32 %v1083, 16
      %v2014 = vrot.slane %v2012, 4
      %v2015 = vor.u32 %v2014, %v2010
      %v2016 = vrot.slane %v2015, 4
      %v2018 = vshll.u32 %v1936, 16
      %v2020 = vrot.slane %v2018, 5
      %v2021 = vsel %vm1549, %v2016, %v2020
      %v2023 = vshrl.u32 %v1084, 16
      %v2025 = vrot.slane %v2023, 4
      %v2026 = vshll.u32 %v1084, 16
      %v2028 = vrot.slane %v2026, 5
      %v2029 = vor.u32 %v2025, %v2028
      %v2030 = vrot.slane %v2029, 4
      %v2032 = vshll.u32 %v1085, 16
      %v2034 = vrot.slane %v2032, 5
      %v2035 = vsel %vm1549, %v2030, %v2034
      %v2036 = vshrl.u32 %v1085, 16
      %v2038 = vrot.slane %v2036, 4
      %v2039 = vor.u32 %v2038, %v2034
      %v2040 = vrot.slane %v2039, 4
      %v2042 = vshll.u32 %v1937, 16
      %v2044 = vrot.slane %v2042, 5
      %v2045 = vsel %vm1549, %v2040, %v2044
      %v2047 = vshrl.u32 %v1086, 16
      %v2049 = vrot.slane %v2047, 4
      %v2050 = vshll.u32 %v1086, 16
      %v2052 = vrot.slane %v2050, 5
      %v2053 = vor.u32 %v2049, %v2052
      %v2054 = vrot.slane %v2053, 4
      %v2056 = vshll.u32 %v1087, 16
      %v2058 = vrot.slane %v2056, 5
      %v2059 = vsel %vm1549, %v2054, %v2058
      %v2060 = vshrl.u32 %v1087, 16
      %v2062 = vrot.slane %v2060, 4
      %v2063 = vor.u32 %v2062, %v2058
      %v2064 = vrot.slane %v2063, 4
      %v2066 = vshll.u32 %v1938, 16
      %v2068 = vrot.slane %v2066, 5
      %v2069 = vsel %vm1549, %v2064, %v2068
      %v2071 = vshrl.u32 %v1088, 16
      %v2073 = vrot.slane %v2071, 4
      %v2074 = vshll.u32 %v1088, 16
      %v2076 = vrot.slane %v2074, 5
      %v2077 = vor.u32 %v2073, %v2076
      %v2078 = vrot.slane %v2077, 4
      %v2080 = vshll.u32 %v1089, 16
      %v2082 = vrot.slane %v2080, 5
      %v2083 = vsel %vm1549, %v2078, %v2082
      %v2084 = vshrl.u32 %v1089, 16
      %v2086 = vrot.slane %v2084, 4
      %v2087 = vor.u32 %v2086, %v2082
      %v2088 = vrot.slane %v2087, 4
      %v2090 = vshll.u32 %v1939, 16
      %v2092 = vrot.slane %v2090, 5
      %v2093 = vsel %vm1549, %v2088, %v2092
      %v2095 = vshrl.u32 %v1090, 16
      %v2097 = vrot.slane %v2095, 4
      %v2098 = vshll.u32 %v1090, 16
      %v2100 = vrot.slane %v2098, 5
      %v2101 = vor.u32 %v2097, %v2100
      %v2102 = vrot.slane %v2101, 4
      %v2104 = vshll.u32 %v1091, 16
      %v2106 = vrot.slane %v2104, 5
      %v2107 = vsel %vm1549, %v2102, %v2106
      %v2108 = vshrl.u32 %v1091, 16
      %v2110 = vrot.slane %v2108, 4
      %v2111 = vor.u32 %v2110, %v2106
      %v2112 = vrot.slane %v2111, 4
      %v2114 = vshll.u32 %v1940, 16
      %v2116 = vrot.slane %v2114, 5
      %v2117 = vsel %vm1549, %v2112, %v2116
      %v2119 = vshrl.u32 %v1092, 16
      %v2121 = vrot.slane %v2119, 4
      %v2122 = vshll.u32 %v1092, 16
      %v2124 = vrot.slane %v2122, 5
      %v2125 = vor.u32 %v2121, %v2124
      %v2126 = vrot.slane %v2125, 4
      %v2128 = vshll.u32 %v1093, 16
      %v2130 = vrot.slane %v2128, 5
      %v2131 = vsel %vm1549, %v2126, %v2130
      %v2132 = vshrl.u32 %v1093, 16
      %v2134 = vrot.slane %v2132, 4
      %v2135 = vor.u32 %v2134, %v2130
      %v2136 = vrot.slane %v2135, 4
      %v2138 = vshll.u32 %v1941, 16
      %v2140 = vrot.slane %v2138, 5
      %v2141 = vsel %vm1549, %v2136, %v2140
      %v2143 = vshrl.u32 %v1094, 16
      %v2145 = vrot.slane %v2143, 4
      %v2146 = vshll.u32 %v1094, 16
      %v2148 = vrot.slane %v2146, 5
      %v2149 = vor.u32 %v2145, %v2148
      %v2150 = vrot.slane %v2149, 4
      %v2152 = vshll.u32 %v1095, 16
      %v2154 = vrot.slane %v2152, 5
      %v2155 = vsel %vm1549, %v2150, %v2154
      %v2156 = vshrl.u32 %v1095, 16
      %v2158 = vrot.slane %v2156, 4
      %v2159 = vor.u32 %v2158, %v2154
      %v2160 = vrot.slane %v2159, 4
      %v2162 = vshll.u32 %v1942, 16
      %v2164 = vrot.slane %v2162, 5
      %v2165 = vsel %vm1549, %v2160, %v2164
      %v2167 = vshrl.u32 %v1096, 16
      %v2169 = vrot.slane %v2167, 4
      %v2170 = vshll.u32 %v1096, 16
      %v2172 = vrot.slane %v2170, 5
      %v2173 = vor.u32 %v2169, %v2172
      %v2174 = vrot.slane %v2173, 4
      %v2176 = vshll.u32 %v1097, 16
      %v2178 = vrot.slane %v2176, 5
      %v2179 = vsel %vm1549, %v2174, %v2178
      %v2180 = vshrl.u32 %v1097, 16
      %v2182 = vrot.slane %v2180, 4
      %v2183 = vor.u32 %v2182, %v2178
      %v2184 = vrot.slane %v2183, 4
      %v2186 = vshll.u32 %v1943, 16
      %v2188 = vrot.slane %v2186, 5
      %v2189 = vsel %vm1549, %v2184, %v2188
      %v2191 = vshrl.u32 %v1098, 16
      %v2193 = vrot.slane %v2191, 4
      %v2194 = vshll.u32 %v1098, 16
      %v2196 = vrot.slane %v2194, 5
      %v2197 = vor.u32 %v2193, %v2196
      %v2198 = vrot.slane %v2197, 4
      %v2200 = vshll.u32 %v1099, 16
      %v2202 = vrot.slane %v2200, 5
      %v2203 = vsel %vm1549, %v2198, %v2202
      %v2204 = vshrl.u32 %v1099, 16
      %v2206 = vrot.slane %v2204, 4
      %v2207 = vor.u32 %v2206, %v2202
      %v2208 = vrot.slane %v2207, 4
      %v2210 = vshll.u32 %v1944, 16
      %v2212 = vrot.slane %v2210, 5
      %v2213 = vsel %vm1549, %v2208, %v2212
      %v2215 = vshrl.u32 %v1100, 16
      %v2217 = vrot.slane %v2215, 4
      %v2218 = vshll.u32 %v1100, 16
      %v2220 = vrot.slane %v2218, 5
      %v2221 = vor.u32 %v2217, %v2220
      %v2222 = vrot.slane %v2221, 4
      %v2224 = vshll.u32 %v1101, 16
      %v2226 = vrot.slane %v2224, 5
      %v2227 = vsel %vm1549, %v2222, %v2226
      %v2228 = vshrl.u32 %v1101, 16
      %v2230 = vrot.slane %v2228, 4
      %v2231 = vor.u32 %v2230, %v2226
      %v2232 = vrot.slane %v2231, 4
      %v2234 = vshll.u32 %v1945, 16
      %v2236 = vrot.slane %v2234, 5
      %v2237 = vsel %vm1549, %v2232, %v2236
      %v2239 = vshrl.u32 %v1102, 16
      %v2241 = vrot.slane %v2239, 4
      %v2242 = vshll.u32 %v1102, 16
      %v2244 = vrot.slane %v2242, 5
      %v2245 = vor.u32 %v2241, %v2244
      %v2246 = vrot.slane %v2245, 4
      %v2248 = vshll.u32 %v1103, 16
      %v2250 = vrot.slane %v2248, 5
      %v2251 = vsel %vm1549, %v2246, %v2250
      %v2252 = vshrl.u32 %v1103, 16
      %v2254 = vrot.slane %v2252, 4
      %v2255 = vor.u32 %v2254, %v2250
      %v2256 = vrot.slane %v2255, 4
      %v2258 = vshll.u32 %v1946, 16
      %v2260 = vrot.slane %v2258, 5
      %v2261 = vsel %vm1549, %v2256, %v2260
      %v2263 = vshrl.u32 %v1104, 16
      %v2265 = vrot.slane %v2263, 4
      %v2266 = vshll.u32 %v1104, 16
      %v2268 = vrot.slane %v2266, 5
      %v2269 = vor.u32 %v2265, %v2268
      %v2270 = vrot.slane %v2269, 4
      %v2272 = vshll.u32 %v1105, 16
      %v2274 = vrot.slane %v2272, 5
      %v2275 = vsel %vm1549, %v2270, %v2274
      %v2276 = vshrl.u32 %v1105, 16
      %v2278 = vrot.slane %v2276, 4
      %v2279 = vor.u32 %v2278, %v2274
      %v2280 = vrot.slane %v2279, 4
      %v2282 = vshll.u32 %v1947, 16
      %v2284 = vrot.slane %v2282, 5
      %v2285 = vsel %vm1549, %v2280, %v2284
      %v2287 = vshrl.u32 %v1106, 16
      %v2289 = vrot.slane %v2287, 4
      %v2290 = vshll.u32 %v1106, 16
      %v2292 = vrot.slane %v2290, 5
      %v2293 = vor.u32 %v2289, %v2292
      %v2294 = vrot.slane %v2293, 4
      %v2296 = vshll.u32 %v1107, 16
      %v2298 = vrot.slane %v2296, 5
      %v2299 = vsel %vm1549, %v2294, %v2298
      %v2300 = vshrl.u32 %v1107, 16
      %v2302 = vrot.slane %v2300, 4
      %v2303 = vor.u32 %v2302, %v2298
      %v2304 = vrot.slane %v2303, 4
      %v2306 = vshll.u32 %v1948, 16
      %v2308 = vrot.slane %v2306, 5
      %v2309 = vsel %vm1549, %v2304, %v2308
      %v2311 = vshrl.u32 %v1108, 16
      %v2313 = vrot.slane %v2311, 4
      %v2314 = vshll.u32 %v1108, 16
      %v2316 = vrot.slane %v2314, 5
      %v2317 = vor.u32 %v2313, %v2316
      %v2318 = vrot.slane %v2317, 4
      %v2320 = vshll.u32 %v1109, 16
      %v2322 = vrot.slane %v2320, 5
      %v2323 = vsel %vm1549, %v2318, %v2322
      %v2324 = vshrl.u32 %v1109, 16
      %v2326 = vrot.slane %v2324, 4
      %v2327 = vor.u32 %v2326, %v2322
      %v2328 = vrot.slane %v2327, 4
      %v2330 = vshll.u32 %v1949, 16
      %v2332 = vrot.slane %v2330, 5
      %v2333 = vsel %vm1549, %v2328, %v2332
      %v2334 = vld [vmem:[%s1110 + $0x8] sm:$0x1]
      %v2335 = vld [vmem:[%s1110 + $0x14] sm:$0x1]
      %v2336 = vld [vmem:[%s1110 + $0x20] sm:$0x1]
      %v2337 = vld [vmem:[%s1110 + $0x2c] sm:$0x1]
      %v2338 = vld [vmem:[%s1110 + $0x38] sm:$0x1]
      %v2339 = vld [vmem:[%s1110 + $0x44] sm:$0x1]
      %v2340 = vld [vmem:[%s1110 + $0x50] sm:$0x1]
      %v2341 = vld [vmem:[%s1110 + $0x5c] sm:$0x1]
      %v2342 = vld [vmem:[%s1110 + $0x68] sm:$0x1]
      %v2343 = vld [vmem:[%s1110 + $0x74] sm:$0x1]
      %v2344 = vld [vmem:[%s1110 + $0x80] sm:$0x1]
      %v2345 = vld [vmem:[%s1110 + $0x8c] sm:$0x1]
      %v2346 = vld [vmem:[%s1110 + $0x98] sm:$0x1]
      %v2347 = vld [vmem:[%s1110 + $0xa4] sm:$0x1]
      %v2348 = vld [vmem:[%s1110 + $0xb0] sm:$0x1]
      %v2349 = vld [vmem:[%s1110 + $0xbc] sm:$0x1]
      %v2351 = vshrl.u32 %v1111, 16
      %v2353 = vrot.slane %v2351, 4
      %v2354 = vshll.u32 %v1111, 16
      %v2356 = vrot.slane %v2354, 5
      %v2357 = vor.u32 %v2353, %v2356
      %v2358 = vrot.slane %v2357, 4
      %v2360 = vshll.u32 %v1112, 16
      %v2362 = vrot.slane %v2360, 5
      %v2363 = vsel %vm1549, %v2358, %v2362
      %v2364 = vshrl.u32 %v1112, 16
      %v2366 = vrot.slane %v2364, 4
      %v2367 = vor.u32 %v2366, %v2362
      %v2368 = vrot.slane %v2367, 4
      %v2370 = vshll.u32 %v2334, 16
      %v2372 = vrot.slane %v2370, 5
      %v2373 = vsel %vm1549, %v2368, %v2372
      %v2375 = vshrl.u32 %v1113, 16
      %v2377 = vrot.slane %v2375, 4
      %v2378 = vshll.u32 %v1113, 16
      %v2380 = vrot.slane %v2378, 5
      %v2381 = vor.u32 %v2377, %v2380
      %v2382 = vrot.slane %v2381, 4
      %v2384 = vshll.u32 %v1114, 16
      %v2386 = vrot.slane %v2384, 5
      %v2387 = vsel %vm1549, %v2382, %v2386
      %v2388 = vshrl.u32 %v1114, 16
      %v2390 = vrot.slane %v2388, 4
      %v2391 = vor.u32 %v2390, %v2386
      %v2392 = vrot.slane %v2391, 4
      %v2394 = vshll.u32 %v2335, 16
      %v2396 = vrot.slane %v2394, 5
      %v2397 = vsel %vm1549, %v2392, %v2396
      %v2399 = vshrl.u32 %v1115, 16
      %v2401 = vrot.slane %v2399, 4
      %v2402 = vshll.u32 %v1115, 16
      %v2404 = vrot.slane %v2402, 5
      %v2405 = vor.u32 %v2401, %v2404
      %v2406 = vrot.slane %v2405, 4
      %v2408 = vshll.u32 %v1116, 16
      %v2410 = vrot.slane %v2408, 5
      %v2411 = vsel %vm1549, %v2406, %v2410
      %v2412 = vshrl.u32 %v1116, 16
      %v2414 = vrot.slane %v2412, 4
      %v2415 = vor.u32 %v2414, %v2410
      %v2416 = vrot.slane %v2415, 4
      %v2418 = vshll.u32 %v2336, 16
      %v2420 = vrot.slane %v2418, 5
      %v2421 = vsel %vm1549, %v2416, %v2420
      %v2423 = vshrl.u32 %v1117, 16
      %v2425 = vrot.slane %v2423, 4
      %v2426 = vshll.u32 %v1117, 16
      %v2428 = vrot.slane %v2426, 5
      %v2429 = vor.u32 %v2425, %v2428
      %v2430 = vrot.slane %v2429, 4
      %v2432 = vshll.u32 %v1118, 16
      %v2434 = vrot.slane %v2432, 5
      %v2435 = vsel %vm1549, %v2430, %v2434
      %v2436 = vshrl.u32 %v1118, 16
      %v2438 = vrot.slane %v2436, 4
      %v2439 = vor.u32 %v2438, %v2434
      %v2440 = vrot.slane %v2439, 4
      %v2442 = vshll.u32 %v2337, 16
      %v2444 = vrot.slane %v2442, 5
      %v2445 = vsel %vm1549, %v2440, %v2444
      %v2447 = vshrl.u32 %v1119, 16
      %v2449 = vrot.slane %v2447, 4
      %v2450 = vshll.u32 %v1119, 16
      %v2452 = vrot.slane %v2450, 5
      %v2453 = vor.u32 %v2449, %v2452
      %v2454 = vrot.slane %v2453, 4
      %v2456 = vshll.u32 %v1120, 16
      %v2458 = vrot.slane %v2456, 5
      %v2459 = vsel %vm1549, %v2454, %v2458
      %v2460 = vshrl.u32 %v1120, 16
      %v2462 = vrot.slane %v2460, 4
      %v2463 = vor.u32 %v2462, %v2458
      %v2464 = vrot.slane %v2463, 4
      %v2466 = vshll.u32 %v2338, 16
      %v2468 = vrot.slane %v2466, 5
      %v2469 = vsel %vm1549, %v2464, %v2468
      %v2471 = vshrl.u32 %v1121, 16
      %v2473 = vrot.slane %v2471, 4
      %v2474 = vshll.u32 %v1121, 16
      %v2476 = vrot.slane %v2474, 5
      %v2477 = vor.u32 %v2473, %v2476
      %v2478 = vrot.slane %v2477, 4
      %v2480 = vshll.u32 %v1122, 16
      %v2482 = vrot.slane %v2480, 5
      %v2483 = vsel %vm1549, %v2478, %v2482
      %v2484 = vshrl.u32 %v1122, 16
      %v2486 = vrot.slane %v2484, 4
      %v2487 = vor.u32 %v2486, %v2482
      %v2488 = vrot.slane %v2487, 4
      %v2490 = vshll.u32 %v2339, 16
      %v2492 = vrot.slane %v2490, 5
      %v2493 = vsel %vm1549, %v2488, %v2492
      %v2495 = vshrl.u32 %v1123, 16
      %v2497 = vrot.slane %v2495, 4
      %v2498 = vshll.u32 %v1123, 16
      %v2500 = vrot.slane %v2498, 5
      %v2501 = vor.u32 %v2497, %v2500
      %v2502 = vrot.slane %v2501, 4
      %v2504 = vshll.u32 %v1124, 16
      %v2506 = vrot.slane %v2504, 5
      %v2507 = vsel %vm1549, %v2502, %v2506
      %v2508 = vshrl.u32 %v1124, 16
      %v2510 = vrot.slane %v2508, 4
      %v2511 = vor.u32 %v2510, %v2506
      %v2512 = vrot.slane %v2511, 4
      %v2514 = vshll.u32 %v2340, 16
      %v2516 = vrot.slane %v2514, 5
      %v2517 = vsel %vm1549, %v2512, %v2516
      %v2519 = vshrl.u32 %v1125, 16
      %v2521 = vrot.slane %v2519, 4
      %v2522 = vshll.u32 %v1125, 16
      %v2524 = vrot.slane %v2522, 5
      %v2525 = vor.u32 %v2521, %v2524
      %v2526 = vrot.slane %v2525, 4
      %v2528 = vshll.u32 %v1126, 16
      %v2530 = vrot.slane %v2528, 5
      %v2531 = vsel %vm1549, %v2526, %v2530
      %v2532 = vshrl.u32 %v1126, 16
      %v2534 = vrot.slane %v2532, 4
      %v2535 = vor.u32 %v2534, %v2530
      %v2536 = vrot.slane %v2535, 4
      %v2538 = vshll.u32 %v2341, 16
      %v2540 = vrot.slane %v2538, 5
      %v2541 = vsel %vm1549, %v2536, %v2540
      %v2543 = vshrl.u32 %v1127, 16
      %v2545 = vrot.slane %v2543, 4
      %v2546 = vshll.u32 %v1127, 16
      %v2548 = vrot.slane %v2546, 5
      %v2549 = vor.u32 %v2545, %v2548
      %v2550 = vrot.slane %v2549, 4
      %v2552 = vshll.u32 %v1128, 16
      %v2554 = vrot.slane %v2552, 5
      %v2555 = vsel %vm1549, %v2550, %v2554
      %v2556 = vshrl.u32 %v1128, 16
      %v2558 = vrot.slane %v2556, 4
      %v2559 = vor.u32 %v2558, %v2554
      %v2560 = vrot.slane %v2559, 4
      %v2562 = vshll.u32 %v2342, 16
      %v2564 = vrot.slane %v2562, 5
      %v2565 = vsel %vm1549, %v2560, %v2564
      %v2567 = vshrl.u32 %v1129, 16
      %v2569 = vrot.slane %v2567, 4
      %v2570 = vshll.u32 %v1129, 16
      %v2572 = vrot.slane %v2570, 5
      %v2573 = vor.u32 %v2569, %v2572
      %v2574 = vrot.slane %v2573, 4
      %v2576 = vshll.u32 %v1130, 16
      %v2578 = vrot.slane %v2576, 5
      %v2579 = vsel %vm1549, %v2574, %v2578
      %v2580 = vshrl.u32 %v1130, 16
      %v2582 = vrot.slane %v2580, 4
      %v2583 = vor.u32 %v2582, %v2578
      %v2584 = vrot.slane %v2583, 4
      %v2586 = vshll.u32 %v2343, 16
      %v2588 = vrot.slane %v2586, 5
      %v2589 = vsel %vm1549, %v2584, %v2588
      %v2591 = vshrl.u32 %v1131, 16
      %v2593 = vrot.slane %v2591, 4
      %v2594 = vshll.u32 %v1131, 16
      %v2596 = vrot.slane %v2594, 5
      %v2597 = vor.u32 %v2593, %v2596
      %v2598 = vrot.slane %v2597, 4
      %v2600 = vshll.u32 %v1132, 16
      %v2602 = vrot.slane %v2600, 5
      %v2603 = vsel %vm1549, %v2598, %v2602
      %v2604 = vshrl.u32 %v1132, 16
      %v2606 = vrot.slane %v2604, 4
      %v2607 = vor.u32 %v2606, %v2602
      %v2608 = vrot.slane %v2607, 4
      %v2610 = vshll.u32 %v2344, 16
      %v2612 = vrot.slane %v2610, 5
      %v2613 = vsel %vm1549, %v2608, %v2612
      %v2615 = vshrl.u32 %v1133, 16
      %v2617 = vrot.slane %v2615, 4
      %v2618 = vshll.u32 %v1133, 16
      %v2620 = vrot.slane %v2618, 5
      %v2621 = vor.u32 %v2617, %v2620
      %v2622 = vrot.slane %v2621, 4
      %v2624 = vshll.u32 %v1134, 16
      %v2626 = vrot.slane %v2624, 5
      %v2627 = vsel %vm1549, %v2622, %v2626
      %v2628 = vshrl.u32 %v1134, 16
      %v2630 = vrot.slane %v2628, 4
      %v2631 = vor.u32 %v2630, %v2626
      %v2632 = vrot.slane %v2631, 4
      %v2634 = vshll.u32 %v2345, 16
      %v2636 = vrot.slane %v2634, 5
      %v2637 = vsel %vm1549, %v2632, %v2636
      %v2639 = vshrl.u32 %v1135, 16
      %v2641 = vrot.slane %v2639, 4
      %v2642 = vshll.u32 %v1135, 16
      %v2644 = vrot.slane %v2642, 5
      %v2645 = vor.u32 %v2641, %v2644
      %v2646 = vrot.slane %v2645, 4
      %v2648 = vshll.u32 %v1136, 16
      %v2650 = vrot.slane %v2648, 5
      %v2651 = vsel %vm1549, %v2646, %v2650
      %v2652 = vshrl.u32 %v1136, 16
      %v2654 = vrot.slane %v2652, 4
      %v2655 = vor.u32 %v2654, %v2650
      %v2656 = vrot.slane %v2655, 4
      %v2658 = vshll.u32 %v2346, 16
      %v2660 = vrot.slane %v2658, 5
      %v2661 = vsel %vm1549, %v2656, %v2660
      %v2663 = vshrl.u32 %v1137, 16
      %v2665 = vrot.slane %v2663, 4
      %v2666 = vshll.u32 %v1137, 16
      %v2668 = vrot.slane %v2666, 5
      %v2669 = vor.u32 %v2665, %v2668
      %v2670 = vrot.slane %v2669, 4
      %v2672 = vshll.u32 %v1138, 16
      %v2674 = vrot.slane %v2672, 5
      %v2675 = vsel %vm1549, %v2670, %v2674
      %v2676 = vshrl.u32 %v1138, 16
      %v2678 = vrot.slane %v2676, 4
      %v2679 = vor.u32 %v2678, %v2674
      %v2680 = vrot.slane %v2679, 4
      %v2682 = vshll.u32 %v2347, 16
      %v2684 = vrot.slane %v2682, 5
      %v2685 = vsel %vm1549, %v2680, %v2684
      %v2687 = vshrl.u32 %v1139, 16
      %v2689 = vrot.slane %v2687, 4
      %v2690 = vshll.u32 %v1139, 16
      %v2692 = vrot.slane %v2690, 5
      %v2693 = vor.u32 %v2689, %v2692
      %v2694 = vrot.slane %v2693, 4
      %v2696 = vshll.u32 %v1140, 16
      %v2698 = vrot.slane %v2696, 5
      %v2699 = vsel %vm1549, %v2694, %v2698
      %v2700 = vshrl.u32 %v1140, 16
      %v2702 = vrot.slane %v2700, 4
      %v2703 = vor.u32 %v2702, %v2698
      %v2704 = vrot.slane %v2703, 4
      %v2706 = vshll.u32 %v2348, 16
      %v2708 = vrot.slane %v2706, 5
      %v2709 = vsel %vm1549, %v2704, %v2708
      %v2711 = vshrl.u32 %v1141, 16
      %v2713 = vrot.slane %v2711, 4
      %v2714 = vshll.u32 %v1141, 16
      %v2716 = vrot.slane %v2714, 5
      %v2717 = vor.u32 %v2713, %v2716
      %v2718 = vrot.slane %v2717, 4
      %v2720 = vshll.u32 %v1142, 16
      %v2722 = vrot.slane %v2720, 5
      %v2723 = vsel %vm1549, %v2718, %v2722
      %v2724 = vshrl.u32 %v1142, 16
      %v2726 = vrot.slane %v2724, 4
      %v2727 = vor.u32 %v2726, %v2722
      %v2728 = vrot.slane %v2727, 4
      %v2730 = vshll.u32 %v2349, 16
      %v2732 = vrot.slane %v2730, 5
      %v2733 = vsel %vm1549, %v2728, %v2732
      %v2734 = vunpack.c.l.b16 %v1563
      %v2735 = vunpack.c.l.b16 %v1573
      %v2736 = vunpack.c.l.b16 %v1587
      %v2737 = vunpack.c.l.b16 %v1597
      %v2738 = vunpack.c.l.b16 %v1611
      %v2739 = vunpack.c.l.b16 %v1621
      %v2740 = vunpack.c.l.b16 %v1635
      %v2741 = vunpack.c.l.b16 %v1645
      %v2742 = vunpack.c.l.b16 %v1659
      %v2743 = vunpack.c.l.b16 %v1669
      %v2744 = vunpack.c.l.b16 %v1683
      %v2745 = vunpack.c.l.b16 %v1693
      %v2746 = vunpack.c.l.b16 %v1707
      %v2747 = vunpack.c.l.b16 %v1717
      %v2748 = vunpack.c.l.b16 %v1731
      %v2749 = vunpack.c.l.b16 %v1741
      %v2750 = vunpack.c.l.b16 %v1755
      %v2751 = vunpack.c.l.b16 %v1765
      %v2752 = vunpack.c.l.b16 %v1779
      %v2753 = vunpack.c.l.b16 %v1789
      %v2754 = vunpack.c.l.b16 %v1803
      %v2755 = vunpack.c.l.b16 %v1813
      %v2756 = vunpack.c.l.b16 %v1827
      %v2757 = vunpack.c.l.b16 %v1837
      %v2758 = vunpack.c.l.b16 %v1851
      %v2759 = vunpack.c.l.b16 %v1861
      %v2760 = vunpack.c.l.b16 %v1875
      %v2761 = vunpack.c.l.b16 %v1885
      %v2762 = vunpack.c.l.b16 %v1899
      %v2763 = vunpack.c.l.b16 %v1909
      %v2764 = vunpack.c.l.b16 %v1923
      %v2765 = vunpack.c.l.b16 %v1933
      %v2766 = vpack.c.b16 %v2735, %v2734
      %v2767 = vpack.c.b16 %v2737, %v2736
      %v2768 = vpack.c.b16 %v2739, %v2738
      %v2769 = vpack.c.b16 %v2741, %v2740
      %v2770 = vpack.c.b16 %v2743, %v2742
      %v2771 = vpack.c.b16 %v2745, %v2744
      %v2772 = vpack.c.b16 %v2747, %v2746
      %v2773 = vpack.c.b16 %v2749, %v2748
      %v2774 = vpack.c.b16 %v2751, %v2750
      %v2775 = vpack.c.b16 %v2753, %v2752
      %v2776 = vpack.c.b16 %v2755, %v2754
      %v2777 = vpack.c.b16 %v2757, %v2756
      %v2778 = vpack.c.b16 %v2759, %v2758
      %v2779 = vpack.c.b16 %v2761, %v2760
      %v2780 = vpack.c.b16 %v2763, %v2762
      %v2781 = vpack.c.b16 %v2765, %v2764
      %v2782 = vunpack.c.l.b16 %v1963
      %v2783 = vunpack.c.l.b16 %v1973
      %v2784 = vunpack.c.l.b16 %v1987
      %v2785 = vunpack.c.l.b16 %v1997
      %v2786 = vunpack.c.l.b16 %v2011
      %v2787 = vunpack.c.l.b16 %v2021
      %v2788 = vunpack.c.l.b16 %v2035
      %v2789 = vunpack.c.l.b16 %v2045
      %v2790 = vunpack.c.l.b16 %v2059
      %v2791 = vunpack.c.l.b16 %v2069
      %v2792 = vunpack.c.l.b16 %v2083
      %v2793 = vunpack.c.l.b16 %v2093
      %v2794 = vunpack.c.l.b16 %v2107
      %v2795 = vunpack.c.l.b16 %v2117
      %v2796 = vunpack.c.l.b16 %v2131
      %v2797 = vunpack.c.l.b16 %v2141
      %v2798 = vunpack.c.l.b16 %v2155
      %v2799 = vunpack.c.l.b16 %v2165
      %v2800 = vunpack.c.l.b16 %v2179
      %v2801 = vunpack.c.l.b16 %v2189
      %v2802 = vunpack.c.l.b16 %v2203
      %v2803 = vunpack.c.l.b16 %v2213
      %v2804 = vunpack.c.l.b16 %v2227
      %v2805 = vunpack.c.l.b16 %v2237
      %v2806 = vunpack.c.l.b16 %v2251
      %v2807 = vunpack.c.l.b16 %v2261
      %v2808 = vunpack.c.l.b16 %v2275
      %v2809 = vunpack.c.l.b16 %v2285
      %v2810 = vunpack.c.l.b16 %v2299
      %v2811 = vunpack.c.l.b16 %v2309
      %v2812 = vunpack.c.l.b16 %v2323
      %v2813 = vunpack.c.l.b16 %v2333
      %v2814 = vpack.c.b16 %v2783, %v2782
      %v2815 = vpack.c.b16 %v2785, %v2784
      %v2816 = vpack.c.b16 %v2787, %v2786
      %v2817 = vpack.c.b16 %v2789, %v2788
      %v2818 = vpack.c.b16 %v2791, %v2790
      %v2819 = vpack.c.b16 %v2793, %v2792
      %v2820 = vpack.c.b16 %v2795, %v2794
      %v2821 = vpack.c.b16 %v2797, %v2796
      %v2822 = vpack.c.b16 %v2799, %v2798
      %v2823 = vpack.c.b16 %v2801, %v2800
      %v2824 = vpack.c.b16 %v2803, %v2802
      %v2825 = vpack.c.b16 %v2805, %v2804
      %v2826 = vpack.c.b16 %v2807, %v2806
      %v2827 = vpack.c.b16 %v2809, %v2808
      %v2828 = vpack.c.b16 %v2811, %v2810
      %v2829 = vpack.c.b16 %v2813, %v2812
      %2830 = vrot.lane.b32.xlu0 %v2814, 4
      %v2831 = vpop.permute.xlu0 %2830
      %2832 = vrot.lane.b32.xlu0 %v2815, 4
      %v2833 = vpop.permute.xlu0 %2832
      %2834 = vrot.lane.b32.xlu0 %v2816, 4
      %v2835 = vpop.permute.xlu0 %2834
      %2836 = vrot.lane.b32.xlu0 %v2817, 4
      %v2837 = vpop.permute.xlu0 %2836
      %2838 = vrot.lane.b32.xlu0 %v2818, 4
      %v2839 = vpop.permute.xlu0 %2838
      %2840 = vrot.lane.b32.xlu0 %v2819, 4
      %v2841 = vpop.permute.xlu0 %2840
      %2842 = vrot.lane.b32.xlu0 %v2820, 4
      %v2843 = vpop.permute.xlu0 %2842
      %2844 = vrot.lane.b32.xlu0 %v2821, 4
      %v2845 = vpop.permute.xlu0 %2844
      %2846 = vrot.lane.b32.xlu0 %v2822, 4
      %v2847 = vpop.permute.xlu0 %2846
      %2848 = vrot.lane.b32.xlu0 %v2823, 4
      %v2849 = vpop.permute.xlu0 %2848
      %2850 = vrot.lane.b32.xlu0 %v2824, 4
      %v2851 = vpop.permute.xlu0 %2850
      %2852 = vrot.lane.b32.xlu0 %v2825, 4
      %v2853 = vpop.permute.xlu0 %2852
      %2854 = vrot.lane.b32.xlu0 %v2826, 4
      %v2855 = vpop.permute.xlu0 %2854
      %2856 = vrot.lane.b32.xlu0 %v2827, 4
      %v2857 = vpop.permute.xlu0 %2856
      %2858 = vrot.lane.b32.xlu0 %v2828, 4
      %v2859 = vpop.permute.xlu0 %2858
      %2860 = vrot.lane.b32.xlu0 %v2829, 4
      %v2861 = vpop.permute.xlu0 %2860
      %v2862 = vunpack.c.l.b16 %v2363
      %v2863 = vunpack.c.l.b16 %v2373
      %v2864 = vunpack.c.l.b16 %v2387
      %v2865 = vunpack.c.l.b16 %v2397
      %v2866 = vunpack.c.l.b16 %v2411
      %v2867 = vunpack.c.l.b16 %v2421
      %v2868 = vunpack.c.l.b16 %v2435
      %v2869 = vunpack.c.l.b16 %v2445
      %v2870 = vunpack.c.l.b16 %v2459
      %v2871 = vunpack.c.l.b16 %v2469
      %v2872 = vunpack.c.l.b16 %v2483
      %v2873 = vunpack.c.l.b16 %v2493
      %v2874 = vunpack.c.l.b16 %v2507
      %v2875 = vunpack.c.l.b16 %v2517
      %v2876 = vunpack.c.l.b16 %v2531
      %v2877 = vunpack.c.l.b16 %v2541
      %v2878 = vunpack.c.l.b16 %v2555
      %v2879 = vunpack.c.l.b16 %v2565
      %v2880 = vunpack.c.l.b16 %v2579
      %v2881 = vunpack.c.l.b16 %v2589
      %v2882 = vunpack.c.l.b16 %v2603
      %v2883 = vunpack.c.l.b16 %v2613
      %v2884 = vunpack.c.l.b16 %v2627
      %v2885 = vunpack.c.l.b16 %v2637
      %v2886 = vunpack.c.l.b16 %v2651
      %v2887 = vunpack.c.l.b16 %v2661
      %v2888 = vunpack.c.l.b16 %v2675
      %v2889 = vunpack.c.l.b16 %v2685
      %v2890 = vunpack.c.l.b16 %v2699
      %v2891 = vunpack.c.l.b16 %v2709
      %v2892 = vunpack.c.l.b16 %v2723
      %v2893 = vunpack.c.l.b16 %v2733
      %v2894 = vpack.c.b16 %v2863, %v2862
      %v2895 = vpack.c.b16 %v2865, %v2864
      %v2896 = vpack.c.b16 %v2867, %v2866
      %v2897 = vpack.c.b16 %v2869, %v2868
      %v2898 = vpack.c.b16 %v2871, %v2870
      %v2899 = vpack.c.b16 %v2873, %v2872
      %v2900 = vpack.c.b16 %v2875, %v2874
      %v2901 = vpack.c.b16 %v2877, %v2876
      %v2902 = vpack.c.b16 %v2879, %v2878
      %v2903 = vpack.c.b16 %v2881, %v2880
      %v2904 = vpack.c.b16 %v2883, %v2882
      %v2905 = vpack.c.b16 %v2885, %v2884
      %v2906 = vpack.c.b16 %v2887, %v2886
      %v2907 = vpack.c.b16 %v2889, %v2888
      %v2908 = vpack.c.b16 %v2891, %v2890
      %v2909 = vpack.c.b16 %v2893, %v2892
      %2910 = vrot.lane.b32.xlu0 %v2894, 8
      %v2911 = vpop.permute.xlu0 %2910
      %2912 = vrot.lane.b32.xlu0 %v2895, 8
      %v2913 = vpop.permute.xlu0 %2912
      %2914 = vrot.lane.b32.xlu0 %v2896, 8
      %v2915 = vpop.permute.xlu0 %2914
      %2916 = vrot.lane.b32.xlu0 %v2897, 8
      %v2917 = vpop.permute.xlu0 %2916
      %2918 = vrot.lane.b32.xlu0 %v2898, 8
      %v2919 = vpop.permute.xlu0 %2918
      %2920 = vrot.lane.b32.xlu0 %v2899, 8
      %v2921 = vpop.permute.xlu0 %2920
      %2922 = vrot.lane.b32.xlu0 %v2900, 8
      %v2923 = vpop.permute.xlu0 %2922
      %2924 = vrot.lane.b32.xlu0 %v2901, 8
      %v2925 = vpop.permute.xlu0 %2924
      %2926 = vrot.lane.b32.xlu0 %v2902, 8
      %v2927 = vpop.permute.xlu0 %2926
      %2928 = vrot.lane.b32.xlu0 %v2903, 8
      %v2929 = vpop.permute.xlu0 %2928
      %2930 = vrot.lane.b32.xlu0 %v2904, 8
      %v2931 = vpop.permute.xlu0 %2930
      %2932 = vrot.lane.b32.xlu0 %v2905, 8
      %v2933 = vpop.permute.xlu0 %2932
      %2934 = vrot.lane.b32.xlu0 %v2906, 8
      %v2935 = vpop.permute.xlu0 %2934
      %2936 = vrot.lane.b32.xlu0 %v2907, 8
      %v2937 = vpop.permute.xlu0 %2936
      %2938 = vrot.lane.b32.xlu0 %v2908, 8
      %v2939 = vpop.permute.xlu0 %2938
      %2940 = vrot.lane.b32.xlu0 %v2909, 8
      %v2941 = vpop.permute.xlu0 %2940
      %v2944 = vsel %vm1447, %v2766, %v2831
      %v2947 = vsel %vm1447, %v2767, %v2833
      %v2950 = vsel %vm1447, %v2768, %v2835
      %v2953 = vsel %vm1447, %v2769, %v2837
      %v2956 = vsel %vm1447, %v2770, %v2839
      %v2959 = vsel %vm1447, %v2771, %v2841
      %v2962 = vsel %vm1447, %v2772, %v2843
      %v2965 = vsel %vm1447, %v2773, %v2845
      %v2968 = vsel %vm1447, %v2774, %v2847
      %v2971 = vsel %vm1447, %v2775, %v2849
      %v2974 = vsel %vm1447, %v2776, %v2851
      %v2977 = vsel %vm1447, %v2777, %v2853
      %v2980 = vsel %vm1447, %v2778, %v2855
      %v2983 = vsel %vm1447, %v2779, %v2857
      %v2986 = vsel %vm1447, %v2780, %v2859
      %v2989 = vsel %vm1447, %v2781, %v2861
      %v2991 = vsel %vm1496, %v2944, %v2911
      %v2993 = vsel %vm1496, %v2947, %v2913
      %v2995 = vsel %vm1496, %v2950, %v2915
      %v2997 = vsel %vm1496, %v2953, %v2917
      %v2999 = vsel %vm1496, %v2956, %v2919
      %v3001 = vsel %vm1496, %v2959, %v2921
      %v3003 = vsel %vm1496, %v2962, %v2923
      %v3005 = vsel %vm1496, %v2965, %v2925
      %v3007 = vsel %vm1496, %v2968, %v2927
      %v3009 = vsel %vm1496, %v2971, %v2929
      %v3011 = vsel %vm1496, %v2974, %v2931
      %v3013 = vsel %vm1496, %v2977, %v2933
      %v3015 = vsel %vm1496, %v2980, %v2935
      %v3017 = vsel %vm1496, %v2983, %v2937
      %v3019 = vsel %vm1496, %v2986, %v2939
      %v3021 = vsel %vm1496, %v2989, %v2941
      %s3022 = scalar_lea.vmem %s1, 8
      %v3023 = vld [vmem:[%s3022] sm:$0xf]
      %v3024 = vld [vmem:[%s3022 + $0x4] sm:$0x3]
      %v3027 = vunpack.c.l.b16 %v3023
      %v3028 = vunpack.c.l.b16 %v3024
      %v3029 = vpack.c.b16 %v3028, %v3027
      %vm3030 = vcmask 97280
      %v3031 = vsel %vm3030, %v2991, 0
      %v3033 = vsel %vm3030, %v2993, 0
      %v3035 = vsel %vm3030, %v2995, 0
      %v3037 = vsel %vm3030, %v2997, 0
      %v3039 = vsel %vm3030, %v2999, 0
      %v3041 = vsel %vm3030, %v3001, 0
      %v3043 = vsel %vm3030, %v3003, 0
      %v3045 = vsel %vm3030, %v3005, 0
      %v3047 = vsel %vm3030, %v3007, 0
      %v3049 = vsel %vm3030, %v3009, 0
      %v3051 = vsel %vm3030, %v3011, 0
      %v3053 = vsel %vm3030, %v3013, 0
      %v3055 = vsel %vm3030, %v3015, 0
      %v3057 = vsel %vm3030, %v3017, 0
      %v3059 = vsel %vm3030, %v3019, 0
      %v3061 = vsel %vm3030, %v3021, 0
      %vm3063 = vcmask 1045504
      %v3065 = vsel %vm3063, %v3029, 0
      %3067 = vmatprep.subr.bf16.mxu0 0
      %3068 = vmatpush1.bf16.msra.mxu0 0
      %3069 = vmatprep.subr.bf16.mxu0 0
      %3070 = vmatpush1.bf16.msra.mxu0 0
      %3071 = vmatprep.subr.bf16.mxu0 0
      %3072 = vmatpush1.bf16.msra.mxu0 0
      %3073 = vmatprep.subr.bf16.mxu0 0
      %3074 = vmatpush1.bf16.msra.mxu0 0
      %3075 = vmatprep.subr.bf16.mxu0 0
      %3076 = vmatpush1.bf16.msra.mxu0 0
      %3077 = vmatprep.subr.bf16.mxu0 0
      %3078 = vmatpush1.bf16.msra.mxu0 0
      %3079 = vmatprep.subr.bf16.mxu0 0
      %3080 = vmatpush1.bf16.msra.mxu0 0
      %3081 = vmatprep.subr.bf16.mxu0 0
      %3082 = vmatpush1.bf16.msra.mxu0 %v3065
      %3083 = vmatprep.subr.bf16.mxu0 0
      %3084 = vmatpush2.bf16.msra.mxu0 0
      %3085 = vmatprep.subr.bf16.mxu0 0
      %3086 = vmatpush2.bf16.msra.mxu0 0
      %3087 = vmatprep.subr.bf16.mxu0 0
      %3088 = vmatpush2.bf16.msra.mxu0 0
      %3089 = vmatprep.subr.bf16.mxu0 0
      %3090 = vmatpush2.bf16.msra.mxu0 0
      %3091 = vmatprep.subr.bf16.mxu0 0
      %3092 = vmatpush2.bf16.msra.mxu0 0
      %3093 = vmatprep.subr.bf16.mxu0 0
      %3094 = vmatpush2.bf16.msra.mxu0 0
      %3095 = vmatprep.subr.bf16.mxu0 0
      %3096 = vmatpush2.bf16.msra.mxu0 0
      %3097 = vmatprep.subr.bf16.mxu0 0
      %3098 = vmatpush2.bf16.msra.mxu0 0
      %3099 = vmatprep.mubr.bf16.mxu0 0
      %3100 = vmatmul.mubr.bf16.gmra.mxu0 %v3031
      %v3101 = vpop.f32.mrf.mxu0
      %v3102 = vadd.f32 0.0, %v3101
      %v3103 = vpop.f32.mrf.mxu0
      %v3104 = vpop.f32.mrf.mxu0
      %v3105 = vadd.f32 0.0, %v3104
      %v3106 = vpop.f32.mrf.mxu0
      %3107 = vmatprep.mubr.bf16.mxu0 0
      %3108 = vmatmul.mubr.bf16.gmra.mxu0 %v3033
      %v3109 = vpop.f32.mrf.mxu0
      %v3110 = vadd.f32 0.0, %v3109
      %v3111 = vpop.f32.mrf.mxu0
      %v3112 = vpop.f32.mrf.mxu0
      %v3113 = vadd.f32 0.0, %v3112
      %v3114 = vpop.f32.mrf.mxu0
      %3115 = vmatprep.mubr.bf16.mxu0 0
      %3116 = vmatmul.mubr.bf16.gmra.mxu0 %v3035
      %v3117 = vpop.f32.mrf.mxu0
      %v3118 = vadd.f32 0.0, %v3117
      %v3119 = vpop.f32.mrf.mxu0
      %v3120 = vpop.f32.mrf.mxu0
      %v3121 = vadd.f32 0.0, %v3120
      %v3122 = vpop.f32.mrf.mxu0
      %3123 = vmatprep.mubr.bf16.mxu0 0
      %3124 = vmatmul.mubr.bf16.gmra.mxu0 %v3037
      %v3125 = vpop.f32.mrf.mxu0
      %v3126 = vadd.f32 0.0, %v3125
      %v3127 = vpop.f32.mrf.mxu0
      %v3128 = vpop.f32.mrf.mxu0
      %v3129 = vadd.f32 0.0, %v3128
      %v3130 = vpop.f32.mrf.mxu0
      %3131 = vmatprep.mubr.bf16.mxu0 0
      %3132 = vmatmul.mubr.bf16.gmra.mxu0 %v3039
      %v3133 = vpop.f32.mrf.mxu0
      %v3134 = vadd.f32 0.0, %v3133
      %v3135 = vpop.f32.mrf.mxu0
      %v3136 = vpop.f32.mrf.mxu0
      %v3137 = vadd.f32 0.0, %v3136
      %v3138 = vpop.f32.mrf.mxu0
      %3139 = vmatprep.mubr.bf16.mxu0 0
      %3140 = vmatmul.mubr.bf16.gmra.mxu0 %v3041
      %v3141 = vpop.f32.mrf.mxu0
      %v3142 = vadd.f32 0.0, %v3141
      %v3143 = vpop.f32.mrf.mxu0
      %v3144 = vpop.f32.mrf.mxu0
      %v3145 = vadd.f32 0.0, %v3144
      %v3146 = vpop.f32.mrf.mxu0
      %3147 = vmatprep.mubr.bf16.mxu0 0
      %3148 = vmatmul.mubr.bf16.gmra.mxu0 %v3043
      %v3149 = vpop.f32.mrf.mxu0
      %v3150 = vadd.f32 0.0, %v3149
      %v3151 = vpop.f32.mrf.mxu0
      %v3152 = vpop.f32.mrf.mxu0
      %v3153 = vadd.f32 0.0, %v3152
      %v3154 = vpop.f32.mrf.mxu0
      %3155 = vmatprep.mubr.bf16.mxu0 0
      %3156 = vmatmul.mubr.bf16.gmra.mxu0 %v3045
      %v3157 = vpop.f32.mrf.mxu0
      %v3158 = vadd.f32 0.0, %v3157
      %v3159 = vpop.f32.mrf.mxu0
      %v3160 = vpop.f32.mrf.mxu0
      %v3161 = vadd.f32 0.0, %v3160
      %v3162 = vpop.f32.mrf.mxu0
      %3163 = vmatprep.mubr.bf16.mxu0 0
      %3164 = vmatmul.mubr.bf16.gmra.mxu0 %v3047
      %v3165 = vpop.f32.mrf.mxu0
      %v3166 = vadd.f32 0.0, %v3165
      %v3167 = vpop.f32.mrf.mxu0
      %v3168 = vpop.f32.mrf.mxu0
      %v3169 = vadd.f32 0.0, %v3168
      %v3170 = vpop.f32.mrf.mxu0
      %3171 = vmatprep.mubr.bf16.mxu0 0
      %3172 = vmatmul.mubr.bf16.gmra.mxu0 %v3049
      %v3173 = vpop.f32.mrf.mxu0
      %v3174 = vadd.f32 0.0, %v3173
      %v3175 = vpop.f32.mrf.mxu0
      %v3176 = vpop.f32.mrf.mxu0
      %v3177 = vadd.f32 0.0, %v3176
      %v3178 = vpop.f32.mrf.mxu0
      %3179 = vmatprep.mubr.bf16.mxu0 0
      %3180 = vmatmul.mubr.bf16.gmra.mxu0 %v3051
      %v3181 = vpop.f32.mrf.mxu0
      %v3182 = vadd.f32 0.0, %v3181
      %v3183 = vpop.f32.mrf.mxu0
      %v3184 = vpop.f32.mrf.mxu0
      %v3185 = vadd.f32 0.0, %v3184
      %v3186 = vpop.f32.mrf.mxu0
      %3187 = vmatprep.mubr.bf16.mxu0 0
      %3188 = vmatmul.mubr.bf16.gmra.mxu0 %v3053
      %v3189 = vpop.f32.mrf.mxu0
      %v3190 = vadd.f32 0.0, %v3189
      %v3191 = vpop.f32.mrf.mxu0
      %v3192 = vpop.f32.mrf.mxu0
      %v3193 = vadd.f32 0.0, %v3192
      %v3194 = vpop.f32.mrf.mxu0
      %3195 = vmatprep.mubr.bf16.mxu0 0
      %3196 = vmatmul.mubr.bf16.gmra.mxu0 %v3055
      %v3197 = vpop.f32.mrf.mxu0
      %v3198 = vadd.f32 0.0, %v3197
      %v3199 = vpop.f32.mrf.mxu0
      %v3200 = vpop.f32.mrf.mxu0
      %v3201 = vadd.f32 0.0, %v3200
      %v3202 = vpop.f32.mrf.mxu0
      %3203 = vmatprep.mubr.bf16.mxu0 0
      %3204 = vmatmul.mubr.bf16.gmra.mxu0 %v3057
      %v3205 = vpop.f32.mrf.mxu0
      %v3206 = vadd.f32 0.0, %v3205
      %v3207 = vpop.f32.mrf.mxu0
      %v3208 = vpop.f32.mrf.mxu0
      %v3209 = vadd.f32 0.0, %v3208
      %v3210 = vpop.f32.mrf.mxu0
      %3211 = vmatprep.mubr.bf16.mxu0 0
      %3212 = vmatmul.mubr.bf16.gmra.mxu0 %v3059
      %v3213 = vpop.f32.mrf.mxu0
      %v3214 = vadd.f32 0.0, %v3213
      %v3215 = vpop.f32.mrf.mxu0
      %v3216 = vpop.f32.mrf.mxu0
      %v3217 = vadd.f32 0.0, %v3216
      %v3218 = vpop.f32.mrf.mxu0
      %3219 = vmatprep.mubr.bf16.mxu0 0
      %3220 = vmatmul.mubr.bf16.gmra.mxu0 %v3061
      %v3221 = vpop.f32.mrf.mxu0
      %v3222 = vadd.f32 0.0, %v3221
      %v3223 = vpop.f32.mrf.mxu0
      %v3224 = vpop.f32.mrf.mxu0
      %v3225 = vadd.f32 0.0, %v3224
      %v3226 = vpop.f32.mrf.mxu0
      %3227 = vdwg.mxu0
      %v3230 = vunpack.c.l.b16 %v1529
      %v3231 = vunpack.c.l.b16 %v1530
      %v3232 = vpack.c.b16 %v3231, %v3230
      %v3233 = vsel %vm3030, %v1498, 0
      %v3235 = vsel %vm3030, %v1500, 0
      %v3237 = vsel %vm3030, %v1502, 0
      %v3239 = vsel %vm3030, %v1504, 0
      %v3241 = vsel %vm3030, %v1506, 0
      %v3243 = vsel %vm3030, %v1508, 0
      %v3245 = vsel %vm3030, %v1510, 0
      %v3247 = vsel %vm3030, %v1512, 0
      %v3249 = vsel %vm3030, %v1514, 0
      %v3251 = vsel %vm3030, %v1516, 0
      %v3253 = vsel %vm3030, %v1518, 0
      %v3255 = vsel %vm3030, %v1520, 0
      %v3257 = vsel %vm3030, %v1522, 0
      %v3259 = vsel %vm3030, %v1524, 0
      %v3261 = vsel %vm3030, %v1526, 0
      %v3263 = vsel %vm3030, %v1528, 0
      %v3266 = vsel %vm3063, %v3232, 0
      %3268 = vmatprep.subr.bf16.mxu0 0
      %3269 = vmatpush1.bf16.msra.mxu0 0
      %3270 = vmatprep.subr.bf16.mxu0 0
      %3271 = vmatpush1.bf16.msra.mxu0 0
      %3272 = vmatprep.subr.bf16.mxu0 0
      %3273 = vmatpush1.bf16.msra.mxu0 0
      %3274 = vmatprep.subr.bf16.mxu0 0
      %3275 = vmatpush1.bf16.msra.mxu0 0
      %3276 = vmatprep.subr.bf16.mxu0 0
      %3277 = vmatpush1.bf16.msra.mxu0 0
      %3278 = vmatprep.subr.bf16.mxu0 0
      %3279 = vmatpush1.bf16.msra.mxu0 0
      %3280 = vmatprep.subr.bf16.mxu0 0
      %3281 = vmatpush1.bf16.msra.mxu0 0
      %3282 = vmatprep.subr.bf16.mxu0 0
      %3283 = vmatpush1.bf16.msra.mxu0 %v3266
      %3284 = vmatprep.subr.bf16.mxu0 0
      %3285 = vmatpush2.bf16.msra.mxu0 0
      %3286 = vmatprep.subr.bf16.mxu0 0
      %3287 = vmatpush2.bf16.msra.mxu0 0
      %3288 = vmatprep.subr.bf16.mxu0 0
      %3289 = vmatpush2.bf16.msra.mxu0 0
      %3290 = vmatprep.subr.bf16.mxu0 0
      %3291 = vmatpush2.bf16.msra.mxu0 0
      %3292 = vmatprep.subr.bf16.mxu0 0
      %3293 = vmatpush2.bf16.msra.mxu0 0
      %3294 = vmatprep.subr.bf16.mxu0 0
      %3295 = vmatpush2.bf16.msra.mxu0 0
      %3296 = vmatprep.subr.bf16.mxu0 0
      %3297 = vmatpush2.bf16.msra.mxu0 0
      %3298 = vmatprep.subr.bf16.mxu0 0
      %3299 = vmatpush2.bf16.msra.mxu0 0
      %3300 = vmatprep.mubr.bf16.mxu0 0
      %3301 = vmatmul.mubr.bf16.gmra.mxu0 %v3233
      %v3302 = vpop.f32.mrf.mxu0
      %v3303 = vadd.f32 %v3102, %v3302
      %v3304 = vpop.f32.mrf.mxu0
      %v3305 = vpop.f32.mrf.mxu0
      %v3306 = vadd.f32 %v3105, %v3305
      %v3307 = vpop.f32.mrf.mxu0
      %3308 = vmatprep.mubr.bf16.mxu0 0
      %3309 = vmatmul.mubr.bf16.gmra.mxu0 %v3235
      %v3310 = vpop.f32.mrf.mxu0
      %v3311 = vadd.f32 %v3110, %v3310
      %v3312 = vpop.f32.mrf.mxu0
      %v3313 = vpop.f32.mrf.mxu0
      %v3314 = vadd.f32 %v3113, %v3313
      %v3315 = vpop.f32.mrf.mxu0
      %3316 = vmatprep.mubr.bf16.mxu0 0
      %3317 = vmatmul.mubr.bf16.gmra.mxu0 %v3237
      %v3318 = vpop.f32.mrf.mxu0
      %v3319 = vadd.f32 %v3118, %v3318
      %v3320 = vpop.f32.mrf.mxu0
      %v3321 = vpop.f32.mrf.mxu0
      %v3322 = vadd.f32 %v3121, %v3321
      %v3323 = vpop.f32.mrf.mxu0
      %3324 = vmatprep.mubr.bf16.mxu0 0
      %3325 = vmatmul.mubr.bf16.gmra.mxu0 %v3239
      %v3326 = vpop.f32.mrf.mxu0
      %v3327 = vadd.f32 %v3126, %v3326
      %v3328 = vpop.f32.mrf.mxu0
      %v3329 = vpop.f32.mrf.mxu0
      %v3330 = vadd.f32 %v3129, %v3329
      %v3331 = vpop.f32.mrf.mxu0
      %3332 = vmatprep.mubr.bf16.mxu0 0
      %3333 = vmatmul.mubr.bf16.gmra.mxu0 %v3241
      %v3334 = vpop.f32.mrf.mxu0
      %v3335 = vadd.f32 %v3134, %v3334
      %v3336 = vpop.f32.mrf.mxu0
      %v3337 = vpop.f32.mrf.mxu0
      %v3338 = vadd.f32 %v3137, %v3337
      %v3339 = vpop.f32.mrf.mxu0
      %3340 = vmatprep.mubr.bf16.mxu0 0
      %3341 = vmatmul.mubr.bf16.gmra.mxu0 %v3243
      %v3342 = vpop.f32.mrf.mxu0
      %v3343 = vadd.f32 %v3142, %v3342
      %v3344 = vpop.f32.mrf.mxu0
      %v3345 = vpop.f32.mrf.mxu0
      %v3346 = vadd.f32 %v3145, %v3345
      %v3347 = vpop.f32.mrf.mxu0
      %3348 = vmatprep.mubr.bf16.mxu0 0
      %3349 = vmatmul.mubr.bf16.gmra.mxu0 %v3245
      %v3350 = vpop.f32.mrf.mxu0
      %v3351 = vadd.f32 %v3150, %v3350
      %v3352 = vpop.f32.mrf.mxu0
      %v3353 = vpop.f32.mrf.mxu0
      %v3354 = vadd.f32 %v3153, %v3353
      %v3355 = vpop.f32.mrf.mxu0
      %3356 = vmatprep.mubr.bf16.mxu0 0
      %3357 = vmatmul.mubr.bf16.gmra.mxu0 %v3247
      %v3358 = vpop.f32.mrf.mxu0
      %v3359 = vadd.f32 %v3158, %v3358
      %v3360 = vpop.f32.mrf.mxu0
      %v3361 = vpop.f32.mrf.mxu0
      %v3362 = vadd.f32 %v3161, %v3361
      %v3363 = vpop.f32.mrf.mxu0
      %3364 = vmatprep.mubr.bf16.mxu0 0
      %3365 = vmatmul.mubr.bf16.gmra.mxu0 %v3249
      %v3366 = vpop.f32.mrf.mxu0
      %v3367 = vadd.f32 %v3166, %v3366
      %v3368 = vpop.f32.mrf.mxu0
      %v3369 = vpop.f32.mrf.mxu0
      %v3370 = vadd.f32 %v3169, %v3369
      %v3371 = vpop.f32.mrf.mxu0
      %3372 = vmatprep.mubr.bf16.mxu0 0
      %3373 = vmatmul.mubr.bf16.gmra.mxu0 %v3251
      %v3374 = vpop.f32.mrf.mxu0
      %v3375 = vadd.f32 %v3174, %v3374
      %v3376 = vpop.f32.mrf.mxu0
      %v3377 = vpop.f32.mrf.mxu0
      %v3378 = vadd.f32 %v3177, %v3377
      %v3379 = vpop.f32.mrf.mxu0
      %3380 = vmatprep.mubr.bf16.mxu0 0
      %3381 = vmatmul.mubr.bf16.gmra.mxu0 %v3253
      %v3382 = vpop.f32.mrf.mxu0
      %v3383 = vadd.f32 %v3182, %v3382
      %v3384 = vpop.f32.mrf.mxu0
      %v3385 = vpop.f32.mrf.mxu0
      %v3386 = vadd.f32 %v3185, %v3385
      %v3387 = vpop.f32.mrf.mxu0
      %3388 = vmatprep.mubr.bf16.mxu0 0
      %3389 = vmatmul.mubr.bf16.gmra.mxu0 %v3255
      %v3390 = vpop.f32.mrf.mxu0
      %v3391 = vadd.f32 %v3190, %v3390
      %v3392 = vpop.f32.mrf.mxu0
      %v3393 = vpop.f32.mrf.mxu0
      %v3394 = vadd.f32 %v3193, %v3393
      %v3395 = vpop.f32.mrf.mxu0
      %3396 = vmatprep.mubr.bf16.mxu0 0
      %3397 = vmatmul.mubr.bf16.gmra.mxu0 %v3257
      %v3398 = vpop.f32.mrf.mxu0
      %v3399 = vadd.f32 %v3198, %v3398
      %v3400 = vpop.f32.mrf.mxu0
      %v3401 = vpop.f32.mrf.mxu0
      %v3402 = vadd.f32 %v3201, %v3401
      %v3403 = vpop.f32.mrf.mxu0
      %3404 = vmatprep.mubr.bf16.mxu0 0
      %3405 = vmatmul.mubr.bf16.gmra.mxu0 %v3259
      %v3406 = vpop.f32.mrf.mxu0
      %v3407 = vadd.f32 %v3206, %v3406
      %v3408 = vpop.f32.mrf.mxu0
      %v3409 = vpop.f32.mrf.mxu0
      %v3410 = vadd.f32 %v3209, %v3409
      %v3411 = vpop.f32.mrf.mxu0
      %3412 = vmatprep.mubr.bf16.mxu0 0
      %3413 = vmatmul.mubr.bf16.gmra.mxu0 %v3261
      %v3414 = vpop.f32.mrf.mxu0
      %v3415 = vadd.f32 %v3214, %v3414
      %v3416 = vpop.f32.mrf.mxu0
      %v3417 = vpop.f32.mrf.mxu0
      %v3418 = vadd.f32 %v3217, %v3417
      %v3419 = vpop.f32.mrf.mxu0
      %3420 = vmatprep.mubr.bf16.mxu0 0
      %3421 = vmatmul.mubr.bf16.gmra.mxu0 %v3263
      %v3422 = vpop.f32.mrf.mxu0
      %v3423 = vadd.f32 %v3222, %v3422
      %v3424 = vpop.f32.mrf.mxu0
      %v3425 = vpop.f32.mrf.mxu0
      %v3426 = vadd.f32 %v3225, %v3425
      %v3427 = vpop.f32.mrf.mxu0
      %3428 = vdwg.mxu0
      %v3429 = vld [vmem:[#allocation2] sm:$0xe]
      %v3430 = vld [vmem:[#allocation2 + $0xc] sm:$0xe]
      %v3431 = vld [vmem:[#allocation2 + $0x18] sm:$0xe]
      %v3432 = vld [vmem:[#allocation2 + $0x24] sm:$0xe]
      %v3433 = vld [vmem:[#allocation2 + $0x30] sm:$0xe]
      %v3434 = vld [vmem:[#allocation2 + $0x3c] sm:$0xe]
      %v3435 = vld [vmem:[#allocation2 + $0x48] sm:$0xe]
      %v3436 = vld [vmem:[#allocation2 + $0x54] sm:$0xe]
      %v3437 = vld [vmem:[#allocation2 + $0x60] sm:$0xe]
      %v3438 = vld [vmem:[#allocation2 + $0x6c] sm:$0xe]
      %v3439 = vld [vmem:[#allocation2 + $0x78] sm:$0xe]
      %v3440 = vld [vmem:[#allocation2 + $0x84] sm:$0xe]
      %v3441 = vld [vmem:[#allocation2 + $0x90] sm:$0xe]
      %v3442 = vld [vmem:[#allocation2 + $0x9c] sm:$0xe]
      %v3443 = vld [vmem:[#allocation2 + $0xa8] sm:$0xe]
      %v3444 = vld [vmem:[#allocation2 + $0xb4] sm:$0xe]
      %vm3477 = vcmask 1042432
      %vm3478 = vcmask 1046532
      %vm3479 = vmor %vm3477, %vm3478
      %v3480 = vrot.slane %v3429, 5
      %v3481 = vrot.slane %v3480, 4
      %v3482 = vrot.slane %v1047, 5
      %v3483 = vsel %vm3479, %v3481, %v3482
      %v3484 = vrot.slane %v3482, 4
      %v3485 = vrot.slane %v1531, 5
      %v3486 = vsel %vm3479, %v3484, %v3485
      %v3487 = vrot.slane %v3430, 5
      %v3488 = vrot.slane %v3487, 4
      %v3489 = vrot.slane %v1049, 5
      %v3490 = vsel %vm3479, %v3488, %v3489
      %v3491 = vrot.slane %v3489, 4
      %v3492 = vrot.slane %v1532, 5
      %v3493 = vsel %vm3479, %v3491, %v3492
      %v3494 = vrot.slane %v3431, 5
      %v3495 = vrot.slane %v3494, 4
      %v3496 = vrot.slane %v1051, 5
      %v3497 = vsel %vm3479, %v3495, %v3496
      %v3498 = vrot.slane %v3496, 4
      %v3499 = vrot.slane %v1533, 5
      %v3500 = vsel %vm3479, %v3498, %v3499
      %v3501 = vrot.slane %v3432, 5
      %v3502 = vrot.slane %v3501, 4
      %v3503 = vrot.slane %v1053, 5
      %v3504 = vsel %vm3479, %v3502, %v3503
      %v3505 = vrot.slane %v3503, 4
      %v3506 = vrot.slane %v1534, 5
      %v3507 = vsel %vm3479, %v3505, %v3506
      %v3508 = vrot.slane %v3433, 5
      %v3509 = vrot.slane %v3508, 4
      %v3510 = vrot.slane %v1055, 5
      %v3511 = vsel %vm3479, %v3509, %v3510
      %v3512 = vrot.slane %v3510, 4
      %v3513 = vrot.slane %v1535, 5
      %v3514 = vsel %vm3479, %v3512, %v3513
      %v3515 = vrot.slane %v3434, 5
      %v3516 = vrot.slane %v3515, 4
      %v3517 = vrot.slane %v1057, 5
      %v3518 = vsel %vm3479, %v3516, %v3517
      %v3519 = vrot.slane %v3517, 4
      %v3520 = vrot.slane %v1536, 5
      %v3521 = vsel %vm3479, %v3519, %v3520
      %v3522 = vrot.slane %v3435, 5
      %v3523 = vrot.slane %v3522, 4
      %v3524 = vrot.slane %v1059, 5
      %v3525 = vsel %vm3479, %v3523, %v3524
      %v3526 = vrot.slane %v3524, 4
      %v3527 = vrot.slane %v1537, 5
      %v3528 = vsel %vm3479, %v3526, %v3527
      %v3529 = vrot.slane %v3436, 5
      %v3530 = vrot.slane %v3529, 4
      %v3531 = vrot.slane %v1061, 5
      %v3532 = vsel %vm3479, %v3530, %v3531
      %v3533 = vrot.slane %v3531, 4
      %v3534 = vrot.slane %v1538, 5
      %v3535 = vsel %vm3479, %v3533, %v3534
      %v3536 = vrot.slane %v3437, 5
      %v3537 = vrot.slane %v3536, 4
      %v3538 = vrot.slane %v1063, 5
      %v3539 = vsel %vm3479, %v3537, %v3538
      %v3540 = vrot.slane %v3538, 4
      %v3541 = vrot.slane %v1539, 5
      %v3542 = vsel %vm3479, %v3540, %v3541
      %v3543 = vrot.slane %v3438, 5
      %v3544 = vrot.slane %v3543, 4
      %v3545 = vrot.slane %v1065, 5
      %v3546 = vsel %vm3479, %v3544, %v3545
      %v3547 = vrot.slane %v3545, 4
      %v3548 = vrot.slane %v1540, 5
      %v3549 = vsel %vm3479, %v3547, %v3548
      %v3550 = vrot.slane %v3439, 5
      %v3551 = vrot.slane %v3550, 4
      %v3552 = vrot.slane %v1067, 5
      %v3553 = vsel %vm3479, %v3551, %v3552
      %v3554 = vrot.slane %v3552, 4
      %v3555 = vrot.slane %v1541, 5
      %v3556 = vsel %vm3479, %v3554, %v3555
      %v3557 = vrot.slane %v3440, 5
      %v3558 = vrot.slane %v3557, 4
      %v3559 = vrot.slane %v1069, 5
      %v3560 = vsel %vm3479, %v3558, %v3559
      %v3561 = vrot.slane %v3559, 4
      %v3562 = vrot.slane %v1542, 5
      %v3563 = vsel %vm3479, %v3561, %v3562
      %v3564 = vrot.slane %v3441, 5
      %v3565 = vrot.slane %v3564, 4
      %v3566 = vrot.slane %v1071, 5
      %v3567 = vsel %vm3479, %v3565, %v3566
      %v3568 = vrot.slane %v3566, 4
      %v3569 = vrot.slane %v1543, 5
      %v3570 = vsel %vm3479, %v3568, %v3569
      %v3571 = vrot.slane %v3442, 5
      %v3572 = vrot.slane %v3571, 4
      %v3573 = vrot.slane %v1073, 5
      %v3574 = vsel %vm3479, %v3572, %v3573
      %v3575 = vrot.slane %v3573, 4
      %v3576 = vrot.slane %v1544, 5
      %v3577 = vsel %vm3479, %v3575, %v3576
      %v3578 = vrot.slane %v3443, 5
      %v3579 = vrot.slane %v3578, 4
      %v3580 = vrot.slane %v1075, 5
      %v3581 = vsel %vm3479, %v3579, %v3580
      %v3582 = vrot.slane %v3580, 4
      %v3583 = vrot.slane %v1545, 5
      %v3584 = vsel %vm3479, %v3582, %v3583
      %v3585 = vrot.slane %v3444, 5
      %v3586 = vrot.slane %v3585, 4
      %v3587 = vrot.slane %v1077, 5
      %v3588 = vsel %vm3479, %v3586, %v3587
      %v3589 = vrot.slane %v3587, 4
      %v3590 = vrot.slane %v1546, 5
      %v3591 = vsel %vm3479, %v3589, %v3590
      %v3592 = vld [vmem:[%s623] sm:$0xe]
      %v3593 = vld [vmem:[%s623 + $0xc] sm:$0xe]
      %v3594 = vld [vmem:[%s623 + $0x18] sm:$0xe]
      %v3595 = vld [vmem:[%s623 + $0x24] sm:$0xe]
      %v3596 = vld [vmem:[%s623 + $0x30] sm:$0xe]
      %v3597 = vld [vmem:[%s623 + $0x3c] sm:$0xe]
      %v3598 = vld [vmem:[%s623 + $0x48] sm:$0xe]
      %v3599 = vld [vmem:[%s623 + $0x54] sm:$0xe]
      %v3600 = vld [vmem:[%s623 + $0x60] sm:$0xe]
      %v3601 = vld [vmem:[%s623 + $0x6c] sm:$0xe]
      %v3602 = vld [vmem:[%s623 + $0x78] sm:$0xe]
      %v3603 = vld [vmem:[%s623 + $0x84] sm:$0xe]
      %v3604 = vld [vmem:[%s623 + $0x90] sm:$0xe]
      %v3605 = vld [vmem:[%s623 + $0x9c] sm:$0xe]
      %v3606 = vld [vmem:[%s623 + $0xa8] sm:$0xe]
      %v3607 = vld [vmem:[%s623 + $0xb4] sm:$0xe]
      %v3640 = vrot.slane %v3592, 5
      %v3641 = vrot.slane %v3640, 4
      %v3642 = vrot.slane %v1079, 5
      %v3643 = vsel %vm3479, %v3641, %v3642
      %v3644 = vrot.slane %v3642, 4
      %v3645 = vrot.slane %v1934, 5
      %v3646 = vsel %vm3479, %v3644, %v3645
      %v3647 = vrot.slane %v3593, 5
      %v3648 = vrot.slane %v3647, 4
      %v3649 = vrot.slane %v1081, 5
      %v3650 = vsel %vm3479, %v3648, %v3649
      %v3651 = vrot.slane %v3649, 4
      %v3652 = vrot.slane %v1935, 5
      %v3653 = vsel %vm3479, %v3651, %v3652
      %v3654 = vrot.slane %v3594, 5
      %v3655 = vrot.slane %v3654, 4
      %v3656 = vrot.slane %v1083, 5
      %v3657 = vsel %vm3479, %v3655, %v3656
      %v3658 = vrot.slane %v3656, 4
      %v3659 = vrot.slane %v1936, 5
      %v3660 = vsel %vm3479, %v3658, %v3659
      %v3661 = vrot.slane %v3595, 5
      %v3662 = vrot.slane %v3661, 4
      %v3663 = vrot.slane %v1085, 5
      %v3664 = vsel %vm3479, %v3662, %v3663
      %v3665 = vrot.slane %v3663, 4
      %v3666 = vrot.slane %v1937, 5
      %v3667 = vsel %vm3479, %v3665, %v3666
      %v3668 = vrot.slane %v3596, 5
      %v3669 = vrot.slane %v3668, 4
      %v3670 = vrot.slane %v1087, 5
      %v3671 = vsel %vm3479, %v3669, %v3670
      %v3672 = vrot.slane %v3670, 4
      %v3673 = vrot.slane %v1938, 5
      %v3674 = vsel %vm3479, %v3672, %v3673
      %v3675 = vrot.slane %v3597, 5
      %v3676 = vrot.slane %v3675, 4
      %v3677 = vrot.slane %v1089, 5
      %v3678 = vsel %vm3479, %v3676, %v3677
      %v3679 = vrot.slane %v3677, 4
      %v3680 = vrot.slane %v1939, 5
      %v3681 = vsel %vm3479, %v3679, %v3680
      %v3682 = vrot.slane %v3598, 5
      %v3683 = vrot.slane %v3682, 4
      %v3684 = vrot.slane %v1091, 5
      %v3685 = vsel %vm3479, %v3683, %v3684
      %v3686 = vrot.slane %v3684, 4
      %v3687 = vrot.slane %v1940, 5
      %v3688 = vsel %vm3479, %v3686, %v3687
      %v3689 = vrot.slane %v3599, 5
      %v3690 = vrot.slane %v3689, 4
      %v3691 = vrot.slane %v1093, 5
      %v3692 = vsel %vm3479, %v3690, %v3691
      %v3693 = vrot.slane %v3691, 4
      %v3694 = vrot.slane %v1941, 5
      %v3695 = vsel %vm3479, %v3693, %v3694
      %v3696 = vrot.slane %v3600, 5
      %v3697 = vrot.slane %v3696, 4
      %v3698 = vrot.slane %v1095, 5
      %v3699 = vsel %vm3479, %v3697, %v3698
      %v3700 = vrot.slane %v3698, 4
      %v3701 = vrot.slane %v1942, 5
      %v3702 = vsel %vm3479, %v3700, %v3701
      %v3703 = vrot.slane %v3601, 5
      %v3704 = vrot.slane %v3703, 4
      %v3705 = vrot.slane %v1097, 5
      %v3706 = vsel %vm3479, %v3704, %v3705
      %v3707 = vrot.slane %v3705, 4
      %v3708 = vrot.slane %v1943, 5
      %v3709 = vsel %vm3479, %v3707, %v3708
      %v3710 = vrot.slane %v3602, 5
      %v3711 = vrot.slane %v3710, 4
      %v3712 = vrot.slane %v1099, 5
      %v3713 = vsel %vm3479, %v3711, %v3712
      %v3714 = vrot.slane %v3712, 4
      %v3715 = vrot.slane %v1944, 5
      %v3716 = vsel %vm3479, %v3714, %v3715
      %v3717 = vrot.slane %v3603, 5
      %v3718 = vrot.slane %v3717, 4
      %v3719 = vrot.slane %v1101, 5
      %v3720 = vsel %vm3479, %v3718, %v3719
      %v3721 = vrot.slane %v3719, 4
      %v3722 = vrot.slane %v1945, 5
      %v3723 = vsel %vm3479, %v3721, %v3722
      %v3724 = vrot.slane %v3604, 5
      %v3725 = vrot.slane %v3724, 4
      %v3726 = vrot.slane %v1103, 5
      %v3727 = vsel %vm3479, %v3725, %v3726
      %v3728 = vrot.slane %v3726, 4
      %v3729 = vrot.slane %v1946, 5
      %v3730 = vsel %vm3479, %v3728, %v3729
      %v3731 = vrot.slane %v3605, 5
      %v3732 = vrot.slane %v3731, 4
      %v3733 = vrot.slane %v1105, 5
      %v3734 = vsel %vm3479, %v3732, %v3733
      %v3735 = vrot.slane %v3733, 4
      %v3736 = vrot.slane %v1947, 5
      %v3737 = vsel %vm3479, %v3735, %v3736
      %v3738 = vrot.slane %v3606, 5
      %v3739 = vrot.slane %v3738, 4
      %v3740 = vrot.slane %v1107, 5
      %v3741 = vsel %vm3479, %v3739, %v3740
      %v3742 = vrot.slane %v3740, 4
      %v3743 = vrot.slane %v1948, 5
      %v3744 = vsel %vm3479, %v3742, %v3743
      %v3745 = vrot.slane %v3607, 5
      %v3746 = vrot.slane %v3745, 4
      %v3747 = vrot.slane %v1109, 5
      %v3748 = vsel %vm3479, %v3746, %v3747
      %v3749 = vrot.slane %v3747, 4
      %v3750 = vrot.slane %v1949, 5
      %v3751 = vsel %vm3479, %v3749, %v3750
      %v3752 = vld [vmem:[%s1110] sm:$0xe]
      %v3753 = vld [vmem:[%s1110 + $0xc] sm:$0xe]
      %v3754 = vld [vmem:[%s1110 + $0x18] sm:$0xe]
      %v3755 = vld [vmem:[%s1110 + $0x24] sm:$0xe]
      %v3756 = vld [vmem:[%s1110 + $0x30] sm:$0xe]
      %v3757 = vld [vmem:[%s1110 + $0x3c] sm:$0xe]
      %v3758 = vld [vmem:[%s1110 + $0x48] sm:$0xe]
      %v3759 = vld [vmem:[%s1110 + $0x54] sm:$0xe]
      %v3760 = vld [vmem:[%s1110 + $0x60] sm:$0xe]
      %v3761 = vld [vmem:[%s1110 + $0x6c] sm:$0xe]
      %v3762 = vld [vmem:[%s1110 + $0x78] sm:$0xe]
      %v3763 = vld [vmem:[%s1110 + $0x84] sm:$0xe]
      %v3764 = vld [vmem:[%s1110 + $0x90] sm:$0xe]
      %v3765 = vld [vmem:[%s1110 + $0x9c] sm:$0xe]
      %v3766 = vld [vmem:[%s1110 + $0xa8] sm:$0xe]
      %v3767 = vld [vmem:[%s1110 + $0xb4] sm:$0xe]
      %v3800 = vrot.slane %v3752, 5
      %v3801 = vrot.slane %v3800, 4
      %v3802 = vrot.slane %v1112, 5
      %v3803 = vsel %vm3479, %v3801, %v3802
      %v3804 = vrot.slane %v3802, 4
      %v3805 = vrot.slane %v2334, 5
      %v3806 = vsel %vm3479, %v3804, %v3805
      %v3807 = vrot.slane %v3753, 5
      %v3808 = vrot.slane %v3807, 4
      %v3809 = vrot.slane %v1114, 5
      %v3810 = vsel %vm3479, %v3808, %v3809
      %v3811 = vrot.slane %v3809, 4
      %v3812 = vrot.slane %v2335, 5
      %v3813 = vsel %vm3479, %v3811, %v3812
      %v3814 = vrot.slane %v3754, 5
      %v3815 = vrot.slane %v3814, 4
      %v3816 = vrot.slane %v1116, 5
      %v3817 = vsel %vm3479, %v3815, %v3816
      %v3818 = vrot.slane %v3816, 4
      %v3819 = vrot.slane %v2336, 5
      %v3820 = vsel %vm3479, %v3818, %v3819
      %v3821 = vrot.slane %v3755, 5
      %v3822 = vrot.slane %v3821, 4
      %v3823 = vrot.slane %v1118, 5
      %v3824 = vsel %vm3479, %v3822, %v3823
      %v3825 = vrot.slane %v3823, 4
      %v3826 = vrot.slane %v2337, 5
      %v3827 = vsel %vm3479, %v3825, %v3826
      %v3828 = vrot.slane %v3756, 5
      %v3829 = vrot.slane %v3828, 4
      %v3830 = vrot.slane %v1120, 5
      %v3831 = vsel %vm3479, %v3829, %v3830
      %v3832 = vrot.slane %v3830, 4
      %v3833 = vrot.slane %v2338, 5
      %v3834 = vsel %vm3479, %v3832, %v3833
      %v3835 = vrot.slane %v3757, 5
      %v3836 = vrot.slane %v3835, 4
      %v3837 = vrot.slane %v1122, 5
      %v3838 = vsel %vm3479, %v3836, %v3837
      %v3839 = vrot.slane %v3837, 4
      %v3840 = vrot.slane %v2339, 5
      %v3841 = vsel %vm3479, %v3839, %v3840
      %v3842 = vrot.slane %v3758, 5
      %v3843 = vrot.slane %v3842, 4
      %v3844 = vrot.slane %v1124, 5
      %v3845 = vsel %vm3479, %v3843, %v3844
      %v3846 = vrot.slane %v3844, 4
      %v3847 = vrot.slane %v2340, 5
      %v3848 = vsel %vm3479, %v3846, %v3847
      %v3849 = vrot.slane %v3759, 5
      %v3850 = vrot.slane %v3849, 4
      %v3851 = vrot.slane %v1126, 5
      %v3852 = vsel %vm3479, %v3850, %v3851
      %v3853 = vrot.slane %v3851, 4
      %v3854 = vrot.slane %v2341, 5
      %v3855 = vsel %vm3479, %v3853, %v3854
      %v3856 = vrot.slane %v3760, 5
      %v3857 = vrot.slane %v3856, 4
      %v3858 = vrot.slane %v1128, 5
      %v3859 = vsel %vm3479, %v3857, %v3858
      %v3860 = vrot.slane %v3858, 4
      %v3861 = vrot.slane %v2342, 5
      %v3862 = vsel %vm3479, %v3860, %v3861
      %v3863 = vrot.slane %v3761, 5
      %v3864 = vrot.slane %v3863, 4
      %v3865 = vrot.slane %v1130, 5
      %v3866 = vsel %vm3479, %v3864, %v3865
      %v3867 = vrot.slane %v3865, 4
      %v3868 = vrot.slane %v2343, 5
      %v3869 = vsel %vm3479, %v3867, %v3868
      %v3870 = vrot.slane %v3762, 5
      %v3871 = vrot.slane %v3870, 4
      %v3872 = vrot.slane %v1132, 5
      %v3873 = vsel %vm3479, %v3871, %v3872
      %v3874 = vrot.slane %v3872, 4
      %v3875 = vrot.slane %v2344, 5
      %v3876 = vsel %vm3479, %v3874, %v3875
      %v3877 = vrot.slane %v3763, 5
      %v3878 = vrot.slane %v3877, 4
      %v3879 = vrot.slane %v1134, 5
      %v3880 = vsel %vm3479, %v3878, %v3879
      %v3881 = vrot.slane %v3879, 4
      %v3882 = vrot.slane %v2345, 5
      %v3883 = vsel %vm3479, %v3881, %v3882
      %v3884 = vrot.slane %v3764, 5
      %v3885 = vrot.slane %v3884, 4
      %v3886 = vrot.slane %v1136, 5
      %v3887 = vsel %vm3479, %v3885, %v3886
      %v3888 = vrot.slane %v3886, 4
      %v3889 = vrot.slane %v2346, 5
      %v3890 = vsel %vm3479, %v3888, %v3889
      %v3891 = vrot.slane %v3765, 5
      %v3892 = vrot.slane %v3891, 4
      %v3893 = vrot.slane %v1138, 5
      %v3894 = vsel %vm3479, %v3892, %v3893
      %v3895 = vrot.slane %v3893, 4
      %v3896 = vrot.slane %v2347, 5
      %v3897 = vsel %vm3479, %v3895, %v3896
      %v3898 = vrot.slane %v3766, 5
      %v3899 = vrot.slane %v3898, 4
      %v3900 = vrot.slane %v1140, 5
      %v3901 = vsel %vm3479, %v3899, %v3900
      %v3902 = vrot.slane %v3900, 4
      %v3903 = vrot.slane %v2348, 5
      %v3904 = vsel %vm3479, %v3902, %v3903
      %v3905 = vrot.slane %v3767, 5
      %v3906 = vrot.slane %v3905, 4
      %v3907 = vrot.slane %v1142, 5
      %v3908 = vsel %vm3479, %v3906, %v3907
      %v3909 = vrot.slane %v3907, 4
      %v3910 = vrot.slane %v2349, 5
      %v3911 = vsel %vm3479, %v3909, %v3910
      %v3912 = vunpack.c.l.b16 %v3483
      %v3913 = vunpack.c.l.b16 %v3486
      %v3914 = vunpack.c.l.b16 %v3490
      %v3915 = vunpack.c.l.b16 %v3493
      %v3916 = vunpack.c.l.b16 %v3497
      %v3917 = vunpack.c.l.b16 %v3500
      %v3918 = vunpack.c.l.b16 %v3504
      %v3919 = vunpack.c.l.b16 %v3507
      %v3920 = vunpack.c.l.b16 %v3511
      %v3921 = vunpack.c.l.b16 %v3514
      %v3922 = vunpack.c.l.b16 %v3518
      %v3923 = vunpack.c.l.b16 %v3521
      %v3924 = vunpack.c.l.b16 %v3525
      %v3925 = vunpack.c.l.b16 %v3528
      %v3926 = vunpack.c.l.b16 %v3532
      %v3927 = vunpack.c.l.b16 %v3535
      %v3928 = vunpack.c.l.b16 %v3539
      %v3929 = vunpack.c.l.b16 %v3542
      %v3930 = vunpack.c.l.b16 %v3546
      %v3931 = vunpack.c.l.b16 %v3549
      %v3932 = vunpack.c.l.b16 %v3553
      %v3933 = vunpack.c.l.b16 %v3556
      %v3934 = vunpack.c.l.b16 %v3560
      %v3935 = vunpack.c.l.b16 %v3563
      %v3936 = vunpack.c.l.b16 %v3567
      %v3937 = vunpack.c.l.b16 %v3570
      %v3938 = vunpack.c.l.b16 %v3574
      %v3939 = vunpack.c.l.b16 %v3577
      %v3940 = vunpack.c.l.b16 %v3581
      %v3941 = vunpack.c.l.b16 %v3584
      %v3942 = vunpack.c.l.b16 %v3588
      %v3943 = vunpack.c.l.b16 %v3591
      %v3944 = vpack.c.b16 %v3913, %v3912
      %v3945 = vpack.c.b16 %v3915, %v3914
      %v3946 = vpack.c.b16 %v3917, %v3916
      %v3947 = vpack.c.b16 %v3919, %v3918
      %v3948 = vpack.c.b16 %v3921, %v3920
      %v3949 = vpack.c.b16 %v3923, %v3922
      %v3950 = vpack.c.b16 %v3925, %v3924
      %v3951 = vpack.c.b16 %v3927, %v3926
      %v3952 = vpack.c.b16 %v3929, %v3928
      %v3953 = vpack.c.b16 %v3931, %v3930
      %v3954 = vpack.c.b16 %v3933, %v3932
      %v3955 = vpack.c.b16 %v3935, %v3934
      %v3956 = vpack.c.b16 %v3937, %v3936
      %v3957 = vpack.c.b16 %v3939, %v3938
      %v3958 = vpack.c.b16 %v3941, %v3940
      %v3959 = vpack.c.b16 %v3943, %v3942
      %v3960 = vunpack.c.l.b16 %v3643
      %v3961 = vunpack.c.l.b16 %v3646
      %v3962 = vunpack.c.l.b16 %v3650
      %v3963 = vunpack.c.l.b16 %v3653
      %v3964 = vunpack.c.l.b16 %v3657
      %v3965 = vunpack.c.l.b16 %v3660
      %v3966 = vunpack.c.l.b16 %v3664
      %v3967 = vunpack.c.l.b16 %v3667
      %v3968 = vunpack.c.l.b16 %v3671
      %v3969 = vunpack.c.l.b16 %v3674
      %v3970 = vunpack.c.l.b16 %v3678
      %v3971 = vunpack.c.l.b16 %v3681
      %v3972 = vunpack.c.l.b16 %v3685
      %v3973 = vunpack.c.l.b16 %v3688
      %v3974 = vunpack.c.l.b16 %v3692
      %v3975 = vunpack.c.l.b16 %v3695
      %v3976 = vunpack.c.l.b16 %v3699
      %v3977 = vunpack.c.l.b16 %v3702
      %v3978 = vunpack.c.l.b16 %v3706
      %v3979 = vunpack.c.l.b16 %v3709
      %v3980 = vunpack.c.l.b16 %v3713
      %v3981 = vunpack.c.l.b16 %v3716
      %v3982 = vunpack.c.l.b16 %v3720
      %v3983 = vunpack.c.l.b16 %v3723
      %v3984 = vunpack.c.l.b16 %v3727
      %v3985 = vunpack.c.l.b16 %v3730
      %v3986 = vunpack.c.l.b16 %v3734
      %v3987 = vunpack.c.l.b16 %v3737
      %v3988 = vunpack.c.l.b16 %v3741
      %v3989 = vunpack.c.l.b16 %v3744
      %v3990 = vunpack.c.l.b16 %v3748
      %v3991 = vunpack.c.l.b16 %v3751
      %v3992 = vpack.c.b16 %v3961, %v3960
      %v3993 = vpack.c.b16 %v3963, %v3962
      %v3994 = vpack.c.b16 %v3965, %v3964
      %v3995 = vpack.c.b16 %v3967, %v3966
      %v3996 = vpack.c.b16 %v3969, %v3968
      %v3997 = vpack.c.b16 %v3971, %v3970
      %v3998 = vpack.c.b16 %v3973, %v3972
      %v3999 = vpack.c.b16 %v3975, %v3974
      %v4000 = vpack.c.b16 %v3977, %v3976
      %v4001 = vpack.c.b16 %v3979, %v3978
      %v4002 = vpack.c.b16 %v3981, %v3980
      %v4003 = vpack.c.b16 %v3983, %v3982
      %v4004 = vpack.c.b16 %v3985, %v3984
      %v4005 = vpack.c.b16 %v3987, %v3986
      %v4006 = vpack.c.b16 %v3989, %v3988
      %v4007 = vpack.c.b16 %v3991, %v3990
      %4008 = vrot.lane.b32.xlu0 %v3992, 4
      %v4009 = vpop.permute.xlu0 %4008
      %4010 = vrot.lane.b32.xlu0 %v3993, 4
      %v4011 = vpop.permute.xlu0 %4010
      %4012 = vrot.lane.b32.xlu0 %v3994, 4
      %v4013 = vpop.permute.xlu0 %4012
      %4014 = vrot.lane.b32.xlu0 %v3995, 4
      %v4015 = vpop.permute.xlu0 %4014
      %4016 = vrot.lane.b32.xlu0 %v3996, 4
      %v4017 = vpop.permute.xlu0 %4016
      %4018 = vrot.lane.b32.xlu0 %v3997, 4
      %v4019 = vpop.permute.xlu0 %4018
      %4020 = vrot.lane.b32.xlu0 %v3998, 4
      %v4021 = vpop.permute.xlu0 %4020
      %4022 = vrot.lane.b32.xlu0 %v3999, 4
      %v4023 = vpop.permute.xlu0 %4022
      %4024 = vrot.lane.b32.xlu0 %v4000, 4
      %v4025 = vpop.permute.xlu0 %4024
      %4026 = vrot.lane.b32.xlu0 %v4001, 4
      %v4027 = vpop.permute.xlu0 %4026
      %4028 = vrot.lane.b32.xlu0 %v4002, 4
      %v4029 = vpop.permute.xlu0 %4028
      %4030 = vrot.lane.b32.xlu0 %v4003, 4
      %v4031 = vpop.permute.xlu0 %4030
      %4032 = vrot.lane.b32.xlu0 %v4004, 4
      %v4033 = vpop.permute.xlu0 %4032
      %4034 = vrot.lane.b32.xlu0 %v4005, 4
      %v4035 = vpop.permute.xlu0 %4034
      %4036 = vrot.lane.b32.xlu0 %v4006, 4
      %v4037 = vpop.permute.xlu0 %4036
      %4038 = vrot.lane.b32.xlu0 %v4007, 4
      %v4039 = vpop.permute.xlu0 %4038
      %v4040 = vunpack.c.l.b16 %v3803
      %v4041 = vunpack.c.l.b16 %v3806
      %v4042 = vunpack.c.l.b16 %v3810
      %v4043 = vunpack.c.l.b16 %v3813
      %v4044 = vunpack.c.l.b16 %v3817
      %v4045 = vunpack.c.l.b16 %v3820
      %v4046 = vunpack.c.l.b16 %v3824
      %v4047 = vunpack.c.l.b16 %v3827
      %v4048 = vunpack.c.l.b16 %v3831
      %v4049 = vunpack.c.l.b16 %v3834
      %v4050 = vunpack.c.l.b16 %v3838
      %v4051 = vunpack.c.l.b16 %v3841
      %v4052 = vunpack.c.l.b16 %v3845
      %v4053 = vunpack.c.l.b16 %v3848
      %v4054 = vunpack.c.l.b16 %v3852
      %v4055 = vunpack.c.l.b16 %v3855
      %v4056 = vunpack.c.l.b16 %v3859
      %v4057 = vunpack.c.l.b16 %v3862
      %v4058 = vunpack.c.l.b16 %v3866
      %v4059 = vunpack.c.l.b16 %v3869
      %v4060 = vunpack.c.l.b16 %v3873
      %v4061 = vunpack.c.l.b16 %v3876
      %v4062 = vunpack.c.l.b16 %v3880
      %v4063 = vunpack.c.l.b16 %v3883
      %v4064 = vunpack.c.l.b16 %v3887
      %v4065 = vunpack.c.l.b16 %v3890
      %v4066 = vunpack.c.l.b16 %v3894
      %v4067 = vunpack.c.l.b16 %v3897
      %v4068 = vunpack.c.l.b16 %v3901
      %v4069 = vunpack.c.l.b16 %v3904
      %v4070 = vunpack.c.l.b16 %v3908
      %v4071 = vunpack.c.l.b16 %v3911
      %v4072 = vpack.c.b16 %v4041, %v4040
      %v4073 = vpack.c.b16 %v4043, %v4042
      %v4074 = vpack.c.b16 %v4045, %v4044
      %v4075 = vpack.c.b16 %v4047, %v4046
      %v4076 = vpack.c.b16 %v4049, %v4048
      %v4077 = vpack.c.b16 %v4051, %v4050
      %v4078 = vpack.c.b16 %v4053, %v4052
      %v4079 = vpack.c.b16 %v4055, %v4054
      %v4080 = vpack.c.b16 %v4057, %v4056
      %v4081 = vpack.c.b16 %v4059, %v4058
      %v4082 = vpack.c.b16 %v4061, %v4060
      %v4083 = vpack.c.b16 %v4063, %v4062
      %v4084 = vpack.c.b16 %v4065, %v4064
      %v4085 = vpack.c.b16 %v4067, %v4066
      %v4086 = vpack.c.b16 %v4069, %v4068
      %v4087 = vpack.c.b16 %v4071, %v4070
      %4088 = vrot.lane.b32.xlu0 %v4072, 8
      %v4089 = vpop.permute.xlu0 %4088
      %4090 = vrot.lane.b32.xlu0 %v4073, 8
      %v4091 = vpop.permute.xlu0 %4090
      %4092 = vrot.lane.b32.xlu0 %v4074, 8
      %v4093 = vpop.permute.xlu0 %4092
      %4094 = vrot.lane.b32.xlu0 %v4075, 8
      %v4095 = vpop.permute.xlu0 %4094
      %4096 = vrot.lane.b32.xlu0 %v4076, 8
      %v4097 = vpop.permute.xlu0 %4096
      %4098 = vrot.lane.b32.xlu0 %v4077, 8
      %v4099 = vpop.permute.xlu0 %4098
      %4100 = vrot.lane.b32.xlu0 %v4078, 8
      %v4101 = vpop.permute.xlu0 %4100
      %4102 = vrot.lane.b32.xlu0 %v4079, 8
      %v4103 = vpop.permute.xlu0 %4102
      %4104 = vrot.lane.b32.xlu0 %v4080, 8
      %v4105 = vpop.permute.xlu0 %4104
      %4106 = vrot.lane.b32.xlu0 %v4081, 8
      %v4107 = vpop.permute.xlu0 %4106
      %4108 = vrot.lane.b32.xlu0 %v4082, 8
      %v4109 = vpop.permute.xlu0 %4108
      %4110 = vrot.lane.b32.xlu0 %v4083, 8
      %v4111 = vpop.permute.xlu0 %4110
      %4112 = vrot.lane.b32.xlu0 %v4084, 8
      %v4113 = vpop.permute.xlu0 %4112
      %4114 = vrot.lane.b32.xlu0 %v4085, 8
      %v4115 = vpop.permute.xlu0 %4114
      %4116 = vrot.lane.b32.xlu0 %v4086, 8
      %v4117 = vpop.permute.xlu0 %4116
      %4118 = vrot.lane.b32.xlu0 %v4087, 8
      %v4119 = vpop.permute.xlu0 %4118
      %v4122 = vsel %vm1447, %v3944, %v4009
      %v4125 = vsel %vm1447, %v3945, %v4011
      %v4128 = vsel %vm1447, %v3946, %v4013
      %v4131 = vsel %vm1447, %v3947, %v4015
      %v4134 = vsel %vm1447, %v3948, %v4017
      %v4137 = vsel %vm1447, %v3949, %v4019
      %v4140 = vsel %vm1447, %v3950, %v4021
      %v4143 = vsel %vm1447, %v3951, %v4023
      %v4146 = vsel %vm1447, %v3952, %v4025
      %v4149 = vsel %vm1447, %v3953, %v4027
      %v4152 = vsel %vm1447, %v3954, %v4029
      %v4155 = vsel %vm1447, %v3955, %v4031
      %v4158 = vsel %vm1447, %v3956, %v4033
      %v4161 = vsel %vm1447, %v3957, %v4035
      %v4164 = vsel %vm1447, %v3958, %v4037
      %v4167 = vsel %vm1447, %v3959, %v4039
      %v4169 = vsel %vm1496, %v4122, %v4089
      %v4171 = vsel %vm1496, %v4125, %v4091
      %v4173 = vsel %vm1496, %v4128, %v4093
      %v4175 = vsel %vm1496, %v4131, %v4095
      %v4177 = vsel %vm1496, %v4134, %v4097
      %v4179 = vsel %vm1496, %v4137, %v4099
      %v4181 = vsel %vm1496, %v4140, %v4101
      %v4183 = vsel %vm1496, %v4143, %v4103
      %v4185 = vsel %vm1496, %v4146, %v4105
      %v4187 = vsel %vm1496, %v4149, %v4107
      %v4189 = vsel %vm1496, %v4152, %v4109
      %v4191 = vsel %vm1496, %v4155, %v4111
      %v4193 = vsel %vm1496, %v4158, %v4113
      %v4195 = vsel %vm1496, %v4161, %v4115
      %v4197 = vsel %vm1496, %v4164, %v4117
      %v4199 = vsel %vm1496, %v4167, %v4119
      %s4200 = scalar_lea.vmem %s1, 16
      %v4201 = vld [vmem:[%s4200] sm:$0xf]
      %v4202 = vld [vmem:[%s4200 + $0x4] sm:$0x3]
      %v4205 = vunpack.c.l.b16 %v4201
      %v4206 = vunpack.c.l.b16 %v4202
      %v4207 = vpack.c.b16 %v4206, %v4205
      %v4208 = vsel %vm3030, %v4169, 0
      %v4210 = vsel %vm3030, %v4171, 0
      %v4212 = vsel %vm3030, %v4173, 0
      %v4214 = vsel %vm3030, %v4175, 0
      %v4216 = vsel %vm3030, %v4177, 0
      %v4218 = vsel %vm3030, %v4179, 0
      %v4220 = vsel %vm3030, %v4181, 0
      %v4222 = vsel %vm3030, %v4183, 0
      %v4224 = vsel %vm3030, %v4185, 0
      %v4226 = vsel %vm3030, %v4187, 0
      %v4228 = vsel %vm3030, %v4189, 0
      %v4230 = vsel %vm3030, %v4191, 0
      %v4232 = vsel %vm3030, %v4193, 0
      %v4234 = vsel %vm3030, %v4195, 0
      %v4236 = vsel %vm3030, %v4197, 0
      %v4238 = vsel %vm3030, %v4199, 0
      %v4241 = vsel %vm3063, %v4207, 0
      %4243 = vmatprep.subr.bf16.mxu0 0
      %4244 = vmatpush1.bf16.msra.mxu0 0
      %4245 = vmatprep.subr.bf16.mxu0 0
      %4246 = vmatpush1.bf16.msra.mxu0 0
      %4247 = vmatprep.subr.bf16.mxu0 0
      %4248 = vmatpush1.bf16.msra.mxu0 0
      %4249 = vmatprep.subr.bf16.mxu0 0
      %4250 = vmatpush1.bf16.msra.mxu0 0
      %4251 = vmatprep.subr.bf16.mxu0 0
      %4252 = vmatpush1.bf16.msra.mxu0 0
      %4253 = vmatprep.subr.bf16.mxu0 0
      %4254 = vmatpush1.bf16.msra.mxu0 0
      %4255 = vmatprep.subr.bf16.mxu0 0
      %4256 = vmatpush1.bf16.msra.mxu0 0
      %4257 = vmatprep.subr.bf16.mxu0 0
      %4258 = vmatpush1.bf16.msra.mxu0 %v4241
      %4259 = vmatprep.subr.bf16.mxu0 0
      %4260 = vmatpush2.bf16.msra.mxu0 0
      %4261 = vmatprep.subr.bf16.mxu0 0
      %4262 = vmatpush2.bf16.msra.mxu0 0
      %4263 = vmatprep.subr.bf16.mxu0 0
      %4264 = vmatpush2.bf16.msra.mxu0 0
      %4265 = vmatprep.subr.bf16.mxu0 0
      %4266 = vmatpush2.bf16.msra.mxu0 0
      %4267 = vmatprep.subr.bf16.mxu0 0
      %4268 = vmatpush2.bf16.msra.mxu0 0
      %4269 = vmatprep.subr.bf16.mxu0 0
      %4270 = vmatpush2.bf16.msra.mxu0 0
      %4271 = vmatprep.subr.bf16.mxu0 0
      %4272 = vmatpush2.bf16.msra.mxu0 0
      %4273 = vmatprep.subr.bf16.mxu0 0
      %4274 = vmatpush2.bf16.msra.mxu0 0
      %4275 = vmatprep.mubr.bf16.mxu0 0
      %4276 = vmatmul.mubr.bf16.gmra.mxu0 %v4208
      %v4277 = vpop.f32.mrf.mxu0
      %v4278 = vadd.f32 0.0, %v4277
      %v4279 = vpop.f32.mrf.mxu0
      %v4280 = vpop.f32.mrf.mxu0
      %v4281 = vadd.f32 0.0, %v4280
      %v4282 = vpop.f32.mrf.mxu0
      %4283 = vmatprep.mubr.bf16.mxu0 0
      %4284 = vmatmul.mubr.bf16.gmra.mxu0 %v4210
      %v4285 = vpop.f32.mrf.mxu0
      %v4286 = vadd.f32 0.0, %v4285
      %v4287 = vpop.f32.mrf.mxu0
      %v4288 = vpop.f32.mrf.mxu0
      %v4289 = vadd.f32 0.0, %v4288
      %v4290 = vpop.f32.mrf.mxu0
      %4291 = vmatprep.mubr.bf16.mxu0 0
      %4292 = vmatmul.mubr.bf16.gmra.mxu0 %v4212
      %v4293 = vpop.f32.mrf.mxu0
      %v4294 = vadd.f32 0.0, %v4293
      %v4295 = vpop.f32.mrf.mxu0
      %v4296 = vpop.f32.mrf.mxu0
      %v4297 = vadd.f32 0.0, %v4296
      %v4298 = vpop.f32.mrf.mxu0
      %4299 = vmatprep.mubr.bf16.mxu0 0
      %4300 = vmatmul.mubr.bf16.gmra.mxu0 %v4214
      %v4301 = vpop.f32.mrf.mxu0
      %v4302 = vadd.f32 0.0, %v4301
      %v4303 = vpop.f32.mrf.mxu0
      %v4304 = vpop.f32.mrf.mxu0
      %v4305 = vadd.f32 0.0, %v4304
      %v4306 = vpop.f32.mrf.mxu0
      %4307 = vmatprep.mubr.bf16.mxu0 0
      %4308 = vmatmul.mubr.bf16.gmra.mxu0 %v4216
      %v4309 = vpop.f32.mrf.mxu0
      %v4310 = vadd.f32 0.0, %v4309
      %v4311 = vpop.f32.mrf.mxu0
      %v4312 = vpop.f32.mrf.mxu0
      %v4313 = vadd.f32 0.0, %v4312
      %v4314 = vpop.f32.mrf.mxu0
      %4315 = vmatprep.mubr.bf16.mxu0 0
      %4316 = vmatmul.mubr.bf16.gmra.mxu0 %v4218
      %v4317 = vpop.f32.mrf.mxu0
      %v4318 = vadd.f32 0.0, %v4317
      %v4319 = vpop.f32.mrf.mxu0
      %v4320 = vpop.f32.mrf.mxu0
      %v4321 = vadd.f32 0.0, %v4320
      %v4322 = vpop.f32.mrf.mxu0
      %4323 = vmatprep.mubr.bf16.mxu0 0
      %4324 = vmatmul.mubr.bf16.gmra.mxu0 %v4220
      %v4325 = vpop.f32.mrf.mxu0
      %v4326 = vadd.f32 0.0, %v4325
      %v4327 = vpop.f32.mrf.mxu0
      %v4328 = vpop.f32.mrf.mxu0
      %v4329 = vadd.f32 0.0, %v4328
      %v4330 = vpop.f32.mrf.mxu0
      %4331 = vmatprep.mubr.bf16.mxu0 0
      %4332 = vmatmul.mubr.bf16.gmra.mxu0 %v4222
      %v4333 = vpop.f32.mrf.mxu0
      %v4334 = vadd.f32 0.0, %v4333
      %v4335 = vpop.f32.mrf.mxu0
      %v4336 = vpop.f32.mrf.mxu0
      %v4337 = vadd.f32 0.0, %v4336
      %v4338 = vpop.f32.mrf.mxu0
      %4339 = vmatprep.mubr.bf16.mxu0 0
      %4340 = vmatmul.mubr.bf16.gmra.mxu0 %v4224
      %v4341 = vpop.f32.mrf.mxu0
      %v4342 = vadd.f32 0.0, %v4341
      %v4343 = vpop.f32.mrf.mxu0
      %v4344 = vpop.f32.mrf.mxu0
      %v4345 = vadd.f32 0.0, %v4344
      %v4346 = vpop.f32.mrf.mxu0
      %4347 = vmatprep.mubr.bf16.mxu0 0
      %4348 = vmatmul.mubr.bf16.gmra.mxu0 %v4226
      %v4349 = vpop.f32.mrf.mxu0
      %v4350 = vadd.f32 0.0, %v4349
      %v4351 = vpop.f32.mrf.mxu0
      %v4352 = vpop.f32.mrf.mxu0
      %v4353 = vadd.f32 0.0, %v4352
      %v4354 = vpop.f32.mrf.mxu0
      %4355 = vmatprep.mubr.bf16.mxu0 0
      %4356 = vmatmul.mubr.bf16.gmra.mxu0 %v4228
      %v4357 = vpop.f32.mrf.mxu0
      %v4358 = vadd.f32 0.0, %v4357
      %v4359 = vpop.f32.mrf.mxu0
      %v4360 = vpop.f32.mrf.mxu0
      %v4361 = vadd.f32 0.0, %v4360
      %v4362 = vpop.f32.mrf.mxu0
      %4363 = vmatprep.mubr.bf16.mxu0 0
      %4364 = vmatmul.mubr.bf16.gmra.mxu0 %v4230
      %v4365 = vpop.f32.mrf.mxu0
      %v4366 = vadd.f32 0.0, %v4365
      %v4367 = vpop.f32.mrf.mxu0
      %v4368 = vpop.f32.mrf.mxu0
      %v4369 = vadd.f32 0.0, %v4368
      %v4370 = vpop.f32.mrf.mxu0
      %4371 = vmatprep.mubr.bf16.mxu0 0
      %4372 = vmatmul.mubr.bf16.gmra.mxu0 %v4232
      %v4373 = vpop.f32.mrf.mxu0
      %v4374 = vadd.f32 0.0, %v4373
      %v4375 = vpop.f32.mrf.mxu0
      %v4376 = vpop.f32.mrf.mxu0
      %v4377 = vadd.f32 0.0, %v4376
      %v4378 = vpop.f32.mrf.mxu0
      %4379 = vmatprep.mubr.bf16.mxu0 0
      %4380 = vmatmul.mubr.bf16.gmra.mxu0 %v4234
      %v4381 = vpop.f32.mrf.mxu0
      %v4382 = vadd.f32 0.0, %v4381
      %v4383 = vpop.f32.mrf.mxu0
      %v4384 = vpop.f32.mrf.mxu0
      %v4385 = vadd.f32 0.0, %v4384
      %v4386 = vpop.f32.mrf.mxu0
      %4387 = vmatprep.mubr.bf16.mxu0 0
      %4388 = vmatmul.mubr.bf16.gmra.mxu0 %v4236
      %v4389 = vpop.f32.mrf.mxu0
      %v4390 = vadd.f32 0.0, %v4389
      %v4391 = vpop.f32.mrf.mxu0
      %v4392 = vpop.f32.mrf.mxu0
      %v4393 = vadd.f32 0.0, %v4392
      %v4394 = vpop.f32.mrf.mxu0
      %4395 = vmatprep.mubr.bf16.mxu0 0
      %4396 = vmatmul.mubr.bf16.gmra.mxu0 %v4238
      %v4397 = vpop.f32.mrf.mxu0
      %v4398 = vadd.f32 0.0, %v4397
      %v4399 = vpop.f32.mrf.mxu0
      %v4400 = vpop.f32.mrf.mxu0
      %v4401 = vadd.f32 0.0, %v4400
      %v4402 = vpop.f32.mrf.mxu0
      %4403 = vdwg.mxu0
      %v4404 = vadd.f32 %v3303, %v4278
      %v4405 = vadd.f32 %v3306, %v4281
      %v4406 = vadd.f32 %v3311, %v4286
      %v4407 = vadd.f32 %v3314, %v4289
      %v4408 = vadd.f32 %v3319, %v4294
      %v4409 = vadd.f32 %v3322, %v4297
      %v4410 = vadd.f32 %v3327, %v4302
      %v4411 = vadd.f32 %v3330, %v4305
      %v4412 = vadd.f32 %v3335, %v4310
      %v4413 = vadd.f32 %v3338, %v4313
      %v4414 = vadd.f32 %v3343, %v4318
      %v4415 = vadd.f32 %v3346, %v4321
      %v4416 = vadd.f32 %v3351, %v4326
      %v4417 = vadd.f32 %v3354, %v4329
      %v4418 = vadd.f32 %v3359, %v4334
      %v4419 = vadd.f32 %v3362, %v4337
      %v4420 = vadd.f32 %v3367, %v4342
      %v4421 = vadd.f32 %v3370, %v4345
      %v4422 = vadd.f32 %v3375, %v4350
      %v4423 = vadd.f32 %v3378, %v4353
      %v4424 = vadd.f32 %v3383, %v4358
      %v4425 = vadd.f32 %v3386, %v4361
      %v4426 = vadd.f32 %v3391, %v4366
      %v4427 = vadd.f32 %v3394, %v4369
      %v4428 = vadd.f32 %v3399, %v4374
      %v4429 = vadd.f32 %v3402, %v4377
      %v4430 = vadd.f32 %v3407, %v4382
      %v4431 = vadd.f32 %v3410, %v4385
      %v4432 = vadd.f32 %v3415, %v4390
      %v4433 = vadd.f32 %v3418, %v4393
      %v4434 = vadd.f32 %v3423, %v4398
      %v4435 = vadd.f32 %v3426, %v4401
      %4436 = vst.msk [vmem:[#allocation3] sm:$0xff] %vm1447, %v4404
      %4437 = vst.msk [vmem:[#allocation3 + $0x8] sm:$0xff] %vm1447, %v4405
      %4438 = vst.msk [vmem:[#allocation3 + $0x10] sm:$0xff] %vm1447, %v4406
      %4439 = vst.msk [vmem:[#allocation3 + $0x18] sm:$0xff] %vm1447, %v4407
      %4440 = vst.msk [vmem:[#allocation3 + $0x20] sm:$0xff] %vm1447, %v4408
      %4441 = vst.msk [vmem:[#allocation3 + $0x28] sm:$0xff] %vm1447, %v4409
      %4442 = vst.msk [vmem:[#allocation3 + $0x30] sm:$0xff] %vm1447, %v4410
      %4443 = vst.msk [vmem:[#allocation3 + $0x38] sm:$0xff] %vm1447, %v4411
      %4444 = vst.msk [vmem:[#allocation3 + $0x40] sm:$0xff] %vm1447, %v4412
      %4445 = vst.msk [vmem:[#allocation3 + $0x48] sm:$0xff] %vm1447, %v4413
      %4446 = vst.msk [vmem:[#allocation3 + $0x50] sm:$0xff] %vm1447, %v4414
      %4447 = vst.msk [vmem:[#allocation3 + $0x58] sm:$0xff] %vm1447, %v4415
      %4448 = vst.msk [vmem:[#allocation3 + $0x60] sm:$0xff] %vm1447, %v4416
      %4449 = vst.msk [vmem:[#allocation3 + $0x68] sm:$0xff] %vm1447, %v4417
      %4450 = vst.msk [vmem:[#allocation3 + $0x70] sm:$0xff] %vm1447, %v4418
      %4451 = vst.msk [vmem:[#allocation3 + $0x78] sm:$0xff] %vm1447, %v4419
      %4452 = vst.msk [vmem:[#allocation3 + $0x80] sm:$0xff] %vm1447, %v4420
      %4453 = vst.msk [vmem:[#allocation3 + $0x88] sm:$0xff] %vm1447, %v4421
      %4454 = vst.msk [vmem:[#allocation3 + $0x90] sm:$0xff] %vm1447, %v4422
      %4455 = vst.msk [vmem:[#allocation3 + $0x98] sm:$0xff] %vm1447, %v4423
      %4456 = vst.msk [vmem:[#allocation3 + $0xa0] sm:$0xff] %vm1447, %v4424
      %4457 = vst.msk [vmem:[#allocation3 + $0xa8] sm:$0xff] %vm1447, %v4425
      %4458 = vst.msk [vmem:[#allocation3 + $0xb0] sm:$0xff] %vm1447, %v4426
      %4459 = vst.msk [vmem:[#allocation3 + $0xb8] sm:$0xff] %vm1447, %v4427
      %4460 = vst.msk [vmem:[#allocation3 + $0xc0] sm:$0xff] %vm1447, %v4428
      %4461 = vst.msk [vmem:[#allocation3 + $0xc8] sm:$0xff] %vm1447, %v4429
      %4462 = vst.msk [vmem:[#allocation3 + $0xd0] sm:$0xff] %vm1447, %v4430
      %4463 = vst.msk [vmem:[#allocation3 + $0xd8] sm:$0xff] %vm1447, %v4431
      %4464 = vst.msk [vmem:[#allocation3 + $0xe0] sm:$0xff] %vm1447, %v4432
      %4465 = vst.msk [vmem:[#allocation3 + $0xe8] sm:$0xff] %vm1447, %v4433
      %4466 = vst.msk [vmem:[#allocation3 + $0xf0] sm:$0xff] %vm1447, %v4434
      %4467 = vst.msk [vmem:[#allocation3 + $0xf8] sm:$0xff] %vm1447, %v4435
      %v4468 = vsel %vm1447, %v4404, 0.0
      %v4469 = vsel %vm1447, %v4405, 0.0
      %v4470 = vadd.f32 %v4468, %v4469
      %v4471 = vsel %vm1447, %v4406, 0.0
      %v4472 = vadd.f32 %v4470, %v4471
      %v4473 = vsel %vm1447, %v4407, 0.0
      %v4474 = vadd.f32 %v4472, %v4473
      %v4475 = vsel %vm1447, %v4408, 0.0
      %v4476 = vadd.f32 %v4474, %v4475
      %v4477 = vsel %vm1447, %v4409, 0.0
      %v4478 = vadd.f32 %v4476, %v4477
      %v4479 = vsel %vm1447, %v4410, 0.0
      %v4480 = vadd.f32 %v4478, %v4479
      %v4481 = vsel %vm1447, %v4411, 0.0
      %v4482 = vadd.f32 %v4480, %v4481
      %v4483 = vsel %vm1447, %v4412, 0.0
      %v4484 = vadd.f32 %v4482, %v4483
      %v4485 = vsel %vm1447, %v4413, 0.0
      %v4486 = vadd.f32 %v4484, %v4485
      %v4487 = vsel %vm1447, %v4414, 0.0
      %v4488 = vadd.f32 %v4486, %v4487
      %v4489 = vsel %vm1447, %v4415, 0.0
      %v4490 = vadd.f32 %v4488, %v4489
      %v4491 = vsel %vm1447, %v4416, 0.0
      %v4492 = vadd.f32 %v4490, %v4491
      %v4493 = vsel %vm1447, %v4417, 0.0
      %v4494 = vadd.f32 %v4492, %v4493
      %v4495 = vsel %vm1447, %v4418, 0.0
      %v4496 = vadd.f32 %v4494, %v4495
      %v4497 = vsel %vm1447, %v4419, 0.0
      %v4498 = vadd.f32 %v4496, %v4497
      %v4499 = vsel %vm1447, %v4420, 0.0
      %v4500 = vadd.f32 %v4498, %v4499
      %v4501 = vsel %vm1447, %v4421, 0.0
      %v4502 = vadd.f32 %v4500, %v4501
      %v4503 = vsel %vm1447, %v4422, 0.0
      %v4504 = vadd.f32 %v4502, %v4503
      %v4505 = vsel %vm1447, %v4423, 0.0
      %v4506 = vadd.f32 %v4504, %v4505
      %v4507 = vsel %vm1447, %v4424, 0.0
      %v4508 = vadd.f32 %v4506, %v4507
      %v4509 = vsel %vm1447, %v4425, 0.0
      %v4510 = vadd.f32 %v4508, %v4509
      %v4511 = vsel %vm1447, %v4426, 0.0
      %v4512 = vadd.f32 %v4510, %v4511
      %v4513 = vsel %vm1447, %v4427, 0.0
      %v4514 = vadd.f32 %v4512, %v4513
      %v4515 = vsel %vm1447, %v4428, 0.0
      %v4516 = vadd.f32 %v4514, %v4515
      %v4517 = vsel %vm1447, %v4429, 0.0
      %v4518 = vadd.f32 %v4516, %v4517
      %v4519 = vsel %vm1447, %v4430, 0.0
      %v4520 = vadd.f32 %v4518, %v4519
      %v4521 = vsel %vm1447, %v4431, 0.0
      %v4522 = vadd.f32 %v4520, %v4521
      %v4523 = vsel %vm1447, %v4432, 0.0
      %v4524 = vadd.f32 %v4522, %v4523
      %v4525 = vsel %vm1447, %v4433, 0.0
      %v4526 = vadd.f32 %v4524, %v4525
      %v4527 = vsel %vm1447, %v4434, 0.0
      %v4528 = vadd.f32 %v4526, %v4527
      %v4529 = vsel %vm1447, %v4435, 0.0
      %v4530 = vadd.f32 %v4528, %v4529
      %v4531 = vrot.slane %v4530, 4
      %v4532 = vadd.f32 %v4530, %v4531
      %v4533 = vrot.slane %v4532, 2
      %v4534 = vadd.f32 %v4532, %v4533
      %v4535 = vrot.slane %v4534, 1
      %v4536 = vadd.f32 %v4534, %v4535
      %v4537 = vadd.f32 %v4536, 0.0
      %v4538 = vmul.f32 %v4404, %v4404
      %v4539 = vmul.f32 %v4405, %v4405
      %v4540 = vmul.f32 %v4406, %v4406
      %v4541 = vmul.f32 %v4407, %v4407
      %v4542 = vmul.f32 %v4408, %v4408
      %v4543 = vmul.f32 %v4409, %v4409
      %v4544 = vmul.f32 %v4410, %v4410
      %v4545 = vmul.f32 %v4411, %v4411
      %v4546 = vmul.f32 %v4412, %v4412
      %v4547 = vmul.f32 %v4413, %v4413
      %v4548 = vmul.f32 %v4414, %v4414
      %v4549 = vmul.f32 %v4415, %v4415
      %v4550 = vmul.f32 %v4416, %v4416
      %v4551 = vmul.f32 %v4417, %v4417
      %v4552 = vmul.f32 %v4418, %v4418
      %v4553 = vmul.f32 %v4419, %v4419
      %v4554 = vmul.f32 %v4420, %v4420
      %v4555 = vmul.f32 %v4421, %v4421
      %v4556 = vmul.f32 %v4422, %v4422
      %v4557 = vmul.f32 %v4423, %v4423
      %v4558 = vmul.f32 %v4424, %v4424
      %v4559 = vmul.f32 %v4425, %v4425
      %v4560 = vmul.f32 %v4426, %v4426
      %v4561 = vmul.f32 %v4427, %v4427
      %v4562 = vmul.f32 %v4428, %v4428
      %v4563 = vmul.f32 %v4429, %v4429
      %v4564 = vmul.f32 %v4430, %v4430
      %v4565 = vmul.f32 %v4431, %v4431
      %v4566 = vmul.f32 %v4432, %v4432
      %v4567 = vmul.f32 %v4433, %v4433
      %v4568 = vmul.f32 %v4434, %v4434
      %v4569 = vmul.f32 %v4435, %v4435
      %v4570 = vsel %vm1447, %v4538, 0.0
      %v4571 = vsel %vm1447, %v4539, 0.0
      %v4572 = vadd.f32 %v4570, %v4571
      %v4573 = vsel %vm1447, %v4540, 0.0
      %v4574 = vadd.f32 %v4572, %v4573
      %v4575 = vsel %vm1447, %v4541, 0.0
      %v4576 = vadd.f32 %v4574, %v4575
      %v4577 = vsel %vm1447, %v4542, 0.0
      %v4578 = vadd.f32 %v4576, %v4577
      %v4579 = vsel %vm1447, %v4543, 0.0
      %v4580 = vadd.f32 %v4578, %v4579
      %v4581 = vsel %vm1447, %v4544, 0.0
      %v4582 = vadd.f32 %v4580, %v4581
      %v4583 = vsel %vm1447, %v4545, 0.0
      %v4584 = vadd.f32 %v4582, %v4583
      %v4585 = vsel %vm1447, %v4546, 0.0
      %v4586 = vadd.f32 %v4584, %v4585
      %v4587 = vsel %vm1447, %v4547, 0.0
      %v4588 = vadd.f32 %v4586, %v4587
      %v4589 = vsel %vm1447, %v4548, 0.0
      %v4590 = vadd.f32 %v4588, %v4589
      %v4591 = vsel %vm1447, %v4549, 0.0
      %v4592 = vadd.f32 %v4590, %v4591
      %v4593 = vsel %vm1447, %v4550, 0.0
      %v4594 = vadd.f32 %v4592, %v4593
      %v4595 = vsel %vm1447, %v4551, 0.0
      %v4596 = vadd.f32 %v4594, %v4595
      %v4597 = vsel %vm1447, %v4552, 0.0
      %v4598 = vadd.f32 %v4596, %v4597
      %v4599 = vsel %vm1447, %v4553, 0.0
      %v4600 = vadd.f32 %v4598, %v4599
      %v4601 = vsel %vm1447, %v4554, 0.0
      %v4602 = vadd.f32 %v4600, %v4601
      %v4603 = vsel %vm1447, %v4555, 0.0
      %v4604 = vadd.f32 %v4602, %v4603
      %v4605 = vsel %vm1447, %v4556, 0.0
      %v4606 = vadd.f32 %v4604, %v4605
      %v4607 = vsel %vm1447, %v4557, 0.0
      %v4608 = vadd.f32 %v4606, %v4607
      %v4609 = vsel %vm1447, %v4558, 0.0
      %v4610 = vadd.f32 %v4608, %v4609
      %v4611 = vsel %vm1447, %v4559, 0.0
      %v4612 = vadd.f32 %v4610, %v4611
      %v4613 = vsel %vm1447, %v4560, 0.0
      %v4614 = vadd.f32 %v4612, %v4613
      %v4615 = vsel %vm1447, %v4561, 0.0
      %v4616 = vadd.f32 %v4614, %v4615
      %v4617 = vsel %vm1447, %v4562, 0.0
      %v4618 = vadd.f32 %v4616, %v4617
      %v4619 = vsel %vm1447, %v4563, 0.0
      %v4620 = vadd.f32 %v4618, %v4619
      %v4621 = vsel %vm1447, %v4564, 0.0
      %v4622 = vadd.f32 %v4620, %v4621
      %v4623 = vsel %vm1447, %v4565, 0.0
      %v4624 = vadd.f32 %v4622, %v4623
      %v4625 = vsel %vm1447, %v4566, 0.0
      %v4626 = vadd.f32 %v4624, %v4625
      %v4627 = vsel %vm1447, %v4567, 0.0
      %v4628 = vadd.f32 %v4626, %v4627
      %v4629 = vsel %vm1447, %v4568, 0.0
      %v4630 = vadd.f32 %v4628, %v4629
      %v4631 = vsel %vm1447, %v4569, 0.0
      %v4632 = vadd.f32 %v4630, %v4631
      %v4633 = vrot.slane %v4632, 4
      %v4634 = vadd.f32 %v4632, %v4633
      %v4635 = vrot.slane %v4634, 2
      %v4636 = vadd.f32 %v4634, %v4635
      %v4637 = vrot.slane %v4636, 1
      %v4638 = vadd.f32 %v4636, %v4637
      %v4639 = vadd.f32 %v4638, 0.0
      %v4640 = vmul.f32 %v4537, 0.00390625
      %v4641 = vmul.f32 %v4639, 0.00390625
      %v4642 = vmul.f32 %v4640, %v4640
      %v4643 = vsub.f32 %v4641, %v4642
      %v4644 = vmax.f32 %v4643, 0.0
      %v4645 = vadd.f32 %v4644, 1e-05
      %v4646 = vrsqrt.pop %v4645
      %v4647 = vld [vmem:[#allocation3] sm:$0xff]
      %v4648 = vld [vmem:[#allocation3 + $0x8] sm:$0xff]
      %v4649 = vld [vmem:[#allocation3 + $0x10] sm:$0xff]
      %v4650 = vld [vmem:[#allocation3 + $0x18] sm:$0xff]
      %v4651 = vld [vmem:[#allocation3 + $0x20] sm:$0xff]
      %v4652 = vld [vmem:[#allocation3 + $0x28] sm:$0xff]
      %v4653 = vld [vmem:[#allocation3 + $0x30] sm:$0xff]
      %v4654 = vld [vmem:[#allocation3 + $0x38] sm:$0xff]
      %v4655 = vld [vmem:[#allocation3 + $0x40] sm:$0xff]
      %v4656 = vld [vmem:[#allocation3 + $0x48] sm:$0xff]
      %v4657 = vld [vmem:[#allocation3 + $0x50] sm:$0xff]
      %v4658 = vld [vmem:[#allocation3 + $0x58] sm:$0xff]
      %v4659 = vld [vmem:[#allocation3 + $0x60] sm:$0xff]
      %v4660 = vld [vmem:[#allocation3 + $0x68] sm:$0xff]
      %v4661 = vld [vmem:[#allocation3 + $0x70] sm:$0xff]
      %v4662 = vld [vmem:[#allocation3 + $0x78] sm:$0xff]
      %v4663 = vld [vmem:[#allocation3 + $0x80] sm:$0xff]
      %v4664 = vld [vmem:[#allocation3 + $0x88] sm:$0xff]
      %v4665 = vld [vmem:[#allocation3 + $0x90] sm:$0xff]
      %v4666 = vld [vmem:[#allocation3 + $0x98] sm:$0xff]
      %v4667 = vld [vmem:[#allocation3 + $0xa0] sm:$0xff]
      %v4668 = vld [vmem:[#allocation3 + $0xa8] sm:$0xff]
      %v4669 = vld [vmem:[#allocation3 + $0xb0] sm:$0xff]
      %v4670 = vld [vmem:[#allocation3 + $0xb8] sm:$0xff]
      %v4671 = vld [vmem:[#allocation3 + $0xc0] sm:$0xff]
      %v4672 = vld [vmem:[#allocation3 + $0xc8] sm:$0xff]
      %v4673 = vld [vmem:[#allocation3 + $0xd0] sm:$0xff]
      %v4674 = vld [vmem:[#allocation3 + $0xd8] sm:$0xff]
      %v4675 = vld [vmem:[#allocation3 + $0xe0] sm:$0xff]
      %v4676 = vld [vmem:[#allocation3 + $0xe8] sm:$0xff]
      %v4677 = vld [vmem:[#allocation3 + $0xf0] sm:$0xff]
      %v4678 = vld [vmem:[#allocation3 + $0xf8] sm:$0xff]
      %v4679 = vsub.f32 %v4647, %v4640
      %v4680 = vsub.f32 %v4648, %v4640
      %v4681 = vsub.f32 %v4649, %v4640
      %v4682 = vsub.f32 %v4650, %v4640
      %v4683 = vsub.f32 %v4651, %v4640
      %v4684 = vsub.f32 %v4652, %v4640
      %v4685 = vsub.f32 %v4653, %v4640
      %v4686 = vsub.f32 %v4654, %v4640
      %v4687 = vsub.f32 %v4655, %v4640
      %v4688 = vsub.f32 %v4656, %v4640
      %v4689 = vsub.f32 %v4657, %v4640
      %v4690 = vsub.f32 %v4658, %v4640
      %v4691 = vsub.f32 %v4659, %v4640
      %v4692 = vsub.f32 %v4660, %v4640
      %v4693 = vsub.f32 %v4661, %v4640
      %v4694 = vsub.f32 %v4662, %v4640
      %v4695 = vsub.f32 %v4663, %v4640
      %v4696 = vsub.f32 %v4664, %v4640
      %v4697 = vsub.f32 %v4665, %v4640
      %v4698 = vsub.f32 %v4666, %v4640
      %v4699 = vsub.f32 %v4667, %v4640
      %v4700 = vsub.f32 %v4668, %v4640
      %v4701 = vsub.f32 %v4669, %v4640
      %v4702 = vsub.f32 %v4670, %v4640
      %v4703 = vsub.f32 %v4671, %v4640
      %v4704 = vsub.f32 %v4672, %v4640
      %v4705 = vsub.f32 %v4673, %v4640
      %v4706 = vsub.f32 %v4674, %v4640
      %v4707 = vsub.f32 %v4675, %v4640
      %v4708 = vsub.f32 %v4676, %v4640
      %v4709 = vsub.f32 %v4677, %v4640
      %v4710 = vsub.f32 %v4678, %v4640
      %v4711 = vmul.f32 %v4679, %v4646
      %v4712 = vmul.f32 %v4680, %v4646
      %v4713 = vmul.f32 %v4681, %v4646
      %v4714 = vmul.f32 %v4682, %v4646
      %v4715 = vmul.f32 %v4683, %v4646
      %v4716 = vmul.f32 %v4684, %v4646
      %v4717 = vmul.f32 %v4685, %v4646
      %v4718 = vmul.f32 %v4686, %v4646
      %v4719 = vmul.f32 %v4687, %v4646
      %v4720 = vmul.f32 %v4688, %v4646
      %v4721 = vmul.f32 %v4689, %v4646
      %v4722 = vmul.f32 %v4690, %v4646
      %v4723 = vmul.f32 %v4691, %v4646
      %v4724 = vmul.f32 %v4692, %v4646
      %v4725 = vmul.f32 %v4693, %v4646
      %v4726 = vmul.f32 %v4694, %v4646
      %v4727 = vmul.f32 %v4695, %v4646
      %v4728 = vmul.f32 %v4696, %v4646
      %v4729 = vmul.f32 %v4697, %v4646
      %v4730 = vmul.f32 %v4698, %v4646
      %v4731 = vmul.f32 %v4699, %v4646
      %v4732 = vmul.f32 %v4700, %v4646
      %v4733 = vmul.f32 %v4701, %v4646
      %v4734 = vmul.f32 %v4702, %v4646
      %v4735 = vmul.f32 %v4703, %v4646
      %v4736 = vmul.f32 %v4704, %v4646
      %v4737 = vmul.f32 %v4705, %v4646
      %v4738 = vmul.f32 %v4706, %v4646
      %v4739 = vmul.f32 %v4707, %v4646
      %v4740 = vmul.f32 %v4708, %v4646
      %v4741 = vmul.f32 %v4709, %v4646
      %v4742 = vmul.f32 %v4710, %v4646
      %v4743 = vmax.f32 %v4711, 0.0
      %v4744 = vmax.f32 %v4712, 0.0
      %v4745 = vmax.f32 %v4713, 0.0
      %v4746 = vmax.f32 %v4714, 0.0
      %v4747 = vmax.f32 %v4715, 0.0
      %v4748 = vmax.f32 %v4716, 0.0
      %v4749 = vmax.f32 %v4717, 0.0
      %v4750 = vmax.f32 %v4718, 0.0
      %v4751 = vmax.f32 %v4719, 0.0
      %v4752 = vmax.f32 %v4720, 0.0
      %v4753 = vmax.f32 %v4721, 0.0
      %v4754 = vmax.f32 %v4722, 0.0
      %v4755 = vmax.f32 %v4723, 0.0
      %v4756 = vmax.f32 %v4724, 0.0
      %v4757 = vmax.f32 %v4725, 0.0
      %v4758 = vmax.f32 %v4726, 0.0
      %v4759 = vmax.f32 %v4727, 0.0
      %v4760 = vmax.f32 %v4728, 0.0
      %v4761 = vmax.f32 %v4729, 0.0
      %v4762 = vmax.f32 %v4730, 0.0
      %v4763 = vmax.f32 %v4731, 0.0
      %v4764 = vmax.f32 %v4732, 0.0
      %v4765 = vmax.f32 %v4733, 0.0
      %v4766 = vmax.f32 %v4734, 0.0
      %v4767 = vmax.f32 %v4735, 0.0
      %v4768 = vmax.f32 %v4736, 0.0
      %v4769 = vmax.f32 %v4737, 0.0
      %v4770 = vmax.f32 %v4738, 0.0
      %v4771 = vmax.f32 %v4739, 0.0
      %v4772 = vmax.f32 %v4740, 0.0
      %v4773 = vmax.f32 %v4741, 0.0
      %v4774 = vmax.f32 %v4742, 0.0
      %v4775 = vpack.c.bf16 %v4744, %v4743
      %v4776 = vpack.c.bf16 %v4746, %v4745
      %v4777 = vpack.c.bf16 %v4748, %v4747
      %v4778 = vpack.c.bf16 %v4750, %v4749
      %v4779 = vpack.c.bf16 %v4752, %v4751
      %v4780 = vpack.c.bf16 %v4754, %v4753
      %v4781 = vpack.c.bf16 %v4756, %v4755
      %v4782 = vpack.c.bf16 %v4758, %v4757
      %v4783 = vpack.c.bf16 %v4760, %v4759
      %v4784 = vpack.c.bf16 %v4762, %v4761
      %v4785 = vpack.c.bf16 %v4764, %v4763
      %v4786 = vpack.c.bf16 %v4766, %v4765
      %v4787 = vpack.c.bf16 %v4768, %v4767
      %v4788 = vpack.c.bf16 %v4770, %v4769
      %v4789 = vpack.c.bf16 %v4772, %v4771
      %v4790 = vpack.c.bf16 %v4774, %v4773
      %v4807 = vunpack.c.l.b16 %v4775
      %v4808 = vunpack.c.h.b16 %v4775
      %v4809 = vunpack.c.l.b16 %v4776
      %v4810 = vunpack.c.h.b16 %v4776
      %v4811 = vunpack.c.l.b16 %v4777
      %v4812 = vunpack.c.h.b16 %v4777
      %v4813 = vunpack.c.l.b16 %v4778
      %v4814 = vunpack.c.h.b16 %v4778
      %v4815 = vunpack.c.l.b16 %v4779
      %v4816 = vunpack.c.h.b16 %v4779
      %v4817 = vunpack.c.l.b16 %v4780
      %v4818 = vunpack.c.h.b16 %v4780
      %v4819 = vunpack.c.l.b16 %v4781
      %v4820 = vunpack.c.h.b16 %v4781
      %v4821 = vunpack.c.l.b16 %v4782
      %v4822 = vunpack.c.h.b16 %v4782
      %v4823 = vunpack.c.l.b16 %v4783
      %v4824 = vunpack.c.h.b16 %v4783
      %v4825 = vunpack.c.l.b16 %v4784
      %v4826 = vunpack.c.h.b16 %v4784
      %v4827 = vunpack.c.l.b16 %v4785
      %v4828 = vunpack.c.h.b16 %v4785
      %v4829 = vunpack.c.l.b16 %v4786
      %v4830 = vunpack.c.h.b16 %v4786
      %v4831 = vunpack.c.l.b16 %v4787
      %v4832 = vunpack.c.h.b16 %v4787
      %v4833 = vunpack.c.l.b16 %v4788
      %v4834 = vunpack.c.h.b16 %v4788
      %v4835 = vunpack.c.l.b16 %v4789
      %v4836 = vunpack.c.h.b16 %v4789
      %v4837 = vunpack.c.l.b16 %v4790
      %v4838 = vunpack.c.h.b16 %v4790
      %v4839 = vpack.c.b16 %v4807, %v4807
      %v4840 = vpack.c.b16 %v4808, %v4808
      %v4841 = vpack.c.b16 %v4809, %v4809
      %v4842 = vpack.c.b16 %v4810, %v4810
      %v4843 = vpack.c.b16 %v4811, %v4811
      %v4844 = vpack.c.b16 %v4812, %v4812
      %v4845 = vpack.c.b16 %v4813, %v4813
      %v4846 = vpack.c.b16 %v4814, %v4814
      %v4847 = vpack.c.b16 %v4815, %v4815
      %v4848 = vpack.c.b16 %v4816, %v4816
      %v4849 = vpack.c.b16 %v4817, %v4817
      %v4850 = vpack.c.b16 %v4818, %v4818
      %v4851 = vpack.c.b16 %v4819, %v4819
      %v4852 = vpack.c.b16 %v4820, %v4820
      %v4853 = vpack.c.b16 %v4821, %v4821
      %v4854 = vpack.c.b16 %v4822, %v4822
      %v4855 = vpack.c.b16 %v4823, %v4823
      %v4856 = vpack.c.b16 %v4824, %v4824
      %v4857 = vpack.c.b16 %v4825, %v4825
      %v4858 = vpack.c.b16 %v4826, %v4826
      %v4859 = vpack.c.b16 %v4827, %v4827
      %v4860 = vpack.c.b16 %v4828, %v4828
      %v4861 = vpack.c.b16 %v4829, %v4829
      %v4862 = vpack.c.b16 %v4830, %v4830
      %v4863 = vpack.c.b16 %v4831, %v4831
      %v4864 = vpack.c.b16 %v4832, %v4832
      %v4865 = vpack.c.b16 %v4833, %v4833
      %v4866 = vpack.c.b16 %v4834, %v4834
      %v4867 = vpack.c.b16 %v4835, %v4835
      %v4868 = vpack.c.b16 %v4836, %v4836
      %v4869 = vpack.c.b16 %v4837, %v4837
      %v4870 = vpack.c.b16 %v4838, %v4838
      %v4872 = vshrl.u32 %v4839, 16
      %v4874 = vrot.slane %v4872, 7
      %v4875 = vshll.u32 %v4839, 16
      %v4877 = vor.u32 %v4874, %v4875
      %v4878 = vrot.slane %v4874, 4
      %v4880 = vshrl.u32 %v4840, 16
      %v4882 = vrot.slane %v4880, 7
      %v4883 = vshll.u32 %v4840, 16
      %v4885 = vor.u32 %v4882, %v4883
      %v4886 = vsel %vm302, %v4878, %v4885
      %v4887 = vrot.slane %v4882, 4
      %v4889 = vshrl.u32 %v4841, 16
      %v4891 = vrot.slane %v4889, 7
      %v4892 = vshll.u32 %v4841, 16
      %v4894 = vor.u32 %v4891, %v4892
      %v4895 = vrot.slane %v4891, 4
      %v4897 = vshrl.u32 %v4842, 16
      %v4899 = vrot.slane %v4897, 7
      %v4900 = vshll.u32 %v4842, 16
      %v4902 = vor.u32 %v4899, %v4900
      %v4903 = vsel %vm302, %v4895, %v4902
      %v4904 = vrot.slane %v4899, 4
      %v4906 = vshrl.u32 %v4843, 16
      %v4908 = vrot.slane %v4906, 7
      %v4909 = vshll.u32 %v4843, 16
      %v4911 = vor.u32 %v4908, %v4909
      %v4912 = vrot.slane %v4908, 4
      %v4914 = vshrl.u32 %v4844, 16
      %v4916 = vrot.slane %v4914, 7
      %v4917 = vshll.u32 %v4844, 16
      %v4919 = vor.u32 %v4916, %v4917
      %v4920 = vsel %vm302, %v4912, %v4919
      %v4921 = vrot.slane %v4916, 4
      %v4923 = vshrl.u32 %v4845, 16
      %v4925 = vrot.slane %v4923, 7
      %v4926 = vshll.u32 %v4845, 16
      %v4928 = vor.u32 %v4925, %v4926
      %v4929 = vrot.slane %v4925, 4
      %v4931 = vshrl.u32 %v4846, 16
      %v4933 = vrot.slane %v4931, 7
      %v4934 = vshll.u32 %v4846, 16
      %v4936 = vor.u32 %v4933, %v4934
      %v4937 = vsel %vm302, %v4929, %v4936
      %v4938 = vrot.slane %v4933, 4
      %v4940 = vshrl.u32 %v4847, 16
      %v4942 = vrot.slane %v4940, 7
      %v4943 = vshll.u32 %v4847, 16
      %v4945 = vor.u32 %v4942, %v4943
      %v4946 = vrot.slane %v4942, 4
      %v4948 = vshrl.u32 %v4848, 16
      %v4950 = vrot.slane %v4948, 7
      %v4951 = vshll.u32 %v4848, 16
      %v4953 = vor.u32 %v4950, %v4951
      %v4954 = vsel %vm302, %v4946, %v4953
      %v4955 = vrot.slane %v4950, 4
      %v4957 = vshrl.u32 %v4849, 16
      %v4959 = vrot.slane %v4957, 7
      %v4960 = vshll.u32 %v4849, 16
      %v4962 = vor.u32 %v4959, %v4960
      %v4963 = vrot.slane %v4959, 4
      %v4965 = vshrl.u32 %v4850, 16
      %v4967 = vrot.slane %v4965, 7
      %v4968 = vshll.u32 %v4850, 16
      %v4970 = vor.u32 %v4967, %v4968
      %v4971 = vsel %vm302, %v4963, %v4970
      %v4972 = vrot.slane %v4967, 4
      %v4974 = vshrl.u32 %v4851, 16
      %v4976 = vrot.slane %v4974, 7
      %v4977 = vshll.u32 %v4851, 16
      %v4979 = vor.u32 %v4976, %v4977
      %v4980 = vrot.slane %v4976, 4
      %v4982 = vshrl.u32 %v4852, 16
      %v4984 = vrot.slane %v4982, 7
      %v4985 = vshll.u32 %v4852, 16
      %v4987 = vor.u32 %v4984, %v4985
      %v4988 = vsel %vm302, %v4980, %v4987
      %v4989 = vrot.slane %v4984, 4
      %v4991 = vshrl.u32 %v4853, 16
      %v4993 = vrot.slane %v4991, 7
      %v4994 = vshll.u32 %v4853, 16
      %v4996 = vor.u32 %v4993, %v4994
      %v4997 = vrot.slane %v4993, 4
      %v4999 = vshrl.u32 %v4854, 16
      %v5001 = vrot.slane %v4999, 7
      %v5002 = vshll.u32 %v4854, 16
      %v5004 = vor.u32 %v5001, %v5002
      %v5005 = vsel %vm302, %v4997, %v5004
      %v5006 = vrot.slane %v5001, 4
      %v5008 = vshrl.u32 %v4855, 16
      %v5010 = vrot.slane %v5008, 7
      %v5011 = vshll.u32 %v4855, 16
      %v5013 = vor.u32 %v5010, %v5011
      %v5014 = vrot.slane %v5010, 4
      %v5016 = vshrl.u32 %v4856, 16
      %v5018 = vrot.slane %v5016, 7
      %v5019 = vshll.u32 %v4856, 16
      %v5021 = vor.u32 %v5018, %v5019
      %v5022 = vsel %vm302, %v5014, %v5021
      %v5023 = vrot.slane %v5018, 4
      %v5025 = vshrl.u32 %v4857, 16
      %v5027 = vrot.slane %v5025, 7
      %v5028 = vshll.u32 %v4857, 16
      %v5030 = vor.u32 %v5027, %v5028
      %v5031 = vrot.slane %v5027, 4
      %v5033 = vshrl.u32 %v4858, 16
      %v5035 = vrot.slane %v5033, 7
      %v5036 = vshll.u32 %v4858, 16
      %v5038 = vor.u32 %v5035, %v5036
      %v5039 = vsel %vm302, %v5031, %v5038
      %v5040 = vrot.slane %v5035, 4
      %v5042 = vshrl.u32 %v4859, 16
      %v5044 = vrot.slane %v5042, 7
      %v5045 = vshll.u32 %v4859, 16
      %v5047 = vor.u32 %v5044, %v5045
      %v5048 = vrot.slane %v5044, 4
      %v5050 = vshrl.u32 %v4860, 16
      %v5052 = vrot.slane %v5050, 7
      %v5053 = vshll.u32 %v4860, 16
      %v5055 = vor.u32 %v5052, %v5053
      %v5056 = vsel %vm302, %v5048, %v5055
      %v5057 = vrot.slane %v5052, 4
      %v5059 = vshrl.u32 %v4861, 16
      %v5061 = vrot.slane %v5059, 7
      %v5062 = vshll.u32 %v4861, 16
      %v5064 = vor.u32 %v5061, %v5062
      %v5065 = vrot.slane %v5061, 4
      %v5067 = vshrl.u32 %v4862, 16
      %v5069 = vrot.slane %v5067, 7
      %v5070 = vshll.u32 %v4862, 16
      %v5072 = vor.u32 %v5069, %v5070
      %v5073 = vsel %vm302, %v5065, %v5072
      %v5074 = vrot.slane %v5069, 4
      %v5076 = vshrl.u32 %v4863, 16
      %v5078 = vrot.slane %v5076, 7
      %v5079 = vshll.u32 %v4863, 16
      %v5081 = vor.u32 %v5078, %v5079
      %v5082 = vrot.slane %v5078, 4
      %v5084 = vshrl.u32 %v4864, 16
      %v5086 = vrot.slane %v5084, 7
      %v5087 = vshll.u32 %v4864, 16
      %v5089 = vor.u32 %v5086, %v5087
      %v5090 = vsel %vm302, %v5082, %v5089
      %v5091 = vrot.slane %v5086, 4
      %v5093 = vshrl.u32 %v4865, 16
      %v5095 = vrot.slane %v5093, 7
      %v5096 = vshll.u32 %v4865, 16
      %v5098 = vor.u32 %v5095, %v5096
      %v5099 = vrot.slane %v5095, 4
      %v5101 = vshrl.u32 %v4866, 16
      %v5103 = vrot.slane %v5101, 7
      %v5104 = vshll.u32 %v4866, 16
      %v5106 = vor.u32 %v5103, %v5104
      %v5107 = vsel %vm302, %v5099, %v5106
      %v5108 = vrot.slane %v5103, 4
      %v5110 = vshrl.u32 %v4867, 16
      %v5112 = vrot.slane %v5110, 7
      %v5113 = vshll.u32 %v4867, 16
      %v5115 = vor.u32 %v5112, %v5113
      %v5116 = vrot.slane %v5112, 4
      %v5118 = vshrl.u32 %v4868, 16
      %v5120 = vrot.slane %v5118, 7
      %v5121 = vshll.u32 %v4868, 16
      %v5123 = vor.u32 %v5120, %v5121
      %v5124 = vsel %vm302, %v5116, %v5123
      %v5125 = vrot.slane %v5120, 4
      %v5127 = vshrl.u32 %v4869, 16
      %v5129 = vrot.slane %v5127, 7
      %v5130 = vshll.u32 %v4869, 16
      %v5132 = vor.u32 %v5129, %v5130
      %v5133 = vrot.slane %v5129, 4
      %v5135 = vshrl.u32 %v4870, 16
      %v5137 = vrot.slane %v5135, 7
      %v5138 = vshll.u32 %v4870, 16
      %v5140 = vor.u32 %v5137, %v5138
      %v5141 = vsel %vm302, %v5133, %v5140
      %v5142 = vrot.slane %v5137, 4
      %v5191 = vld [vmem:[%s623] sm:$0xf]
      %v5192 = vsel %vm626, %v4877, %v5191
      %5193 = vst [vmem:[%s623] sm:$0xf] %v5192
      %5194 = vst.msk [vmem:[%s623 + $0x4] sm:$0xf] %vm630, %v4886
      %v5195 = vld [vmem:[%s623 + $0x8] sm:$0x1]
      %v5196 = vsel %vm633, %v4887, %v5195
      %5197 = vst [vmem:[%s623 + $0x8] sm:$0x1] %v5196
      %v5198 = vld [vmem:[%s623 + $0xc] sm:$0xf]
      %v5199 = vsel %vm626, %v4894, %v5198
      %5200 = vst [vmem:[%s623 + $0xc] sm:$0xf] %v5199
      %5201 = vst.msk [vmem:[%s623 + $0x10] sm:$0xf] %vm630, %v4903
      %v5202 = vld [vmem:[%s623 + $0x14] sm:$0x1]
      %v5203 = vsel %vm633, %v4904, %v5202
      %5204 = vst [vmem:[%s623 + $0x14] sm:$0x1] %v5203
      %v5205 = vld [vmem:[%s623 + $0x18] sm:$0xf]
      %v5206 = vsel %vm626, %v4911, %v5205
      %5207 = vst [vmem:[%s623 + $0x18] sm:$0xf] %v5206
      %5208 = vst.msk [vmem:[%s623 + $0x1c] sm:$0xf] %vm630, %v4920
      %v5209 = vld [vmem:[%s623 + $0x20] sm:$0x1]
      %v5210 = vsel %vm633, %v4921, %v5209
      %5211 = vst [vmem:[%s623 + $0x20] sm:$0x1] %v5210
      %v5212 = vld [vmem:[%s623 + $0x24] sm:$0xf]
      %v5213 = vsel %vm626, %v4928, %v5212
      %5214 = vst [vmem:[%s623 + $0x24] sm:$0xf] %v5213
      %5215 = vst.msk [vmem:[%s623 + $0x28] sm:$0xf] %vm630, %v4937
      %v5216 = vld [vmem:[%s623 + $0x2c] sm:$0x1]
      %v5217 = vsel %vm633, %v4938, %v5216
      %5218 = vst [vmem:[%s623 + $0x2c] sm:$0x1] %v5217
      %v5219 = vld [vmem:[%s623 + $0x30] sm:$0xf]
      %v5220 = vsel %vm626, %v4945, %v5219
      %5221 = vst [vmem:[%s623 + $0x30] sm:$0xf] %v5220
      %5222 = vst.msk [vmem:[%s623 + $0x34] sm:$0xf] %vm630, %v4954
      %v5223 = vld [vmem:[%s623 + $0x38] sm:$0x1]
      %v5224 = vsel %vm633, %v4955, %v5223
      %5225 = vst [vmem:[%s623 + $0x38] sm:$0x1] %v5224
      %v5226 = vld [vmem:[%s623 + $0x3c] sm:$0xf]
      %v5227 = vsel %vm626, %v4962, %v5226
      %5228 = vst [vmem:[%s623 + $0x3c] sm:$0xf] %v5227
      %5229 = vst.msk [vmem:[%s623 + $0x40] sm:$0xf] %vm630, %v4971
      %v5230 = vld [vmem:[%s623 + $0x44] sm:$0x1]
      %v5231 = vsel %vm633, %v4972, %v5230
      %5232 = vst [vmem:[%s623 + $0x44] sm:$0x1] %v5231
      %v5233 = vld [vmem:[%s623 + $0x48] sm:$0xf]
      %v5234 = vsel %vm626, %v4979, %v5233
      %5235 = vst [vmem:[%s623 + $0x48] sm:$0xf] %v5234
      %5236 = vst.msk [vmem:[%s623 + $0x4c] sm:$0xf] %vm630, %v4988
      %v5237 = vld [vmem:[%s623 + $0x50] sm:$0x1]
      %v5238 = vsel %vm633, %v4989, %v5237
      %5239 = vst [vmem:[%s623 + $0x50] sm:$0x1] %v5238
      %v5240 = vld [vmem:[%s623 + $0x54] sm:$0xf]
      %v5241 = vsel %vm626, %v4996, %v5240
      %5242 = vst [vmem:[%s623 + $0x54] sm:$0xf] %v5241
      %5243 = vst.msk [vmem:[%s623 + $0x58] sm:$0xf] %vm630, %v5005
      %v5244 = vld [vmem:[%s623 + $0x5c] sm:$0x1]
      %v5245 = vsel %vm633, %v5006, %v5244
      %5246 = vst [vmem:[%s623 + $0x5c] sm:$0x1] %v5245
      %v5247 = vld [vmem:[%s623 + $0x60] sm:$0xf]
      %v5248 = vsel %vm626, %v5013, %v5247
      %5249 = vst [vmem:[%s623 + $0x60] sm:$0xf] %v5248
      %5250 = vst.msk [vmem:[%s623 + $0x64] sm:$0xf] %vm630, %v5022
      %v5251 = vld [vmem:[%s623 + $0x68] sm:$0x1]
      %v5252 = vsel %vm633, %v5023, %v5251
      %5253 = vst [vmem:[%s623 + $0x68] sm:$0x1] %v5252
      %v5254 = vld [vmem:[%s623 + $0x6c] sm:$0xf]
      %v5255 = vsel %vm626, %v5030, %v5254
      %5256 = vst [vmem:[%s623 + $0x6c] sm:$0xf] %v5255
      %5257 = vst.msk [vmem:[%s623 + $0x70] sm:$0xf] %vm630, %v5039
      %v5258 = vld [vmem:[%s623 + $0x74] sm:$0x1]
      %v5259 = vsel %vm633, %v5040, %v5258
      %5260 = vst [vmem:[%s623 + $0x74] sm:$0x1] %v5259
      %v5261 = vld [vmem:[%s623 + $0x78] sm:$0xf]
      %v5262 = vsel %vm626, %v5047, %v5261
      %5263 = vst [vmem:[%s623 + $0x78] sm:$0xf] %v5262
      %5264 = vst.msk [vmem:[%s623 + $0x7c] sm:$0xf] %vm630, %v5056
      %v5265 = vld [vmem:[%s623 + $0x80] sm:$0x1]
      %v5266 = vsel %vm633, %v5057, %v5265
      %5267 = vst [vmem:[%s623 + $0x80] sm:$0x1] %v5266
      %v5268 = vld [vmem:[%s623 + $0x84] sm:$0xf]
      %v5269 = vsel %vm626, %v5064, %v5268
      %5270 = vst [vmem:[%s623 + $0x84] sm:$0xf] %v5269
      %5271 = vst.msk [vmem:[%s623 + $0x88] sm:$0xf] %vm630, %v5073
      %v5272 = vld [vmem:[%s623 + $0x8c] sm:$0x1]
      %v5273 = vsel %vm633, %v5074, %v5272
      %5274 = vst [vmem:[%s623 + $0x8c] sm:$0x1] %v5273
      %v5275 = vld [vmem:[%s623 + $0x90] sm:$0xf]
      %v5276 = vsel %vm626, %v5081, %v5275
      %5277 = vst [vmem:[%s623 + $0x90] sm:$0xf] %v5276
      %5278 = vst.msk [vmem:[%s623 + $0x94] sm:$0xf] %vm630, %v5090
      %v5279 = vld [vmem:[%s623 + $0x98] sm:$0x1]
      %v5280 = vsel %vm633, %v5091, %v5279
      %5281 = vst [vmem:[%s623 + $0x98] sm:$0x1] %v5280
      %v5282 = vld [vmem:[%s623 + $0x9c] sm:$0xf]
      %v5283 = vsel %vm626, %v5098, %v5282
      %5284 = vst [vmem:[%s623 + $0x9c] sm:$0xf] %v5283
      %5285 = vst.msk [vmem:[%s623 + $0xa0] sm:$0xf] %vm630, %v5107
      %v5286 = vld [vmem:[%s623 + $0xa4] sm:$0x1]
      %v5287 = vsel %vm633, %v5108, %v5286
      %5288 = vst [vmem:[%s623 + $0xa4] sm:$0x1] %v5287
      %v5289 = vld [vmem:[%s623 + $0xa8] sm:$0xf]
      %v5290 = vsel %vm626, %v5115, %v5289
      %5291 = vst [vmem:[%s623 + $0xa8] sm:$0xf] %v5290
      %5292 = vst.msk [vmem:[%s623 + $0xac] sm:$0xf] %vm630, %v5124
      %v5293 = vld [vmem:[%s623 + $0xb0] sm:$0x1]
      %v5294 = vsel %vm633, %v5125, %v5293
      %5295 = vst [vmem:[%s623 + $0xb0] sm:$0x1] %v5294
      %v5296 = vld [vmem:[%s623 + $0xb4] sm:$0xf]
      %v5297 = vsel %vm626, %v5132, %v5296
      %5298 = vst [vmem:[%s623 + $0xb4] sm:$0xf] %v5297
      %5299 = vst.msk [vmem:[%s623 + $0xb8] sm:$0xf] %vm630, %v5141
      %v5300 = vld [vmem:[%s623 + $0xbc] sm:$0x1]
      %v5301 = vsel %vm633, %v5142, %v5300
      %5302 = vst [vmem:[%s623 + $0xbc] sm:$0x1] %v5301
      %v5303 = vld [vmem:[#allocation2] sm:$0xf]
      %v5304 = vsel %vm626, %v4894, %v5303
      %5305 = vst [vmem:[#allocation2] sm:$0xf] %v5304
      %5306 = vst.msk [vmem:[#allocation2 + $0x4] sm:$0xf] %vm630, %v4903
      %v5307 = vld [vmem:[#allocation2 + $0x8] sm:$0x1]
      %v5308 = vsel %vm633, %v4904, %v5307
      %5309 = vst [vmem:[#allocation2 + $0x8] sm:$0x1] %v5308
      %v5310 = vld [vmem:[%s749] sm:$0xf]
      %v5311 = vsel %vm626, %v5115, %v5310
      %5312 = vst [vmem:[%s749] sm:$0xf] %v5311
      %5313 = vst.msk [vmem:[%s749 + $0x4] sm:$0xf] %vm630, %v5124
      %v5314 = vld [vmem:[%s749 + $0x8] sm:$0x1]
      %v5315 = vsel %vm633, %v5125, %v5314
      %5316 = vst [vmem:[%s749 + $0x8] sm:$0x1] %v5315
      %v5317 = vld [vmem:[#allocation2] sm:$0x2]
      %v5318 = vld [vmem:[#allocation2 + $0xc] sm:$0x2]
      %v5319 = vld [vmem:[#allocation2 + $0x18] sm:$0x2]
      %v5320 = vld [vmem:[#allocation2 + $0x24] sm:$0x2]
      %v5321 = vld [vmem:[#allocation2 + $0x30] sm:$0x2]
      %v5322 = vld [vmem:[#allocation2 + $0x3c] sm:$0x2]
      %v5323 = vld [vmem:[#allocation2 + $0x48] sm:$0x2]
      %v5324 = vld [vmem:[#allocation2 + $0x54] sm:$0x2]
      %v5325 = vld [vmem:[#allocation2 + $0x60] sm:$0x2]
      %v5326 = vld [vmem:[#allocation2 + $0x6c] sm:$0x2]
      %v5327 = vld [vmem:[#allocation2 + $0x78] sm:$0x2]
      %v5328 = vld [vmem:[#allocation2 + $0x84] sm:$0x2]
      %v5329 = vld [vmem:[#allocation2 + $0x90] sm:$0x2]
      %v5330 = vld [vmem:[#allocation2 + $0x9c] sm:$0x2]
      %v5331 = vld [vmem:[#allocation2 + $0xa8] sm:$0x2]
      %v5332 = vld [vmem:[#allocation2 + $0xb4] sm:$0x2]
      %v5333 = vld [vmem:[#allocation2 + $0xc0] sm:$0x2]
      %v5334 = vld [vmem:[#allocation2 + $0xcc] sm:$0x2]
      %v5353 = vrot.slane %v5317, 5
      %v5354 = vrot.slane %v5353, 4
      %v5355 = vrot.slane %v5318, 5
      %v5356 = vrot.slane %v5355, 4
      %v5357 = vrot.slane %v5319, 5
      %v5358 = vrot.slane %v5357, 4
      %v5359 = vrot.slane %v5320, 5
      %v5360 = vrot.slane %v5359, 4
      %v5361 = vrot.slane %v5321, 5
      %v5362 = vrot.slane %v5361, 4
      %v5363 = vrot.slane %v5322, 5
      %v5364 = vrot.slane %v5363, 4
      %v5365 = vrot.slane %v5323, 5
      %v5366 = vrot.slane %v5365, 4
      %v5367 = vrot.slane %v5324, 5
      %v5368 = vrot.slane %v5367, 4
      %v5369 = vrot.slane %v5325, 5
      %v5370 = vrot.slane %v5369, 4
      %v5371 = vrot.slane %v5326, 5
      %v5372 = vrot.slane %v5371, 4
      %v5373 = vrot.slane %v5327, 5
      %v5374 = vrot.slane %v5373, 4
      %v5375 = vrot.slane %v5328, 5
      %v5376 = vrot.slane %v5375, 4
      %v5377 = vrot.slane %v5329, 5
      %v5378 = vrot.slane %v5377, 4
      %v5379 = vrot.slane %v5330, 5
      %v5380 = vrot.slane %v5379, 4
      %v5381 = vrot.slane %v5331, 5
      %v5382 = vrot.slane %v5381, 4
      %v5383 = vrot.slane %v5332, 5
      %v5384 = vrot.slane %v5383, 4
      %v5385 = vrot.slane %v5333, 5
      %v5386 = vrot.slane %v5385, 4
      %v5387 = vrot.slane %v5334, 5
      %v5388 = vrot.slane %v5387, 4
      %v5407 = vld [vmem:[#allocation2] sm:$0x1]
      %v5408 = vsel %vm633, %v5354, %v5407
      %5409 = vst [vmem:[#allocation2] sm:$0x1] %v5408
      %v5410 = vld [vmem:[#allocation2 + $0xc] sm:$0x1]
      %v5411 = vsel %vm633, %v5356, %v5410
      %5412 = vst [vmem:[#allocation2 + $0xc] sm:$0x1] %v5411
      %v5413 = vld [vmem:[#allocation2 + $0x18] sm:$0x1]
      %v5414 = vsel %vm633, %v5358, %v5413
      %5415 = vst [vmem:[#allocation2 + $0x18] sm:$0x1] %v5414
      %v5416 = vld [vmem:[#allocation2 + $0x24] sm:$0x1]
      %v5417 = vsel %vm633, %v5360, %v5416
      %5418 = vst [vmem:[#allocation2 + $0x24] sm:$0x1] %v5417
      %v5419 = vld [vmem:[#allocation2 + $0x30] sm:$0x1]
      %v5420 = vsel %vm633, %v5362, %v5419
      %5421 = vst [vmem:[#allocation2 + $0x30] sm:$0x1] %v5420
      %v5422 = vld [vmem:[#allocation2 + $0x3c] sm:$0x1]
      %v5423 = vsel %vm633, %v5364, %v5422
      %5424 = vst [vmem:[#allocation2 + $0x3c] sm:$0x1] %v5423
      %v5425 = vld [vmem:[#allocation2 + $0x48] sm:$0x1]
      %v5426 = vsel %vm633, %v5366, %v5425
      %5427 = vst [vmem:[#allocation2 + $0x48] sm:$0x1] %v5426
      %v5428 = vld [vmem:[#allocation2 + $0x54] sm:$0x1]
      %v5429 = vsel %vm633, %v5368, %v5428
      %5430 = vst [vmem:[#allocation2 + $0x54] sm:$0x1] %v5429
      %v5431 = vld [vmem:[#allocation2 + $0x60] sm:$0x1]
      %v5432 = vsel %vm633, %v5370, %v5431
      %5433 = vst [vmem:[#allocation2 + $0x60] sm:$0x1] %v5432
      %v5434 = vld [vmem:[#allocation2 + $0x6c] sm:$0x1]
      %v5435 = vsel %vm633, %v5372, %v5434
      %5436 = vst [vmem:[#allocation2 + $0x6c] sm:$0x1] %v5435
      %v5437 = vld [vmem:[#allocation2 + $0x78] sm:$0x1]
      %v5438 = vsel %vm633, %v5374, %v5437
      %5439 = vst [vmem:[#allocation2 + $0x78] sm:$0x1] %v5438
      %v5440 = vld [vmem:[#allocation2 + $0x84] sm:$0x1]
      %v5441 = vsel %vm633, %v5376, %v5440
      %5442 = vst [vmem:[#allocation2 + $0x84] sm:$0x1] %v5441
      %v5443 = vld [vmem:[#allocation2 + $0x90] sm:$0x1]
      %v5444 = vsel %vm633, %v5378, %v5443
      %5445 = vst [vmem:[#allocation2 + $0x90] sm:$0x1] %v5444
      %v5446 = vld [vmem:[#allocation2 + $0x9c] sm:$0x1]
      %v5447 = vsel %vm633, %v5380, %v5446
      %5448 = vst [vmem:[#allocation2 + $0x9c] sm:$0x1] %v5447
      %v5449 = vld [vmem:[#allocation2 + $0xa8] sm:$0x1]
      %v5450 = vsel %vm633, %v5382, %v5449
      %5451 = vst [vmem:[#allocation2 + $0xa8] sm:$0x1] %v5450
      %v5452 = vld [vmem:[#allocation2 + $0xb4] sm:$0x1]
      %v5453 = vsel %vm633, %v5384, %v5452
      %5454 = vst [vmem:[#allocation2 + $0xb4] sm:$0x1] %v5453
      %v5455 = vld [vmem:[#allocation2 + $0xc0] sm:$0x1]
      %v5456 = vsel %vm633, %v5386, %v5455
      %5457 = vst [vmem:[#allocation2 + $0xc0] sm:$0x1] %v5456
      %v5458 = vld [vmem:[#allocation2 + $0xcc] sm:$0x1]
      %v5459 = vsel %vm633, %v5388, %v5458
      %5460 = vst [vmem:[#allocation2 + $0xcc] sm:$0x1] %v5459
      %v5461 = vld [vmem:[#allocation2 + $0x4] sm:$0x8]
      %v5462 = vld [vmem:[#allocation2 + $0x10] sm:$0x8]
      %v5463 = vld [vmem:[#allocation2 + $0x1c] sm:$0x8]
      %v5464 = vld [vmem:[#allocation2 + $0x28] sm:$0x8]
      %v5465 = vld [vmem:[#allocation2 + $0x34] sm:$0x8]
      %v5466 = vld [vmem:[#allocation2 + $0x40] sm:$0x8]
      %v5467 = vld [vmem:[#allocation2 + $0x4c] sm:$0x8]
      %v5468 = vld [vmem:[#allocation2 + $0x58] sm:$0x8]
      %v5469 = vld [vmem:[#allocation2 + $0x64] sm:$0x8]
      %v5470 = vld [vmem:[#allocation2 + $0x70] sm:$0x8]
      %v5471 = vld [vmem:[#allocation2 + $0x7c] sm:$0x8]
      %v5472 = vld [vmem:[#allocation2 + $0x88] sm:$0x8]
      %v5473 = vld [vmem:[#allocation2 + $0x94] sm:$0x8]
      %v5474 = vld [vmem:[#allocation2 + $0xa0] sm:$0x8]
      %v5475 = vld [vmem:[#allocation2 + $0xac] sm:$0x8]
      %v5476 = vld [vmem:[#allocation2 + $0xb8] sm:$0x8]
      %v5477 = vld [vmem:[#allocation2 + $0xc4] sm:$0x8]
      %v5478 = vld [vmem:[#allocation2 + $0xd0] sm:$0x8]
      %v5497 = vrot.slane %v5461, 7
      %v5498 = vrot.slane %v5497, 4
      %v5499 = vrot.slane %v5462, 7
      %v5500 = vrot.slane %v5499, 4
      %v5501 = vrot.slane %v5463, 7
      %v5502 = vrot.slane %v5501, 4
      %v5503 = vrot.slane %v5464, 7
      %v5504 = vrot.slane %v5503, 4
      %v5505 = vrot.slane %v5465, 7
      %v5506 = vrot.slane %v5505, 4
      %v5507 = vrot.slane %v5466, 7
      %v5508 = vrot.slane %v5507, 4
      %v5509 = vrot.slane %v5467, 7
      %v5510 = vrot.slane %v5509, 4
      %v5511 = vrot.slane %v5468, 7
      %v5512 = vrot.slane %v5511, 4
      %v5513 = vrot.slane %v5469, 7
      %v5514 = vrot.slane %v5513, 4
      %v5515 = vrot.slane %v5470, 7
      %v5516 = vrot.slane %v5515, 4
      %v5517 = vrot.slane %v5471, 7
      %v5518 = vrot.slane %v5517, 4
      %v5519 = vrot.slane %v5472, 7
      %v5520 = vrot.slane %v5519, 4
      %v5521 = vrot.slane %v5473, 7
      %v5522 = vrot.slane %v5521, 4
      %v5523 = vrot.slane %v5474, 7
      %v5524 = vrot.slane %v5523, 4
      %v5525 = vrot.slane %v5475, 7
      %v5526 = vrot.slane %v5525, 4
      %v5527 = vrot.slane %v5476, 7
      %v5528 = vrot.slane %v5527, 4
      %v5529 = vrot.slane %v5477, 7
      %v5530 = vrot.slane %v5529, 4
      %v5531 = vrot.slane %v5478, 7
      %v5532 = vrot.slane %v5531, 4
      %v5551 = vld [vmem:[#allocation2 + $0x8] sm:$0x1]
      %v5552 = vsel %vm991, %v5498, %v5551
      %5553 = vst [vmem:[#allocation2 + $0x8] sm:$0x1] %v5552
      %v5554 = vld [vmem:[#allocation2 + $0x14] sm:$0x1]
      %v5555 = vsel %vm991, %v5500, %v5554
      %5556 = vst [vmem:[#allocation2 + $0x14] sm:$0x1] %v5555
      %v5557 = vld [vmem:[#allocation2 + $0x20] sm:$0x1]
      %v5558 = vsel %vm991, %v5502, %v5557
      %5559 = vst [vmem:[#allocation2 + $0x20] sm:$0x1] %v5558
      %v5560 = vld [vmem:[#allocation2 + $0x2c] sm:$0x1]
      %v5561 = vsel %vm991, %v5504, %v5560
      %5562 = vst [vmem:[#allocation2 + $0x2c] sm:$0x1] %v5561
      %v5563 = vld [vmem:[#allocation2 + $0x38] sm:$0x1]
      %v5564 = vsel %vm991, %v5506, %v5563
      %5565 = vst [vmem:[#allocation2 + $0x38] sm:$0x1] %v5564
      %v5566 = vld [vmem:[#allocation2 + $0x44] sm:$0x1]
      %v5567 = vsel %vm991, %v5508, %v5566
      %5568 = vst [vmem:[#allocation2 + $0x44] sm:$0x1] %v5567
      %v5569 = vld [vmem:[#allocation2 + $0x50] sm:$0x1]
      %v5570 = vsel %vm991, %v5510, %v5569
      %5571 = vst [vmem:[#allocation2 + $0x50] sm:$0x1] %v5570
      %v5572 = vld [vmem:[#allocation2 + $0x5c] sm:$0x1]
      %v5573 = vsel %vm991, %v5512, %v5572
      %5574 = vst [vmem:[#allocation2 + $0x5c] sm:$0x1] %v5573
      %v5575 = vld [vmem:[#allocation2 + $0x68] sm:$0x1]
      %v5576 = vsel %vm991, %v5514, %v5575
      %5577 = vst [vmem:[#allocation2 + $0x68] sm:$0x1] %v5576
      %v5578 = vld [vmem:[#allocation2 + $0x74] sm:$0x1]
      %v5579 = vsel %vm991, %v5516, %v5578
      %5580 = vst [vmem:[#allocation2 + $0x74] sm:$0x1] %v5579
      %v5581 = vld [vmem:[#allocation2 + $0x80] sm:$0x1]
      %v5582 = vsel %vm991, %v5518, %v5581
      %5583 = vst [vmem:[#allocation2 + $0x80] sm:$0x1] %v5582
      %v5584 = vld [vmem:[#allocation2 + $0x8c] sm:$0x1]
      %v5585 = vsel %vm991, %v5520, %v5584
      %5586 = vst [vmem:[#allocation2 + $0x8c] sm:$0x1] %v5585
      %v5587 = vld [vmem:[#allocation2 + $0x98] sm:$0x1]
      %v5588 = vsel %vm991, %v5522, %v5587
      %5589 = vst [vmem:[#allocation2 + $0x98] sm:$0x1] %v5588
      %v5590 = vld [vmem:[#allocation2 + $0xa4] sm:$0x1]
      %v5591 = vsel %vm991, %v5524, %v5590
      %5592 = vst [vmem:[#allocation2 + $0xa4] sm:$0x1] %v5591
      %v5593 = vld [vmem:[#allocation2 + $0xb0] sm:$0x1]
      %v5594 = vsel %vm991, %v5526, %v5593
      %5595 = vst [vmem:[#allocation2 + $0xb0] sm:$0x1] %v5594
      %v5596 = vld [vmem:[#allocation2 + $0xbc] sm:$0x1]
      %v5597 = vsel %vm991, %v5528, %v5596
      %5598 = vst [vmem:[#allocation2 + $0xbc] sm:$0x1] %v5597
      %v5599 = vld [vmem:[#allocation2 + $0xc8] sm:$0x1]
      %v5600 = vsel %vm991, %v5530, %v5599
      %5601 = vst [vmem:[#allocation2 + $0xc8] sm:$0x1] %v5600
      %v5602 = vld [vmem:[#allocation2 + $0xd4] sm:$0x1]
      %v5603 = vsel %vm991, %v5532, %v5602
      %5604 = vst [vmem:[#allocation2 + $0xd4] sm:$0x1] %v5603
      %v5605 = vld [vmem:[#allocation2] sm:$0xf]
      %v5606 = vld [vmem:[#allocation2 + $0x4] sm:$0xf]
      %v5607 = vld [vmem:[#allocation2 + $0xc] sm:$0xf]
      %v5608 = vld [vmem:[#allocation2 + $0x10] sm:$0xf]
      %v5609 = vld [vmem:[#allocation2 + $0x18] sm:$0xf]
      %v5610 = vld [vmem:[#allocation2 + $0x1c] sm:$0xf]
      %v5611 = vld [vmem:[#allocation2 + $0x24] sm:$0xf]
      %v5612 = vld [vmem:[#allocation2 + $0x28] sm:$0xf]
      %v5613 = vld [vmem:[#allocation2 + $0x30] sm:$0xf]
      %v5614 = vld [vmem:[#allocation2 + $0x34] sm:$0xf]
      %v5615 = vld [vmem:[#allocation2 + $0x3c] sm:$0xf]
      %v5616 = vld [vmem:[#allocation2 + $0x40] sm:$0xf]
      %v5617 = vld [vmem:[#allocation2 + $0x48] sm:$0xf]
      %v5618 = vld [vmem:[#allocation2 + $0x4c] sm:$0xf]
      %v5619 = vld [vmem:[#allocation2 + $0x54] sm:$0xf]
      %v5620 = vld [vmem:[#allocation2 + $0x58] sm:$0xf]
      %v5621 = vld [vmem:[#allocation2 + $0x60] sm:$0xf]
      %v5622 = vld [vmem:[#allocation2 + $0x64] sm:$0xf]
      %v5623 = vld [vmem:[#allocation2 + $0x6c] sm:$0xf]
      %v5624 = vld [vmem:[#allocation2 + $0x70] sm:$0xf]
      %v5625 = vld [vmem:[#allocation2 + $0x78] sm:$0xf]
      %v5626 = vld [vmem:[#allocation2 + $0x7c] sm:$0xf]
      %v5627 = vld [vmem:[#allocation2 + $0x84] sm:$0xf]
      %v5628 = vld [vmem:[#allocation2 + $0x88] sm:$0xf]
      %v5629 = vld [vmem:[#allocation2 + $0x90] sm:$0xf]
      %v5630 = vld [vmem:[#allocation2 + $0x94] sm:$0xf]
      %v5631 = vld [vmem:[#allocation2 + $0x9c] sm:$0xf]
      %v5632 = vld [vmem:[#allocation2 + $0xa0] sm:$0xf]
      %v5633 = vld [vmem:[#allocation2 + $0xa8] sm:$0xf]
      %v5634 = vld [vmem:[#allocation2 + $0xac] sm:$0xf]
      %v5635 = vld [vmem:[#allocation2 + $0xb4] sm:$0xf]
      %v5636 = vld [vmem:[#allocation2 + $0xb8] sm:$0xf]
      %v5637 = vld [vmem:[%s623] sm:$0xf]
      %v5638 = vld [vmem:[%s623 + $0x4] sm:$0xf]
      %v5639 = vld [vmem:[%s623 + $0xc] sm:$0xf]
      %v5640 = vld [vmem:[%s623 + $0x10] sm:$0xf]
      %v5641 = vld [vmem:[%s623 + $0x18] sm:$0xf]
      %v5642 = vld [vmem:[%s623 + $0x1c] sm:$0xf]
      %v5643 = vld [vmem:[%s623 + $0x24] sm:$0xf]
      %v5644 = vld [vmem:[%s623 + $0x28] sm:$0xf]
      %v5645 = vld [vmem:[%s623 + $0x30] sm:$0xf]
      %v5646 = vld [vmem:[%s623 + $0x34] sm:$0xf]
      %v5647 = vld [vmem:[%s623 + $0x3c] sm:$0xf]
      %v5648 = vld [vmem:[%s623 + $0x40] sm:$0xf]
      %v5649 = vld [vmem:[%s623 + $0x48] sm:$0xf]
      %v5650 = vld [vmem:[%s623 + $0x4c] sm:$0xf]
      %v5651 = vld [vmem:[%s623 + $0x54] sm:$0xf]
      %v5652 = vld [vmem:[%s623 + $0x58] sm:$0xf]
      %v5653 = vld [vmem:[%s623 + $0x60] sm:$0xf]
      %v5654 = vld [vmem:[%s623 + $0x64] sm:$0xf]
      %v5655 = vld [vmem:[%s623 + $0x6c] sm:$0xf]
      %v5656 = vld [vmem:[%s623 + $0x70] sm:$0xf]
      %v5657 = vld [vmem:[%s623 + $0x78] sm:$0xf]
      %v5658 = vld [vmem:[%s623 + $0x7c] sm:$0xf]
      %v5659 = vld [vmem:[%s623 + $0x84] sm:$0xf]
      %v5660 = vld [vmem:[%s623 + $0x88] sm:$0xf]
      %v5661 = vld [vmem:[%s623 + $0x90] sm:$0xf]
      %v5662 = vld [vmem:[%s623 + $0x94] sm:$0xf]
      %v5663 = vld [vmem:[%s623 + $0x9c] sm:$0xf]
      %v5664 = vld [vmem:[%s623 + $0xa0] sm:$0xf]
      %v5665 = vld [vmem:[%s623 + $0xa8] sm:$0xf]
      %v5666 = vld [vmem:[%s623 + $0xac] sm:$0xf]
      %v5667 = vld [vmem:[%s623 + $0xb4] sm:$0xf]
      %v5668 = vld [vmem:[%s623 + $0xb8] sm:$0xf]
      %v5669 = vld [vmem:[%s1110] sm:$0xf]
      %v5670 = vld [vmem:[%s1110 + $0x4] sm:$0xf]
      %v5671 = vld [vmem:[%s1110 + $0xc] sm:$0xf]
      %v5672 = vld [vmem:[%s1110 + $0x10] sm:$0xf]
      %v5673 = vld [vmem:[%s1110 + $0x18] sm:$0xf]
      %v5674 = vld [vmem:[%s1110 + $0x1c] sm:$0xf]
      %v5675 = vld [vmem:[%s1110 + $0x24] sm:$0xf]
      %v5676 = vld [vmem:[%s1110 + $0x28] sm:$0xf]
      %v5677 = vld [vmem:[%s1110 + $0x30] sm:$0xf]
      %v5678 = vld [vmem:[%s1110 + $0x34] sm:$0xf]
      %v5679 = vld [vmem:[%s1110 + $0x3c] sm:$0xf]
      %v5680 = vld [vmem:[%s1110 + $0x40] sm:$0xf]
      %v5681 = vld [vmem:[%s1110 + $0x48] sm:$0xf]
      %v5682 = vld [vmem:[%s1110 + $0x4c] sm:$0xf]
      %v5683 = vld [vmem:[%s1110 + $0x54] sm:$0xf]
      %v5684 = vld [vmem:[%s1110 + $0x58] sm:$0xf]
      %v5685 = vld [vmem:[%s1110 + $0x60] sm:$0xf]
      %v5686 = vld [vmem:[%s1110 + $0x64] sm:$0xf]
      %v5687 = vld [vmem:[%s1110 + $0x6c] sm:$0xf]
      %v5688 = vld [vmem:[%s1110 + $0x70] sm:$0xf]
      %v5689 = vld [vmem:[%s1110 + $0x78] sm:$0xf]
      %v5690 = vld [vmem:[%s1110 + $0x7c] sm:$0xf]
      %v5691 = vld [vmem:[%s1110 + $0x84] sm:$0xf]
      %v5692 = vld [vmem:[%s1110 + $0x88] sm:$0xf]
      %v5693 = vld [vmem:[%s1110 + $0x90] sm:$0xf]
      %v5694 = vld [vmem:[%s1110 + $0x94] sm:$0xf]
      %v5695 = vld [vmem:[%s1110 + $0x9c] sm:$0xf]
      %v5696 = vld [vmem:[%s1110 + $0xa0] sm:$0xf]
      %v5697 = vld [vmem:[%s1110 + $0xa8] sm:$0xf]
      %v5698 = vld [vmem:[%s1110 + $0xac] sm:$0xf]
      %v5699 = vld [vmem:[%s1110 + $0xb4] sm:$0xf]
      %v5700 = vld [vmem:[%s1110 + $0xb8] sm:$0xf]
      %v5733 = vunpack.c.l.b16 %v5605
      %v5734 = vunpack.c.l.b16 %v5606
      %v5735 = vunpack.c.l.b16 %v5607
      %v5736 = vunpack.c.l.b16 %v5608
      %v5737 = vunpack.c.l.b16 %v5609
      %v5738 = vunpack.c.l.b16 %v5610
      %v5739 = vunpack.c.l.b16 %v5611
      %v5740 = vunpack.c.l.b16 %v5612
      %v5741 = vunpack.c.l.b16 %v5613
      %v5742 = vunpack.c.l.b16 %v5614
      %v5743 = vunpack.c.l.b16 %v5615
      %v5744 = vunpack.c.l.b16 %v5616
      %v5745 = vunpack.c.l.b16 %v5617
      %v5746 = vunpack.c.l.b16 %v5618
      %v5747 = vunpack.c.l.b16 %v5619
      %v5748 = vunpack.c.l.b16 %v5620
      %v5749 = vunpack.c.l.b16 %v5621
      %v5750 = vunpack.c.l.b16 %v5622
      %v5751 = vunpack.c.l.b16 %v5623
      %v5752 = vunpack.c.l.b16 %v5624
      %v5753 = vunpack.c.l.b16 %v5625
      %v5754 = vunpack.c.l.b16 %v5626
      %v5755 = vunpack.c.l.b16 %v5627
      %v5756 = vunpack.c.l.b16 %v5628
      %v5757 = vunpack.c.l.b16 %v5629
      %v5758 = vunpack.c.l.b16 %v5630
      %v5759 = vunpack.c.l.b16 %v5631
      %v5760 = vunpack.c.l.b16 %v5632
      %v5761 = vunpack.c.l.b16 %v5633
      %v5762 = vunpack.c.l.b16 %v5634
      %v5763 = vunpack.c.l.b16 %v5635
      %v5764 = vunpack.c.l.b16 %v5636
      %v5765 = vpack.c.b16 %v5734, %v5733
      %v5766 = vpack.c.b16 %v5736, %v5735
      %v5767 = vpack.c.b16 %v5738, %v5737
      %v5768 = vpack.c.b16 %v5740, %v5739
      %v5769 = vpack.c.b16 %v5742, %v5741
      %v5770 = vpack.c.b16 %v5744, %v5743
      %v5771 = vpack.c.b16 %v5746, %v5745
      %v5772 = vpack.c.b16 %v5748, %v5747
      %v5773 = vpack.c.b16 %v5750, %v5749
      %v5774 = vpack.c.b16 %v5752, %v5751
      %v5775 = vpack.c.b16 %v5754, %v5753
      %v5776 = vpack.c.b16 %v5756, %v5755
      %v5777 = vpack.c.b16 %v5758, %v5757
      %v5778 = vpack.c.b16 %v5760, %v5759
      %v5779 = vpack.c.b16 %v5762, %v5761
      %v5780 = vpack.c.b16 %v5764, %v5763
      %v5813 = vunpack.c.l.b16 %v5637
      %v5814 = vunpack.c.l.b16 %v5638
      %v5815 = vunpack.c.l.b16 %v5639
      %v5816 = vunpack.c.l.b16 %v5640
      %v5817 = vunpack.c.l.b16 %v5641
      %v5818 = vunpack.c.l.b16 %v5642
      %v5819 = vunpack.c.l.b16 %v5643
      %v5820 = vunpack.c.l.b16 %v5644
      %v5821 = vunpack.c.l.b16 %v5645
      %v5822 = vunpack.c.l.b16 %v5646
      %v5823 = vunpack.c.l.b16 %v5647
      %v5824 = vunpack.c.l.b16 %v5648
      %v5825 = vunpack.c.l.b16 %v5649
      %v5826 = vunpack.c.l.b16 %v5650
      %v5827 = vunpack.c.l.b16 %v5651
      %v5828 = vunpack.c.l.b16 %v5652
      %v5829 = vunpack.c.l.b16 %v5653
      %v5830 = vunpack.c.l.b16 %v5654
      %v5831 = vunpack.c.l.b16 %v5655
      %v5832 = vunpack.c.l.b16 %v5656
      %v5833 = vunpack.c.l.b16 %v5657
      %v5834 = vunpack.c.l.b16 %v5658
      %v5835 = vunpack.c.l.b16 %v5659
      %v5836 = vunpack.c.l.b16 %v5660
      %v5837 = vunpack.c.l.b16 %v5661
      %v5838 = vunpack.c.l.b16 %v5662
      %v5839 = vunpack.c.l.b16 %v5663
      %v5840 = vunpack.c.l.b16 %v5664
      %v5841 = vunpack.c.l.b16 %v5665
      %v5842 = vunpack.c.l.b16 %v5666
      %v5843 = vunpack.c.l.b16 %v5667
      %v5844 = vunpack.c.l.b16 %v5668
      %v5845 = vpack.c.b16 %v5814, %v5813
      %v5846 = vpack.c.b16 %v5816, %v5815
      %v5847 = vpack.c.b16 %v5818, %v5817
      %v5848 = vpack.c.b16 %v5820, %v5819
      %v5849 = vpack.c.b16 %v5822, %v5821
      %v5850 = vpack.c.b16 %v5824, %v5823
      %v5851 = vpack.c.b16 %v5826, %v5825
      %v5852 = vpack.c.b16 %v5828, %v5827
      %v5853 = vpack.c.b16 %v5830, %v5829
      %v5854 = vpack.c.b16 %v5832, %v5831
      %v5855 = vpack.c.b16 %v5834, %v5833
      %v5856 = vpack.c.b16 %v5836, %v5835
      %v5857 = vpack.c.b16 %v5838, %v5837
      %v5858 = vpack.c.b16 %v5840, %v5839
      %v5859 = vpack.c.b16 %v5842, %v5841
      %v5860 = vpack.c.b16 %v5844, %v5843
      %5861 = vrot.lane.b32.xlu0 %v5845, 4
      %v5862 = vpop.permute.xlu0 %5861
      %5863 = vrot.lane.b32.xlu0 %v5846, 4
      %v5864 = vpop.permute.xlu0 %5863
      %5865 = vrot.lane.b32.xlu0 %v5847, 4
      %v5866 = vpop.permute.xlu0 %5865
      %5867 = vrot.lane.b32.xlu0 %v5848, 4
      %v5868 = vpop.permute.xlu0 %5867
      %5869 = vrot.lane.b32.xlu0 %v5849, 4
      %v5870 = vpop.permute.xlu0 %5869
      %5871 = vrot.lane.b32.xlu0 %v5850, 4
      %v5872 = vpop.permute.xlu0 %5871
      %5873 = vrot.lane.b32.xlu0 %v5851, 4
      %v5874 = vpop.permute.xlu0 %5873
      %5875 = vrot.lane.b32.xlu0 %v5852, 4
      %v5876 = vpop.permute.xlu0 %5875
      %5877 = vrot.lane.b32.xlu0 %v5853, 4
      %v5878 = vpop.permute.xlu0 %5877
      %5879 = vrot.lane.b32.xlu0 %v5854, 4
      %v5880 = vpop.permute.xlu0 %5879
      %5881 = vrot.lane.b32.xlu0 %v5855, 4
      %v5882 = vpop.permute.xlu0 %5881
      %5883 = vrot.lane.b32.xlu0 %v5856, 4
      %v5884 = vpop.permute.xlu0 %5883
      %5885 = vrot.lane.b32.xlu0 %v5857, 4
      %v5886 = vpop.permute.xlu0 %5885
      %5887 = vrot.lane.b32.xlu0 %v5858, 4
      %v5888 = vpop.permute.xlu0 %5887
      %5889 = vrot.lane.b32.xlu0 %v5859, 4
      %v5890 = vpop.permute.xlu0 %5889
      %5891 = vrot.lane.b32.xlu0 %v5860, 4
      %v5892 = vpop.permute.xlu0 %5891
      %v5925 = vunpack.c.l.b16 %v5669
      %v5926 = vunpack.c.l.b16 %v5670
      %v5927 = vunpack.c.l.b16 %v5671
      %v5928 = vunpack.c.l.b16 %v5672
      %v5929 = vunpack.c.l.b16 %v5673
      %v5930 = vunpack.c.l.b16 %v5674
      %v5931 = vunpack.c.l.b16 %v5675
      %v5932 = vunpack.c.l.b16 %v5676
      %v5933 = vunpack.c.l.b16 %v5677
      %v5934 = vunpack.c.l.b16 %v5678
      %v5935 = vunpack.c.l.b16 %v5679
      %v5936 = vunpack.c.l.b16 %v5680
      %v5937 = vunpack.c.l.b16 %v5681
      %v5938 = vunpack.c.l.b16 %v5682
      %v5939 = vunpack.c.l.b16 %v5683
      %v5940 = vunpack.c.l.b16 %v5684
      %v5941 = vunpack.c.l.b16 %v5685
      %v5942 = vunpack.c.l.b16 %v5686
      %v5943 = vunpack.c.l.b16 %v5687
      %v5944 = vunpack.c.l.b16 %v5688
      %v5945 = vunpack.c.l.b16 %v5689
      %v5946 = vunpack.c.l.b16 %v5690
      %v5947 = vunpack.c.l.b16 %v5691
      %v5948 = vunpack.c.l.b16 %v5692
      %v5949 = vunpack.c.l.b16 %v5693
      %v5950 = vunpack.c.l.b16 %v5694
      %v5951 = vunpack.c.l.b16 %v5695
      %v5952 = vunpack.c.l.b16 %v5696
      %v5953 = vunpack.c.l.b16 %v5697
      %v5954 = vunpack.c.l.b16 %v5698
      %v5955 = vunpack.c.l.b16 %v5699
      %v5956 = vunpack.c.l.b16 %v5700
      %v5957 = vpack.c.b16 %v5926, %v5925
      %v5958 = vpack.c.b16 %v5928, %v5927
      %v5959 = vpack.c.b16 %v5930, %v5929
      %v5960 = vpack.c.b16 %v5932, %v5931
      %v5961 = vpack.c.b16 %v5934, %v5933
      %v5962 = vpack.c.b16 %v5936, %v5935
      %v5963 = vpack.c.b16 %v5938, %v5937
      %v5964 = vpack.c.b16 %v5940, %v5939
      %v5965 = vpack.c.b16 %v5942, %v5941
      %v5966 = vpack.c.b16 %v5944, %v5943
      %v5967 = vpack.c.b16 %v5946, %v5945
      %v5968 = vpack.c.b16 %v5948, %v5947
      %v5969 = vpack.c.b16 %v5950, %v5949
      %v5970 = vpack.c.b16 %v5952, %v5951
      %v5971 = vpack.c.b16 %v5954, %v5953
      %v5972 = vpack.c.b16 %v5956, %v5955
      %5973 = vrot.lane.b32.xlu0 %v5957, 8
      %v5974 = vpop.permute.xlu0 %5973
      %5975 = vrot.lane.b32.xlu0 %v5958, 8
      %v5976 = vpop.permute.xlu0 %5975
      %5977 = vrot.lane.b32.xlu0 %v5959, 8
      %v5978 = vpop.permute.xlu0 %5977
      %5979 = vrot.lane.b32.xlu0 %v5960, 8
      %v5980 = vpop.permute.xlu0 %5979
      %5981 = vrot.lane.b32.xlu0 %v5961, 8
      %v5982 = vpop.permute.xlu0 %5981
      %5983 = vrot.lane.b32.xlu0 %v5962, 8
      %v5984 = vpop.permute.xlu0 %5983
      %5985 = vrot.lane.b32.xlu0 %v5963, 8
      %v5986 = vpop.permute.xlu0 %5985
      %5987 = vrot.lane.b32.xlu0 %v5964, 8
      %v5988 = vpop.permute.xlu0 %5987
      %5989 = vrot.lane.b32.xlu0 %v5965, 8
      %v5990 = vpop.permute.xlu0 %5989
      %5991 = vrot.lane.b32.xlu0 %v5966, 8
      %v5992 = vpop.permute.xlu0 %5991
      %5993 = vrot.lane.b32.xlu0 %v5967, 8
      %v5994 = vpop.permute.xlu0 %5993
      %5995 = vrot.lane.b32.xlu0 %v5968, 8
      %v5996 = vpop.permute.xlu0 %5995
      %5997 = vrot.lane.b32.xlu0 %v5969, 8
      %v5998 = vpop.permute.xlu0 %5997
      %5999 = vrot.lane.b32.xlu0 %v5970, 8
      %v6000 = vpop.permute.xlu0 %5999
      %6001 = vrot.lane.b32.xlu0 %v5971, 8
      %v6002 = vpop.permute.xlu0 %6001
      %6003 = vrot.lane.b32.xlu0 %v5972, 8
      %v6004 = vpop.permute.xlu0 %6003
      %v6007 = vsel %vm1447, %v5765, %v5862
      %v6010 = vsel %vm1447, %v5766, %v5864
      %v6013 = vsel %vm1447, %v5767, %v5866
      %v6016 = vsel %vm1447, %v5768, %v5868
      %v6019 = vsel %vm1447, %v5769, %v5870
      %v6022 = vsel %vm1447, %v5770, %v5872
      %v6025 = vsel %vm1447, %v5771, %v5874
      %v6028 = vsel %vm1447, %v5772, %v5876
      %v6031 = vsel %vm1447, %v5773, %v5878
      %v6034 = vsel %vm1447, %v5774, %v5880
      %v6037 = vsel %vm1447, %v5775, %v5882
      %v6040 = vsel %vm1447, %v5776, %v5884
      %v6043 = vsel %vm1447, %v5777, %v5886
      %v6046 = vsel %vm1447, %v5778, %v5888
      %v6049 = vsel %vm1447, %v5779, %v5890
      %v6052 = vsel %vm1447, %v5780, %v5892
      %v6054 = vsel %vm1496, %v6007, %v5974
      %v6056 = vsel %vm1496, %v6010, %v5976
      %v6058 = vsel %vm1496, %v6013, %v5978
      %v6060 = vsel %vm1496, %v6016, %v5980
      %v6062 = vsel %vm1496, %v6019, %v5982
      %v6064 = vsel %vm1496, %v6022, %v5984
      %v6066 = vsel %vm1496, %v6025, %v5986
      %v6068 = vsel %vm1496, %v6028, %v5988
      %v6070 = vsel %vm1496, %v6031, %v5990
      %v6072 = vsel %vm1496, %v6034, %v5992
      %v6074 = vsel %vm1496, %v6037, %v5994
      %v6076 = vsel %vm1496, %v6040, %v5996
      %v6078 = vsel %vm1496, %v6043, %v5998
      %v6080 = vsel %vm1496, %v6046, %v6000
      %v6082 = vsel %vm1496, %v6049, %v6002
      %v6084 = vsel %vm1496, %v6052, %v6004
      %v6085 = vld [vmem:[%s2] sm:$0xf]
      %v6086 = vld [vmem:[%s2 + $0x4] sm:$0x3]
      %v6087 = vld [vmem:[#allocation2 + $0x8] sm:$0x1]
      %v6088 = vld [vmem:[#allocation2 + $0x14] sm:$0x1]
      %v6089 = vld [vmem:[#allocation2 + $0x20] sm:$0x1]
      %v6090 = vld [vmem:[#allocation2 + $0x2c] sm:$0x1]
      %v6091 = vld [vmem:[#allocation2 + $0x38] sm:$0x1]
      %v6092 = vld [vmem:[#allocation2 + $0x44] sm:$0x1]
      %v6093 = vld [vmem:[#allocation2 + $0x50] sm:$0x1]
      %v6094 = vld [vmem:[#allocation2 + $0x5c] sm:$0x1]
      %v6095 = vld [vmem:[#allocation2 + $0x68] sm:$0x1]
      %v6096 = vld [vmem:[#allocation2 + $0x74] sm:$0x1]
      %v6097 = vld [vmem:[#allocation2 + $0x80] sm:$0x1]
      %v6098 = vld [vmem:[#allocation2 + $0x8c] sm:$0x1]
      %v6099 = vld [vmem:[#allocation2 + $0x98] sm:$0x1]
      %v6100 = vld [vmem:[#allocation2 + $0xa4] sm:$0x1]
      %v6101 = vld [vmem:[#allocation2 + $0xb0] sm:$0x1]
      %v6102 = vld [vmem:[#allocation2 + $0xbc] sm:$0x1]
      %v6104 = vshrl.u32 %v5605, 16
      %v6106 = vrot.slane %v6104, 4
      %v6107 = vshll.u32 %v5605, 16
      %v6109 = vrot.slane %v6107, 5
      %v6110 = vor.u32 %v6106, %v6109
      %v6111 = vrot.slane %v6110, 4
      %v6113 = vshll.u32 %v5606, 16
      %v6115 = vrot.slane %v6113, 5
      %v6116 = vsel %vm1549, %v6111, %v6115
      %v6117 = vshrl.u32 %v5606, 16
      %v6119 = vrot.slane %v6117, 4
      %v6120 = vor.u32 %v6119, %v6115
      %v6121 = vrot.slane %v6120, 4
      %v6123 = vshll.u32 %v6087, 16
      %v6125 = vrot.slane %v6123, 5
      %v6126 = vsel %vm1549, %v6121, %v6125
      %v6128 = vshrl.u32 %v5607, 16
      %v6130 = vrot.slane %v6128, 4
      %v6131 = vshll.u32 %v5607, 16
      %v6133 = vrot.slane %v6131, 5
      %v6134 = vor.u32 %v6130, %v6133
      %v6135 = vrot.slane %v6134, 4
      %v6137 = vshll.u32 %v5608, 16
      %v6139 = vrot.slane %v6137, 5
      %v6140 = vsel %vm1549, %v6135, %v6139
      %v6141 = vshrl.u32 %v5608, 16
      %v6143 = vrot.slane %v6141, 4
      %v6144 = vor.u32 %v6143, %v6139
      %v6145 = vrot.slane %v6144, 4
      %v6147 = vshll.u32 %v6088, 16
      %v6149 = vrot.slane %v6147, 5
      %v6150 = vsel %vm1549, %v6145, %v6149
      %v6152 = vshrl.u32 %v5609, 16
      %v6154 = vrot.slane %v6152, 4
      %v6155 = vshll.u32 %v5609, 16
      %v6157 = vrot.slane %v6155, 5
      %v6158 = vor.u32 %v6154, %v6157
      %v6159 = vrot.slane %v6158, 4
      %v6161 = vshll.u32 %v5610, 16
      %v6163 = vrot.slane %v6161, 5
      %v6164 = vsel %vm1549, %v6159, %v6163
      %v6165 = vshrl.u32 %v5610, 16
      %v6167 = vrot.slane %v6165, 4
      %v6168 = vor.u32 %v6167, %v6163
      %v6169 = vrot.slane %v6168, 4
      %v6171 = vshll.u32 %v6089, 16
      %v6173 = vrot.slane %v6171, 5
      %v6174 = vsel %vm1549, %v6169, %v6173
      %v6176 = vshrl.u32 %v5611, 16
      %v6178 = vrot.slane %v6176, 4
      %v6179 = vshll.u32 %v5611, 16
      %v6181 = vrot.slane %v6179, 5
      %v6182 = vor.u32 %v6178, %v6181
      %v6183 = vrot.slane %v6182, 4
      %v6185 = vshll.u32 %v5612, 16
      %v6187 = vrot.slane %v6185, 5
      %v6188 = vsel %vm1549, %v6183, %v6187
      %v6189 = vshrl.u32 %v5612, 16
      %v6191 = vrot.slane %v6189, 4
      %v6192 = vor.u32 %v6191, %v6187
      %v6193 = vrot.slane %v6192, 4
      %v6195 = vshll.u32 %v6090, 16
      %v6197 = vrot.slane %v6195, 5
      %v6198 = vsel %vm1549, %v6193, %v6197
      %v6200 = vshrl.u32 %v5613, 16
      %v6202 = vrot.slane %v6200, 4
      %v6203 = vshll.u32 %v5613, 16
      %v6205 = vrot.slane %v6203, 5
      %v6206 = vor.u32 %v6202, %v6205
      %v6207 = vrot.slane %v6206, 4
      %v6209 = vshll.u32 %v5614, 16
      %v6211 = vrot.slane %v6209, 5
      %v6212 = vsel %vm1549, %v6207, %v6211
      %v6213 = vshrl.u32 %v5614, 16
      %v6215 = vrot.slane %v6213, 4
      %v6216 = vor.u32 %v6215, %v6211
      %v6217 = vrot.slane %v6216, 4
      %v6219 = vshll.u32 %v6091, 16
      %v6221 = vrot.slane %v6219, 5
      %v6222 = vsel %vm1549, %v6217, %v6221
      %v6224 = vshrl.u32 %v5615, 16
      %v6226 = vrot.slane %v6224, 4
      %v6227 = vshll.u32 %v5615, 16
      %v6229 = vrot.slane %v6227, 5
      %v6230 = vor.u32 %v6226, %v6229
      %v6231 = vrot.slane %v6230, 4
      %v6233 = vshll.u32 %v5616, 16
      %v6235 = vrot.slane %v6233, 5
      %v6236 = vsel %vm1549, %v6231, %v6235
      %v6237 = vshrl.u32 %v5616, 16
      %v6239 = vrot.slane %v6237, 4
      %v6240 = vor.u32 %v6239, %v6235
      %v6241 = vrot.slane %v6240, 4
      %v6243 = vshll.u32 %v6092, 16
      %v6245 = vrot.slane %v6243, 5
      %v6246 = vsel %vm1549, %v6241, %v6245
      %v6248 = vshrl.u32 %v5617, 16
      %v6250 = vrot.slane %v6248, 4
      %v6251 = vshll.u32 %v5617, 16
      %v6253 = vrot.slane %v6251, 5
      %v6254 = vor.u32 %v6250, %v6253
      %v6255 = vrot.slane %v6254, 4
      %v6257 = vshll.u32 %v5618, 16
      %v6259 = vrot.slane %v6257, 5
      %v6260 = vsel %vm1549, %v6255, %v6259
      %v6261 = vshrl.u32 %v5618, 16
      %v6263 = vrot.slane %v6261, 4
      %v6264 = vor.u32 %v6263, %v6259
      %v6265 = vrot.slane %v6264, 4
      %v6267 = vshll.u32 %v6093, 16
      %v6269 = vrot.slane %v6267, 5
      %v6270 = vsel %vm1549, %v6265, %v6269
      %v6272 = vshrl.u32 %v5619, 16
      %v6274 = vrot.slane %v6272, 4
      %v6275 = vshll.u32 %v5619, 16
      %v6277 = vrot.slane %v6275, 5
      %v6278 = vor.u32 %v6274, %v6277
      %v6279 = vrot.slane %v6278, 4
      %v6281 = vshll.u32 %v5620, 16
      %v6283 = vrot.slane %v6281, 5
      %v6284 = vsel %vm1549, %v6279, %v6283
      %v6285 = vshrl.u32 %v5620, 16
      %v6287 = vrot.slane %v6285, 4
      %v6288 = vor.u32 %v6287, %v6283
      %v6289 = vrot.slane %v6288, 4
      %v6291 = vshll.u32 %v6094, 16
      %v6293 = vrot.slane %v6291, 5
      %v6294 = vsel %vm1549, %v6289, %v6293
      %v6296 = vshrl.u32 %v5621, 16
      %v6298 = vrot.slane %v6296, 4
      %v6299 = vshll.u32 %v5621, 16
      %v6301 = vrot.slane %v6299, 5
      %v6302 = vor.u32 %v6298, %v6301
      %v6303 = vrot.slane %v6302, 4
      %v6305 = vshll.u32 %v5622, 16
      %v6307 = vrot.slane %v6305, 5
      %v6308 = vsel %vm1549, %v6303, %v6307
      %v6309 = vshrl.u32 %v5622, 16
      %v6311 = vrot.slane %v6309, 4
      %v6312 = vor.u32 %v6311, %v6307
      %v6313 = vrot.slane %v6312, 4
      %v6315 = vshll.u32 %v6095, 16
      %v6317 = vrot.slane %v6315, 5
      %v6318 = vsel %vm1549, %v6313, %v6317
      %v6320 = vshrl.u32 %v5623, 16
      %v6322 = vrot.slane %v6320, 4
      %v6323 = vshll.u32 %v5623, 16
      %v6325 = vrot.slane %v6323, 5
      %v6326 = vor.u32 %v6322, %v6325
      %v6327 = vrot.slane %v6326, 4
      %v6329 = vshll.u32 %v5624, 16
      %v6331 = vrot.slane %v6329, 5
      %v6332 = vsel %vm1549, %v6327, %v6331
      %v6333 = vshrl.u32 %v5624, 16
      %v6335 = vrot.slane %v6333, 4
      %v6336 = vor.u32 %v6335, %v6331
      %v6337 = vrot.slane %v6336, 4
      %v6339 = vshll.u32 %v6096, 16
      %v6341 = vrot.slane %v6339, 5
      %v6342 = vsel %vm1549, %v6337, %v6341
      %v6344 = vshrl.u32 %v5625, 16
      %v6346 = vrot.slane %v6344, 4
      %v6347 = vshll.u32 %v5625, 16
      %v6349 = vrot.slane %v6347, 5
      %v6350 = vor.u32 %v6346, %v6349
      %v6351 = vrot.slane %v6350, 4
      %v6353 = vshll.u32 %v5626, 16
      %v6355 = vrot.slane %v6353, 5
      %v6356 = vsel %vm1549, %v6351, %v6355
      %v6357 = vshrl.u32 %v5626, 16
      %v6359 = vrot.slane %v6357, 4
      %v6360 = vor.u32 %v6359, %v6355
      %v6361 = vrot.slane %v6360, 4
      %v6363 = vshll.u32 %v6097, 16
      %v6365 = vrot.slane %v6363, 5
      %v6366 = vsel %vm1549, %v6361, %v6365
      %v6368 = vshrl.u32 %v5627, 16
      %v6370 = vrot.slane %v6368, 4
      %v6371 = vshll.u32 %v5627, 16
      %v6373 = vrot.slane %v6371, 5
      %v6374 = vor.u32 %v6370, %v6373
      %v6375 = vrot.slane %v6374, 4
      %v6377 = vshll.u32 %v5628, 16
      %v6379 = vrot.slane %v6377, 5
      %v6380 = vsel %vm1549, %v6375, %v6379
      %v6381 = vshrl.u32 %v5628, 16
      %v6383 = vrot.slane %v6381, 4
      %v6384 = vor.u32 %v6383, %v6379
      %v6385 = vrot.slane %v6384, 4
      %v6387 = vshll.u32 %v6098, 16
      %v6389 = vrot.slane %v6387, 5
      %v6390 = vsel %vm1549, %v6385, %v6389
      %v6392 = vshrl.u32 %v5629, 16
      %v6394 = vrot.slane %v6392, 4
      %v6395 = vshll.u32 %v5629, 16
      %v6397 = vrot.slane %v6395, 5
      %v6398 = vor.u32 %v6394, %v6397
      %v6399 = vrot.slane %v6398, 4
      %v6401 = vshll.u32 %v5630, 16
      %v6403 = vrot.slane %v6401, 5
      %v6404 = vsel %vm1549, %v6399, %v6403
      %v6405 = vshrl.u32 %v5630, 16
      %v6407 = vrot.slane %v6405, 4
      %v6408 = vor.u32 %v6407, %v6403
      %v6409 = vrot.slane %v6408, 4
      %v6411 = vshll.u32 %v6099, 16
      %v6413 = vrot.slane %v6411, 5
      %v6414 = vsel %vm1549, %v6409, %v6413
      %v6416 = vshrl.u32 %v5631, 16
      %v6418 = vrot.slane %v6416, 4
      %v6419 = vshll.u32 %v5631, 16
      %v6421 = vrot.slane %v6419, 5
      %v6422 = vor.u32 %v6418, %v6421
      %v6423 = vrot.slane %v6422, 4
      %v6425 = vshll.u32 %v5632, 16
      %v6427 = vrot.slane %v6425, 5
      %v6428 = vsel %vm1549, %v6423, %v6427
      %v6429 = vshrl.u32 %v5632, 16
      %v6431 = vrot.slane %v6429, 4
      %v6432 = vor.u32 %v6431, %v6427
      %v6433 = vrot.slane %v6432, 4
      %v6435 = vshll.u32 %v6100, 16
      %v6437 = vrot.slane %v6435, 5
      %v6438 = vsel %vm1549, %v6433, %v6437
      %v6440 = vshrl.u32 %v5633, 16
      %v6442 = vrot.slane %v6440, 4
      %v6443 = vshll.u32 %v5633, 16
      %v6445 = vrot.slane %v6443, 5
      %v6446 = vor.u32 %v6442, %v6445
      %v6447 = vrot.slane %v6446, 4
      %v6449 = vshll.u32 %v5634, 16
      %v6451 = vrot.slane %v6449, 5
      %v6452 = vsel %vm1549, %v6447, %v6451
      %v6453 = vshrl.u32 %v5634, 16
      %v6455 = vrot.slane %v6453, 4
      %v6456 = vor.u32 %v6455, %v6451
      %v6457 = vrot.slane %v6456, 4
      %v6459 = vshll.u32 %v6101, 16
      %v6461 = vrot.slane %v6459, 5
      %v6462 = vsel %vm1549, %v6457, %v6461
      %v6464 = vshrl.u32 %v5635, 16
      %v6466 = vrot.slane %v6464, 4
      %v6467 = vshll.u32 %v5635, 16
      %v6469 = vrot.slane %v6467, 5
      %v6470 = vor.u32 %v6466, %v6469
      %v6471 = vrot.slane %v6470, 4
      %v6473 = vshll.u32 %v5636, 16
      %v6475 = vrot.slane %v6473, 5
      %v6476 = vsel %vm1549, %v6471, %v6475
      %v6477 = vshrl.u32 %v5636, 16
      %v6479 = vrot.slane %v6477, 4
      %v6480 = vor.u32 %v6479, %v6475
      %v6481 = vrot.slane %v6480, 4
      %v6483 = vshll.u32 %v6102, 16
      %v6485 = vrot.slane %v6483, 5
      %v6486 = vsel %vm1549, %v6481, %v6485
      %v6487 = vld [vmem:[%s623 + $0x8] sm:$0x1]
      %v6488 = vld [vmem:[%s623 + $0x14] sm:$0x1]
      %v6489 = vld [vmem:[%s623 + $0x20] sm:$0x1]
      %v6490 = vld [vmem:[%s623 + $0x2c] sm:$0x1]
      %v6491 = vld [vmem:[%s623 + $0x38] sm:$0x1]
      %v6492 = vld [vmem:[%s623 + $0x44] sm:$0x1]
      %v6493 = vld [vmem:[%s623 + $0x50] sm:$0x1]
      %v6494 = vld [vmem:[%s623 + $0x5c] sm:$0x1]
      %v6495 = vld [vmem:[%s623 + $0x68] sm:$0x1]
      %v6496 = vld [vmem:[%s623 + $0x74] sm:$0x1]
      %v6497 = vld [vmem:[%s623 + $0x80] sm:$0x1]
      %v6498 = vld [vmem:[%s623 + $0x8c] sm:$0x1]
      %v6499 = vld [vmem:[%s623 + $0x98] sm:$0x1]
      %v6500 = vld [vmem:[%s623 + $0xa4] sm:$0x1]
      %v6501 = vld [vmem:[%s623 + $0xb0] sm:$0x1]
      %v6502 = vld [vmem:[%s623 + $0xbc] sm:$0x1]
      %v6504 = vshrl.u32 %v5637, 16
      %v6506 = vrot.slane %v6504, 4
      %v6507 = vshll.u32 %v5637, 16
      %v6509 = vrot.slane %v6507, 5
      %v6510 = vor.u32 %v6506, %v6509
      %v6511 = vrot.slane %v6510, 4
      %v6513 = vshll.u32 %v5638, 16
      %v6515 = vrot.slane %v6513, 5
      %v6516 = vsel %vm1549, %v6511, %v6515
      %v6517 = vshrl.u32 %v5638, 16
      %v6519 = vrot.slane %v6517, 4
      %v6520 = vor.u32 %v6519, %v6515
      %v6521 = vrot.slane %v6520, 4
      %v6523 = vshll.u32 %v6487, 16
      %v6525 = vrot.slane %v6523, 5
      %v6526 = vsel %vm1549, %v6521, %v6525
      %v6528 = vshrl.u32 %v5639, 16
      %v6530 = vrot.slane %v6528, 4
      %v6531 = vshll.u32 %v5639, 16
      %v6533 = vrot.slane %v6531, 5
      %v6534 = vor.u32 %v6530, %v6533
      %v6535 = vrot.slane %v6534, 4
      %v6537 = vshll.u32 %v5640, 16
      %v6539 = vrot.slane %v6537, 5
      %v6540 = vsel %vm1549, %v6535, %v6539
      %v6541 = vshrl.u32 %v5640, 16
      %v6543 = vrot.slane %v6541, 4
      %v6544 = vor.u32 %v6543, %v6539
      %v6545 = vrot.slane %v6544, 4
      %v6547 = vshll.u32 %v6488, 16
      %v6549 = vrot.slane %v6547, 5
      %v6550 = vsel %vm1549, %v6545, %v6549
      %v6552 = vshrl.u32 %v5641, 16
      %v6554 = vrot.slane %v6552, 4
      %v6555 = vshll.u32 %v5641, 16
      %v6557 = vrot.slane %v6555, 5
      %v6558 = vor.u32 %v6554, %v6557
      %v6559 = vrot.slane %v6558, 4
      %v6561 = vshll.u32 %v5642, 16
      %v6563 = vrot.slane %v6561, 5
      %v6564 = vsel %vm1549, %v6559, %v6563
      %v6565 = vshrl.u32 %v5642, 16
      %v6567 = vrot.slane %v6565, 4
      %v6568 = vor.u32 %v6567, %v6563
      %v6569 = vrot.slane %v6568, 4
      %v6571 = vshll.u32 %v6489, 16
      %v6573 = vrot.slane %v6571, 5
      %v6574 = vsel %vm1549, %v6569, %v6573
      %v6576 = vshrl.u32 %v5643, 16
      %v6578 = vrot.slane %v6576, 4
      %v6579 = vshll.u32 %v5643, 16
      %v6581 = vrot.slane %v6579, 5
      %v6582 = vor.u32 %v6578, %v6581
      %v6583 = vrot.slane %v6582, 4
      %v6585 = vshll.u32 %v5644, 16
      %v6587 = vrot.slane %v6585, 5
      %v6588 = vsel %vm1549, %v6583, %v6587
      %v6589 = vshrl.u32 %v5644, 16
      %v6591 = vrot.slane %v6589, 4
      %v6592 = vor.u32 %v6591, %v6587
      %v6593 = vrot.slane %v6592, 4
      %v6595 = vshll.u32 %v6490, 16
      %v6597 = vrot.slane %v6595, 5
      %v6598 = vsel %vm1549, %v6593, %v6597
      %v6600 = vshrl.u32 %v5645, 16
      %v6602 = vrot.slane %v6600, 4
      %v6603 = vshll.u32 %v5645, 16
      %v6605 = vrot.slane %v6603, 5
      %v6606 = vor.u32 %v6602, %v6605
      %v6607 = vrot.slane %v6606, 4
      %v6609 = vshll.u32 %v5646, 16
      %v6611 = vrot.slane %v6609, 5
      %v6612 = vsel %vm1549, %v6607, %v6611
      %v6613 = vshrl.u32 %v5646, 16
      %v6615 = vrot.slane %v6613, 4
      %v6616 = vor.u32 %v6615, %v6611
      %v6617 = vrot.slane %v6616, 4
      %v6619 = vshll.u32 %v6491, 16
      %v6621 = vrot.slane %v6619, 5
      %v6622 = vsel %vm1549, %v6617, %v6621
      %v6624 = vshrl.u32 %v5647, 16
      %v6626 = vrot.slane %v6624, 4
      %v6627 = vshll.u32 %v5647, 16
      %v6629 = vrot.slane %v6627, 5
      %v6630 = vor.u32 %v6626, %v6629
      %v6631 = vrot.slane %v6630, 4
      %v6633 = vshll.u32 %v5648, 16
      %v6635 = vrot.slane %v6633, 5
      %v6636 = vsel %vm1549, %v6631, %v6635
      %v6637 = vshrl.u32 %v5648, 16
      %v6639 = vrot.slane %v6637, 4
      %v6640 = vor.u32 %v6639, %v6635
      %v6641 = vrot.slane %v6640, 4
      %v6643 = vshll.u32 %v6492, 16
      %v6645 = vrot.slane %v6643, 5
      %v6646 = vsel %vm1549, %v6641, %v6645
      %v6648 = vshrl.u32 %v5649, 16
      %v6650 = vrot.slane %v6648, 4
      %v6651 = vshll.u32 %v5649, 16
      %v6653 = vrot.slane %v6651, 5
      %v6654 = vor.u32 %v6650, %v6653
      %v6655 = vrot.slane %v6654, 4
      %v6657 = vshll.u32 %v5650, 16
      %v6659 = vrot.slane %v6657, 5
      %v6660 = vsel %vm1549, %v6655, %v6659
      %v6661 = vshrl.u32 %v5650, 16
      %v6663 = vrot.slane %v6661, 4
      %v6664 = vor.u32 %v6663, %v6659
      %v6665 = vrot.slane %v6664, 4
      %v6667 = vshll.u32 %v6493, 16
      %v6669 = vrot.slane %v6667, 5
      %v6670 = vsel %vm1549, %v6665, %v6669
      %v6672 = vshrl.u32 %v5651, 16
      %v6674 = vrot.slane %v6672, 4
      %v6675 = vshll.u32 %v5651, 16
      %v6677 = vrot.slane %v6675, 5
      %v6678 = vor.u32 %v6674, %v6677
      %v6679 = vrot.slane %v6678, 4
      %v6681 = vshll.u32 %v5652, 16
      %v6683 = vrot.slane %v6681, 5
      %v6684 = vsel %vm1549, %v6679, %v6683
      %v6685 = vshrl.u32 %v5652, 16
      %v6687 = vrot.slane %v6685, 4
      %v6688 = vor.u32 %v6687, %v6683
      %v6689 = vrot.slane %v6688, 4
      %v6691 = vshll.u32 %v6494, 16
      %v6693 = vrot.slane %v6691, 5
      %v6694 = vsel %vm1549, %v6689, %v6693
      %v6696 = vshrl.u32 %v5653, 16
      %v6698 = vrot.slane %v6696, 4
      %v6699 = vshll.u32 %v5653, 16
      %v6701 = vrot.slane %v6699, 5
      %v6702 = vor.u32 %v6698, %v6701
      %v6703 = vrot.slane %v6702, 4
      %v6705 = vshll.u32 %v5654, 16
      %v6707 = vrot.slane %v6705, 5
      %v6708 = vsel %vm1549, %v6703, %v6707
      %v6709 = vshrl.u32 %v5654, 16
      %v6711 = vrot.slane %v6709, 4
      %v6712 = vor.u32 %v6711, %v6707
      %v6713 = vrot.slane %v6712, 4
      %v6715 = vshll.u32 %v6495, 16
      %v6717 = vrot.slane %v6715, 5
      %v6718 = vsel %vm1549, %v6713, %v6717
      %v6720 = vshrl.u32 %v5655, 16
      %v6722 = vrot.slane %v6720, 4
      %v6723 = vshll.u32 %v5655, 16
      %v6725 = vrot.slane %v6723, 5
      %v6726 = vor.u32 %v6722, %v6725
      %v6727 = vrot.slane %v6726, 4
      %v6729 = vshll.u32 %v5656, 16
      %v6731 = vrot.slane %v6729, 5
      %v6732 = vsel %vm1549, %v6727, %v6731
      %v6733 = vshrl.u32 %v5656, 16
      %v6735 = vrot.slane %v6733, 4
      %v6736 = vor.u32 %v6735, %v6731
      %v6737 = vrot.slane %v6736, 4
      %v6739 = vshll.u32 %v6496, 16
      %v6741 = vrot.slane %v6739, 5
      %v6742 = vsel %vm1549, %v6737, %v6741
      %v6744 = vshrl.u32 %v5657, 16
      %v6746 = vrot.slane %v6744, 4
      %v6747 = vshll.u32 %v5657, 16
      %v6749 = vrot.slane %v6747, 5
      %v6750 = vor.u32 %v6746, %v6749
      %v6751 = vrot.slane %v6750, 4
      %v6753 = vshll.u32 %v5658, 16
      %v6755 = vrot.slane %v6753, 5
      %v6756 = vsel %vm1549, %v6751, %v6755
      %v6757 = vshrl.u32 %v5658, 16
      %v6759 = vrot.slane %v6757, 4
      %v6760 = vor.u32 %v6759, %v6755
      %v6761 = vrot.slane %v6760, 4
      %v6763 = vshll.u32 %v6497, 16
      %v6765 = vrot.slane %v6763, 5
      %v6766 = vsel %vm1549, %v6761, %v6765
      %v6768 = vshrl.u32 %v5659, 16
      %v6770 = vrot.slane %v6768, 4
      %v6771 = vshll.u32 %v5659, 16
      %v6773 = vrot.slane %v6771, 5
      %v6774 = vor.u32 %v6770, %v6773
      %v6775 = vrot.slane %v6774, 4
      %v6777 = vshll.u32 %v5660, 16
      %v6779 = vrot.slane %v6777, 5
      %v6780 = vsel %vm1549, %v6775, %v6779
      %v6781 = vshrl.u32 %v5660, 16
      %v6783 = vrot.slane %v6781, 4
      %v6784 = vor.u32 %v6783, %v6779
      %v6785 = vrot.slane %v6784, 4
      %v6787 = vshll.u32 %v6498, 16
      %v6789 = vrot.slane %v6787, 5
      %v6790 = vsel %vm1549, %v6785, %v6789
      %v6792 = vshrl.u32 %v5661, 16
      %v6794 = vrot.slane %v6792, 4
      %v6795 = vshll.u32 %v5661, 16
      %v6797 = vrot.slane %v6795, 5
      %v6798 = vor.u32 %v6794, %v6797
      %v6799 = vrot.slane %v6798, 4
      %v6801 = vshll.u32 %v5662, 16
      %v6803 = vrot.slane %v6801, 5
      %v6804 = vsel %vm1549, %v6799, %v6803
      %v6805 = vshrl.u32 %v5662, 16
      %v6807 = vrot.slane %v6805, 4
      %v6808 = vor.u32 %v6807, %v6803
      %v6809 = vrot.slane %v6808, 4
      %v6811 = vshll.u32 %v6499, 16
      %v6813 = vrot.slane %v6811, 5
      %v6814 = vsel %vm1549, %v6809, %v6813
      %v6816 = vshrl.u32 %v5663, 16
      %v6818 = vrot.slane %v6816, 4
      %v6819 = vshll.u32 %v5663, 16
      %v6821 = vrot.slane %v6819, 5
      %v6822 = vor.u32 %v6818, %v6821
      %v6823 = vrot.slane %v6822, 4
      %v6825 = vshll.u32 %v5664, 16
      %v6827 = vrot.slane %v6825, 5
      %v6828 = vsel %vm1549, %v6823, %v6827
      %v6829 = vshrl.u32 %v5664, 16
      %v6831 = vrot.slane %v6829, 4
      %v6832 = vor.u32 %v6831, %v6827
      %v6833 = vrot.slane %v6832, 4
      %v6835 = vshll.u32 %v6500, 16
      %v6837 = vrot.slane %v6835, 5
      %v6838 = vsel %vm1549, %v6833, %v6837
      %v6840 = vshrl.u32 %v5665, 16
      %v6842 = vrot.slane %v6840, 4
      %v6843 = vshll.u32 %v5665, 16
      %v6845 = vrot.slane %v6843, 5
      %v6846 = vor.u32 %v6842, %v6845
      %v6847 = vrot.slane %v6846, 4
      %v6849 = vshll.u32 %v5666, 16
      %v6851 = vrot.slane %v6849, 5
      %v6852 = vsel %vm1549, %v6847, %v6851
      %v6853 = vshrl.u32 %v5666, 16
      %v6855 = vrot.slane %v6853, 4
      %v6856 = vor.u32 %v6855, %v6851
      %v6857 = vrot.slane %v6856, 4
      %v6859 = vshll.u32 %v6501, 16
      %v6861 = vrot.slane %v6859, 5
      %v6862 = vsel %vm1549, %v6857, %v6861
      %v6864 = vshrl.u32 %v5667, 16
      %v6866 = vrot.slane %v6864, 4
      %v6867 = vshll.u32 %v5667, 16
      %v6869 = vrot.slane %v6867, 5
      %v6870 = vor.u32 %v6866, %v6869
      %v6871 = vrot.slane %v6870, 4
      %v6873 = vshll.u32 %v5668, 16
      %v6875 = vrot.slane %v6873, 5
      %v6876 = vsel %vm1549, %v6871, %v6875
      %v6877 = vshrl.u32 %v5668, 16
      %v6879 = vrot.slane %v6877, 4
      %v6880 = vor.u32 %v6879, %v6875
      %v6881 = vrot.slane %v6880, 4
      %v6883 = vshll.u32 %v6502, 16
      %v6885 = vrot.slane %v6883, 5
      %v6886 = vsel %vm1549, %v6881, %v6885
      %v6887 = vld [vmem:[%s1110 + $0x8] sm:$0x1]
      %v6888 = vld [vmem:[%s1110 + $0x14] sm:$0x1]
      %v6889 = vld [vmem:[%s1110 + $0x20] sm:$0x1]
      %v6890 = vld [vmem:[%s1110 + $0x2c] sm:$0x1]
      %v6891 = vld [vmem:[%s1110 + $0x38] sm:$0x1]
      %v6892 = vld [vmem:[%s1110 + $0x44] sm:$0x1]
      %v6893 = vld [vmem:[%s1110 + $0x50] sm:$0x1]
      %v6894 = vld [vmem:[%s1110 + $0x5c] sm:$0x1]
      %v6895 = vld [vmem:[%s1110 + $0x68] sm:$0x1]
      %v6896 = vld [vmem:[%s1110 + $0x74] sm:$0x1]
      %v6897 = vld [vmem:[%s1110 + $0x80] sm:$0x1]
      %v6898 = vld [vmem:[%s1110 + $0x8c] sm:$0x1]
      %v6899 = vld [vmem:[%s1110 + $0x98] sm:$0x1]
      %v6900 = vld [vmem:[%s1110 + $0xa4] sm:$0x1]
      %v6901 = vld [vmem:[%s1110 + $0xb0] sm:$0x1]
      %v6902 = vld [vmem:[%s1110 + $0xbc] sm:$0x1]
      %v6904 = vshrl.u32 %v5669, 16
      %v6906 = vrot.slane %v6904, 4
      %v6907 = vshll.u32 %v5669, 16
      %v6909 = vrot.slane %v6907, 5
      %v6910 = vor.u32 %v6906, %v6909
      %v6911 = vrot.slane %v6910, 4
      %v6913 = vshll.u32 %v5670, 16
      %v6915 = vrot.slane %v6913, 5
      %v6916 = vsel %vm1549, %v6911, %v6915
      %v6917 = vshrl.u32 %v5670, 16
      %v6919 = vrot.slane %v6917, 4
      %v6920 = vor.u32 %v6919, %v6915
      %v6921 = vrot.slane %v6920, 4
      %v6923 = vshll.u32 %v6887, 16
      %v6925 = vrot.slane %v6923, 5
      %v6926 = vsel %vm1549, %v6921, %v6925
      %v6928 = vshrl.u32 %v5671, 16
      %v6930 = vrot.slane %v6928, 4
      %v6931 = vshll.u32 %v5671, 16
      %v6933 = vrot.slane %v6931, 5
      %v6934 = vor.u32 %v6930, %v6933
      %v6935 = vrot.slane %v6934, 4
      %v6937 = vshll.u32 %v5672, 16
      %v6939 = vrot.slane %v6937, 5
      %v6940 = vsel %vm1549, %v6935, %v6939
      %v6941 = vshrl.u32 %v5672, 16
      %v6943 = vrot.slane %v6941, 4
      %v6944 = vor.u32 %v6943, %v6939
      %v6945 = vrot.slane %v6944, 4
      %v6947 = vshll.u32 %v6888, 16
      %v6949 = vrot.slane %v6947, 5
      %v6950 = vsel %vm1549, %v6945, %v6949
      %v6952 = vshrl.u32 %v5673, 16
      %v6954 = vrot.slane %v6952, 4
      %v6955 = vshll.u32 %v5673, 16
      %v6957 = vrot.slane %v6955, 5
      %v6958 = vor.u32 %v6954, %v6957
      %v6959 = vrot.slane %v6958, 4
      %v6961 = vshll.u32 %v5674, 16
      %v6963 = vrot.slane %v6961, 5
      %v6964 = vsel %vm1549, %v6959, %v6963
      %v6965 = vshrl.u32 %v5674, 16
      %v6967 = vrot.slane %v6965, 4
      %v6968 = vor.u32 %v6967, %v6963
      %v6969 = vrot.slane %v6968, 4
      %v6971 = vshll.u32 %v6889, 16
      %v6973 = vrot.slane %v6971, 5
      %v6974 = vsel %vm1549, %v6969, %v6973
      %v6976 = vshrl.u32 %v5675, 16
      %v6978 = vrot.slane %v6976, 4
      %v6979 = vshll.u32 %v5675, 16
      %v6981 = vrot.slane %v6979, 5
      %v6982 = vor.u32 %v6978, %v6981
      %v6983 = vrot.slane %v6982, 4
      %v6985 = vshll.u32 %v5676, 16
      %v6987 = vrot.slane %v6985, 5
      %v6988 = vsel %vm1549, %v6983, %v6987
      %v6989 = vshrl.u32 %v5676, 16
      %v6991 = vrot.slane %v6989, 4
      %v6992 = vor.u32 %v6991, %v6987
      %v6993 = vrot.slane %v6992, 4
      %v6995 = vshll.u32 %v6890, 16
      %v6997 = vrot.slane %v6995, 5
      %v6998 = vsel %vm1549, %v6993, %v6997
      %v7000 = vshrl.u32 %v5677, 16
      %v7002 = vrot.slane %v7000, 4
      %v7003 = vshll.u32 %v5677, 16
      %v7005 = vrot.slane %v7003, 5
      %v7006 = vor.u32 %v7002, %v7005
      %v7007 = vrot.slane %v7006, 4
      %v7009 = vshll.u32 %v5678, 16
      %v7011 = vrot.slane %v7009, 5
      %v7012 = vsel %vm1549, %v7007, %v7011
      %v7013 = vshrl.u32 %v5678, 16
      %v7015 = vrot.slane %v7013, 4
      %v7016 = vor.u32 %v7015, %v7011
      %v7017 = vrot.slane %v7016, 4
      %v7019 = vshll.u32 %v6891, 16
      %v7021 = vrot.slane %v7019, 5
      %v7022 = vsel %vm1549, %v7017, %v7021
      %v7024 = vshrl.u32 %v5679, 16
      %v7026 = vrot.slane %v7024, 4
      %v7027 = vshll.u32 %v5679, 16
      %v7029 = vrot.slane %v7027, 5
      %v7030 = vor.u32 %v7026, %v7029
      %v7031 = vrot.slane %v7030, 4
      %v7033 = vshll.u32 %v5680, 16
      %v7035 = vrot.slane %v7033, 5
      %v7036 = vsel %vm1549, %v7031, %v7035
      %v7037 = vshrl.u32 %v5680, 16
      %v7039 = vrot.slane %v7037, 4
      %v7040 = vor.u32 %v7039, %v7035
      %v7041 = vrot.slane %v7040, 4
      %v7043 = vshll.u32 %v6892, 16
      %v7045 = vrot.slane %v7043, 5
      %v7046 = vsel %vm1549, %v7041, %v7045
      %v7048 = vshrl.u32 %v5681, 16
      %v7050 = vrot.slane %v7048, 4
      %v7051 = vshll.u32 %v5681, 16
      %v7053 = vrot.slane %v7051, 5
      %v7054 = vor.u32 %v7050, %v7053
      %v7055 = vrot.slane %v7054, 4
      %v7057 = vshll.u32 %v5682, 16
      %v7059 = vrot.slane %v7057, 5
      %v7060 = vsel %vm1549, %v7055, %v7059
      %v7061 = vshrl.u32 %v5682, 16
      %v7063 = vrot.slane %v7061, 4
      %v7064 = vor.u32 %v7063, %v7059
      %v7065 = vrot.slane %v7064, 4
      %v7067 = vshll.u32 %v6893, 16
      %v7069 = vrot.slane %v7067, 5
      %v7070 = vsel %vm1549, %v7065, %v7069
      %v7072 = vshrl.u32 %v5683, 16
      %v7074 = vrot.slane %v7072, 4
      %v7075 = vshll.u32 %v5683, 16
      %v7077 = vrot.slane %v7075, 5
      %v7078 = vor.u32 %v7074, %v7077
      %v7079 = vrot.slane %v7078, 4
      %v7081 = vshll.u32 %v5684, 16
      %v7083 = vrot.slane %v7081, 5
      %v7084 = vsel %vm1549, %v7079, %v7083
      %v7085 = vshrl.u32 %v5684, 16
      %v7087 = vrot.slane %v7085, 4
      %v7088 = vor.u32 %v7087, %v7083
      %v7089 = vrot.slane %v7088, 4
      %v7091 = vshll.u32 %v6894, 16
      %v7093 = vrot.slane %v7091, 5
      %v7094 = vsel %vm1549, %v7089, %v7093
      %v7096 = vshrl.u32 %v5685, 16
      %v7098 = vrot.slane %v7096, 4
      %v7099 = vshll.u32 %v5685, 16
      %v7101 = vrot.slane %v7099, 5
      %v7102 = vor.u32 %v7098, %v7101
      %v7103 = vrot.slane %v7102, 4
      %v7105 = vshll.u32 %v5686, 16
      %v7107 = vrot.slane %v7105, 5
      %v7108 = vsel %vm1549, %v7103, %v7107
      %v7109 = vshrl.u32 %v5686, 16
      %v7111 = vrot.slane %v7109, 4
      %v7112 = vor.u32 %v7111, %v7107
      %v7113 = vrot.slane %v7112, 4
      %v7115 = vshll.u32 %v6895, 16
      %v7117 = vrot.slane %v7115, 5
      %v7118 = vsel %vm1549, %v7113, %v7117
      %v7120 = vshrl.u32 %v5687, 16
      %v7122 = vrot.slane %v7120, 4
      %v7123 = vshll.u32 %v5687, 16
      %v7125 = vrot.slane %v7123, 5
      %v7126 = vor.u32 %v7122, %v7125
      %v7127 = vrot.slane %v7126, 4
      %v7129 = vshll.u32 %v5688, 16
      %v7131 = vrot.slane %v7129, 5
      %v7132 = vsel %vm1549, %v7127, %v7131
      %v7133 = vshrl.u32 %v5688, 16
      %v7135 = vrot.slane %v7133, 4
      %v7136 = vor.u32 %v7135, %v7131
      %v7137 = vrot.slane %v7136, 4
      %v7139 = vshll.u32 %v6896, 16
      %v7141 = vrot.slane %v7139, 5
      %v7142 = vsel %vm1549, %v7137, %v7141
      %v7144 = vshrl.u32 %v5689, 16
      %v7146 = vrot.slane %v7144, 4
      %v7147 = vshll.u32 %v5689, 16
      %v7149 = vrot.slane %v7147, 5
      %v7150 = vor.u32 %v7146, %v7149
      %v7151 = vrot.slane %v7150, 4
      %v7153 = vshll.u32 %v5690, 16
      %v7155 = vrot.slane %v7153, 5
      %v7156 = vsel %vm1549, %v7151, %v7155
      %v7157 = vshrl.u32 %v5690, 16
      %v7159 = vrot.slane %v7157, 4
      %v7160 = vor.u32 %v7159, %v7155
      %v7161 = vrot.slane %v7160, 4
      %v7163 = vshll.u32 %v6897, 16
      %v7165 = vrot.slane %v7163, 5
      %v7166 = vsel %vm1549, %v7161, %v7165
      %v7168 = vshrl.u32 %v5691, 16
      %v7170 = vrot.slane %v7168, 4
      %v7171 = vshll.u32 %v5691, 16
      %v7173 = vrot.slane %v7171, 5
      %v7174 = vor.u32 %v7170, %v7173
      %v7175 = vrot.slane %v7174, 4
      %v7177 = vshll.u32 %v5692, 16
      %v7179 = vrot.slane %v7177, 5
      %v7180 = vsel %vm1549, %v7175, %v7179
      %v7181 = vshrl.u32 %v5692, 16
      %v7183 = vrot.slane %v7181, 4
      %v7184 = vor.u32 %v7183, %v7179
      %v7185 = vrot.slane %v7184, 4
      %v7187 = vshll.u32 %v6898, 16
      %v7189 = vrot.slane %v7187, 5
      %v7190 = vsel %vm1549, %v7185, %v7189
      %v7192 = vshrl.u32 %v5693, 16
      %v7194 = vrot.slane %v7192, 4
      %v7195 = vshll.u32 %v5693, 16
      %v7197 = vrot.slane %v7195, 5
      %v7198 = vor.u32 %v7194, %v7197
      %v7199 = vrot.slane %v7198, 4
      %v7201 = vshll.u32 %v5694, 16
      %v7203 = vrot.slane %v7201, 5
      %v7204 = vsel %vm1549, %v7199, %v7203
      %v7205 = vshrl.u32 %v5694, 16
      %v7207 = vrot.slane %v7205, 4
      %v7208 = vor.u32 %v7207, %v7203
      %v7209 = vrot.slane %v7208, 4
      %v7211 = vshll.u32 %v6899, 16
      %v7213 = vrot.slane %v7211, 5
      %v7214 = vsel %vm1549, %v7209, %v7213
      %v7216 = vshrl.u32 %v5695, 16
      %v7218 = vrot.slane %v7216, 4
      %v7219 = vshll.u32 %v5695, 16
      %v7221 = vrot.slane %v7219, 5
      %v7222 = vor.u32 %v7218, %v7221
      %v7223 = vrot.slane %v7222, 4
      %v7225 = vshll.u32 %v5696, 16
      %v7227 = vrot.slane %v7225, 5
      %v7228 = vsel %vm1549, %v7223, %v7227
      %v7229 = vshrl.u32 %v5696, 16
      %v7231 = vrot.slane %v7229, 4
      %v7232 = vor.u32 %v7231, %v7227
      %v7233 = vrot.slane %v7232, 4
      %v7235 = vshll.u32 %v6900, 16
      %v7237 = vrot.slane %v7235, 5
      %v7238 = vsel %vm1549, %v7233, %v7237
      %v7240 = vshrl.u32 %v5697, 16
      %v7242 = vrot.slane %v7240, 4
      %v7243 = vshll.u32 %v5697, 16
      %v7245 = vrot.slane %v7243, 5
      %v7246 = vor.u32 %v7242, %v7245
      %v7247 = vrot.slane %v7246, 4
      %v7249 = vshll.u32 %v5698, 16
      %v7251 = vrot.slane %v7249, 5
      %v7252 = vsel %vm1549, %v7247, %v7251
      %v7253 = vshrl.u32 %v5698, 16
      %v7255 = vrot.slane %v7253, 4
      %v7256 = vor.u32 %v7255, %v7251
      %v7257 = vrot.slane %v7256, 4
      %v7259 = vshll.u32 %v6901, 16
      %v7261 = vrot.slane %v7259, 5
      %v7262 = vsel %vm1549, %v7257, %v7261
      %v7264 = vshrl.u32 %v5699, 16
      %v7266 = vrot.slane %v7264, 4
      %v7267 = vshll.u32 %v5699, 16
      %v7269 = vrot.slane %v7267, 5
      %v7270 = vor.u32 %v7266, %v7269
      %v7271 = vrot.slane %v7270, 4
      %v7273 = vshll.u32 %v5700, 16
      %v7275 = vrot.slane %v7273, 5
      %v7276 = vsel %vm1549, %v7271, %v7275
      %v7277 = vshrl.u32 %v5700, 16
      %v7279 = vrot.slane %v7277, 4
      %v7280 = vor.u32 %v7279, %v7275
      %v7281 = vrot.slane %v7280, 4
      %v7283 = vshll.u32 %v6902, 16
      %v7285 = vrot.slane %v7283, 5
      %v7286 = vsel %vm1549, %v7281, %v7285
      %v7287 = vunpack.c.l.b16 %v6116
      %v7288 = vunpack.c.l.b16 %v6126
      %v7289 = vunpack.c.l.b16 %v6140
      %v7290 = vunpack.c.l.b16 %v6150
      %v7291 = vunpack.c.l.b16 %v6164
      %v7292 = vunpack.c.l.b16 %v6174
      %v7293 = vunpack.c.l.b16 %v6188
      %v7294 = vunpack.c.l.b16 %v6198
      %v7295 = vunpack.c.l.b16 %v6212
      %v7296 = vunpack.c.l.b16 %v6222
      %v7297 = vunpack.c.l.b16 %v6236
      %v7298 = vunpack.c.l.b16 %v6246
      %v7299 = vunpack.c.l.b16 %v6260
      %v7300 = vunpack.c.l.b16 %v6270
      %v7301 = vunpack.c.l.b16 %v6284
      %v7302 = vunpack.c.l.b16 %v6294
      %v7303 = vunpack.c.l.b16 %v6308
      %v7304 = vunpack.c.l.b16 %v6318
      %v7305 = vunpack.c.l.b16 %v6332
      %v7306 = vunpack.c.l.b16 %v6342
      %v7307 = vunpack.c.l.b16 %v6356
      %v7308 = vunpack.c.l.b16 %v6366
      %v7309 = vunpack.c.l.b16 %v6380
      %v7310 = vunpack.c.l.b16 %v6390
      %v7311 = vunpack.c.l.b16 %v6404
      %v7312 = vunpack.c.l.b16 %v6414
      %v7313 = vunpack.c.l.b16 %v6428
      %v7314 = vunpack.c.l.b16 %v6438
      %v7315 = vunpack.c.l.b16 %v6452
      %v7316 = vunpack.c.l.b16 %v6462
      %v7317 = vunpack.c.l.b16 %v6476
      %v7318 = vunpack.c.l.b16 %v6486
      %v7319 = vpack.c.b16 %v7288, %v7287
      %v7320 = vpack.c.b16 %v7290, %v7289
      %v7321 = vpack.c.b16 %v7292, %v7291
      %v7322 = vpack.c.b16 %v7294, %v7293
      %v7323 = vpack.c.b16 %v7296, %v7295
      %v7324 = vpack.c.b16 %v7298, %v7297
      %v7325 = vpack.c.b16 %v7300, %v7299
      %v7326 = vpack.c.b16 %v7302, %v7301
      %v7327 = vpack.c.b16 %v7304, %v7303
      %v7328 = vpack.c.b16 %v7306, %v7305
      %v7329 = vpack.c.b16 %v7308, %v7307
      %v7330 = vpack.c.b16 %v7310, %v7309
      %v7331 = vpack.c.b16 %v7312, %v7311
      %v7332 = vpack.c.b16 %v7314, %v7313
      %v7333 = vpack.c.b16 %v7316, %v7315
      %v7334 = vpack.c.b16 %v7318, %v7317
      %v7335 = vunpack.c.l.b16 %v6516
      %v7336 = vunpack.c.l.b16 %v6526
      %v7337 = vunpack.c.l.b16 %v6540
      %v7338 = vunpack.c.l.b16 %v6550
      %v7339 = vunpack.c.l.b16 %v6564
      %v7340 = vunpack.c.l.b16 %v6574
      %v7341 = vunpack.c.l.b16 %v6588
      %v7342 = vunpack.c.l.b16 %v6598
      %v7343 = vunpack.c.l.b16 %v6612
      %v7344 = vunpack.c.l.b16 %v6622
      %v7345 = vunpack.c.l.b16 %v6636
      %v7346 = vunpack.c.l.b16 %v6646
      %v7347 = vunpack.c.l.b16 %v6660
      %v7348 = vunpack.c.l.b16 %v6670
      %v7349 = vunpack.c.l.b16 %v6684
      %v7350 = vunpack.c.l.b16 %v6694
      %v7351 = vunpack.c.l.b16 %v6708
      %v7352 = vunpack.c.l.b16 %v6718
      %v7353 = vunpack.c.l.b16 %v6732
      %v7354 = vunpack.c.l.b16 %v6742
      %v7355 = vunpack.c.l.b16 %v6756
      %v7356 = vunpack.c.l.b16 %v6766
      %v7357 = vunpack.c.l.b16 %v6780
      %v7358 = vunpack.c.l.b16 %v6790
      %v7359 = vunpack.c.l.b16 %v6804
      %v7360 = vunpack.c.l.b16 %v6814
      %v7361 = vunpack.c.l.b16 %v6828
      %v7362 = vunpack.c.l.b16 %v6838
      %v7363 = vunpack.c.l.b16 %v6852
      %v7364 = vunpack.c.l.b16 %v6862
      %v7365 = vunpack.c.l.b16 %v6876
      %v7366 = vunpack.c.l.b16 %v6886
      %v7367 = vpack.c.b16 %v7336, %v7335
      %v7368 = vpack.c.b16 %v7338, %v7337
      %v7369 = vpack.c.b16 %v7340, %v7339
      %v7370 = vpack.c.b16 %v7342, %v7341
      %v7371 = vpack.c.b16 %v7344, %v7343
      %v7372 = vpack.c.b16 %v7346, %v7345
      %v7373 = vpack.c.b16 %v7348, %v7347
      %v7374 = vpack.c.b16 %v7350, %v7349
      %v7375 = vpack.c.b16 %v7352, %v7351
      %v7376 = vpack.c.b16 %v7354, %v7353
      %v7377 = vpack.c.b16 %v7356, %v7355
      %v7378 = vpack.c.b16 %v7358, %v7357
      %v7379 = vpack.c.b16 %v7360, %v7359
      %v7380 = vpack.c.b16 %v7362, %v7361
      %v7381 = vpack.c.b16 %v7364, %v7363
      %v7382 = vpack.c.b16 %v7366, %v7365
      %7383 = vrot.lane.b32.xlu0 %v7367, 4
      %v7384 = vpop.permute.xlu0 %7383
      %7385 = vrot.lane.b32.xlu0 %v7368, 4
      %v7386 = vpop.permute.xlu0 %7385
      %7387 = vrot.lane.b32.xlu0 %v7369, 4
      %v7388 = vpop.permute.xlu0 %7387
      %7389 = vrot.lane.b32.xlu0 %v7370, 4
      %v7390 = vpop.permute.xlu0 %7389
      %7391 = vrot.lane.b32.xlu0 %v7371, 4
      %v7392 = vpop.permute.xlu0 %7391
      %7393 = vrot.lane.b32.xlu0 %v7372, 4
      %v7394 = vpop.permute.xlu0 %7393
      %7395 = vrot.lane.b32.xlu0 %v7373, 4
      %v7396 = vpop.permute.xlu0 %7395
      %7397 = vrot.lane.b32.xlu0 %v7374, 4
      %v7398 = vpop.permute.xlu0 %7397
      %7399 = vrot.lane.b32.xlu0 %v7375, 4
      %v7400 = vpop.permute.xlu0 %7399
      %7401 = vrot.lane.b32.xlu0 %v7376, 4
      %v7402 = vpop.permute.xlu0 %7401
      %7403 = vrot.lane.b32.xlu0 %v7377, 4
      %v7404 = vpop.permute.xlu0 %7403
      %7405 = vrot.lane.b32.xlu0 %v7378, 4
      %v7406 = vpop.permute.xlu0 %7405
      %7407 = vrot.lane.b32.xlu0 %v7379, 4
      %v7408 = vpop.permute.xlu0 %7407
      %7409 = vrot.lane.b32.xlu0 %v7380, 4
      %v7410 = vpop.permute.xlu0 %7409
      %7411 = vrot.lane.b32.xlu0 %v7381, 4
      %v7412 = vpop.permute.xlu0 %7411
      %7413 = vrot.lane.b32.xlu0 %v7382, 4
      %v7414 = vpop.permute.xlu0 %7413
      %v7415 = vunpack.c.l.b16 %v6916
      %v7416 = vunpack.c.l.b16 %v6926
      %v7417 = vunpack.c.l.b16 %v6940
      %v7418 = vunpack.c.l.b16 %v6950
      %v7419 = vunpack.c.l.b16 %v6964
      %v7420 = vunpack.c.l.b16 %v6974
      %v7421 = vunpack.c.l.b16 %v6988
      %v7422 = vunpack.c.l.b16 %v6998
      %v7423 = vunpack.c.l.b16 %v7012
      %v7424 = vunpack.c.l.b16 %v7022
      %v7425 = vunpack.c.l.b16 %v7036
      %v7426 = vunpack.c.l.b16 %v7046
      %v7427 = vunpack.c.l.b16 %v7060
      %v7428 = vunpack.c.l.b16 %v7070
      %v7429 = vunpack.c.l.b16 %v7084
      %v7430 = vunpack.c.l.b16 %v7094
      %v7431 = vunpack.c.l.b16 %v7108
      %v7432 = vunpack.c.l.b16 %v7118
      %v7433 = vunpack.c.l.b16 %v7132
      %v7434 = vunpack.c.l.b16 %v7142
      %v7435 = vunpack.c.l.b16 %v7156
      %v7436 = vunpack.c.l.b16 %v7166
      %v7437 = vunpack.c.l.b16 %v7180
      %v7438 = vunpack.c.l.b16 %v7190
      %v7439 = vunpack.c.l.b16 %v7204
      %v7440 = vunpack.c.l.b16 %v7214
      %v7441 = vunpack.c.l.b16 %v7228
      %v7442 = vunpack.c.l.b16 %v7238
      %v7443 = vunpack.c.l.b16 %v7252
      %v7444 = vunpack.c.l.b16 %v7262
      %v7445 = vunpack.c.l.b16 %v7276
      %v7446 = vunpack.c.l.b16 %v7286
      %v7447 = vpack.c.b16 %v7416, %v7415
      %v7448 = vpack.c.b16 %v7418, %v7417
      %v7449 = vpack.c.b16 %v7420, %v7419
      %v7450 = vpack.c.b16 %v7422, %v7421
      %v7451 = vpack.c.b16 %v7424, %v7423
      %v7452 = vpack.c.b16 %v7426, %v7425
      %v7453 = vpack.c.b16 %v7428, %v7427
      %v7454 = vpack.c.b16 %v7430, %v7429
      %v7455 = vpack.c.b16 %v7432, %v7431
      %v7456 = vpack.c.b16 %v7434, %v7433
      %v7457 = vpack.c.b16 %v7436, %v7435
      %v7458 = vpack.c.b16 %v7438, %v7437
      %v7459 = vpack.c.b16 %v7440, %v7439
      %v7460 = vpack.c.b16 %v7442, %v7441
      %v7461 = vpack.c.b16 %v7444, %v7443
      %v7462 = vpack.c.b16 %v7446, %v7445
      %7463 = vrot.lane.b32.xlu0 %v7447, 8
      %v7464 = vpop.permute.xlu0 %7463
      %7465 = vrot.lane.b32.xlu0 %v7448, 8
      %v7466 = vpop.permute.xlu0 %7465
      %7467 = vrot.lane.b32.xlu0 %v7449, 8
      %v7468 = vpop.permute.xlu0 %7467
      %7469 = vrot.lane.b32.xlu0 %v7450, 8
      %v7470 = vpop.permute.xlu0 %7469
      %7471 = vrot.lane.b32.xlu0 %v7451, 8
      %v7472 = vpop.permute.xlu0 %7471
      %7473 = vrot.lane.b32.xlu0 %v7452, 8
      %v7474 = vpop.permute.xlu0 %7473
      %7475 = vrot.lane.b32.xlu0 %v7453, 8
      %v7476 = vpop.permute.xlu0 %7475
      %7477 = vrot.lane.b32.xlu0 %v7454, 8
      %v7478 = vpop.permute.xlu0 %7477
      %7479 = vrot.lane.b32.xlu0 %v7455, 8
      %v7480 = vpop.permute.xlu0 %7479
      %7481 = vrot.lane.b32.xlu0 %v7456, 8
      %v7482 = vpop.permute.xlu0 %7481
      %7483 = vrot.lane.b32.xlu0 %v7457, 8
      %v7484 = vpop.permute.xlu0 %7483
      %7485 = vrot.lane.b32.xlu0 %v7458, 8
      %v7486 = vpop.permute.xlu0 %7485
      %7487 = vrot.lane.b32.xlu0 %v7459, 8
      %v7488 = vpop.permute.xlu0 %7487
      %7489 = vrot.lane.b32.xlu0 %v7460, 8
      %v7490 = vpop.permute.xlu0 %7489
      %7491 = vrot.lane.b32.xlu0 %v7461, 8
      %v7492 = vpop.permute.xlu0 %7491
      %7493 = vrot.lane.b32.xlu0 %v7462, 8
      %v7494 = vpop.permute.xlu0 %7493
      %v7497 = vsel %vm1447, %v7319, %v7384
      %v7500 = vsel %vm1447, %v7320, %v7386
      %v7503 = vsel %vm1447, %v7321, %v7388
      %v7506 = vsel %vm1447, %v7322, %v7390
      %v7509 = vsel %vm1447, %v7323, %v7392
      %v7512 = vsel %vm1447, %v7324, %v7394
      %v7515 = vsel %vm1447, %v7325, %v7396
      %v7518 = vsel %vm1447, %v7326, %v7398
      %v7521 = vsel %vm1447, %v7327, %v7400
      %v7524 = vsel %vm1447, %v7328, %v7402
      %v7527 = vsel %vm1447, %v7329, %v7404
      %v7530 = vsel %vm1447, %v7330, %v7406
      %v7533 = vsel %vm1447, %v7331, %v7408
      %v7536 = vsel %vm1447, %v7332, %v7410
      %v7539 = vsel %vm1447, %v7333, %v7412
      %v7542 = vsel %vm1447, %v7334, %v7414
      %v7544 = vsel %vm1496, %v7497, %v7464
      %v7546 = vsel %vm1496, %v7500, %v7466
      %v7548 = vsel %vm1496, %v7503, %v7468
      %v7550 = vsel %vm1496, %v7506, %v7470
      %v7552 = vsel %vm1496, %v7509, %v7472
      %v7554 = vsel %vm1496, %v7512, %v7474
      %v7556 = vsel %vm1496, %v7515, %v7476
      %v7558 = vsel %vm1496, %v7518, %v7478
      %v7560 = vsel %vm1496, %v7521, %v7480
      %v7562 = vsel %vm1496, %v7524, %v7482
      %v7564 = vsel %vm1496, %v7527, %v7484
      %v7566 = vsel %vm1496, %v7530, %v7486
      %v7568 = vsel %vm1496, %v7533, %v7488
      %v7570 = vsel %vm1496, %v7536, %v7490
      %v7572 = vsel %vm1496, %v7539, %v7492
      %v7574 = vsel %vm1496, %v7542, %v7494
      %s7575 = scalar_lea.vmem %s2, 8
      %v7576 = vld [vmem:[%s7575] sm:$0xf]
      %v7577 = vld [vmem:[%s7575 + $0x4] sm:$0x3]
      %v7580 = vunpack.c.l.b16 %v7576
      %v7581 = vunpack.c.l.b16 %v7577
      %v7582 = vpack.c.b16 %v7581, %v7580
      %v7583 = vsel %vm3030, %v7544, 0
      %v7585 = vsel %vm3030, %v7546, 0
      %v7587 = vsel %vm3030, %v7548, 0
      %v7589 = vsel %vm3030, %v7550, 0
      %v7591 = vsel %vm3030, %v7552, 0
      %v7593 = vsel %vm3030, %v7554, 0
      %v7595 = vsel %vm3030, %v7556, 0
      %v7597 = vsel %vm3030, %v7558, 0
      %v7599 = vsel %vm3030, %v7560, 0
      %v7601 = vsel %vm3030, %v7562, 0
      %v7603 = vsel %vm3030, %v7564, 0
      %v7605 = vsel %vm3030, %v7566, 0
      %v7607 = vsel %vm3030, %v7568, 0
      %v7609 = vsel %vm3030, %v7570, 0
      %v7611 = vsel %vm3030, %v7572, 0
      %v7613 = vsel %vm3030, %v7574, 0
      %v7616 = vsel %vm3063, %v7582, 0
      %7618 = vmatprep.subr.bf16.mxu0 0
      %7619 = vmatpush1.bf16.msra.mxu0 0
      %7620 = vmatprep.subr.bf16.mxu0 0
      %7621 = vmatpush1.bf16.msra.mxu0 0
      %7622 = vmatprep.subr.bf16.mxu0 0
      %7623 = vmatpush1.bf16.msra.mxu0 0
      %7624 = vmatprep.subr.bf16.mxu0 0
      %7625 = vmatpush1.bf16.msra.mxu0 0
      %7626 = vmatprep.subr.bf16.mxu0 0
      %7627 = vmatpush1.bf16.msra.mxu0 0
      %7628 = vmatprep.subr.bf16.mxu0 0
      %7629 = vmatpush1.bf16.msra.mxu0 0
      %7630 = vmatprep.subr.bf16.mxu0 0
      %7631 = vmatpush1.bf16.msra.mxu0 0
      %7632 = vmatprep.subr.bf16.mxu0 0
      %7633 = vmatpush1.bf16.msra.mxu0 %v7616
      %7634 = vmatprep.subr.bf16.mxu0 0
      %7635 = vmatpush2.bf16.msra.mxu0 0
      %7636 = vmatprep.subr.bf16.mxu0 0
      %7637 = vmatpush2.bf16.msra.mxu0 0
      %7638 = vmatprep.subr.bf16.mxu0 0
      %7639 = vmatpush2.bf16.msra.mxu0 0
      %7640 = vmatprep.subr.bf16.mxu0 0
      %7641 = vmatpush2.bf16.msra.mxu0 0
      %7642 = vmatprep.subr.bf16.mxu0 0
      %7643 = vmatpush2.bf16.msra.mxu0 0
      %7644 = vmatprep.subr.bf16.mxu0 0
      %7645 = vmatpush2.bf16.msra.mxu0 0
      %7646 = vmatprep.subr.bf16.mxu0 0
      %7647 = vmatpush2.bf16.msra.mxu0 0
      %7648 = vmatprep.subr.bf16.mxu0 0
      %7649 = vmatpush2.bf16.msra.mxu0 0
      %7650 = vmatprep.mubr.bf16.mxu0 0
      %7651 = vmatmul.mubr.bf16.gmra.mxu0 %v7583
      %v7652 = vpop.f32.mrf.mxu0
      %v7653 = vadd.f32 0.0, %v7652
      %v7654 = vpop.f32.mrf.mxu0
      %v7655 = vpop.f32.mrf.mxu0
      %v7656 = vadd.f32 0.0, %v7655
      %v7657 = vpop.f32.mrf.mxu0
      %7658 = vmatprep.mubr.bf16.mxu0 0
      %7659 = vmatmul.mubr.bf16.gmra.mxu0 %v7585
      %v7660 = vpop.f32.mrf.mxu0
      %v7661 = vadd.f32 0.0, %v7660
      %v7662 = vpop.f32.mrf.mxu0
      %v7663 = vpop.f32.mrf.mxu0
      %v7664 = vadd.f32 0.0, %v7663
      %v7665 = vpop.f32.mrf.mxu0
      %7666 = vmatprep.mubr.bf16.mxu0 0
      %7667 = vmatmul.mubr.bf16.gmra.mxu0 %v7587
      %v7668 = vpop.f32.mrf.mxu0
      %v7669 = vadd.f32 0.0, %v7668
      %v7670 = vpop.f32.mrf.mxu0
      %v7671 = vpop.f32.mrf.mxu0
      %v7672 = vadd.f32 0.0, %v7671
      %v7673 = vpop.f32.mrf.mxu0
      %7674 = vmatprep.mubr.bf16.mxu0 0
      %7675 = vmatmul.mubr.bf16.gmra.mxu0 %v7589
      %v7676 = vpop.f32.mrf.mxu0
      %v7677 = vadd.f32 0.0, %v7676
      %v7678 = vpop.f32.mrf.mxu0
      %v7679 = vpop.f32.mrf.mxu0
      %v7680 = vadd.f32 0.0, %v7679
      %v7681 = vpop.f32.mrf.mxu0
      %7682 = vmatprep.mubr.bf16.mxu0 0
      %7683 = vmatmul.mubr.bf16.gmra.mxu0 %v7591
      %v7684 = vpop.f32.mrf.mxu0
      %v7685 = vadd.f32 0.0, %v7684
      %v7686 = vpop.f32.mrf.mxu0
      %v7687 = vpop.f32.mrf.mxu0
      %v7688 = vadd.f32 0.0, %v7687
      %v7689 = vpop.f32.mrf.mxu0
      %7690 = vmatprep.mubr.bf16.mxu0 0
      %7691 = vmatmul.mubr.bf16.gmra.mxu0 %v7593
      %v7692 = vpop.f32.mrf.mxu0
      %v7693 = vadd.f32 0.0, %v7692
      %v7694 = vpop.f32.mrf.mxu0
      %v7695 = vpop.f32.mrf.mxu0
      %v7696 = vadd.f32 0.0, %v7695
      %v7697 = vpop.f32.mrf.mxu0
      %7698 = vmatprep.mubr.bf16.mxu0 0
      %7699 = vmatmul.mubr.bf16.gmra.mxu0 %v7595
      %v7700 = vpop.f32.mrf.mxu0
      %v7701 = vadd.f32 0.0, %v7700
      %v7702 = vpop.f32.mrf.mxu0
      %v7703 = vpop.f32.mrf.mxu0
      %v7704 = vadd.f32 0.0, %v7703
      %v7705 = vpop.f32.mrf.mxu0
      %7706 = vmatprep.mubr.bf16.mxu0 0
      %7707 = vmatmul.mubr.bf16.gmra.mxu0 %v7597
      %v7708 = vpop.f32.mrf.mxu0
      %v7709 = vadd.f32 0.0, %v7708
      %v7710 = vpop.f32.mrf.mxu0
      %v7711 = vpop.f32.mrf.mxu0
      %v7712 = vadd.f32 0.0, %v7711
      %v7713 = vpop.f32.mrf.mxu0
      %7714 = vmatprep.mubr.bf16.mxu0 0
      %7715 = vmatmul.mubr.bf16.gmra.mxu0 %v7599
      %v7716 = vpop.f32.mrf.mxu0
      %v7717 = vadd.f32 0.0, %v7716
      %v7718 = vpop.f32.mrf.mxu0
      %v7719 = vpop.f32.mrf.mxu0
      %v7720 = vadd.f32 0.0, %v7719
      %v7721 = vpop.f32.mrf.mxu0
      %7722 = vmatprep.mubr.bf16.mxu0 0
      %7723 = vmatmul.mubr.bf16.gmra.mxu0 %v7601
      %v7724 = vpop.f32.mrf.mxu0
      %v7725 = vadd.f32 0.0, %v7724
      %v7726 = vpop.f32.mrf.mxu0
      %v7727 = vpop.f32.mrf.mxu0
      %v7728 = vadd.f32 0.0, %v7727
      %v7729 = vpop.f32.mrf.mxu0
      %7730 = vmatprep.mubr.bf16.mxu0 0
      %7731 = vmatmul.mubr.bf16.gmra.mxu0 %v7603
      %v7732 = vpop.f32.mrf.mxu0
      %v7733 = vadd.f32 0.0, %v7732
      %v7734 = vpop.f32.mrf.mxu0
      %v7735 = vpop.f32.mrf.mxu0
      %v7736 = vadd.f32 0.0, %v7735
      %v7737 = vpop.f32.mrf.mxu0
      %7738 = vmatprep.mubr.bf16.mxu0 0
      %7739 = vmatmul.mubr.bf16.gmra.mxu0 %v7605
      %v7740 = vpop.f32.mrf.mxu0
      %v7741 = vadd.f32 0.0, %v7740
      %v7742 = vpop.f32.mrf.mxu0
      %v7743 = vpop.f32.mrf.mxu0
      %v7744 = vadd.f32 0.0, %v7743
      %v7745 = vpop.f32.mrf.mxu0
      %7746 = vmatprep.mubr.bf16.mxu0 0
      %7747 = vmatmul.mubr.bf16.gmra.mxu0 %v7607
      %v7748 = vpop.f32.mrf.mxu0
      %v7749 = vadd.f32 0.0, %v7748
      %v7750 = vpop.f32.mrf.mxu0
      %v7751 = vpop.f32.mrf.mxu0
      %v7752 = vadd.f32 0.0, %v7751
      %v7753 = vpop.f32.mrf.mxu0
      %7754 = vmatprep.mubr.bf16.mxu0 0
      %7755 = vmatmul.mubr.bf16.gmra.mxu0 %v7609
      %v7756 = vpop.f32.mrf.mxu0
      %v7757 = vadd.f32 0.0, %v7756
      %v7758 = vpop.f32.mrf.mxu0
      %v7759 = vpop.f32.mrf.mxu0
      %v7760 = vadd.f32 0.0, %v7759
      %v7761 = vpop.f32.mrf.mxu0
      %7762 = vmatprep.mubr.bf16.mxu0 0
      %7763 = vmatmul.mubr.bf16.gmra.mxu0 %v7611
      %v7764 = vpop.f32.mrf.mxu0
      %v7765 = vadd.f32 0.0, %v7764
      %v7766 = vpop.f32.mrf.mxu0
      %v7767 = vpop.f32.mrf.mxu0
      %v7768 = vadd.f32 0.0, %v7767
      %v7769 = vpop.f32.mrf.mxu0
      %7770 = vmatprep.mubr.bf16.mxu0 0
      %7771 = vmatmul.mubr.bf16.gmra.mxu0 %v7613
      %v7772 = vpop.f32.mrf.mxu0
      %v7773 = vadd.f32 0.0, %v7772
      %v7774 = vpop.f32.mrf.mxu0
      %v7775 = vpop.f32.mrf.mxu0
      %v7776 = vadd.f32 0.0, %v7775
      %v7777 = vpop.f32.mrf.mxu0
      %7778 = vdwg.mxu0
      %v7781 = vunpack.c.l.b16 %v6085
      %v7782 = vunpack.c.l.b16 %v6086
      %v7783 = vpack.c.b16 %v7782, %v7781
      %v7784 = vsel %vm3030, %v6054, 0
      %v7786 = vsel %vm3030, %v6056, 0
      %v7788 = vsel %vm3030, %v6058, 0
      %v7790 = vsel %vm3030, %v6060, 0
      %v7792 = vsel %vm3030, %v6062, 0
      %v7794 = vsel %vm3030, %v6064, 0
      %v7796 = vsel %vm3030, %v6066, 0
      %v7798 = vsel %vm3030, %v6068, 0
      %v7800 = vsel %vm3030, %v6070, 0
      %v7802 = vsel %vm3030, %v6072, 0
      %v7804 = vsel %vm3030, %v6074, 0
      %v7806 = vsel %vm3030, %v6076, 0
      %v7808 = vsel %vm3030, %v6078, 0
      %v7810 = vsel %vm3030, %v6080, 0
      %v7812 = vsel %vm3030, %v6082, 0
      %v7814 = vsel %vm3030, %v6084, 0
      %v7817 = vsel %vm3063, %v7783, 0
      %7819 = vmatprep.subr.bf16.mxu0 0
      %7820 = vmatpush1.bf16.msra.mxu0 0
      %7821 = vmatprep.subr.bf16.mxu0 0
      %7822 = vmatpush1.bf16.msra.mxu0 0
      %7823 = vmatprep.subr.bf16.mxu0 0
      %7824 = vmatpush1.bf16.msra.mxu0 0
      %7825 = vmatprep.subr.bf16.mxu0 0
      %7826 = vmatpush1.bf16.msra.mxu0 0
      %7827 = vmatprep.subr.bf16.mxu0 0
      %7828 = vmatpush1.bf16.msra.mxu0 0
      %7829 = vmatprep.subr.bf16.mxu0 0
      %7830 = vmatpush1.bf16.msra.mxu0 0
      %7831 = vmatprep.subr.bf16.mxu0 0
      %7832 = vmatpush1.bf16.msra.mxu0 0
      %7833 = vmatprep.subr.bf16.mxu0 0
      %7834 = vmatpush1.bf16.msra.mxu0 %v7817
      %7835 = vmatprep.subr.bf16.mxu0 0
      %7836 = vmatpush2.bf16.msra.mxu0 0
      %7837 = vmatprep.subr.bf16.mxu0 0
      %7838 = vmatpush2.bf16.msra.mxu0 0
      %7839 = vmatprep.subr.bf16.mxu0 0
      %7840 = vmatpush2.bf16.msra.mxu0 0
      %7841 = vmatprep.subr.bf16.mxu0 0
      %7842 = vmatpush2.bf16.msra.mxu0 0
      %7843 = vmatprep.subr.bf16.mxu0 0
      %7844 = vmatpush2.bf16.msra.mxu0 0
      %7845 = vmatprep.subr.bf16.mxu0 0
      %7846 = vmatpush2.bf16.msra.mxu0 0
      %7847 = vmatprep.subr.bf16.mxu0 0
      %7848 = vmatpush2.bf16.msra.mxu0 0
      %7849 = vmatprep.subr.bf16.mxu0 0
      %7850 = vmatpush2.bf16.msra.mxu0 0
      %7851 = vmatprep.mubr.bf16.mxu0 0
      %7852 = vmatmul.mubr.bf16.gmra.mxu0 %v7784
      %v7853 = vpop.f32.mrf.mxu0
      %v7854 = vadd.f32 %v7653, %v7853
      %v7855 = vpop.f32.mrf.mxu0
      %v7856 = vpop.f32.mrf.mxu0
      %v7857 = vadd.f32 %v7656, %v7856
      %v7858 = vpop.f32.mrf.mxu0
      %7859 = vmatprep.mubr.bf16.mxu0 0
      %7860 = vmatmul.mubr.bf16.gmra.mxu0 %v7786
      %v7861 = vpop.f32.mrf.mxu0
      %v7862 = vadd.f32 %v7661, %v7861
      %v7863 = vpop.f32.mrf.mxu0
      %v7864 = vpop.f32.mrf.mxu0
      %v7865 = vadd.f32 %v7664, %v7864
      %v7866 = vpop.f32.mrf.mxu0
      %7867 = vmatprep.mubr.bf16.mxu0 0
      %7868 = vmatmul.mubr.bf16.gmra.mxu0 %v7788
      %v7869 = vpop.f32.mrf.mxu0
      %v7870 = vadd.f32 %v7669, %v7869
      %v7871 = vpop.f32.mrf.mxu0
      %v7872 = vpop.f32.mrf.mxu0
      %v7873 = vadd.f32 %v7672, %v7872
      %v7874 = vpop.f32.mrf.mxu0
      %7875 = vmatprep.mubr.bf16.mxu0 0
      %7876 = vmatmul.mubr.bf16.gmra.mxu0 %v7790
      %v7877 = vpop.f32.mrf.mxu0
      %v7878 = vadd.f32 %v7677, %v7877
      %v7879 = vpop.f32.mrf.mxu0
      %v7880 = vpop.f32.mrf.mxu0
      %v7881 = vadd.f32 %v7680, %v7880
      %v7882 = vpop.f32.mrf.mxu0
      %7883 = vmatprep.mubr.bf16.mxu0 0
      %7884 = vmatmul.mubr.bf16.gmra.mxu0 %v7792
      %v7885 = vpop.f32.mrf.mxu0
      %v7886 = vadd.f32 %v7685, %v7885
      %v7887 = vpop.f32.mrf.mxu0
      %v7888 = vpop.f32.mrf.mxu0
      %v7889 = vadd.f32 %v7688, %v7888
      %v7890 = vpop.f32.mrf.mxu0
      %7891 = vmatprep.mubr.bf16.mxu0 0
      %7892 = vmatmul.mubr.bf16.gmra.mxu0 %v7794
      %v7893 = vpop.f32.mrf.mxu0
      %v7894 = vadd.f32 %v7693, %v7893
      %v7895 = vpop.f32.mrf.mxu0
      %v7896 = vpop.f32.mrf.mxu0
      %v7897 = vadd.f32 %v7696, %v7896
      %v7898 = vpop.f32.mrf.mxu0
      %7899 = vmatprep.mubr.bf16.mxu0 0
      %7900 = vmatmul.mubr.bf16.gmra.mxu0 %v7796
      %v7901 = vpop.f32.mrf.mxu0
      %v7902 = vadd.f32 %v7701, %v7901
      %v7903 = vpop.f32.mrf.mxu0
      %v7904 = vpop.f32.mrf.mxu0
      %v7905 = vadd.f32 %v7704, %v7904
      %v7906 = vpop.f32.mrf.mxu0
      %7907 = vmatprep.mubr.bf16.mxu0 0
      %7908 = vmatmul.mubr.bf16.gmra.mxu0 %v7798
      %v7909 = vpop.f32.mrf.mxu0
      %v7910 = vadd.f32 %v7709, %v7909
      %v7911 = vpop.f32.mrf.mxu0
      %v7912 = vpop.f32.mrf.mxu0
      %v7913 = vadd.f32 %v7712, %v7912
      %v7914 = vpop.f32.mrf.mxu0
      %7915 = vmatprep.mubr.bf16.mxu0 0
      %7916 = vmatmul.mubr.bf16.gmra.mxu0 %v7800
      %v7917 = vpop.f32.mrf.mxu0
      %v7918 = vadd.f32 %v7717, %v7917
      %v7919 = vpop.f32.mrf.mxu0
      %v7920 = vpop.f32.mrf.mxu0
      %v7921 = vadd.f32 %v7720, %v7920
      %v7922 = vpop.f32.mrf.mxu0
      %7923 = vmatprep.mubr.bf16.mxu0 0
      %7924 = vmatmul.mubr.bf16.gmra.mxu0 %v7802
      %v7925 = vpop.f32.mrf.mxu0
      %v7926 = vadd.f32 %v7725, %v7925
      %v7927 = vpop.f32.mrf.mxu0
      %v7928 = vpop.f32.mrf.mxu0
      %v7929 = vadd.f32 %v7728, %v7928
      %v7930 = vpop.f32.mrf.mxu0
      %7931 = vmatprep.mubr.bf16.mxu0 0
      %7932 = vmatmul.mubr.bf16.gmra.mxu0 %v7804
      %v7933 = vpop.f32.mrf.mxu0
      %v7934 = vadd.f32 %v7733, %v7933
      %v7935 = vpop.f32.mrf.mxu0
      %v7936 = vpop.f32.mrf.mxu0
      %v7937 = vadd.f32 %v7736, %v7936
      %v7938 = vpop.f32.mrf.mxu0
      %7939 = vmatprep.mubr.bf16.mxu0 0
      %7940 = vmatmul.mubr.bf16.gmra.mxu0 %v7806
      %v7941 = vpop.f32.mrf.mxu0
      %v7942 = vadd.f32 %v7741, %v7941
      %v7943 = vpop.f32.mrf.mxu0
      %v7944 = vpop.f32.mrf.mxu0
      %v7945 = vadd.f32 %v7744, %v7944
      %v7946 = vpop.f32.mrf.mxu0
      %7947 = vmatprep.mubr.bf16.mxu0 0
      %7948 = vmatmul.mubr.bf16.gmra.mxu0 %v7808
      %v7949 = vpop.f32.mrf.mxu0
      %v7950 = vadd.f32 %v7749, %v7949
      %v7951 = vpop.f32.mrf.mxu0
      %v7952 = vpop.f32.mrf.mxu0
      %v7953 = vadd.f32 %v7752, %v7952
      %v7954 = vpop.f32.mrf.mxu0
      %7955 = vmatprep.mubr.bf16.mxu0 0
      %7956 = vmatmul.mubr.bf16.gmra.mxu0 %v7810
      %v7957 = vpop.f32.mrf.mxu0
      %v7958 = vadd.f32 %v7757, %v7957
      %v7959 = vpop.f32.mrf.mxu0
      %v7960 = vpop.f32.mrf.mxu0
      %v7961 = vadd.f32 %v7760, %v7960
      %v7962 = vpop.f32.mrf.mxu0
      %7963 = vmatprep.mubr.bf16.mxu0 0
      %7964 = vmatmul.mubr.bf16.gmra.mxu0 %v7812
      %v7965 = vpop.f32.mrf.mxu0
      %v7966 = vadd.f32 %v7765, %v7965
      %v7967 = vpop.f32.mrf.mxu0
      %v7968 = vpop.f32.mrf.mxu0
      %v7969 = vadd.f32 %v7768, %v7968
      %v7970 = vpop.f32.mrf.mxu0
      %7971 = vmatprep.mubr.bf16.mxu0 0
      %7972 = vmatmul.mubr.bf16.gmra.mxu0 %v7814
      %v7973 = vpop.f32.mrf.mxu0
      %v7974 = vadd.f32 %v7773, %v7973
      %v7975 = vpop.f32.mrf.mxu0
      %v7976 = vpop.f32.mrf.mxu0
      %v7977 = vadd.f32 %v7776, %v7976
      %v7978 = vpop.f32.mrf.mxu0
      %7979 = vdwg.mxu0
      %v7980 = vld [vmem:[#allocation2] sm:$0xe]
      %v7981 = vld [vmem:[#allocation2 + $0xc] sm:$0xe]
      %v7982 = vld [vmem:[#allocation2 + $0x18] sm:$0xe]
      %v7983 = vld [vmem:[#allocation2 + $0x24] sm:$0xe]
      %v7984 = vld [vmem:[#allocation2 + $0x30] sm:$0xe]
      %v7985 = vld [vmem:[#allocation2 + $0x3c] sm:$0xe]
      %v7986 = vld [vmem:[#allocation2 + $0x48] sm:$0xe]
      %v7987 = vld [vmem:[#allocation2 + $0x54] sm:$0xe]
      %v7988 = vld [vmem:[#allocation2 + $0x60] sm:$0xe]
      %v7989 = vld [vmem:[#allocation2 + $0x6c] sm:$0xe]
      %v7990 = vld [vmem:[#allocation2 + $0x78] sm:$0xe]
      %v7991 = vld [vmem:[#allocation2 + $0x84] sm:$0xe]
      %v7992 = vld [vmem:[#allocation2 + $0x90] sm:$0xe]
      %v7993 = vld [vmem:[#allocation2 + $0x9c] sm:$0xe]
      %v7994 = vld [vmem:[#allocation2 + $0xa8] sm:$0xe]
      %v7995 = vld [vmem:[#allocation2 + $0xb4] sm:$0xe]
      %v8028 = vrot.slane %v7980, 5
      %v8029 = vrot.slane %v8028, 4
      %v8030 = vrot.slane %v5606, 5
      %v8031 = vsel %vm3479, %v8029, %v8030
      %v8032 = vrot.slane %v8030, 4
      %v8033 = vrot.slane %v6087, 5
      %v8034 = vsel %vm3479, %v8032, %v8033
      %v8035 = vrot.slane %v7981, 5
      %v8036 = vrot.slane %v8035, 4
      %v8037 = vrot.slane %v5608, 5
      %v8038 = vsel %vm3479, %v8036, %v8037
      %v8039 = vrot.slane %v8037, 4
      %v8040 = vrot.slane %v6088, 5
      %v8041 = vsel %vm3479, %v8039, %v8040
      %v8042 = vrot.slane %v7982, 5
      %v8043 = vrot.slane %v8042, 4
      %v8044 = vrot.slane %v5610, 5
      %v8045 = vsel %vm3479, %v8043, %v8044
      %v8046 = vrot.slane %v8044, 4
      %v8047 = vrot.slane %v6089, 5
      %v8048 = vsel %vm3479, %v8046, %v8047
      %v8049 = vrot.slane %v7983, 5
      %v8050 = vrot.slane %v8049, 4
      %v8051 = vrot.slane %v5612, 5
      %v8052 = vsel %vm3479, %v8050, %v8051
      %v8053 = vrot.slane %v8051, 4
      %v8054 = vrot.slane %v6090, 5
      %v8055 = vsel %vm3479, %v8053, %v8054
      %v8056 = vrot.slane %v7984, 5
      %v8057 = vrot.slane %v8056, 4
      %v8058 = vrot.slane %v5614, 5
      %v8059 = vsel %vm3479, %v8057, %v8058
      %v8060 = vrot.slane %v8058, 4
      %v8061 = vrot.slane %v6091, 5
      %v8062 = vsel %vm3479, %v8060, %v8061
      %v8063 = vrot.slane %v7985, 5
      %v8064 = vrot.slane %v8063, 4
      %v8065 = vrot.slane %v5616, 5
      %v8066 = vsel %vm3479, %v8064, %v8065
      %v8067 = vrot.slane %v8065, 4
      %v8068 = vrot.slane %v6092, 5
      %v8069 = vsel %vm3479, %v8067, %v8068
      %v8070 = vrot.slane %v7986, 5
      %v8071 = vrot.slane %v8070, 4
      %v8072 = vrot.slane %v5618, 5
      %v8073 = vsel %vm3479, %v8071, %v8072
      %v8074 = vrot.slane %v8072, 4
      %v8075 = vrot.slane %v6093, 5
      %v8076 = vsel %vm3479, %v8074, %v8075
      %v8077 = vrot.slane %v7987, 5
      %v8078 = vrot.slane %v8077, 4
      %v8079 = vrot.slane %v5620, 5
      %v8080 = vsel %vm3479, %v8078, %v8079
      %v8081 = vrot.slane %v8079, 4
      %v8082 = vrot.slane %v6094, 5
      %v8083 = vsel %vm3479, %v8081, %v8082
      %v8084 = vrot.slane %v7988, 5
      %v8085 = vrot.slane %v8084, 4
      %v8086 = vrot.slane %v5622, 5
      %v8087 = vsel %vm3479, %v8085, %v8086
      %v8088 = vrot.slane %v8086, 4
      %v8089 = vrot.slane %v6095, 5
      %v8090 = vsel %vm3479, %v8088, %v8089
      %v8091 = vrot.slane %v7989, 5
      %v8092 = vrot.slane %v8091, 4
      %v8093 = vrot.slane %v5624, 5
      %v8094 = vsel %vm3479, %v8092, %v8093
      %v8095 = vrot.slane %v8093, 4
      %v8096 = vrot.slane %v6096, 5
      %v8097 = vsel %vm3479, %v8095, %v8096
      %v8098 = vrot.slane %v7990, 5
      %v8099 = vrot.slane %v8098, 4
      %v8100 = vrot.slane %v5626, 5
      %v8101 = vsel %vm3479, %v8099, %v8100
      %v8102 = vrot.slane %v8100, 4
      %v8103 = vrot.slane %v6097, 5
      %v8104 = vsel %vm3479, %v8102, %v8103
      %v8105 = vrot.slane %v7991, 5
      %v8106 = vrot.slane %v8105, 4
      %v8107 = vrot.slane %v5628, 5
      %v8108 = vsel %vm3479, %v8106, %v8107
      %v8109 = vrot.slane %v8107, 4
      %v8110 = vrot.slane %v6098, 5
      %v8111 = vsel %vm3479, %v8109, %v8110
      %v8112 = vrot.slane %v7992, 5
      %v8113 = vrot.slane %v8112, 4
      %v8114 = vrot.slane %v5630, 5
      %v8115 = vsel %vm3479, %v8113, %v8114
      %v8116 = vrot.slane %v8114, 4
      %v8117 = vrot.slane %v6099, 5
      %v8118 = vsel %vm3479, %v8116, %v8117
      %v8119 = vrot.slane %v7993, 5
      %v8120 = vrot.slane %v8119, 4
      %v8121 = vrot.slane %v5632, 5
      %v8122 = vsel %vm3479, %v8120, %v8121
      %v8123 = vrot.slane %v8121, 4
      %v8124 = vrot.slane %v6100, 5
      %v8125 = vsel %vm3479, %v8123, %v8124
      %v8126 = vrot.slane %v7994, 5
      %v8127 = vrot.slane %v8126, 4
      %v8128 = vrot.slane %v5634, 5
      %v8129 = vsel %vm3479, %v8127, %v8128
      %v8130 = vrot.slane %v8128, 4
      %v8131 = vrot.slane %v6101, 5
      %v8132 = vsel %vm3479, %v8130, %v8131
      %v8133 = vrot.slane %v7995, 5
      %v8134 = vrot.slane %v8133, 4
      %v8135 = vrot.slane %v5636, 5
      %v8136 = vsel %vm3479, %v8134, %v8135
      %v8137 = vrot.slane %v8135, 4
      %v8138 = vrot.slane %v6102, 5
      %v8139 = vsel %vm3479, %v8137, %v8138
      %v8140 = vld [vmem:[%s623] sm:$0xe]
      %v8141 = vld [vmem:[%s623 + $0xc] sm:$0xe]
      %v8142 = vld [vmem:[%s623 + $0x18] sm:$0xe]
      %v8143 = vld [vmem:[%s623 + $0x24] sm:$0xe]
      %v8144 = vld [vmem:[%s623 + $0x30] sm:$0xe]
      %v8145 = vld [vmem:[%s623 + $0x3c] sm:$0xe]
      %v8146 = vld [vmem:[%s623 + $0x48] sm:$0xe]
      %v8147 = vld [vmem:[%s623 + $0x54] sm:$0xe]
      %v8148 = vld [vmem:[%s623 + $0x60] sm:$0xe]
      %v8149 = vld [vmem:[%s623 + $0x6c] sm:$0xe]
      %v8150 = vld [vmem:[%s623 + $0x78] sm:$0xe]
      %v8151 = vld [vmem:[%s623 + $0x84] sm:$0xe]
      %v8152 = vld [vmem:[%s623 + $0x90] sm:$0xe]
      %v8153 = vld [vmem:[%s623 + $0x9c] sm:$0xe]
      %v8154 = vld [vmem:[%s623 + $0xa8] sm:$0xe]
      %v8155 = vld [vmem:[%s623 + $0xb4] sm:$0xe]
      %v8188 = vrot.slane %v8140, 5
      %v8189 = vrot.slane %v8188, 4
      %v8190 = vrot.slane %v5638, 5
      %v8191 = vsel %vm3479, %v8189, %v8190
      %v8192 = vrot.slane %v8190, 4
      %v8193 = vrot.slane %v6487, 5
      %v8194 = vsel %vm3479, %v8192, %v8193
      %v8195 = vrot.slane %v8141, 5
      %v8196 = vrot.slane %v8195, 4
      %v8197 = vrot.slane %v5640, 5
      %v8198 = vsel %vm3479, %v8196, %v8197
      %v8199 = vrot.slane %v8197, 4
      %v8200 = vrot.slane %v6488, 5
      %v8201 = vsel %vm3479, %v8199, %v8200
      %v8202 = vrot.slane %v8142, 5
      %v8203 = vrot.slane %v8202, 4
      %v8204 = vrot.slane %v5642, 5
      %v8205 = vsel %vm3479, %v8203, %v8204
      %v8206 = vrot.slane %v8204, 4
      %v8207 = vrot.slane %v6489, 5
      %v8208 = vsel %vm3479, %v8206, %v8207
      %v8209 = vrot.slane %v8143, 5
      %v8210 = vrot.slane %v8209, 4
      %v8211 = vrot.slane %v5644, 5
      %v8212 = vsel %vm3479, %v8210, %v8211
      %v8213 = vrot.slane %v8211, 4
      %v8214 = vrot.slane %v6490, 5
      %v8215 = vsel %vm3479, %v8213, %v8214
      %v8216 = vrot.slane %v8144, 5
      %v8217 = vrot.slane %v8216, 4
      %v8218 = vrot.slane %v5646, 5
      %v8219 = vsel %vm3479, %v8217, %v8218
      %v8220 = vrot.slane %v8218, 4
      %v8221 = vrot.slane %v6491, 5
      %v8222 = vsel %vm3479, %v8220, %v8221
      %v8223 = vrot.slane %v8145, 5
      %v8224 = vrot.slane %v8223, 4
      %v8225 = vrot.slane %v5648, 5
      %v8226 = vsel %vm3479, %v8224, %v8225
      %v8227 = vrot.slane %v8225, 4
      %v8228 = vrot.slane %v6492, 5
      %v8229 = vsel %vm3479, %v8227, %v8228
      %v8230 = vrot.slane %v8146, 5
      %v8231 = vrot.slane %v8230, 4
      %v8232 = vrot.slane %v5650, 5
      %v8233 = vsel %vm3479, %v8231, %v8232
      %v8234 = vrot.slane %v8232, 4
      %v8235 = vrot.slane %v6493, 5
      %v8236 = vsel %vm3479, %v8234, %v8235
      %v8237 = vrot.slane %v8147, 5
      %v8238 = vrot.slane %v8237, 4
      %v8239 = vrot.slane %v5652, 5
      %v8240 = vsel %vm3479, %v8238, %v8239
      %v8241 = vrot.slane %v8239, 4
      %v8242 = vrot.slane %v6494, 5
      %v8243 = vsel %vm3479, %v8241, %v8242
      %v8244 = vrot.slane %v8148, 5
      %v8245 = vrot.slane %v8244, 4
      %v8246 = vrot.slane %v5654, 5
      %v8247 = vsel %vm3479, %v8245, %v8246
      %v8248 = vrot.slane %v8246, 4
      %v8249 = vrot.slane %v6495, 5
      %v8250 = vsel %vm3479, %v8248, %v8249
      %v8251 = vrot.slane %v8149, 5
      %v8252 = vrot.slane %v8251, 4
      %v8253 = vrot.slane %v5656, 5
      %v8254 = vsel %vm3479, %v8252, %v8253
      %v8255 = vrot.slane %v8253, 4
      %v8256 = vrot.slane %v6496, 5
      %v8257 = vsel %vm3479, %v8255, %v8256
      %v8258 = vrot.slane %v8150, 5
      %v8259 = vrot.slane %v8258, 4
      %v8260 = vrot.slane %v5658, 5
      %v8261 = vsel %vm3479, %v8259, %v8260
      %v8262 = vrot.slane %v8260, 4
      %v8263 = vrot.slane %v6497, 5
      %v8264 = vsel %vm3479, %v8262, %v8263
      %v8265 = vrot.slane %v8151, 5
      %v8266 = vrot.slane %v8265, 4
      %v8267 = vrot.slane %v5660, 5
      %v8268 = vsel %vm3479, %v8266, %v8267
      %v8269 = vrot.slane %v8267, 4
      %v8270 = vrot.slane %v6498, 5
      %v8271 = vsel %vm3479, %v8269, %v8270
      %v8272 = vrot.slane %v8152, 5
      %v8273 = vrot.slane %v8272, 4
      %v8274 = vrot.slane %v5662, 5
      %v8275 = vsel %vm3479, %v8273, %v8274
      %v8276 = vrot.slane %v8274, 4
      %v8277 = vrot.slane %v6499, 5
      %v8278 = vsel %vm3479, %v8276, %v8277
      %v8279 = vrot.slane %v8153, 5
      %v8280 = vrot.slane %v8279, 4
      %v8281 = vrot.slane %v5664, 5
      %v8282 = vsel %vm3479, %v8280, %v8281
      %v8283 = vrot.slane %v8281, 4
      %v8284 = vrot.slane %v6500, 5
      %v8285 = vsel %vm3479, %v8283, %v8284
      %v8286 = vrot.slane %v8154, 5
      %v8287 = vrot.slane %v8286, 4
      %v8288 = vrot.slane %v5666, 5
      %v8289 = vsel %vm3479, %v8287, %v8288
      %v8290 = vrot.slane %v8288, 4
      %v8291 = vrot.slane %v6501, 5
      %v8292 = vsel %vm3479, %v8290, %v8291
      %v8293 = vrot.slane %v8155, 5
      %v8294 = vrot.slane %v8293, 4
      %v8295 = vrot.slane %v5668, 5
      %v8296 = vsel %vm3479, %v8294, %v8295
      %v8297 = vrot.slane %v8295, 4
      %v8298 = vrot.slane %v6502, 5
      %v8299 = vsel %vm3479, %v8297, %v8298
      %v8300 = vld [vmem:[%s1110] sm:$0xe]
      %v8301 = vld [vmem:[%s1110 + $0xc] sm:$0xe]
      %v8302 = vld [vmem:[%s1110 + $0x18] sm:$0xe]
      %v8303 = vld [vmem:[%s1110 + $0x24] sm:$0xe]
      %v8304 = vld [vmem:[%s1110 + $0x30] sm:$0xe]
      %v8305 = vld [vmem:[%s1110 + $0x3c] sm:$0xe]
      %v8306 = vld [vmem:[%s1110 + $0x48] sm:$0xe]
      %v8307 = vld [vmem:[%s1110 + $0x54] sm:$0xe]
      %v8308 = vld [vmem:[%s1110 + $0x60] sm:$0xe]
      %v8309 = vld [vmem:[%s1110 + $0x6c] sm:$0xe]
      %v8310 = vld [vmem:[%s1110 + $0x78] sm:$0xe]
      %v8311 = vld [vmem:[%s1110 + $0x84] sm:$0xe]
      %v8312 = vld [vmem:[%s1110 + $0x90] sm:$0xe]
      %v8313 = vld [vmem:[%s1110 + $0x9c] sm:$0xe]
      %v8314 = vld [vmem:[%s1110 + $0xa8] sm:$0xe]
      %v8315 = vld [vmem:[%s1110 + $0xb4] sm:$0xe]
      %v8348 = vrot.slane %v8300, 5
      %v8349 = vrot.slane %v8348, 4
      %v8350 = vrot.slane %v5670, 5
      %v8351 = vsel %vm3479, %v8349, %v8350
      %v8352 = vrot.slane %v8350, 4
      %v8353 = vrot.slane %v6887, 5
      %v8354 = vsel %vm3479, %v8352, %v8353
      %v8355 = vrot.slane %v8301, 5
      %v8356 = vrot.slane %v8355, 4
      %v8357 = vrot.slane %v5672, 5
      %v8358 = vsel %vm3479, %v8356, %v8357
      %v8359 = vrot.slane %v8357, 4
      %v8360 = vrot.slane %v6888, 5
      %v8361 = vsel %vm3479, %v8359, %v8360
      %v8362 = vrot.slane %v8302, 5
      %v8363 = vrot.slane %v8362, 4
      %v8364 = vrot.slane %v5674, 5
      %v8365 = vsel %vm3479, %v8363, %v8364
      %v8366 = vrot.slane %v8364, 4
      %v8367 = vrot.slane %v6889, 5
      %v8368 = vsel %vm3479, %v8366, %v8367
      %v8369 = vrot.slane %v8303, 5
      %v8370 = vrot.slane %v8369, 4
      %v8371 = vrot.slane %v5676, 5
      %v8372 = vsel %vm3479, %v8370, %v8371
      %v8373 = vrot.slane %v8371, 4
      %v8374 = vrot.slane %v6890, 5
      %v8375 = vsel %vm3479, %v8373, %v8374
      %v8376 = vrot.slane %v8304, 5
      %v8377 = vrot.slane %v8376, 4
      %v8378 = vrot.slane %v5678, 5
      %v8379 = vsel %vm3479, %v8377, %v8378
      %v8380 = vrot.slane %v8378, 4
      %v8381 = vrot.slane %v6891, 5
      %v8382 = vsel %vm3479, %v8380, %v8381
      %v8383 = vrot.slane %v8305, 5
      %v8384 = vrot.slane %v8383, 4
      %v8385 = vrot.slane %v5680, 5
      %v8386 = vsel %vm3479, %v8384, %v8385
      %v8387 = vrot.slane %v8385, 4
      %v8388 = vrot.slane %v6892, 5
      %v8389 = vsel %vm3479, %v8387, %v8388
      %v8390 = vrot.slane %v8306, 5
      %v8391 = vrot.slane %v8390, 4
      %v8392 = vrot.slane %v5682, 5
      %v8393 = vsel %vm3479, %v8391, %v8392
      %v8394 = vrot.slane %v8392, 4
      %v8395 = vrot.slane %v6893, 5
      %v8396 = vsel %vm3479, %v8394, %v8395
      %v8397 = vrot.slane %v8307, 5
      %v8398 = vrot.slane %v8397, 4
      %v8399 = vrot.slane %v5684, 5
      %v8400 = vsel %vm3479, %v8398, %v8399
      %v8401 = vrot.slane %v8399, 4
      %v8402 = vrot.slane %v6894, 5
      %v8403 = vsel %vm3479, %v8401, %v8402
      %v8404 = vrot.slane %v8308, 5
      %v8405 = vrot.slane %v8404, 4
      %v8406 = vrot.slane %v5686, 5
      %v8407 = vsel %vm3479, %v8405, %v8406
      %v8408 = vrot.slane %v8406, 4
      %v8409 = vrot.slane %v6895, 5
      %v8410 = vsel %vm3479, %v8408, %v8409
      %v8411 = vrot.slane %v8309, 5
      %v8412 = vrot.slane %v8411, 4
      %v8413 = vrot.slane %v5688, 5
      %v8414 = vsel %vm3479, %v8412, %v8413
      %v8415 = vrot.slane %v8413, 4
      %v8416 = vrot.slane %v6896, 5
      %v8417 = vsel %vm3479, %v8415, %v8416
      %v8418 = vrot.slane %v8310, 5
      %v8419 = vrot.slane %v8418, 4
      %v8420 = vrot.slane %v5690, 5
      %v8421 = vsel %vm3479, %v8419, %v8420
      %v8422 = vrot.slane %v8420, 4
      %v8423 = vrot.slane %v6897, 5
      %v8424 = vsel %vm3479, %v8422, %v8423
      %v8425 = vrot.slane %v8311, 5
      %v8426 = vrot.slane %v8425, 4
      %v8427 = vrot.slane %v5692, 5
      %v8428 = vsel %vm3479, %v8426, %v8427
      %v8429 = vrot.slane %v8427, 4
      %v8430 = vrot.slane %v6898, 5
      %v8431 = vsel %vm3479, %v8429, %v8430
      %v8432 = vrot.slane %v8312, 5
      %v8433 = vrot.slane %v8432, 4
      %v8434 = vrot.slane %v5694, 5
      %v8435 = vsel %vm3479, %v8433, %v8434
      %v8436 = vrot.slane %v8434, 4
      %v8437 = vrot.slane %v6899, 5
      %v8438 = vsel %vm3479, %v8436, %v8437
      %v8439 = vrot.slane %v8313, 5
      %v8440 = vrot.slane %v8439, 4
      %v8441 = vrot.slane %v5696, 5
      %v8442 = vsel %vm3479, %v8440, %v8441
      %v8443 = vrot.slane %v8441, 4
      %v8444 = vrot.slane %v6900, 5
      %v8445 = vsel %vm3479, %v8443, %v8444
      %v8446 = vrot.slane %v8314, 5
      %v8447 = vrot.slane %v8446, 4
      %v8448 = vrot.slane %v5698, 5
      %v8449 = vsel %vm3479, %v8447, %v8448
      %v8450 = vrot.slane %v8448, 4
      %v8451 = vrot.slane %v6901, 5
      %v8452 = vsel %vm3479, %v8450, %v8451
      %v8453 = vrot.slane %v8315, 5
      %v8454 = vrot.slane %v8453, 4
      %v8455 = vrot.slane %v5700, 5
      %v8456 = vsel %vm3479, %v8454, %v8455
      %v8457 = vrot.slane %v8455, 4
      %v8458 = vrot.slane %v6902, 5
      %v8459 = vsel %vm3479, %v8457, %v8458
      %v8460 = vunpack.c.l.b16 %v8031
      %v8461 = vunpack.c.l.b16 %v8034
      %v8462 = vunpack.c.l.b16 %v8038
      %v8463 = vunpack.c.l.b16 %v8041
      %v8464 = vunpack.c.l.b16 %v8045
      %v8465 = vunpack.c.l.b16 %v8048
      %v8466 = vunpack.c.l.b16 %v8052
      %v8467 = vunpack.c.l.b16 %v8055
      %v8468 = vunpack.c.l.b16 %v8059
      %v8469 = vunpack.c.l.b16 %v8062
      %v8470 = vunpack.c.l.b16 %v8066
      %v8471 = vunpack.c.l.b16 %v8069
      %v8472 = vunpack.c.l.b16 %v8073
      %v8473 = vunpack.c.l.b16 %v8076
      %v8474 = vunpack.c.l.b16 %v8080
      %v8475 = vunpack.c.l.b16 %v8083
      %v8476 = vunpack.c.l.b16 %v8087
      %v8477 = vunpack.c.l.b16 %v8090
      %v8478 = vunpack.c.l.b16 %v8094
      %v8479 = vunpack.c.l.b16 %v8097
      %v8480 = vunpack.c.l.b16 %v8101
      %v8481 = vunpack.c.l.b16 %v8104
      %v8482 = vunpack.c.l.b16 %v8108
      %v8483 = vunpack.c.l.b16 %v8111
      %v8484 = vunpack.c.l.b16 %v8115
      %v8485 = vunpack.c.l.b16 %v8118
      %v8486 = vunpack.c.l.b16 %v8122
      %v8487 = vunpack.c.l.b16 %v8125
      %v8488 = vunpack.c.l.b16 %v8129
      %v8489 = vunpack.c.l.b16 %v8132
      %v8490 = vunpack.c.l.b16 %v8136
      %v8491 = vunpack.c.l.b16 %v8139
      %v8492 = vpack.c.b16 %v8461, %v8460
      %v8493 = vpack.c.b16 %v8463, %v8462
      %v8494 = vpack.c.b16 %v8465, %v8464
      %v8495 = vpack.c.b16 %v8467, %v8466
      %v8496 = vpack.c.b16 %v8469, %v8468
      %v8497 = vpack.c.b16 %v8471, %v8470
      %v8498 = vpack.c.b16 %v8473, %v8472
      %v8499 = vpack.c.b16 %v8475, %v8474
      %v8500 = vpack.c.b16 %v8477, %v8476
      %v8501 = vpack.c.b16 %v8479, %v8478
      %v8502 = vpack.c.b16 %v8481, %v8480
      %v8503 = vpack.c.b16 %v8483, %v8482
      %v8504 = vpack.c.b16 %v8485, %v8484
      %v8505 = vpack.c.b16 %v8487, %v8486
      %v8506 = vpack.c.b16 %v8489, %v8488
      %v8507 = vpack.c.b16 %v8491, %v8490
      %v8508 = vunpack.c.l.b16 %v8191
      %v8509 = vunpack.c.l.b16 %v8194
      %v8510 = vunpack.c.l.b16 %v8198
      %v8511 = vunpack.c.l.b16 %v8201
      %v8512 = vunpack.c.l.b16 %v8205
      %v8513 = vunpack.c.l.b16 %v8208
      %v8514 = vunpack.c.l.b16 %v8212
      %v8515 = vunpack.c.l.b16 %v8215
      %v8516 = vunpack.c.l.b16 %v8219
      %v8517 = vunpack.c.l.b16 %v8222
      %v8518 = vunpack.c.l.b16 %v8226
      %v8519 = vunpack.c.l.b16 %v8229
      %v8520 = vunpack.c.l.b16 %v8233
      %v8521 = vunpack.c.l.b16 %v8236
      %v8522 = vunpack.c.l.b16 %v8240
      %v8523 = vunpack.c.l.b16 %v8243
      %v8524 = vunpack.c.l.b16 %v8247
      %v8525 = vunpack.c.l.b16 %v8250
      %v8526 = vunpack.c.l.b16 %v8254
      %v8527 = vunpack.c.l.b16 %v8257
      %v8528 = vunpack.c.l.b16 %v8261
      %v8529 = vunpack.c.l.b16 %v8264
      %v8530 = vunpack.c.l.b16 %v8268
      %v8531 = vunpack.c.l.b16 %v8271
      %v8532 = vunpack.c.l.b16 %v8275
      %v8533 = vunpack.c.l.b16 %v8278
      %v8534 = vunpack.c.l.b16 %v8282
      %v8535 = vunpack.c.l.b16 %v8285
      %v8536 = vunpack.c.l.b16 %v8289
      %v8537 = vunpack.c.l.b16 %v8292
      %v8538 = vunpack.c.l.b16 %v8296
      %v8539 = vunpack.c.l.b16 %v8299
      %v8540 = vpack.c.b16 %v8509, %v8508
      %v8541 = vpack.c.b16 %v8511, %v8510
      %v8542 = vpack.c.b16 %v8513, %v8512
      %v8543 = vpack.c.b16 %v8515, %v8514
      %v8544 = vpack.c.b16 %v8517, %v8516
      %v8545 = vpack.c.b16 %v8519, %v8518
      %v8546 = vpack.c.b16 %v8521, %v8520
      %v8547 = vpack.c.b16 %v8523, %v8522
      %v8548 = vpack.c.b16 %v8525, %v8524
      %v8549 = vpack.c.b16 %v8527, %v8526
      %v8550 = vpack.c.b16 %v8529, %v8528
      %v8551 = vpack.c.b16 %v8531, %v8530
      %v8552 = vpack.c.b16 %v8533, %v8532
      %v8553 = vpack.c.b16 %v8535, %v8534
      %v8554 = vpack.c.b16 %v8537, %v8536
      %v8555 = vpack.c.b16 %v8539, %v8538
      %8556 = vrot.lane.b32.xlu0 %v8540, 4
      %v8557 = vpop.permute.xlu0 %8556
      %8558 = vrot.lane.b32.xlu0 %v8541, 4
      %v8559 = vpop.permute.xlu0 %8558
      %8560 = vrot.lane.b32.xlu0 %v8542, 4
      %v8561 = vpop.permute.xlu0 %8560
      %8562 = vrot.lane.b32.xlu0 %v8543, 4
      %v8563 = vpop.permute.xlu0 %8562
      %8564 = vrot.lane.b32.xlu0 %v8544, 4
      %v8565 = vpop.permute.xlu0 %8564
      %8566 = vrot.lane.b32.xlu0 %v8545, 4
      %v8567 = vpop.permute.xlu0 %8566
      %8568 = vrot.lane.b32.xlu0 %v8546, 4
      %v8569 = vpop.permute.xlu0 %8568
      %8570 = vrot.lane.b32.xlu0 %v8547, 4
      %v8571 = vpop.permute.xlu0 %8570
      %8572 = vrot.lane.b32.xlu0 %v8548, 4
      %v8573 = vpop.permute.xlu0 %8572
      %8574 = vrot.lane.b32.xlu0 %v8549, 4
      %v8575 = vpop.permute.xlu0 %8574
      %8576 = vrot.lane.b32.xlu0 %v8550, 4
      %v8577 = vpop.permute.xlu0 %8576
      %8578 = vrot.lane.b32.xlu0 %v8551, 4
      %v8579 = vpop.permute.xlu0 %8578
      %8580 = vrot.lane.b32.xlu0 %v8552, 4
      %v8581 = vpop.permute.xlu0 %8580
      %8582 = vrot.lane.b32.xlu0 %v8553, 4
      %v8583 = vpop.permute.xlu0 %8582
      %8584 = vrot.lane.b32.xlu0 %v8554, 4
      %v8585 = vpop.permute.xlu0 %8584
      %8586 = vrot.lane.b32.xlu0 %v8555, 4
      %v8587 = vpop.permute.xlu0 %8586
      %v8588 = vunpack.c.l.b16 %v8351
      %v8589 = vunpack.c.l.b16 %v8354
      %v8590 = vunpack.c.l.b16 %v8358
      %v8591 = vunpack.c.l.b16 %v8361
      %v8592 = vunpack.c.l.b16 %v8365
      %v8593 = vunpack.c.l.b16 %v8368
      %v8594 = vunpack.c.l.b16 %v8372
      %v8595 = vunpack.c.l.b16 %v8375
      %v8596 = vunpack.c.l.b16 %v8379
      %v8597 = vunpack.c.l.b16 %v8382
      %v8598 = vunpack.c.l.b16 %v8386
      %v8599 = vunpack.c.l.b16 %v8389
      %v8600 = vunpack.c.l.b16 %v8393
      %v8601 = vunpack.c.l.b16 %v8396
      %v8602 = vunpack.c.l.b16 %v8400
      %v8603 = vunpack.c.l.b16 %v8403
      %v8604 = vunpack.c.l.b16 %v8407
      %v8605 = vunpack.c.l.b16 %v8410
      %v8606 = vunpack.c.l.b16 %v8414
      %v8607 = vunpack.c.l.b16 %v8417
      %v8608 = vunpack.c.l.b16 %v8421
      %v8609 = vunpack.c.l.b16 %v8424
      %v8610 = vunpack.c.l.b16 %v8428
      %v8611 = vunpack.c.l.b16 %v8431
      %v8612 = vunpack.c.l.b16 %v8435
      %v8613 = vunpack.c.l.b16 %v8438
      %v8614 = vunpack.c.l.b16 %v8442
      %v8615 = vunpack.c.l.b16 %v8445
      %v8616 = vunpack.c.l.b16 %v8449
      %v8617 = vunpack.c.l.b16 %v8452
      %v8618 = vunpack.c.l.b16 %v8456
      %v8619 = vunpack.c.l.b16 %v8459
      %v8620 = vpack.c.b16 %v8589, %v8588
      %v8621 = vpack.c.b16 %v8591, %v8590
      %v8622 = vpack.c.b16 %v8593, %v8592
      %v8623 = vpack.c.b16 %v8595, %v8594
      %v8624 = vpack.c.b16 %v8597, %v8596
      %v8625 = vpack.c.b16 %v8599, %v8598
      %v8626 = vpack.c.b16 %v8601, %v8600
      %v8627 = vpack.c.b16 %v8603, %v8602
      %v8628 = vpack.c.b16 %v8605, %v8604
      %v8629 = vpack.c.b16 %v8607, %v8606
      %v8630 = vpack.c.b16 %v8609, %v8608
      %v8631 = vpack.c.b16 %v8611, %v8610
      %v8632 = vpack.c.b16 %v8613, %v8612
      %v8633 = vpack.c.b16 %v8615, %v8614
      %v8634 = vpack.c.b16 %v8617, %v8616
      %v8635 = vpack.c.b16 %v8619, %v8618
      %8636 = vrot.lane.b32.xlu0 %v8620, 8
      %v8637 = vpop.permute.xlu0 %8636
      %8638 = vrot.lane.b32.xlu0 %v8621, 8
      %v8639 = vpop.permute.xlu0 %8638
      %8640 = vrot.lane.b32.xlu0 %v8622, 8
      %v8641 = vpop.permute.xlu0 %8640
      %8642 = vrot.lane.b32.xlu0 %v8623, 8
      %v8643 = vpop.permute.xlu0 %8642
      %8644 = vrot.lane.b32.xlu0 %v8624, 8
      %v8645 = vpop.permute.xlu0 %8644
      %8646 = vrot.lane.b32.xlu0 %v8625, 8
      %v8647 = vpop.permute.xlu0 %8646
      %8648 = vrot.lane.b32.xlu0 %v8626, 8
      %v8649 = vpop.permute.xlu0 %8648
      %8650 = vrot.lane.b32.xlu0 %v8627, 8
      %v8651 = vpop.permute.xlu0 %8650
      %8652 = vrot.lane.b32.xlu0 %v8628, 8
      %v8653 = vpop.permute.xlu0 %8652
      %8654 = vrot.lane.b32.xlu0 %v8629, 8
      %v8655 = vpop.permute.xlu0 %8654
      %8656 = vrot.lane.b32.xlu0 %v8630, 8
      %v8657 = vpop.permute.xlu0 %8656
      %8658 = vrot.lane.b32.xlu0 %v8631, 8
      %v8659 = vpop.permute.xlu0 %8658
      %8660 = vrot.lane.b32.xlu0 %v8632, 8
      %v8661 = vpop.permute.xlu0 %8660
      %8662 = vrot.lane.b32.xlu0 %v8633, 8
      %v8663 = vpop.permute.xlu0 %8662
      %8664 = vrot.lane.b32.xlu0 %v8634, 8
      %v8665 = vpop.permute.xlu0 %8664
      %8666 = vrot.lane.b32.xlu0 %v8635, 8
      %v8667 = vpop.permute.xlu0 %8666
      %v8670 = vsel %vm1447, %v8492, %v8557
      %v8673 = vsel %vm1447, %v8493, %v8559
      %v8676 = vsel %vm1447, %v8494, %v8561
      %v8679 = vsel %vm1447, %v8495, %v8563
      %v8682 = vsel %vm1447, %v8496, %v8565
      %v8685 = vsel %vm1447, %v8497, %v8567
      %v8688 = vsel %vm1447, %v8498, %v8569
      %v8691 = vsel %vm1447, %v8499, %v8571
      %v8694 = vsel %vm1447, %v8500, %v8573
      %v8697 = vsel %vm1447, %v8501, %v8575
      %v8700 = vsel %vm1447, %v8502, %v8577
      %v8703 = vsel %vm1447, %v8503, %v8579
      %v8706 = vsel %vm1447, %v8504, %v8581
      %v8709 = vsel %vm1447, %v8505, %v8583
      %v8712 = vsel %vm1447, %v8506, %v8585
      %v8715 = vsel %vm1447, %v8507, %v8587
      %v8717 = vsel %vm1496, %v8670, %v8637
      %v8719 = vsel %vm1496, %v8673, %v8639
      %v8721 = vsel %vm1496, %v8676, %v8641
      %v8723 = vsel %vm1496, %v8679, %v8643
      %v8725 = vsel %vm1496, %v8682, %v8645
      %v8727 = vsel %vm1496, %v8685, %v8647
      %v8729 = vsel %vm1496, %v8688, %v8649
      %v8731 = vsel %vm1496, %v8691, %v8651
      %v8733 = vsel %vm1496, %v8694, %v8653
      %v8735 = vsel %vm1496, %v8697, %v8655
      %v8737 = vsel %vm1496, %v8700, %v8657
      %v8739 = vsel %vm1496, %v8703, %v8659
      %v8741 = vsel %vm1496, %v8706, %v8661
      %v8743 = vsel %vm1496, %v8709, %v8663
      %v8745 = vsel %vm1496, %v8712, %v8665
      %v8747 = vsel %vm1496, %v8715, %v8667
      %s8748 = scalar_lea.vmem %s2, 16
      %v8749 = vld [vmem:[%s8748] sm:$0xf]
      %v8750 = vld [vmem:[%s8748 + $0x4] sm:$0x3]
      %v8753 = vunpack.c.l.b16 %v8749
      %v8754 = vunpack.c.l.b16 %v8750
      %v8755 = vpack.c.b16 %v8754, %v8753
      %v8756 = vsel %vm3030, %v8717, 0
      %v8758 = vsel %vm3030, %v8719, 0
      %v8760 = vsel %vm3030, %v8721, 0
      %v8762 = vsel %vm3030, %v8723, 0
      %v8764 = vsel %vm3030, %v8725, 0
      %v8766 = vsel %vm3030, %v8727, 0
      %v8768 = vsel %vm3030, %v8729, 0
      %v8770 = vsel %vm3030, %v8731, 0
      %v8772 = vsel %vm3030, %v8733, 0
      %v8774 = vsel %vm3030, %v8735, 0
      %v8776 = vsel %vm3030, %v8737, 0
      %v8778 = vsel %vm3030, %v8739, 0
      %v8780 = vsel %vm3030, %v8741, 0
      %v8782 = vsel %vm3030, %v8743, 0
      %v8784 = vsel %vm3030, %v8745, 0
      %v8786 = vsel %vm3030, %v8747, 0
      %v8789 = vsel %vm3063, %v8755, 0
      %8791 = vmatprep.subr.bf16.mxu0 0
      %8792 = vmatpush1.bf16.msra.mxu0 0
      %8793 = vmatprep.subr.bf16.mxu0 0
      %8794 = vmatpush1.bf16.msra.mxu0 0
      %8795 = vmatprep.subr.bf16.mxu0 0
      %8796 = vmatpush1.bf16.msra.mxu0 0
      %8797 = vmatprep.subr.bf16.mxu0 0
      %8798 = vmatpush1.bf16.msra.mxu0 0
      %8799 = vmatprep.subr.bf16.mxu0 0
      %8800 = vmatpush1.bf16.msra.mxu0 0
      %8801 = vmatprep.subr.bf16.mxu0 0
      %8802 = vmatpush1.bf16.msra.mxu0 0
      %8803 = vmatprep.subr.bf16.mxu0 0
      %8804 = vmatpush1.bf16.msra.mxu0 0
      %8805 = vmatprep.subr.bf16.mxu0 0
      %8806 = vmatpush1.bf16.msra.mxu0 %v8789
      %8807 = vmatprep.subr.bf16.mxu0 0
      %8808 = vmatpush2.bf16.msra.mxu0 0
      %8809 = vmatprep.subr.bf16.mxu0 0
      %8810 = vmatpush2.bf16.msra.mxu0 0
      %8811 = vmatprep.subr.bf16.mxu0 0
      %8812 = vmatpush2.bf16.msra.mxu0 0
      %8813 = vmatprep.subr.bf16.mxu0 0
      %8814 = vmatpush2.bf16.msra.mxu0 0
      %8815 = vmatprep.subr.bf16.mxu0 0
      %8816 = vmatpush2.bf16.msra.mxu0 0
      %8817 = vmatprep.subr.bf16.mxu0 0
      %8818 = vmatpush2.bf16.msra.mxu0 0
      %8819 = vmatprep.subr.bf16.mxu0 0
      %8820 = vmatpush2.bf16.msra.mxu0 0
      %8821 = vmatprep.subr.bf16.mxu0 0
      %8822 = vmatpush2.bf16.msra.mxu0 0
      %8823 = vmatprep.mubr.bf16.mxu0 0
      %8824 = vmatmul.mubr.bf16.gmra.mxu0 %v8756
      %v8825 = vpop.f32.mrf.mxu0
      %v8826 = vadd.f32 0.0, %v8825
      %v8827 = vpop.f32.mrf.mxu0
      %v8828 = vpop.f32.mrf.mxu0
      %v8829 = vadd.f32 0.0, %v8828
      %v8830 = vpop.f32.mrf.mxu0
      %8831 = vmatprep.mubr.bf16.mxu0 0
      %8832 = vmatmul.mubr.bf16.gmra.mxu0 %v8758
      %v8833 = vpop.f32.mrf.mxu0
      %v8834 = vadd.f32 0.0, %v8833
      %v8835 = vpop.f32.mrf.mxu0
      %v8836 = vpop.f32.mrf.mxu0
      %v8837 = vadd.f32 0.0, %v8836
      %v8838 = vpop.f32.mrf.mxu0
      %8839 = vmatprep.mubr.bf16.mxu0 0
      %8840 = vmatmul.mubr.bf16.gmra.mxu0 %v8760
      %v8841 = vpop.f32.mrf.mxu0
      %v8842 = vadd.f32 0.0, %v8841
      %v8843 = vpop.f32.mrf.mxu0
      %v8844 = vpop.f32.mrf.mxu0
      %v8845 = vadd.f32 0.0, %v8844
      %v8846 = vpop.f32.mrf.mxu0
      %8847 = vmatprep.mubr.bf16.mxu0 0
      %8848 = vmatmul.mubr.bf16.gmra.mxu0 %v8762
      %v8849 = vpop.f32.mrf.mxu0
      %v8850 = vadd.f32 0.0, %v8849
      %v8851 = vpop.f32.mrf.mxu0
      %v8852 = vpop.f32.mrf.mxu0
      %v8853 = vadd.f32 0.0, %v8852
      %v8854 = vpop.f32.mrf.mxu0
      %8855 = vmatprep.mubr.bf16.mxu0 0
      %8856 = vmatmul.mubr.bf16.gmra.mxu0 %v8764
      %v8857 = vpop.f32.mrf.mxu0
      %v8858 = vadd.f32 0.0, %v8857
      %v8859 = vpop.f32.mrf.mxu0
      %v8860 = vpop.f32.mrf.mxu0
      %v8861 = vadd.f32 0.0, %v8860
      %v8862 = vpop.f32.mrf.mxu0
      %8863 = vmatprep.mubr.bf16.mxu0 0
      %8864 = vmatmul.mubr.bf16.gmra.mxu0 %v8766
      %v8865 = vpop.f32.mrf.mxu0
      %v8866 = vadd.f32 0.0, %v8865
      %v8867 = vpop.f32.mrf.mxu0
      %v8868 = vpop.f32.mrf.mxu0
      %v8869 = vadd.f32 0.0, %v8868
      %v8870 = vpop.f32.mrf.mxu0
      %8871 = vmatprep.mubr.bf16.mxu0 0
      %8872 = vmatmul.mubr.bf16.gmra.mxu0 %v8768
      %v8873 = vpop.f32.mrf.mxu0
      %v8874 = vadd.f32 0.0, %v8873
      %v8875 = vpop.f32.mrf.mxu0
      %v8876 = vpop.f32.mrf.mxu0
      %v8877 = vadd.f32 0.0, %v8876
      %v8878 = vpop.f32.mrf.mxu0
      %8879 = vmatprep.mubr.bf16.mxu0 0
      %8880 = vmatmul.mubr.bf16.gmra.mxu0 %v8770
      %v8881 = vpop.f32.mrf.mxu0
      %v8882 = vadd.f32 0.0, %v8881
      %v8883 = vpop.f32.mrf.mxu0
      %v8884 = vpop.f32.mrf.mxu0
      %v8885 = vadd.f32 0.0, %v8884
      %v8886 = vpop.f32.mrf.mxu0
      %8887 = vmatprep.mubr.bf16.mxu0 0
      %8888 = vmatmul.mubr.bf16.gmra.mxu0 %v8772
      %v8889 = vpop.f32.mrf.mxu0
      %v8890 = vadd.f32 0.0, %v8889
      %v8891 = vpop.f32.mrf.mxu0
      %v8892 = vpop.f32.mrf.mxu0
      %v8893 = vadd.f32 0.0, %v8892
      %v8894 = vpop.f32.mrf.mxu0
      %8895 = vmatprep.mubr.bf16.mxu0 0
      %8896 = vmatmul.mubr.bf16.gmra.mxu0 %v8774
      %v8897 = vpop.f32.mrf.mxu0
      %v8898 = vadd.f32 0.0, %v8897
      %v8899 = vpop.f32.mrf.mxu0
      %v8900 = vpop.f32.mrf.mxu0
      %v8901 = vadd.f32 0.0, %v8900
      %v8902 = vpop.f32.mrf.mxu0
      %8903 = vmatprep.mubr.bf16.mxu0 0
      %8904 = vmatmul.mubr.bf16.gmra.mxu0 %v8776
      %v8905 = vpop.f32.mrf.mxu0
      %v8906 = vadd.f32 0.0, %v8905
      %v8907 = vpop.f32.mrf.mxu0
      %v8908 = vpop.f32.mrf.mxu0
      %v8909 = vadd.f32 0.0, %v8908
      %v8910 = vpop.f32.mrf.mxu0
      %8911 = vmatprep.mubr.bf16.mxu0 0
      %8912 = vmatmul.mubr.bf16.gmra.mxu0 %v8778
      %v8913 = vpop.f32.mrf.mxu0
      %v8914 = vadd.f32 0.0, %v8913
      %v8915 = vpop.f32.mrf.mxu0
      %v8916 = vpop.f32.mrf.mxu0
      %v8917 = vadd.f32 0.0, %v8916
      %v8918 = vpop.f32.mrf.mxu0
      %8919 = vmatprep.mubr.bf16.mxu0 0
      %8920 = vmatmul.mubr.bf16.gmra.mxu0 %v8780
      %v8921 = vpop.f32.mrf.mxu0
      %v8922 = vadd.f32 0.0, %v8921
      %v8923 = vpop.f32.mrf.mxu0
      %v8924 = vpop.f32.mrf.mxu0
      %v8925 = vadd.f32 0.0, %v8924
      %v8926 = vpop.f32.mrf.mxu0
      %8927 = vmatprep.mubr.bf16.mxu0 0
      %8928 = vmatmul.mubr.bf16.gmra.mxu0 %v8782
      %v8929 = vpop.f32.mrf.mxu0
      %v8930 = vadd.f32 0.0, %v8929
      %v8931 = vpop.f32.mrf.mxu0
      %v8932 = vpop.f32.mrf.mxu0
      %v8933 = vadd.f32 0.0, %v8932
      %v8934 = vpop.f32.mrf.mxu0
      %8935 = vmatprep.mubr.bf16.mxu0 0
      %8936 = vmatmul.mubr.bf16.gmra.mxu0 %v8784
      %v8937 = vpop.f32.mrf.mxu0
      %v8938 = vadd.f32 0.0, %v8937
      %v8939 = vpop.f32.mrf.mxu0
      %v8940 = vpop.f32.mrf.mxu0
      %v8941 = vadd.f32 0.0, %v8940
      %v8942 = vpop.f32.mrf.mxu0
      %8943 = vmatprep.mubr.bf16.mxu0 0
      %8944 = vmatmul.mubr.bf16.gmra.mxu0 %v8786
      %v8945 = vpop.f32.mrf.mxu0
      %v8946 = vadd.f32 0.0, %v8945
      %v8947 = vpop.f32.mrf.mxu0
      %v8948 = vpop.f32.mrf.mxu0
      %v8949 = vadd.f32 0.0, %v8948
      %v8950 = vpop.f32.mrf.mxu0
      %8951 = vdwg.mxu0
      %v8952 = vadd.f32 %v7854, %v8826
      %v8953 = vadd.f32 %v7857, %v8829
      %v8954 = vadd.f32 %v7862, %v8834
      %v8955 = vadd.f32 %v7865, %v8837
      %v8956 = vadd.f32 %v7870, %v8842
      %v8957 = vadd.f32 %v7873, %v8845
      %v8958 = vadd.f32 %v7878, %v8850
      %v8959 = vadd.f32 %v7881, %v8853
      %v8960 = vadd.f32 %v7886, %v8858
      %v8961 = vadd.f32 %v7889, %v8861
      %v8962 = vadd.f32 %v7894, %v8866
      %v8963 = vadd.f32 %v7897, %v8869
      %v8964 = vadd.f32 %v7902, %v8874
      %v8965 = vadd.f32 %v7905, %v8877
      %v8966 = vadd.f32 %v7910, %v8882
      %v8967 = vadd.f32 %v7913, %v8885
      %v8968 = vadd.f32 %v7918, %v8890
      %v8969 = vadd.f32 %v7921, %v8893
      %v8970 = vadd.f32 %v7926, %v8898
      %v8971 = vadd.f32 %v7929, %v8901
      %v8972 = vadd.f32 %v7934, %v8906
      %v8973 = vadd.f32 %v7937, %v8909
      %v8974 = vadd.f32 %v7942, %v8914
      %v8975 = vadd.f32 %v7945, %v8917
      %v8976 = vadd.f32 %v7950, %v8922
      %v8977 = vadd.f32 %v7953, %v8925
      %v8978 = vadd.f32 %v7958, %v8930
      %v8979 = vadd.f32 %v7961, %v8933
      %v8980 = vadd.f32 %v7966, %v8938
      %v8981 = vadd.f32 %v7969, %v8941
      %v8982 = vadd.f32 %v7974, %v8946
      %v8983 = vadd.f32 %v7977, %v8949
      %8984 = vst.msk [vmem:[#allocation3] sm:$0xff] %vm1447, %v8952
      %8985 = vst.msk [vmem:[#allocation3 + $0x8] sm:$0xff] %vm1447, %v8953
      %8986 = vst.msk [vmem:[#allocation3 + $0x10] sm:$0xff] %vm1447, %v8954
      %8987 = vst.msk [vmem:[#allocation3 + $0x18] sm:$0xff] %vm1447, %v8955
      %8988 = vst.msk [vmem:[#allocation3 + $0x20] sm:$0xff] %vm1447, %v8956
      %8989 = vst.msk [vmem:[#allocation3 + $0x28] sm:$0xff] %vm1447, %v8957
      %8990 = vst.msk [vmem:[#allocation3 + $0x30] sm:$0xff] %vm1447, %v8958
      %8991 = vst.msk [vmem:[#allocation3 + $0x38] sm:$0xff] %vm1447, %v8959
      %8992 = vst.msk [vmem:[#allocation3 + $0x40] sm:$0xff] %vm1447, %v8960
      %8993 = vst.msk [vmem:[#allocation3 + $0x48] sm:$0xff] %vm1447, %v8961
      %8994 = vst.msk [vmem:[#allocation3 + $0x50] sm:$0xff] %vm1447, %v8962
      %8995 = vst.msk [vmem:[#allocation3 + $0x58] sm:$0xff] %vm1447, %v8963
      %8996 = vst.msk [vmem:[#allocation3 + $0x60] sm:$0xff] %vm1447, %v8964
      %8997 = vst.msk [vmem:[#allocation3 + $0x68] sm:$0xff] %vm1447, %v8965
      %8998 = vst.msk [vmem:[#allocation3 + $0x70] sm:$0xff] %vm1447, %v8966
      %8999 = vst.msk [vmem:[#allocation3 + $0x78] sm:$0xff] %vm1447, %v8967
      %9000 = vst.msk [vmem:[#allocation3 + $0x80] sm:$0xff] %vm1447, %v8968
      %9001 = vst.msk [vmem:[#allocation3 + $0x88] sm:$0xff] %vm1447, %v8969
      %9002 = vst.msk [vmem:[#allocation3 + $0x90] sm:$0xff] %vm1447, %v8970
      %9003 = vst.msk [vmem:[#allocation3 + $0x98] sm:$0xff] %vm1447, %v8971
      %9004 = vst.msk [vmem:[#allocation3 + $0xa0] sm:$0xff] %vm1447, %v8972
      %9005 = vst.msk [vmem:[#allocation3 + $0xa8] sm:$0xff] %vm1447, %v8973
      %9006 = vst.msk [vmem:[#allocation3 + $0xb0] sm:$0xff] %vm1447, %v8974
      %9007 = vst.msk [vmem:[#allocation3 + $0xb8] sm:$0xff] %vm1447, %v8975
      %9008 = vst.msk [vmem:[#allocation3 + $0xc0] sm:$0xff] %vm1447, %v8976
      %9009 = vst.msk [vmem:[#allocation3 + $0xc8] sm:$0xff] %vm1447, %v8977
      %9010 = vst.msk [vmem:[#allocation3 + $0xd0] sm:$0xff] %vm1447, %v8978
      %9011 = vst.msk [vmem:[#allocation3 + $0xd8] sm:$0xff] %vm1447, %v8979
      %9012 = vst.msk [vmem:[#allocation3 + $0xe0] sm:$0xff] %vm1447, %v8980
      %9013 = vst.msk [vmem:[#allocation3 + $0xe8] sm:$0xff] %vm1447, %v8981
      %9014 = vst.msk [vmem:[#allocation3 + $0xf0] sm:$0xff] %vm1447, %v8982
      %9015 = vst.msk [vmem:[#allocation3 + $0xf8] sm:$0xff] %vm1447, %v8983
      %v9016 = vsel %vm1447, %v8952, 0.0
      %v9017 = vsel %vm1447, %v8953, 0.0
      %v9018 = vadd.f32 %v9016, %v9017
      %v9019 = vsel %vm1447, %v8954, 0.0
      %v9020 = vadd.f32 %v9018, %v9019
      %v9021 = vsel %vm1447, %v8955, 0.0
      %v9022 = vadd.f32 %v9020, %v9021
      %v9023 = vsel %vm1447, %v8956, 0.0
      %v9024 = vadd.f32 %v9022, %v9023
      %v9025 = vsel %vm1447, %v8957, 0.0
      %v9026 = vadd.f32 %v9024, %v9025
      %v9027 = vsel %vm1447, %v8958, 0.0
      %v9028 = vadd.f32 %v9026, %v9027
      %v9029 = vsel %vm1447, %v8959, 0.0
      %v9030 = vadd.f32 %v9028, %v9029
      %v9031 = vsel %vm1447, %v8960, 0.0
      %v9032 = vadd.f32 %v9030, %v9031
      %v9033 = vsel %vm1447, %v8961, 0.0
      %v9034 = vadd.f32 %v9032, %v9033
      %v9035 = vsel %vm1447, %v8962, 0.0
      %v9036 = vadd.f32 %v9034, %v9035
      %v9037 = vsel %vm1447, %v8963, 0.0
      %v9038 = vadd.f32 %v9036, %v9037
      %v9039 = vsel %vm1447, %v8964, 0.0
      %v9040 = vadd.f32 %v9038, %v9039
      %v9041 = vsel %vm1447, %v8965, 0.0
      %v9042 = vadd.f32 %v9040, %v9041
      %v9043 = vsel %vm1447, %v8966, 0.0
      %v9044 = vadd.f32 %v9042, %v9043
      %v9045 = vsel %vm1447, %v8967, 0.0
      %v9046 = vadd.f32 %v9044, %v9045
      %v9047 = vsel %vm1447, %v8968, 0.0
      %v9048 = vadd.f32 %v9046, %v9047
      %v9049 = vsel %vm1447, %v8969, 0.0
      %v9050 = vadd.f32 %v9048, %v9049
      %v9051 = vsel %vm1447, %v8970, 0.0
      %v9052 = vadd.f32 %v9050, %v9051
      %v9053 = vsel %vm1447, %v8971, 0.0
      %v9054 = vadd.f32 %v9052, %v9053
      %v9055 = vsel %vm1447, %v8972, 0.0
      %v9056 = vadd.f32 %v9054, %v9055
      %v9057 = vsel %vm1447, %v8973, 0.0
      %v9058 = vadd.f32 %v9056, %v9057
      %v9059 = vsel %vm1447, %v8974, 0.0
      %v9060 = vadd.f32 %v9058, %v9059
      %v9061 = vsel %vm1447, %v8975, 0.0
      %v9062 = vadd.f32 %v9060, %v9061
      %v9063 = vsel %vm1447, %v8976, 0.0
      %v9064 = vadd.f32 %v9062, %v9063
      %v9065 = vsel %vm1447, %v8977, 0.0
      %v9066 = vadd.f32 %v9064, %v9065
      %v9067 = vsel %vm1447, %v8978, 0.0
      %v9068 = vadd.f32 %v9066, %v9067
      %v9069 = vsel %vm1447, %v8979, 0.0
      %v9070 = vadd.f32 %v9068, %v9069
      %v9071 = vsel %vm1447, %v8980, 0.0
      %v9072 = vadd.f32 %v9070, %v9071
      %v9073 = vsel %vm1447, %v8981, 0.0
      %v9074 = vadd.f32 %v9072, %v9073
      %v9075 = vsel %vm1447, %v8982, 0.0
      %v9076 = vadd.f32 %v9074, %v9075
      %v9077 = vsel %vm1447, %v8983, 0.0
      %v9078 = vadd.f32 %v9076, %v9077
      %v9079 = vrot.slane %v9078, 4
      %v9080 = vadd.f32 %v9078, %v9079
      %v9081 = vrot.slane %v9080, 2
      %v9082 = vadd.f32 %v9080, %v9081
      %v9083 = vrot.slane %v9082, 1
      %v9084 = vadd.f32 %v9082, %v9083
      %v9085 = vadd.f32 %v9084, 0.0
      %v9086 = vmul.f32 %v8952, %v8952
      %v9087 = vmul.f32 %v8953, %v8953
      %v9088 = vmul.f32 %v8954, %v8954
      %v9089 = vmul.f32 %v8955, %v8955
      %v9090 = vmul.f32 %v8956, %v8956
      %v9091 = vmul.f32 %v8957, %v8957
      %v9092 = vmul.f32 %v8958, %v8958
      %v9093 = vmul.f32 %v8959, %v8959
      %v9094 = vmul.f32 %v8960, %v8960
      %v9095 = vmul.f32 %v8961, %v8961
      %v9096 = vmul.f32 %v8962, %v8962
      %v9097 = vmul.f32 %v8963, %v8963
      %v9098 = vmul.f32 %v8964, %v8964
      %v9099 = vmul.f32 %v8965, %v8965
      %v9100 = vmul.f32 %v8966, %v8966
      %v9101 = vmul.f32 %v8967, %v8967
      %v9102 = vmul.f32 %v8968, %v8968
      %v9103 = vmul.f32 %v8969, %v8969
      %v9104 = vmul.f32 %v8970, %v8970
      %v9105 = vmul.f32 %v8971, %v8971
      %v9106 = vmul.f32 %v8972, %v8972
      %v9107 = vmul.f32 %v8973, %v8973
      %v9108 = vmul.f32 %v8974, %v8974
      %v9109 = vmul.f32 %v8975, %v8975
      %v9110 = vmul.f32 %v8976, %v8976
      %v9111 = vmul.f32 %v8977, %v8977
      %v9112 = vmul.f32 %v8978, %v8978
      %v9113 = vmul.f32 %v8979, %v8979
      %v9114 = vmul.f32 %v8980, %v8980
      %v9115 = vmul.f32 %v8981, %v8981
      %v9116 = vmul.f32 %v8982, %v8982
      %v9117 = vmul.f32 %v8983, %v8983
      %v9118 = vsel %vm1447, %v9086, 0.0
      %v9119 = vsel %vm1447, %v9087, 0.0
      %v9120 = vadd.f32 %v9118, %v9119
      %v9121 = vsel %vm1447, %v9088, 0.0
      %v9122 = vadd.f32 %v9120, %v9121
      %v9123 = vsel %vm1447, %v9089, 0.0
      %v9124 = vadd.f32 %v9122, %v9123
      %v9125 = vsel %vm1447, %v9090, 0.0
      %v9126 = vadd.f32 %v9124, %v9125
      %v9127 = vsel %vm1447, %v9091, 0.0
      %v9128 = vadd.f32 %v9126, %v9127
      %v9129 = vsel %vm1447, %v9092, 0.0
      %v9130 = vadd.f32 %v9128, %v9129
      %v9131 = vsel %vm1447, %v9093, 0.0
      %v9132 = vadd.f32 %v9130, %v9131
      %v9133 = vsel %vm1447, %v9094, 0.0
      %v9134 = vadd.f32 %v9132, %v9133
      %v9135 = vsel %vm1447, %v9095, 0.0
      %v9136 = vadd.f32 %v9134, %v9135
      %v9137 = vsel %vm1447, %v9096, 0.0
      %v9138 = vadd.f32 %v9136, %v9137
      %v9139 = vsel %vm1447, %v9097, 0.0
      %v9140 = vadd.f32 %v9138, %v9139
      %v9141 = vsel %vm1447, %v9098, 0.0
      %v9142 = vadd.f32 %v9140, %v9141
      %v9143 = vsel %vm1447, %v9099, 0.0
      %v9144 = vadd.f32 %v9142, %v9143
      %v9145 = vsel %vm1447, %v9100, 0.0
      %v9146 = vadd.f32 %v9144, %v9145
      %v9147 = vsel %vm1447, %v9101, 0.0
      %v9148 = vadd.f32 %v9146, %v9147
      %v9149 = vsel %vm1447, %v9102, 0.0
      %v9150 = vadd.f32 %v9148, %v9149
      %v9151 = vsel %vm1447, %v9103, 0.0
      %v9152 = vadd.f32 %v9150, %v9151
      %v9153 = vsel %vm1447, %v9104, 0.0
      %v9154 = vadd.f32 %v9152, %v9153
      %v9155 = vsel %vm1447, %v9105, 0.0
      %v9156 = vadd.f32 %v9154, %v9155
      %v9157 = vsel %vm1447, %v9106, 0.0
      %v9158 = vadd.f32 %v9156, %v9157
      %v9159 = vsel %vm1447, %v9107, 0.0
      %v9160 = vadd.f32 %v9158, %v9159
      %v9161 = vsel %vm1447, %v9108, 0.0
      %v9162 = vadd.f32 %v9160, %v9161
      %v9163 = vsel %vm1447, %v9109, 0.0
      %v9164 = vadd.f32 %v9162, %v9163
      %v9165 = vsel %vm1447, %v9110, 0.0
      %v9166 = vadd.f32 %v9164, %v9165
      %v9167 = vsel %vm1447, %v9111, 0.0
      %v9168 = vadd.f32 %v9166, %v9167
      %v9169 = vsel %vm1447, %v9112, 0.0
      %v9170 = vadd.f32 %v9168, %v9169
      %v9171 = vsel %vm1447, %v9113, 0.0
      %v9172 = vadd.f32 %v9170, %v9171
      %v9173 = vsel %vm1447, %v9114, 0.0
      %v9174 = vadd.f32 %v9172, %v9173
      %v9175 = vsel %vm1447, %v9115, 0.0
      %v9176 = vadd.f32 %v9174, %v9175
      %v9177 = vsel %vm1447, %v9116, 0.0
      %v9178 = vadd.f32 %v9176, %v9177
      %v9179 = vsel %vm1447, %v9117, 0.0
      %v9180 = vadd.f32 %v9178, %v9179
      %v9181 = vrot.slane %v9180, 4
      %v9182 = vadd.f32 %v9180, %v9181
      %v9183 = vrot.slane %v9182, 2
      %v9184 = vadd.f32 %v9182, %v9183
      %v9185 = vrot.slane %v9184, 1
      %v9186 = vadd.f32 %v9184, %v9185
      %v9187 = vadd.f32 %v9186, 0.0
      %v9188 = vmul.f32 %v9085, 0.00390625
      %v9189 = vmul.f32 %v9187, 0.00390625
      %v9190 = vmul.f32 %v9188, %v9188
      %v9191 = vsub.f32 %v9189, %v9190
      %v9192 = vmax.f32 %v9191, 0.0
      %v9193 = vadd.f32 %v9192, 1e-05
      %v9194 = vrsqrt.pop %v9193
      %v9195 = vld [vmem:[%s165] sm:$0xff]
      %v9196 = vld [vmem:[%s165 + $0x8] sm:$0xff]
      %v9197 = vld [vmem:[%s165 + $0x10] sm:$0xff]
      %v9198 = vld [vmem:[%s165 + $0x18] sm:$0xff]
      %v9199 = vld [vmem:[%s165 + $0x20] sm:$0xff]
      %v9200 = vld [vmem:[%s165 + $0x28] sm:$0xff]
      %v9201 = vld [vmem:[%s165 + $0x30] sm:$0xff]
      %v9202 = vld [vmem:[%s165 + $0x38] sm:$0xff]
      %v9203 = vld [vmem:[%s165 + $0x40] sm:$0xff]
      %v9204 = vld [vmem:[%s165 + $0x48] sm:$0xff]
      %v9205 = vld [vmem:[%s165 + $0x50] sm:$0xff]
      %v9206 = vld [vmem:[%s165 + $0x58] sm:$0xff]
      %v9207 = vld [vmem:[%s165 + $0x60] sm:$0xff]
      %v9208 = vld [vmem:[%s165 + $0x68] sm:$0xff]
      %v9209 = vld [vmem:[%s165 + $0x70] sm:$0xff]
      %v9210 = vld [vmem:[%s165 + $0x78] sm:$0xff]
      %v9211 = vld [vmem:[%s165 + $0x80] sm:$0xff]
      %v9212 = vld [vmem:[%s165 + $0x88] sm:$0xff]
      %v9213 = vld [vmem:[%s165 + $0x90] sm:$0xff]
      %v9214 = vld [vmem:[%s165 + $0x98] sm:$0xff]
      %v9215 = vld [vmem:[%s165 + $0xa0] sm:$0xff]
      %v9216 = vld [vmem:[%s165 + $0xa8] sm:$0xff]
      %v9217 = vld [vmem:[%s165 + $0xb0] sm:$0xff]
      %v9218 = vld [vmem:[%s165 + $0xb8] sm:$0xff]
      %v9219 = vld [vmem:[%s165 + $0xc0] sm:$0xff]
      %v9220 = vld [vmem:[%s165 + $0xc8] sm:$0xff]
      %v9221 = vld [vmem:[%s165 + $0xd0] sm:$0xff]
      %v9222 = vld [vmem:[%s165 + $0xd8] sm:$0xff]
      %v9223 = vld [vmem:[%s165 + $0xe0] sm:$0xff]
      %v9224 = vld [vmem:[%s165 + $0xe8] sm:$0xff]
      %v9225 = vld [vmem:[%s165 + $0xf0] sm:$0xff]
      %v9226 = vld [vmem:[%s165 + $0xf8] sm:$0xff]
      %v9227 = vld [vmem:[#allocation3] sm:$0xff]
      %v9228 = vld [vmem:[#allocation3 + $0x8] sm:$0xff]
      %v9229 = vld [vmem:[#allocation3 + $0x10] sm:$0xff]
      %v9230 = vld [vmem:[#allocation3 + $0x18] sm:$0xff]
      %v9231 = vld [vmem:[#allocation3 + $0x20] sm:$0xff]
      %v9232 = vld [vmem:[#allocation3 + $0x28] sm:$0xff]
      %v9233 = vld [vmem:[#allocation3 + $0x30] sm:$0xff]
      %v9234 = vld [vmem:[#allocation3 + $0x38] sm:$0xff]
      %v9235 = vld [vmem:[#allocation3 + $0x40] sm:$0xff]
      %v9236 = vld [vmem:[#allocation3 + $0x48] sm:$0xff]
      %v9237 = vld [vmem:[#allocation3 + $0x50] sm:$0xff]
      %v9238 = vld [vmem:[#allocation3 + $0x58] sm:$0xff]
      %v9239 = vld [vmem:[#allocation3 + $0x60] sm:$0xff]
      %v9240 = vld [vmem:[#allocation3 + $0x68] sm:$0xff]
      %v9241 = vld [vmem:[#allocation3 + $0x70] sm:$0xff]
      %v9242 = vld [vmem:[#allocation3 + $0x78] sm:$0xff]
      %v9243 = vld [vmem:[#allocation3 + $0x80] sm:$0xff]
      %v9244 = vld [vmem:[#allocation3 + $0x88] sm:$0xff]
      %v9245 = vld [vmem:[#allocation3 + $0x90] sm:$0xff]
      %v9246 = vld [vmem:[#allocation3 + $0x98] sm:$0xff]
      %v9247 = vld [vmem:[#allocation3 + $0xa0] sm:$0xff]
      %v9248 = vld [vmem:[#allocation3 + $0xa8] sm:$0xff]
      %v9249 = vld [vmem:[#allocation3 + $0xb0] sm:$0xff]
      %v9250 = vld [vmem:[#allocation3 + $0xb8] sm:$0xff]
      %v9251 = vld [vmem:[#allocation3 + $0xc0] sm:$0xff]
      %v9252 = vld [vmem:[#allocation3 + $0xc8] sm:$0xff]
      %v9253 = vld [vmem:[#allocation3 + $0xd0] sm:$0xff]
      %v9254 = vld [vmem:[#allocation3 + $0xd8] sm:$0xff]
      %v9255 = vld [vmem:[#allocation3 + $0xe0] sm:$0xff]
      %v9256 = vld [vmem:[#allocation3 + $0xe8] sm:$0xff]
      %v9257 = vld [vmem:[#allocation3 + $0xf0] sm:$0xff]
      %v9258 = vld [vmem:[#allocation3 + $0xf8] sm:$0xff]
      %v9259 = vsub.f32 %v9227, %v9188
      %v9260 = vsub.f32 %v9228, %v9188
      %v9261 = vsub.f32 %v9229, %v9188
      %v9262 = vsub.f32 %v9230, %v9188
      %v9263 = vsub.f32 %v9231, %v9188
      %v9264 = vsub.f32 %v9232, %v9188
      %v9265 = vsub.f32 %v9233, %v9188
      %v9266 = vsub.f32 %v9234, %v9188
      %v9267 = vsub.f32 %v9235, %v9188
      %v9268 = vsub.f32 %v9236, %v9188
      %v9269 = vsub.f32 %v9237, %v9188
      %v9270 = vsub.f32 %v9238, %v9188
      %v9271 = vsub.f32 %v9239, %v9188
      %v9272 = vsub.f32 %v9240, %v9188
      %v9273 = vsub.f32 %v9241, %v9188
      %v9274 = vsub.f32 %v9242, %v9188
      %v9275 = vsub.f32 %v9243, %v9188
      %v9276 = vsub.f32 %v9244, %v9188
      %v9277 = vsub.f32 %v9245, %v9188
      %v9278 = vsub.f32 %v9246, %v9188
      %v9279 = vsub.f32 %v9247, %v9188
      %v9280 = vsub.f32 %v9248, %v9188
      %v9281 = vsub.f32 %v9249, %v9188
      %v9282 = vsub.f32 %v9250, %v9188
      %v9283 = vsub.f32 %v9251, %v9188
      %v9284 = vsub.f32 %v9252, %v9188
      %v9285 = vsub.f32 %v9253, %v9188
      %v9286 = vsub.f32 %v9254, %v9188
      %v9287 = vsub.f32 %v9255, %v9188
      %v9288 = vsub.f32 %v9256, %v9188
      %v9289 = vsub.f32 %v9257, %v9188
      %v9290 = vsub.f32 %v9258, %v9188
      %v9291 = vmul.f32 %v9259, %v9194
      %v9292 = vmul.f32 %v9260, %v9194
      %v9293 = vmul.f32 %v9261, %v9194
      %v9294 = vmul.f32 %v9262, %v9194
      %v9295 = vmul.f32 %v9263, %v9194
      %v9296 = vmul.f32 %v9264, %v9194
      %v9297 = vmul.f32 %v9265, %v9194
      %v9298 = vmul.f32 %v9266, %v9194
      %v9299 = vmul.f32 %v9267, %v9194
      %v9300 = vmul.f32 %v9268, %v9194
      %v9301 = vmul.f32 %v9269, %v9194
      %v9302 = vmul.f32 %v9270, %v9194
      %v9303 = vmul.f32 %v9271, %v9194
      %v9304 = vmul.f32 %v9272, %v9194
      %v9305 = vmul.f32 %v9273, %v9194
      %v9306 = vmul.f32 %v9274, %v9194
      %v9307 = vmul.f32 %v9275, %v9194
      %v9308 = vmul.f32 %v9276, %v9194
      %v9309 = vmul.f32 %v9277, %v9194
      %v9310 = vmul.f32 %v9278, %v9194
      %v9311 = vmul.f32 %v9279, %v9194
      %v9312 = vmul.f32 %v9280, %v9194
      %v9313 = vmul.f32 %v9281, %v9194
      %v9314 = vmul.f32 %v9282, %v9194
      %v9315 = vmul.f32 %v9283, %v9194
      %v9316 = vmul.f32 %v9284, %v9194
      %v9317 = vmul.f32 %v9285, %v9194
      %v9318 = vmul.f32 %v9286, %v9194
      %v9319 = vmul.f32 %v9287, %v9194
      %v9320 = vmul.f32 %v9288, %v9194
      %v9321 = vmul.f32 %v9289, %v9194
      %v9322 = vmul.f32 %v9290, %v9194
      %v9323 = vadd.f32 %v9195, %v9291
      %v9324 = vadd.f32 %v9196, %v9292
      %v9325 = vadd.f32 %v9197, %v9293
      %v9326 = vadd.f32 %v9198, %v9294
      %v9327 = vadd.f32 %v9199, %v9295
      %v9328 = vadd.f32 %v9200, %v9296
      %v9329 = vadd.f32 %v9201, %v9297
      %v9330 = vadd.f32 %v9202, %v9298
      %v9331 = vadd.f32 %v9203, %v9299
      %v9332 = vadd.f32 %v9204, %v9300
      %v9333 = vadd.f32 %v9205, %v9301
      %v9334 = vadd.f32 %v9206, %v9302
      %v9335 = vadd.f32 %v9207, %v9303
      %v9336 = vadd.f32 %v9208, %v9304
      %v9337 = vadd.f32 %v9209, %v9305
      %v9338 = vadd.f32 %v9210, %v9306
      %v9339 = vadd.f32 %v9211, %v9307
      %v9340 = vadd.f32 %v9212, %v9308
      %v9341 = vadd.f32 %v9213, %v9309
      %v9342 = vadd.f32 %v9214, %v9310
      %v9343 = vadd.f32 %v9215, %v9311
      %v9344 = vadd.f32 %v9216, %v9312
      %v9345 = vadd.f32 %v9217, %v9313
      %v9346 = vadd.f32 %v9218, %v9314
      %v9347 = vadd.f32 %v9219, %v9315
      %v9348 = vadd.f32 %v9220, %v9316
      %v9349 = vadd.f32 %v9221, %v9317
      %v9350 = vadd.f32 %v9222, %v9318
      %v9351 = vadd.f32 %v9223, %v9319
      %v9352 = vadd.f32 %v9224, %v9320
      %v9353 = vadd.f32 %v9225, %v9321
      %v9354 = vadd.f32 %v9226, %v9322
      %9355 = vst.msk [vmem:[%s170] sm:$0xff] %vm1447, %v9323
      %9356 = vst.msk [vmem:[%s170 + $0x8] sm:$0xff] %vm1447, %v9324
      %9357 = vst.msk [vmem:[%s170 + $0x10] sm:$0xff] %vm1447, %v9325
      %9358 = vst.msk [vmem:[%s170 + $0x18] sm:$0xff] %vm1447, %v9326
      %9359 = vst.msk [vmem:[%s170 + $0x20] sm:$0xff] %vm1447, %v9327
      %9360 = vst.msk [vmem:[%s170 + $0x28] sm:$0xff] %vm1447, %v9328
      %9361 = vst.msk [vmem:[%s170 + $0x30] sm:$0xff] %vm1447, %v9329
      %9362 = vst.msk [vmem:[%s170 + $0x38] sm:$0xff] %vm1447, %v9330
      %9363 = vst.msk [vmem:[%s170 + $0x40] sm:$0xff] %vm1447, %v9331
      %9364 = vst.msk [vmem:[%s170 + $0x48] sm:$0xff] %vm1447, %v9332
      %9365 = vst.msk [vmem:[%s170 + $0x50] sm:$0xff] %vm1447, %v9333
      %9366 = vst.msk [vmem:[%s170 + $0x58] sm:$0xff] %vm1447, %v9334
      %9367 = vst.msk [vmem:[%s170 + $0x60] sm:$0xff] %vm1447, %v9335
      %9368 = vst.msk [vmem:[%s170 + $0x68] sm:$0xff] %vm1447, %v9336
      %9369 = vst.msk [vmem:[%s170 + $0x70] sm:$0xff] %vm1447, %v9337
      %9370 = vst.msk [vmem:[%s170 + $0x78] sm:$0xff] %vm1447, %v9338
      %9371 = vst.msk [vmem:[%s170 + $0x80] sm:$0xff] %vm1447, %v9339
      %9372 = vst.msk [vmem:[%s170 + $0x88] sm:$0xff] %vm1447, %v9340
      %9373 = vst.msk [vmem:[%s170 + $0x90] sm:$0xff] %vm1447, %v9341
      %9374 = vst.msk [vmem:[%s170 + $0x98] sm:$0xff] %vm1447, %v9342
      %9375 = vst.msk [vmem:[%s170 + $0xa0] sm:$0xff] %vm1447, %v9343
      %9376 = vst.msk [vmem:[%s170 + $0xa8] sm:$0xff] %vm1447, %v9344
      %9377 = vst.msk [vmem:[%s170 + $0xb0] sm:$0xff] %vm1447, %v9345
      %9378 = vst.msk [vmem:[%s170 + $0xb8] sm:$0xff] %vm1447, %v9346
      %9379 = vst.msk [vmem:[%s170 + $0xc0] sm:$0xff] %vm1447, %v9347
      %9380 = vst.msk [vmem:[%s170 + $0xc8] sm:$0xff] %vm1447, %v9348
      %9381 = vst.msk [vmem:[%s170 + $0xd0] sm:$0xff] %vm1447, %v9349
      %9382 = vst.msk [vmem:[%s170 + $0xd8] sm:$0xff] %vm1447, %v9350
      %9383 = vst.msk [vmem:[%s170 + $0xe0] sm:$0xff] %vm1447, %v9351
      %9384 = vst.msk [vmem:[%s170 + $0xe8] sm:$0xff] %vm1447, %v9352
      %9385 = vst.msk [vmem:[%s170 + $0xf0] sm:$0xff] %vm1447, %v9353
      %9386 = vst.msk [vmem:[%s170 + $0xf8] sm:$0xff] %vm1447, %v9354
      %p9387 = scmp.lt.s32.totalorder %s14, 1
      %s9388 = scalar_select %p9387, %s14, 1
      %s9389 = smul.addr %s9388, 32
      %s9390 = smul.addr %s9389, 8
      %s9391 = scalar_lea.vmem %s3, %s9390
      // Predicated region
      $region33: #{tpu_custom_call.1} parent=31 // pred_check
        %p9392 = pneg %p100
      $region34: #{tpu_custom_call.1} parent=31 // pred_check_branch
        %9394 = sbr.rel (%p9392) target = $region36
      $region35: #{tpu_custom_call.1} parent=31 // pred_region
        _
      $region36: #{tpu_custom_call.1} parent=31 // pred_fallthru
        _
    $region32: #{tpu_custom_call.1} parent=5 // pred_fallthru
      _
    %p9395 = scmp.le.s32.totalorder 2, %s9
    // Predicated region
    $region37: #{tpu_custom_call.1} parent=5 // pred_check
      %p9396 = pneg %p9395
    $region38: #{tpu_custom_call.1} parent=5 // pred_check_branch
      %9398 = sbr.rel (%p9396) target = $region40
    $region39: #{tpu_custom_call.1} parent=5 // pred_region
      %s9399 = ssub.s32 %s9, 2
      // Predicated region
      $region41: #{tpu_custom_call.1} parent=39 // pred_check
        %p9400 = pneg %p106
      $region42: #{tpu_custom_call.1} parent=39 // pred_check_branch
        %9402 = sbr.rel (%p9400) target = $region44
      $region43: #{tpu_custom_call.1} parent=39 // pred_region
        %p9403 = scmp.lt.s32.totalorder %s15, 1
        %s9404 = scalar_select %p9403, %s15, 1
        %s9405 = smul.addr %s9404, 32
        %s9406 = smul.addr %s9405, 8
        %s9407 = scalar_lea.vmem %s3, %s9406
      $region44: #{tpu_custom_call.1} parent=39 // pred_fallthru
        _
    $region40: #{tpu_custom_call.1} parent=5 // pred_fallthru
      _
  $region6: #{tpu_custom_call.1} parent=0 // loop_footer
    %s13 = sadd.s32 1, %s9
  $region7: #{tpu_custom_call.1} parent=0 // loop_footer_branch
    %8 = sbr.rel target = $region3
  $region8: #{tpu_custom_call.1} parent=0 // loop_exit
    _

</llo_original>
